<compile_context>
chip_gen: v5e
topology: v5e:2x2
jax: 0.10.0
libtpu: 0.0.40
codegen_flags: <defaults>
</compile_context>

<pallas_src>
import jax
import jax.numpy as jnp
from jax.experimental import pallas as pl
from jax.experimental.pallas import tpu as pltpu

GROWTH = 32
NUM_INIT_FEATURES = 64
BN_SIZE = 4
NUM_CLASSES = 13
BN_EPS = 1e-5

_TM = 512          # M tile (rows) when M is large
_TK_FULL = 2048    # single-K-block threshold (largest K here is 1152; the
                   # affine-prologue K is <= ~128 so its live range is small)
_TK_TILE = 512     # K tile in the (unused here) large-K fallback


def _rup(x, m):
    return (x + m - 1) // m * m


# ---------------------------------------------------------------------------
# Fused matmul kernel
#   out = concat(xcat, cast(relu?(A*scale+bias) @ B))      (concat optional)
#   stats = per-channel [sum; sumsq] of the matmul result  (optional epilogue)
# ---------------------------------------------------------------------------
def _make_mm_kernel(*, has_affine, relu, nk, want_stats, cprev, tm, m_real):
    """Ref order: a, [s, c], [xcat], b  ->  o, [stats], [acc scratch if nk>1]."""

    def kernel(*refs):
        idx = 0
        a_ref = refs[idx]; idx += 1
        if has_affine:
            s_ref = refs[idx]
            c_ref = refs[idx + 1]
            idx += 2
        x_ref = None
        if cprev:
            x_ref = refs[idx]; idx += 1
        b_ref = refs[idx]; idx += 1
        o_ref = refs[idx]; idx += 1
        st_ref = None
        if want_stats:
            st_ref = refs[idx]; idx += 1
        acc_ref = refs[idx] if nk > 1 else None

        # --- A prologue: optional fused BN affine (+ReLU), bf16 to the MXU.
        if has_affine:
            a = a_ref[...].astype(jnp.float32) * s_ref[...] + c_ref[...]
            if relu:
                a = jnp.maximum(a, 0.0)
            a = a.astype(jnp.bfloat16)
        else:
            a = a_ref[...]
            if relu:
                a = jnp.maximum(a, jnp.zeros_like(a))
        contrib = jnp.dot(a, b_ref[...], preferred_element_type=jnp.float32)

        def finalize(acc):
            y = acc.astype(o_ref.dtype)
            if cprev:
                # DenseNet concat fused into the kernel: one full-width store.
                o_ref[...] = jnp.concatenate([x_ref[...], y], axis=-1)
            else:
                o_ref[...] = y
            if want_stats:
                y32 = y.astype(jnp.float32)          # stats of the stored data
                if m_real is not None:               # mask padded rows
                    row = (jax.lax.broadcasted_iota(jnp.int32, y32.shape, 0)
                           + pl.program_id(0) * tm)
                    y32 = jnp.where(row < m_real, y32, 0.0)
                s1 = jnp.sum(y32, axis=0, keepdims=True)
                s2 = jnp.sum(y32 * y32, axis=0, keepdims=True)
                ridx = jax.lax.broadcasted_iota(
                    jnp.int32, (8, y32.shape[1]), 0)
                tile = jnp.where(ridx == 0, s1,
                                 jnp.where(ridx == 1, s2, 0.0))
                st_ref[0] = tile

        if nk == 1:
            finalize(contrib)
        else:
            @pl.when(pl.program_id(2) == 0)
            def _zero():
                acc_ref[...] = jnp.zeros_like(acc_ref)

            acc_ref[...] += contrib

            @pl.when(pl.program_id(2) == nk - 1)
            def _fin():
                finalize(acc_ref[...])

    return kernel


def fused_matmul(a, b, *, in_scale=None, in_bias=None, relu=False,
                 concat_with=None, want_stats=False, out_dtype=jnp.bfloat16):
    """C = concat(concat_with, relu?(A*scale+bias) @ B)  (+ optional stats).

    a: (M, K) activations (cast to bf16).
    b: (Kp, Nw) bf16 weights, packed/padded once at init.
    in_scale/in_bias: optional per-K f32 affine (fused BatchNorm) prologue.
    concat_with: optional (M, Cprev) bf16 passthrough written to the leading
        output channels (fuses the DenseNet concat into the conv kernel).
    want_stats: also return (Gi, 8, Nw) f32 partial [sum; sumsq] rows of the
        matmul result (fused BN batch statistics).
    """
    M, K = a.shape
    Kp, Nw = b.shape
    assert Kp >= K
    has_affine = in_scale is not None

    # K plan is dictated by the packed weight (padded once at init).
    if Kp <= _TK_FULL:
        tk, nk = Kp, 1
    else:
        assert Kp % _TK_TILE == 0
        tk, nk = _TK_TILE, Kp // _TK_TILE

    # M tiling: large tile for big M, otherwise split into >=2 parallel blocks
    # whenever possible so both v7x TensorCores get work (no-op on v5e/v6e).
    Mp = _rup(M, 8)
    if Mp > _TM:
        Mp = _rup(M, _TM)
        tm = _TM
    elif Mp >= 32 and Mp % 32 == 0:
        tm = Mp // 2
    else:
        tm = Mp

    # N tiling: full-width block (single lane-dense store) unless very wide.
    if Nw <= 512:
        tn = Nw
    elif Nw % 256 == 0:
        tn = 256
    elif Nw % 128 == 0:
        tn = 128
    else:
        tn = Nw
    gj = Nw // tn
    gi = Mp // tm
    if want_stats or concat_with is not None:
        assert gj == 1, "stats/concat fusion require a single N block"

    a = a.astype(jnp.bfloat16)
    if Mp != M or Kp != K:
        a = jnp.pad(a, ((0, Mp - M), (0, Kp - K)))

    inputs = [a]
    in_specs = [pl.BlockSpec((tm, tk), lambda i, j, k: (i, k))]

    if has_affine:
        s = in_scale.astype(jnp.float32).reshape(1, K)
        c = in_bias.astype(jnp.float32).reshape(1, K)
        if Kp != K:
            # zero scale/bias on padded K columns -> they contribute 0.
            s = jnp.pad(s, ((0, 0), (0, Kp - K)))
            c = jnp.pad(c, ((0, 0), (0, Kp - K)))
        inputs += [s, c]
        in_specs += [pl.BlockSpec((1, tk), lambda i, j, k: (0, k)),
                     pl.BlockSpec((1, tk), lambda i, j, k: (0, k))]

    cprev = 0
    if concat_with is not None:
        cprev = concat_with.shape[1]
        xc = concat_with.astype(jnp.bfloat16)
        if Mp != M:
            xc = jnp.pad(xc, ((0, Mp - M), (0, 0)))
        inputs.append(xc)
        in_specs.append(pl.BlockSpec((tm, cprev), lambda i, j, k: (i, 0)))

    inputs.append(b)
    in_specs.append(pl.BlockSpec((tk, tn), lambda i, j, k: (k, j)))

    n_out = cprev + Nw
    out_shapes = [jax.ShapeDtypeStruct((Mp, n_out), out_dtype)]
    if concat_with is not None:
        out_specs = [pl.BlockSpec((tm, n_out), lambda i, j, k: (i, 0))]
    else:
        out_specs = [pl.BlockSpec((tm, tn), lambda i, j, k: (i, j))]
    if want_stats:
        out_shapes.append(jax.ShapeDtypeStruct((gi, 8, Nw), jnp.float32))
        out_specs.append(pl.BlockSpec((1, 8, Nw), lambda i, j, k: (i, 0, 0)))

    scratch_shapes = []
    if nk > 1:
        scratch_shapes.append(pltpu.VMEM((tm, tn), jnp.float32))

    kernel = _make_mm_kernel(
        has_affine=has_affine, relu=relu, nk=nk, want_stats=want_stats,
        cprev=cprev, tm=tm,
        m_real=(M if (want_stats and Mp != M) else None))

    res = pl.pallas_call(
        kernel,
        out_shape=tuple(out_shapes),
        grid=(gi, gj, nk),
        in_specs=in_specs,
        out_specs=tuple(out_specs),
        scratch_shapes=tuple(scratch_shapes),
        compiler_params=pltpu.CompilerParams(
            dimension_semantics=("parallel", "parallel", "arbitrary")),
    )(*inputs)

    out = res[0]
    if Mp != M:
        out = out[:M]
    if want_stats:
        return out, res[1]
    return out


# ---------------------------------------------------------------------------
# Layer ops (glue: im2col / padding / pooling in plain JAX, fused by XLA)
# ---------------------------------------------------------------------------
def conv2d(x, w_packed, kh, kw, stride=1, pad=0, in_scale=None, in_bias=None,
           relu=False, concat_with=None, want_stats=False):
    """x: (N,H,W,Cin) NHWC bf16; w_packed: (Kp, Cout) bf16 packed at init."""
    N, H, W, Cin = x.shape
    Cout = w_packed.shape[1]
    assert in_scale is None or (kh == 1 and kw == 1 and pad == 0)
    if kh == 1 and kw == 1 and stride == 1 and pad == 0:
        patches = x.reshape(N * H * W, Cin)
        Ho, Wo = H, W
    else:
        # TODO(synk): im2col still materializes the (now bf16) patch slab in
        # HBM; a shifted-window BlockSpec over the kh*kw taps would remove it.
        xp = jnp.pad(x, ((0, 0), (pad, pad), (pad, pad), (0, 0)))
        Ho = (H + 2 * pad - kh) // stride + 1
        Wo = (W + 2 * pad - kw) // stride + 1
        cols = []
        for i in range(kh):
            for j in range(kw):
                cols.append(xp[:, i:i + stride * (Ho - 1) + 1:stride,
                               j:j + stride * (Wo - 1) + 1:stride, :])
        patches = jnp.stack(cols, axis=3).reshape(N * Ho * Wo, kh * kw * Cin)
    cat2 = None
    c_extra = 0
    if concat_with is not None:
        c_extra = concat_with.shape[-1]
        cat2 = concat_with.reshape(N * Ho * Wo, c_extra)
    res = fused_matmul(patches, w_packed, in_scale=in_scale, in_bias=in_bias,
                       relu=relu, concat_with=cat2, want_stats=want_stats)
    if want_stats:
        y, st = res
    else:
        y, st = res, None
    y = y.reshape(N, Ho, Wo, c_extra + Cout)
    return (y, st) if want_stats else y


def _stats_from_pallas(st, m):
    """st: (Gi, 8, C) partial [sum; sumsq] rows from the matmul epilogue."""
    s1 = jnp.sum(st[:, 0, :], axis=0)
    s2 = jnp.sum(st[:, 1, :], axis=0)
    mean = s1 / m
    var = jnp.maximum(s2 / m - mean * mean, 0.0)
    return mean, var


def _stats_from_tensor(x):
    """Per-channel batch statistics of a (N,H,W,C) tensor (JAX, XLA-fused)."""
    x32 = x.astype(jnp.float32).reshape(-1, x.shape[-1])
    mean = jnp.mean(x32, axis=0)
    var = jnp.maximum(jnp.mean(x32 * x32, axis=0) - mean * mean, 0.0)
    return mean, var


def _bn_affine(mean, var, gamma, beta):
    scale = gamma * jax.lax.rsqrt(var + BN_EPS)
    bias = beta - mean * scale
    return scale, bias


def maxpool_3x3_s2_p1(x):
    N, H, W, C = x.shape
    xp = jnp.pad(x, ((0, 0), (1, 1), (1, 1), (0, 0)),
                 constant_values=-jnp.inf)
    Ho = (H + 2 - 3) // 2 + 1
    Wo = (W + 2 - 3) // 2 + 1
    out = None
    for i in range(3):
        for j in range(3):
            s = xp[:, i:i + 2 * (Ho - 1) + 1:2, j:j + 2 * (Wo - 1) + 1:2, :]
            out = s if out is None else jnp.maximum(out, s)
    return out


def avgpool_2x2(x):
    N, H, W, C = x.shape
    x32 = x.astype(jnp.float32)
    y = x32.reshape(N, H // 2, 2, W // 2, 2, C).mean(axis=(2, 4))
    return y.astype(jnp.bfloat16)


# ---------------------------------------------------------------------------
# DenseNet building blocks (tracking per-channel BN batch stats alongside x)
# ---------------------------------------------------------------------------
def dense_layer(x, mean_c, var_c, p):
    N, H, W, C = x.shape
    M = N * H * W
    # BN1 + ReLU fused into the 1x1 bottleneck conv prologue; BN2 batch
    # statistics come back as a fused epilogue (no extra slab read).
    s1, b1 = _bn_affine(mean_c, var_c, p['g1'], p['b1'])
    y, st2 = conv2d(x, p['w1'], 1, 1, in_scale=s1, in_bias=b1, relu=True,
                    want_stats=True)
    m2, v2 = _stats_from_pallas(st2, M)
    s2, b2 = _bn_affine(m2, v2, p['g2'], p['b2'])
    # BN2 + ReLU are folded into the im2col glue (XLA fuses the affine with
    # the zero-pad / patch gather, so the BN'd slab is never materialized).
    yb = jnp.maximum(y.astype(jnp.float32) * s2 + b2, 0.0).astype(jnp.bfloat16)
    # 3x3 conv with the DenseNet concat fused into the kernel output and the
    # new channels' BN statistics fused as an epilogue.
    out, st3 = conv2d(yb, p['w2'], 3, 3, stride=1, pad=1,
                      concat_with=x, want_stats=True)
    m3, v3 = _stats_from_pallas(st3, M)
    return out, jnp.concatenate([mean_c, m3]), jnp.concatenate([var_c, v3])


def dense_block(x, mean_c, var_c, layers):
    for p in layers:
        x, mean_c, var_c = dense_layer(x, mean_c, var_c, p)
    return x, mean_c, var_c


def transition(x, mean_c, var_c, p):
    s, b = _bn_affine(mean_c, var_c, p['g'], p['b'])
    y = conv2d(x, p['w'], 1, 1, in_scale=s, in_bias=b, relu=True)  # BN fused
    # TODO(synk): the 2x2 avgpool could be fused into the conv epilogue by
    # grouping output rows into complete 2x2 windows.
    y = avgpool_2x2(y)
    mean_c, var_c = _stats_from_tensor(y)   # XLA-fused with the pool
    return y, mean_c, var_c


def stream_forward(x, p):
    # Stem 7x7/s2 conv; BN1 batch stats fused into the conv epilogue; the
    # BN+ReLU affine is folded into the maxpool glue (one XLA fusion).
    y, st = conv2d(x, p['conv_stem'], 7, 7, stride=2, pad=3, want_stats=True)
    n, ho, wo, _ = y.shape
    m, v = _stats_from_pallas(st, n * ho * wo)
    s, b = _bn_affine(m, v, p['g_stem'], p['b_stem'])
    yb = jnp.maximum(y.astype(jnp.float32) * s + b, 0.0)
    y = maxpool_3x3_s2_p1(yb).astype(jnp.bfloat16)
    mean_c, var_c = _stats_from_tensor(y)
    y, mean_c, var_c = dense_block(y, mean_c, var_c, p['block1'])
    y, mean_c, var_c = transition(y, mean_c, var_c, p['trans1'])
    y, mean_c, var_c = dense_block(y, mean_c, var_c, p['block2'])
    y, mean_c, var_c = transition(y, mean_c, var_c, p['trans2'])
    y, mean_c, var_c = dense_block(y, mean_c, var_c, p['block3'])
    y, _, _ = transition(y, mean_c, var_c, p['trans3'])
    return y


def densenet2_forward(x1_nchw, x2_nchw, params):
    # TODO(synk): on v7x the two identical-shape streams could be stacked and
    # run concurrently on the two TensorCores (leading parallel grid axis).
    x1 = jnp.transpose(x1_nchw, (0, 2, 3, 1)).astype(jnp.bfloat16)
    x2 = jnp.transpose(x2_nchw, (0, 2, 3, 1)).astype(jnp.bfloat16)
    y1 = stream_forward(x1, params['s1'])
    y2 = stream_forward(x2, params['s2'])
    y = ((y1.astype(jnp.float32) + y2.astype(jnp.float32)) * 0.5
         ).astype(jnp.bfloat16)
    h = params['head']
    mean_c, var_c = _stats_from_tensor(y)
    y, mean_c, var_c = dense_block(y, mean_c, var_c, h['block41'])
    # bn21 (no ReLU): a per-channel affine commutes with the spatial mean of
    # AdaptiveAvgPool2d(1), so fold it into the FC matmul's A-prologue.
    s21, b21 = _bn_affine(mean_c, var_c, h['g21'], h['b21'])
    pooled = jnp.mean(y.astype(jnp.float32), axis=(1, 2))          # (N, C)
    logits = fused_matmul(pooled, h['fc_w'], in_scale=s21, in_bias=b21,
                          relu=False, out_dtype=jnp.float32)
    return logits[:, :NUM_CLASSES] + h['fc_b']


# ---------------------------------------------------------------------------
# Deterministic parameter initialization (shapes from Densenet2.__init__).
# Conv/FC weights are packed to (Kp, Np) bf16 matmul layout ONCE here.
# ---------------------------------------------------------------------------
def _kaiming(key, shape, fan_in):
    return jax.random.normal(key, shape, jnp.float32) * jnp.sqrt(2.0 / fan_in)


def pack_conv_weight(w, k_pad_to=None):
    """(Cout, Cin, kh, kw) PyTorch layout -> (Kp, Cout) bf16 matmul layout."""
    Cout, Cin, kh, kw = w.shape
    K = kh * kw * Cin
    wm = jnp.transpose(w, (2, 3, 1, 0)).reshape(K, Cout)
    Kp = K if k_pad_to is None else _rup(K, k_pad_to)
    if Kp > _TK_FULL:
        Kp = _rup(Kp, _TK_TILE)
    if Kp != K:
        wm = jnp.pad(wm, ((0, Kp - K), (0, 0)))
    return wm.astype(jnp.bfloat16)


def init_dense_layer(key, cin):
    k1, k2 = jax.random.split(key)
    mid = BN_SIZE * GROWTH
    return dict(
        g1=jnp.ones((cin,), jnp.float32), b1=jnp.zeros((cin,), jnp.float32),
        w1=pack_conv_weight(_kaiming(k1, (mid, cin, 1, 1), cin)),
        g2=jnp.ones((mid,), jnp.float32), b2=jnp.zeros((mid,), jnp.float32),
        w2=pack_conv_weight(_kaiming(k2, (GROWTH, mid, 3, 3), mid * 9)),
    )


def init_block(key, cin, num_layers):
    layers = []
    for i in range(num_layers):
        key, sub = jax.random.split(key)
        layers.append(init_dense_layer(sub, cin + i * GROWTH))
    return layers


def init_transition(key, cin, cout):
    return dict(g=jnp.ones((cin,), jnp.float32),
                b=jnp.zeros((cin,), jnp.float32),
                w=pack_conv_weight(_kaiming(key, (cout, cin, 1, 1), cin)))


def init_stream(key, block_config):
    keys = jax.random.split(key, 7)
    p = {}
    # Stem K = 7*7*1 = 49 -> pad to 128 at init for lane-dense A loads.
    p['conv_stem'] = pack_conv_weight(
        _kaiming(keys[0], (NUM_INIT_FEATURES, 1, 7, 7), 49), k_pad_to=128)
    p['g_stem'] = jnp.ones((NUM_INIT_FEATURES,), jnp.float32)
    p['b_stem'] = jnp.zeros((NUM_INIT_FEATURES,), jnp.float32)
    nf = NUM_INIT_FEATURES
    p['block1'] = init_block(keys[1], nf, block_config[0]); nf += block_config[0] * GROWTH
    p['trans1'] = init_transition(keys[2], nf, nf // 2); nf //= 2
    p['block2'] = init_block(keys[3], nf, block_config[1]); nf += block_config[1] * GROWTH
    p['trans2'] = init_transition(keys[4], nf, nf // 2); nf //= 2
    p['block3'] = init_block(keys[5], nf, block_config[2]); nf += block_config[2] * GROWTH
    p['trans3'] = init_transition(keys[6], nf, nf // 2); nf //= 2
    return p, nf


def init_head(key, nf, block_config):
    k1, k2, k3 = jax.random.split(key, 3)
    p = {}
    p['block41'] = init_block(k1, nf, block_config[3])
    nf2 = nf + block_config[3] * GROWTH
    p['g21'] = jnp.ones((nf2,), jnp.float32)
    p['b21'] = jnp.zeros((nf2,), jnp.float32)
    fc_w = jax.random.normal(k2, (NUM_CLASSES, nf2), jnp.float32) / jnp.sqrt(nf2)
    wm = jnp.transpose(fc_w)                               # (nf2, 13)
    kp, np_ = _rup(nf2, 128), _rup(NUM_CLASSES, 128)       # lane-dense 128x128
    p['fc_w'] = jnp.pad(wm, ((0, kp - nf2), (0, np_ - NUM_CLASSES))
                        ).astype(jnp.bfloat16)
    p['fc_b'] = jax.random.normal(k3, (NUM_CLASSES,), jnp.float32) * 0.01
    return p


# ---------------------------------------------------------------------------
if __name__ == "__main__":
    key = jax.random.PRNGKey(0)
    k_in1, k_in2, k_s1, k_s2, k_head = jax.random.split(key, 5)

    block_config = (1, 1, 1, 1)  # small synthetic config
    s1, nf = init_stream(k_s1, block_config)
    s2, _ = init_stream(k_s2, block_config)
    head = init_head(k_head, nf, block_config)
    params = dict(s1=s1, s2=s2, head=head)

    # PyTorch-convention NCHW inputs: (batch=2, channels=1, 32, 32)
    x1 = jax.random.normal(k_in1, (2, 1, 32, 32), jnp.float32)
    x2 = jax.random.normal(k_in2, (2, 1, 32, 32), jnp.float32)

    fwd = jax.jit(densenet2_forward)
    out = fwd(x1, x2, params)
    jax.block_until_ready(out)
    assert out.shape == (2, NUM_CLASSES) and out.dtype == jnp.float32
    assert bool(jnp.all(jnp.isfinite(out)))
    print("KERNEL_OK")
</pallas_src>

<mosaic_0001>
module attributes {stable_mosaic.version = 11 : i64} {
  func.func @kernel(%arg0: i32, %arg1: i32, %arg2: i32, %arg3: memref<256x128xbf16, #tpu.memory_space<vmem>>, %arg4: memref<128x64xbf16, #tpu.memory_space<vmem>>, %arg5: memref<256x64xbf16, #tpu.memory_space<vmem>>, %arg6: memref<1x8x64xf32, #tpu.memory_space<vmem>>) attributes {dimension_semantics = [#tpu.dimension_semantics<parallel>, #tpu.dimension_semantics<parallel>, #tpu.dimension_semantics<arbitrary>], iteration_bounds = array<i64: 2, 1, 1>, scalar_prefetch = 0 : i64, scratch_operands = 0 : i64, tpu.core_type = #tpu.core_type<tc>, window_params = [{transform_indices = @transform_0, window_bounds = array<i64: 256, 128>}, {transform_indices = @transform_1, window_bounds = array<i64: 128, 64>}, {transform_indices = @transform_2, window_bounds = array<i64: 256, 64>}, {transform_indices = @transform_3, window_bounds = array<i64: 1, 8, 64>}]} {
    %c0 = arith.constant 0 : index
    %c0_0 = arith.constant 0 : index
    %0 = vector.load %arg3[%c0, %c0_0] : memref<256x128xbf16, #tpu.memory_space<vmem>>, vector<256x128xbf16>
    %c0_1 = arith.constant 0 : index
    %c0_2 = arith.constant 0 : index
    %1 = vector.load %arg4[%c0_1, %c0_2] : memref<128x64xbf16, #tpu.memory_space<vmem>>, vector<128x64xbf16>
    %cst = arith.constant dense<0.000000e+00> : vector<256x64xf32>
    %2 = tpu.matmul %0, %1, %cst {dimension_numbers = #tpu.dot_dimension_numbers<[1], [0], [0], [1], [0, 0, 1, 1], [], []>} : vector<256x128xbf16>, vector<128x64xbf16>, vector<256x64xf32> -> vector<256x64xf32>
    %3 = arith.truncf %2 : vector<256x64xf32> to vector<256x64xbf16>
    %c0_3 = arith.constant 0 : index
    %c0_4 = arith.constant 0 : index
    %4 = vector.load %arg5[%c0_3, %c0_4] : memref<256x64xbf16, #tpu.memory_space<vmem>>, vector<256x64xbf16>
    tpu.vector_store %arg5[%c0_3, %c0_4], %3 {strides = array<i32>} : memref<256x64xbf16, #tpu.memory_space<vmem>>, vector<256x64xbf16>,
    %5 = arith.extf %3 : vector<256x64xbf16> to vector<256x64xf32>
    %cst_5 = arith.constant dense<0.000000e+00> : vector<64xf32>
    %6 = vector.multi_reduction <add>, %5, %cst_5 [0] : vector<256x64xf32> to vector<64xf32>
    %7 = vector.shape_cast %6 : vector<64xf32> to vector<1x64xf32>
    %8 = arith.mulf %5, %5 : vector<256x64xf32>
    %cst_6 = arith.constant dense<0.000000e+00> : vector<64xf32>
    %9 = vector.multi_reduction <add>, %8, %cst_6 [0] : vector<256x64xf32> to vector<64xf32>
    %10 = vector.shape_cast %9 : vector<64xf32> to vector<1x64xf32>
    %11 = tpu.iota {dimensions = array<i32: 0>} : vector<8x64xi32>
    %c0_i32 = arith.constant 0 : i32
    %12 = vector.broadcast %c0_i32 : i32 to vector<8x64xi32>
    %13 = arith.cmpi eq, %11, %12 : vector<8x64xi32>
    %c1_i32 = arith.constant 1 : i32
    %14 = vector.broadcast %c1_i32 : i32 to vector<8x64xi32>
    %15 = arith.cmpi eq, %11, %14 : vector<8x64xi32>
    %cst_7 = arith.constant 0.000000e+00 : f32
    %16 = vector.shape_cast %10 : vector<1x64xf32> to vector<1x64xf32>
    %17 = vector.broadcast %16 : vector<1x64xf32> to vector<8x64xf32>
    %18 = vector.broadcast %cst_7 : f32 to vector<8x64xf32>
    %19 = arith.select %15, %17, %18 : vector<8x64xi1>, vector<8x64xf32>
    %20 = vector.shape_cast %7 : vector<1x64xf32> to vector<1x64xf32>
    %21 = vector.broadcast %20 : vector<1x64xf32> to vector<8x64xf32>
    %22 = arith.select %13, %21, %19 : vector<8x64xi1>, vector<8x64xf32>
    %c0_8 = arith.constant 0 : index
    %c0_9 = arith.constant 0 : index
    %c0_10 = arith.constant 0 : index
    %23 = vector.load %arg6[%c0_8, %c0_9, %c0_10] : memref<1x8x64xf32, #tpu.memory_space<vmem>>, vector<1x8x64xf32>
    %24 = vector.shape_cast %23 : vector<1x8x64xf32> to vector<8x64xf32>
    %25 = vector.shape_cast %22 : vector<8x64xf32> to vector<1x8x64xf32>
    tpu.vector_store %arg6[%c0_8, %c0_9, %c0_10], %25 {strides = array<i32>} : memref<1x8x64xf32, #tpu.memory_space<vmem>>, vector<1x8x64xf32>,
    return
  }
  func.func @transform_0(%arg0: i32, %arg1: i32, %arg2: i32) -> (i32, i32) {
    %c0_i32 = arith.constant 0 : i32
    return %arg0, %arg2 : i32, i32
  }
  func.func @transform_1(%arg0: i32, %arg1: i32, %arg2: i32) -> (i32, i32) {
    %c0_i32 = arith.constant 0 : i32
    return %arg2, %arg1 : i32, i32
  }
  func.func @transform_2(%arg0: i32, %arg1: i32, %arg2: i32) -> (i32, i32) {
    %c0_i32 = arith.constant 0 : i32
    return %arg0, %arg1 : i32, i32
  }
  func.func @transform_3(%arg0: i32, %arg1: i32, %arg2: i32) -> (i32, i32, i32) {
    %c0_i32 = arith.constant 0 : i32
    %c0_i32_0 = arith.constant 0 : i32
    %c0_i32_1 = arith.constant 0 : i32
    return %arg0, %c0_i32, %c0_i32_0 : i32, i32, i32
  }
}

module attributes {stable_mosaic.version = 11 : i64} {
  func.func @kernel(%arg0: i32, %arg1: i32, %arg2: i32, %arg3: memref<64x64xbf16, #tpu.memory_space<vmem>>, %arg4: memref<1x64xf32, #tpu.memory_space<vmem>>, %arg5: memref<1x64xf32, #tpu.memory_space<vmem>>, %arg6: memref<64x128xbf16, #tpu.memory_space<vmem>>, %arg7: memref<64x128xbf16, #tpu.memory_space<vmem>>, %arg8: memref<1x8x128xf32, #tpu.memory_space<vmem>>) attributes {dimension_semantics = [#tpu.dimension_semantics<parallel>, #tpu.dimension_semantics<parallel>, #tpu.dimension_semantics<arbitrary>], iteration_bounds = array<i64: 2, 1, 1>, scalar_prefetch = 0 : i64, scratch_operands = 0 : i64, tpu.core_type = #tpu.core_type<tc>, window_params = [{transform_indices = @transform_0, window_bounds = array<i64: 64, 64>}, {transform_indices = @transform_1, window_bounds = array<i64: 1, 64>}, {transform_indices = @transform_2, window_bounds = array<i64: 1, 64>}, {transform_indices = @transform_3, window_bounds = array<i64: 64, 128>}, {transform_indices = @transform_4, window_bounds = array<i64: 64, 128>}, {transform_indices = @transform_5, window_bounds = array<i64: 1, 8, 128>}]} {
    %c0 = arith.constant 0 : index
    %c0_0 = arith.constant 0 : index
    %0 = vector.load %arg3[%c0, %c0_0] : memref<64x64xbf16, #tpu.memory_space<vmem>>, vector<64x64xbf16>
    %1 = arith.extf %0 : vector<64x64xbf16> to vector<64x64xf32>
    %c0_1 = arith.constant 0 : index
    %c0_2 = arith.constant 0 : index
    %2 = vector.load %arg4[%c0_1, %c0_2] : memref<1x64xf32, #tpu.memory_space<vmem>>, vector<1x64xf32>
    %3 = vector.broadcast %2 : vector<1x64xf32> to vector<64x64xf32>
    %4 = arith.mulf %1, %3 : vector<64x64xf32>
    %c0_3 = arith.constant 0 : index
    %c0_4 = arith.constant 0 : index
    %5 = vector.load %arg5[%c0_3, %c0_4] : memref<1x64xf32, #tpu.memory_space<vmem>>, vector<1x64xf32>
    %6 = vector.broadcast %5 : vector<1x64xf32> to vector<64x64xf32>
    %7 = arith.addf %4, %6 : vector<64x64xf32>
    %cst = arith.constant 0.000000e+00 : f32
    %8 = vector.broadcast %cst : f32 to vector<64x64xf32>
    %9 = arith.maximumf %7, %8 : vector<64x64xf32>
    %10 = arith.truncf %9 : vector<64x64xf32> to vector<64x64xbf16>
    %c0_5 = arith.constant 0 : index
    %c0_6 = arith.constant 0 : index
    %11 = vector.load %arg6[%c0_5, %c0_6] : memref<64x128xbf16, #tpu.memory_space<vmem>>, vector<64x128xbf16>
    %cst_7 = arith.constant dense<0.000000e+00> : vector<64x128xf32>
    %12 = tpu.matmul %10, %11, %cst_7 {dimension_numbers = #tpu.dot_dimension_numbers<[1], [0], [0], [1], [0, 0, 1, 1], [], []>} : vector<64x64xbf16>, vector<64x128xbf16>, vector<64x128xf32> -> vector<64x128xf32>
    %13 = arith.truncf %12 : vector<64x128xf32> to vector<64x128xbf16>
    %c0_8 = arith.constant 0 : index
    %c0_9 = arith.constant 0 : index
    %14 = vector.load %arg7[%c0_8, %c0_9] : memref<64x128xbf16, #tpu.memory_space<vmem>>, vector<64x128xbf16>
    tpu.vector_store %arg7[%c0_8, %c0_9], %13 {strides = array<i32>} : memref<64x128xbf16, #tpu.memory_space<vmem>>, vector<64x128xbf16>,
    %15 = arith.extf %13 : vector<64x128xbf16> to vector<64x128xf32>
    %cst_10 = arith.constant dense<0.000000e+00> : vector<128xf32>
    %16 = vector.multi_reduction <add>, %15, %cst_10 [0] : vector<64x128xf32> to vector<128xf32>
    %17 = vector.shape_cast %16 : vector<128xf32> to vector<1x128xf32>
    %18 = arith.mulf %15, %15 : vector<64x128xf32>
    %cst_11 = arith.constant dense<0.000000e+00> : vector<128xf32>
    %19 = vector.multi_reduction <add>, %18, %cst_11 [0] : vector<64x128xf32> to vector<128xf32>
    %20 = vector.shape_cast %19 : vector<128xf32> to vector<1x128xf32>
    %21 = tpu.iota {dimensions = array<i32: 0>} : vector<8x128xi32>
    %c0_i32 = arith.constant 0 : i32
    %22 = vector.broadcast %c0_i32 : i32 to vector<8x128xi32>
    %23 = arith.cmpi eq, %21, %22 : vector<8x128xi32>
    %c1_i32 = arith.constant 1 : i32
    %24 = vector.broadcast %c1_i32 : i32 to vector<8x128xi32>
    %25 = arith.cmpi eq, %21, %24 : vector<8x128xi32>
    %cst_12 = arith.constant 0.000000e+00 : f32
    %26 = vector.shape_cast %20 : vector<1x128xf32> to vector<1x128xf32>
    %27 = vector.broadcast %26 : vector<1x128xf32> to vector<8x128xf32>
    %28 = vector.broadcast %cst_12 : f32 to vector<8x128xf32>
    %29 = arith.select %25, %27, %28 : vector<8x128xi1>, vector<8x128xf32>
    %30 = vector.shape_cast %17 : vector<1x128xf32> to vector<1x128xf32>
    %31 = vector.broadcast %30 : vector<1x128xf32> to vector<8x128xf32>
    %32 = arith.select %23, %31, %29 : vector<8x128xi1>, vector<8x128xf32>
    %c0_13 = arith.constant 0 : index
    %c0_14 = arith.constant 0 : index
    %c0_15 = arith.constant 0 : index
    %33 = vector.load %arg8[%c0_13, %c0_14, %c0_15] : memref<1x8x128xf32, #tpu.memory_space<vmem>>, vector<1x8x128xf32>
    %34 = vector.shape_cast %33 : vector<1x8x128xf32> to vector<8x128xf32>
    %35 = vector.shape_cast %32 : vector<8x128xf32> to vector<1x8x128xf32>
    tpu.vector_store %arg8[%c0_13, %c0_14, %c0_15], %35 {strides = array<i32>} : memref<1x8x128xf32, #tpu.memory_space<vmem>>, vector<1x8x128xf32>,
    return
  }
  func.func @transform_0(%arg0: i32, %arg1: i32, %arg2: i32) -> (i32, i32) {
    %c0_i32 = arith.constant 0 : i32
    return %arg0, %arg2 : i32, i32
  }
  func.func @transform_1(%arg0: i32, %arg1: i32, %arg2: i32) -> (i32, i32) {
    %c0_i32 = arith.constant 0 : i32
    %c0_i32_0 = arith.constant 0 : i32
    return %c0_i32, %arg2 : i32, i32
  }
  func.func @transform_2(%arg0: i32, %arg1: i32, %arg2: i32) -> (i32, i32) {
    %c0_i32 = arith.constant 0 : i32
    %c0_i32_0 = arith.constant 0 : i32
    return %c0_i32, %arg2 : i32, i32
  }
  func.func @transform_3(%arg0: i32, %arg1: i32, %arg2: i32) -> (i32, i32) {
    %c0_i32 = arith.constant 0 : i32
    return %arg2, %arg1 : i32, i32
  }
  func.func @transform_4(%arg0: i32, %arg1: i32, %arg2: i32) -> (i32, i32) {
    %c0_i32 = arith.constant 0 : i32
    return %arg0, %arg1 : i32, i32
  }
  func.func @transform_5(%arg0: i32, %arg1: i32, %arg2: i32) -> (i32, i32, i32) {
    %c0_i32 = arith.constant 0 : i32
    %c0_i32_0 = arith.constant 0 : i32
    %c0_i32_1 = arith.constant 0 : i32
    return %arg0, %c0_i32, %c0_i32_0 : i32, i32, i32
  }
}

module attributes {stable_mosaic.version = 11 : i64} {
  func.func @kernel(%arg0: i32, %arg1: i32, %arg2: i32, %arg3: memref<64x1152xbf16, #tpu.memory_space<vmem>>, %arg4: memref<64x64xbf16, #tpu.memory_space<vmem>>, %arg5: memref<1152x32xbf16, #tpu.memory_space<vmem>>, %arg6: memref<64x96xbf16, #tpu.memory_space<vmem>>, %arg7: memref<1x8x32xf32, #tpu.memory_space<vmem>>) attributes {dimension_semantics = [#tpu.dimension_semantics<parallel>, #tpu.dimension_semantics<parallel>, #tpu.dimension_semantics<arbitrary>], iteration_bounds = array<i64: 2, 1, 1>, scalar_prefetch = 0 : i64, scratch_operands = 0 : i64, tpu.core_type = #tpu.core_type<tc>, window_params = [{transform_indices = @transform_0, window_bounds = array<i64: 64, 1152>}, {transform_indices = @transform_1, window_bounds = array<i64: 64, 64>}, {transform_indices = @transform_2, window_bounds = array<i64: 1152, 32>}, {transform_indices = @transform_3, window_bounds = array<i64: 64, 96>}, {transform_indices = @transform_4, window_bounds = array<i64: 1, 8, 32>}]} {
    %c0 = arith.constant 0 : index
    %c0_0 = arith.constant 0 : index
    %0 = vector.load %arg3[%c0, %c0_0] : memref<64x1152xbf16, #tpu.memory_space<vmem>>, vector<64x1152xbf16>
    %c0_1 = arith.constant 0 : index
    %c0_2 = arith.constant 0 : index
    %1 = vector.load %arg5[%c0_1, %c0_2] : memref<1152x32xbf16, #tpu.memory_space<vmem>>, vector<1152x32xbf16>
    %cst = arith.constant dense<0.000000e+00> : vector<64x32xf32>
    %2 = tpu.matmul %0, %1, %cst {dimension_numbers = #tpu.dot_dimension_numbers<[1], [0], [0], [1], [0, 0, 1, 1], [], []>} : vector<64x1152xbf16>, vector<1152x32xbf16>, vector<64x32xf32> -> vector<64x32xf32>
    %3 = arith.truncf %2 : vector<64x32xf32> to vector<64x32xbf16>
    %c0_3 = arith.constant 0 : index
    %c0_4 = arith.constant 0 : index
    %4 = vector.load %arg4[%c0_3, %c0_4] : memref<64x64xbf16, #tpu.memory_space<vmem>>, vector<64x64xbf16>
    %5 = tpu.concatenate %4, %3 in 1 : vector<64x64xbf16>, vector<64x32xbf16> -> vector<64x96xbf16>
    %c0_5 = arith.constant 0 : index
    %c0_6 = arith.constant 0 : index
    %6 = vector.load %arg6[%c0_5, %c0_6] : memref<64x96xbf16, #tpu.memory_space<vmem>>, vector<64x96xbf16>
    tpu.vector_store %arg6[%c0_5, %c0_6], %5 {strides = array<i32>} : memref<64x96xbf16, #tpu.memory_space<vmem>>, vector<64x96xbf16>,
    %7 = arith.extf %3 : vector<64x32xbf16> to vector<64x32xf32>
    %cst_7 = arith.constant dense<0.000000e+00> : vector<32xf32>
    %8 = vector.multi_reduction <add>, %7, %cst_7 [0] : vector<64x32xf32> to vector<32xf32>
    %9 = vector.shape_cast %8 : vector<32xf32> to vector<1x32xf32>
    %10 = arith.mulf %7, %7 : vector<64x32xf32>
    %cst_8 = arith.constant dense<0.000000e+00> : vector<32xf32>
    %11 = vector.multi_reduction <add>, %10, %cst_8 [0] : vector<64x32xf32> to vector<32xf32>
    %12 = vector.shape_cast %11 : vector<32xf32> to vector<1x32xf32>
    %13 = tpu.iota {dimensions = array<i32: 0>} : vector<8x32xi32>
    %c0_i32 = arith.constant 0 : i32
    %14 = vector.broadcast %c0_i32 : i32 to vector<8x32xi32>
    %15 = arith.cmpi eq, %13, %14 : vector<8x32xi32>
    %c1_i32 = arith.constant 1 : i32
    %16 = vector.broadcast %c1_i32 : i32 to vector<8x32xi32>
    %17 = arith.cmpi eq, %13, %16 : vector<8x32xi32>
    %cst_9 = arith.constant 0.000000e+00 : f32
    %18 = vector.shape_cast %12 : vector<1x32xf32> to vector<1x32xf32>
    %19 = vector.broadcast %18 : vector<1x32xf32> to vector<8x32xf32>
    %20 = vector.broadcast %cst_9 : f32 to vector<8x32xf32>
    %21 = arith.select %17, %19, %20 : vector<8x32xi1>, vector<8x32xf32>
    %22 = vector.shape_cast %9 : vector<1x32xf32> to vector<1x32xf32>
    %23 = vector.broadcast %22 : vector<1x32xf32> to vector<8x32xf32>
    %24 = arith.select %15, %23, %21 : vector<8x32xi1>, vector<8x32xf32>
    %c0_10 = arith.constant 0 : index
    %c0_11 = arith.constant 0 : index
    %c0_12 = arith.constant 0 : index
    %25 = vector.load %arg7[%c0_10, %c0_11, %c0_12] : memref<1x8x32xf32, #tpu.memory_space<vmem>>, vector<1x8x32xf32>
    %26 = vector.shape_cast %25 : vector<1x8x32xf32> to vector<8x32xf32>
    %27 = vector.shape_cast %24 : vector<8x32xf32> to vector<1x8x32xf32>
    tpu.vector_store %arg7[%c0_10, %c0_11, %c0_12], %27 {strides = array<i32>} : memref<1x8x32xf32, #tpu.memory_space<vmem>>, vector<1x8x32xf32>,
    return
  }
  func.func @transform_0(%arg0: i32, %arg1: i32, %arg2: i32) -> (i32, i32) {
    %c0_i32 = arith.constant 0 : i32
    return %arg0, %arg2 : i32, i32
  }
  func.func @transform_1(%arg0: i32, %arg1: i32, %arg2: i32) -> (i32, i32) {
    %c0_i32 = arith.constant 0 : i32
    %c0_i32_0 = arith.constant 0 : i32
    return %arg0, %c0_i32 : i32, i32
  }
  func.func @transform_2(%arg0: i32, %arg1: i32, %arg2: i32) -> (i32, i32) {
    %c0_i32 = arith.constant 0 : i32
    return %arg2, %arg1 : i32, i32
  }
  func.func @transform_3(%arg0: i32, %arg1: i32, %arg2: i32) -> (i32, i32) {
    %c0_i32 = arith.constant 0 : i32
    %c0_i32_0 = arith.constant 0 : i32
    return %arg0, %c0_i32 : i32, i32
  }
  func.func @transform_4(%arg0: i32, %arg1: i32, %arg2: i32) -> (i32, i32, i32) {
    %c0_i32 = arith.constant 0 : i32
    %c0_i32_0 = arith.constant 0 : i32
    %c0_i32_1 = arith.constant 0 : i32
    return %arg0, %c0_i32, %c0_i32_0 : i32, i32, i32
  }
}

module attributes {stable_mosaic.version = 11 : i64} {
  func.func @kernel(%arg0: i32, %arg1: i32, %arg2: i32, %arg3: memref<64x96xbf16, #tpu.memory_space<vmem>>, %arg4: memref<1x96xf32, #tpu.memory_space<vmem>>, %arg5: memref<1x96xf32, #tpu.memory_space<vmem>>, %arg6: memref<96x48xbf16, #tpu.memory_space<vmem>>, %arg7: memref<64x48xbf16, #tpu.memory_space<vmem>>) attributes {dimension_semantics = [#tpu.dimension_semantics<parallel>, #tpu.dimension_semantics<parallel>, #tpu.dimension_semantics<arbitrary>], iteration_bounds = array<i64: 2, 1, 1>, scalar_prefetch = 0 : i64, scratch_operands = 0 : i64, tpu.core_type = #tpu.core_type<tc>, window_params = [{transform_indices = @transform_0, window_bounds = array<i64: 64, 96>}, {transform_indices = @transform_1, window_bounds = array<i64: 1, 96>}, {transform_indices = @transform_2, window_bounds = array<i64: 1, 96>}, {transform_indices = @transform_3, window_bounds = array<i64: 96, 48>}, {transform_indices = @transform_4, window_bounds = array<i64: 64, 48>}]} {
    %c0 = arith.constant 0 : index
    %c0_0 = arith.constant 0 : index
    %0 = vector.load %arg3[%c0, %c0_0] : memref<64x96xbf16, #tpu.memory_space<vmem>>, vector<64x96xbf16>
    %1 = arith.extf %0 : vector<64x96xbf16> to vector<64x96xf32>
    %c0_1 = arith.constant 0 : index
    %c0_2 = arith.constant 0 : index
    %2 = vector.load %arg4[%c0_1, %c0_2] : memref<1x96xf32, #tpu.memory_space<vmem>>, vector<1x96xf32>
    %3 = vector.broadcast %2 : vector<1x96xf32> to vector<64x96xf32>
    %4 = arith.mulf %1, %3 : vector<64x96xf32>
    %c0_3 = arith.constant 0 : index
    %c0_4 = arith.constant 0 : index
    %5 = vector.load %arg5[%c0_3, %c0_4] : memref<1x96xf32, #tpu.memory_space<vmem>>, vector<1x96xf32>
    %6 = vector.broadcast %5 : vector<1x96xf32> to vector<64x96xf32>
    %7 = arith.addf %4, %6 : vector<64x96xf32>
    %cst = arith.constant 0.000000e+00 : f32
    %8 = vector.broadcast %cst : f32 to vector<64x96xf32>
    %9 = arith.maximumf %7, %8 : vector<64x96xf32>
    %10 = arith.truncf %9 : vector<64x96xf32> to vector<64x96xbf16>
    %c0_5 = arith.constant 0 : index
    %c0_6 = arith.constant 0 : index
    %11 = vector.load %arg6[%c0_5, %c0_6] : memref<96x48xbf16, #tpu.memory_space<vmem>>, vector<96x48xbf16>
    %cst_7 = arith.constant dense<0.000000e+00> : vector<64x48xf32>
    %12 = tpu.matmul %10, %11, %cst_7 {dimension_numbers = #tpu.dot_dimension_numbers<[1], [0], [0], [1], [0, 0, 1, 1], [], []>} : vector<64x96xbf16>, vector<96x48xbf16>, vector<64x48xf32> -> vector<64x48xf32>
    %13 = arith.truncf %12 : vector<64x48xf32> to vector<64x48xbf16>
    %c0_8 = arith.constant 0 : index
    %c0_9 = arith.constant 0 : index
    %14 = vector.load %arg7[%c0_8, %c0_9] : memref<64x48xbf16, #tpu.memory_space<vmem>>, vector<64x48xbf16>
    tpu.vector_store %arg7[%c0_8, %c0_9], %13 {strides = array<i32>} : memref<64x48xbf16, #tpu.memory_space<vmem>>, vector<64x48xbf16>,
    return
  }
  func.func @transform_0(%arg0: i32, %arg1: i32, %arg2: i32) -> (i32, i32) {
    %c0_i32 = arith.constant 0 : i32
    return %arg0, %arg2 : i32, i32
  }
  func.func @transform_1(%arg0: i32, %arg1: i32, %arg2: i32) -> (i32, i32) {
    %c0_i32 = arith.constant 0 : i32
    %c0_i32_0 = arith.constant 0 : i32
    return %c0_i32, %arg2 : i32, i32
  }
  func.func @transform_2(%arg0: i32, %arg1: i32, %arg2: i32) -> (i32, i32) {
    %c0_i32 = arith.constant 0 : i32
    %c0_i32_0 = arith.constant 0 : i32
    return %c0_i32, %arg2 : i32, i32
  }
  func.func @transform_3(%arg0: i32, %arg1: i32, %arg2: i32) -> (i32, i32) {
    %c0_i32 = arith.constant 0 : i32
    return %arg2, %arg1 : i32, i32
  }
  func.func @transform_4(%arg0: i32, %arg1: i32, %arg2: i32) -> (i32, i32) {
    %c0_i32 = arith.constant 0 : i32
    return %arg0, %arg1 : i32, i32
  }
}

module attributes {stable_mosaic.version = 11 : i64} {
  func.func @kernel(%arg0: i32, %arg1: i32, %arg2: i32, %arg3: memref<16x48xbf16, #tpu.memory_space<vmem>>, %arg4: memref<1x48xf32, #tpu.memory_space<vmem>>, %arg5: memref<1x48xf32, #tpu.memory_space<vmem>>, %arg6: memref<48x128xbf16, #tpu.memory_space<vmem>>, %arg7: memref<16x128xbf16, #tpu.memory_space<vmem>>, %arg8: memref<1x8x128xf32, #tpu.memory_space<vmem>>) attributes {dimension_semantics = [#tpu.dimension_semantics<parallel>, #tpu.dimension_semantics<parallel>, #tpu.dimension_semantics<arbitrary>], iteration_bounds = array<i64: 2, 1, 1>, scalar_prefetch = 0 : i64, scratch_operands = 0 : i64, tpu.core_type = #tpu.core_type<tc>, window_params = [{transform_indices = @transform_0, window_bounds = array<i64: 16, 48>}, {transform_indices = @transform_1, window_bounds = array<i64: 1, 48>}, {transform_indices = @transform_2, window_bounds = array<i64: 1, 48>}, {transform_indices = @transform_3, window_bounds = array<i64: 48, 128>}, {transform_indices = @transform_4, window_bounds = array<i64: 16, 128>}, {transform_indices = @transform_5, window_bounds = array<i64: 1, 8, 128>}]} {
    %c0 = arith.constant 0 : index
    %c0_0 = arith.constant 0 : index
    %0 = vector.load %arg3[%c0, %c0_0] : memref<16x48xbf16, #tpu.memory_space<vmem>>, vector<16x48xbf16>
    %1 = arith.extf %0 : vector<16x48xbf16> to vector<16x48xf32>
    %c0_1 = arith.constant 0 : index
    %c0_2 = arith.constant 0 : index
    %2 = vector.load %arg4[%c0_1, %c0_2] : memref<1x48xf32, #tpu.memory_space<vmem>>, vector<1x48xf32>
    %3 = vector.broadcast %2 : vector<1x48xf32> to vector<16x48xf32>
    %4 = arith.mulf %1, %3 : vector<16x48xf32>
    %c0_3 = arith.constant 0 : index
    %c0_4 = arith.constant 0 : index
    %5 = vector.load %arg5[%c0_3, %c0_4] : memref<1x48xf32, #tpu.memory_space<vmem>>, vector<1x48xf32>
    %6 = vector.broadcast %5 : vector<1x48xf32> to vector<16x48xf32>
    %7 = arith.addf %4, %6 : vector<16x48xf32>
    %cst = arith.constant 0.000000e+00 : f32
    %8 = vector.broadcast %cst : f32 to vector<16x48xf32>
    %9 = arith.maximumf %7, %8 : vector<16x48xf32>
    %10 = arith.truncf %9 : vector<16x48xf32> to vector<16x48xbf16>
    %c0_5 = arith.constant 0 : index
    %c0_6 = arith.constant 0 : index
    %11 = vector.load %arg6[%c0_5, %c0_6] : memref<48x128xbf16, #tpu.memory_space<vmem>>, vector<48x128xbf16>
    %cst_7 = arith.constant dense<0.000000e+00> : vector<16x128xf32>
    %12 = tpu.matmul %10, %11, %cst_7 {dimension_numbers = #tpu.dot_dimension_numbers<[1], [0], [0], [1], [0, 0, 1, 1], [], []>} : vector<16x48xbf16>, vector<48x128xbf16>, vector<16x128xf32> -> vector<16x128xf32>
    %13 = arith.truncf %12 : vector<16x128xf32> to vector<16x128xbf16>
    %c0_8 = arith.constant 0 : index
    %c0_9 = arith.constant 0 : index
    %14 = vector.load %arg7[%c0_8, %c0_9] : memref<16x128xbf16, #tpu.memory_space<vmem>>, vector<16x128xbf16>
    tpu.vector_store %arg7[%c0_8, %c0_9], %13 {strides = array<i32>} : memref<16x128xbf16, #tpu.memory_space<vmem>>, vector<16x128xbf16>,
    %15 = arith.extf %13 : vector<16x128xbf16> to vector<16x128xf32>
    %cst_10 = arith.constant dense<0.000000e+00> : vector<128xf32>
    %16 = vector.multi_reduction <add>, %15, %cst_10 [0] : vector<16x128xf32> to vector<128xf32>
    %17 = vector.shape_cast %16 : vector<128xf32> to vector<1x128xf32>
    %18 = arith.mulf %15, %15 : vector<16x128xf32>
    %cst_11 = arith.constant dense<0.000000e+00> : vector<128xf32>
    %19 = vector.multi_reduction <add>, %18, %cst_11 [0] : vector<16x128xf32> to vector<128xf32>
    %20 = vector.shape_cast %19 : vector<128xf32> to vector<1x128xf32>
    %21 = tpu.iota {dimensions = array<i32: 0>} : vector<8x128xi32>
    %c0_i32 = arith.constant 0 : i32
    %22 = vector.broadcast %c0_i32 : i32 to vector<8x128xi32>
    %23 = arith.cmpi eq, %21, %22 : vector<8x128xi32>
    %c1_i32 = arith.constant 1 : i32
    %24 = vector.broadcast %c1_i32 : i32 to vector<8x128xi32>
    %25 = arith.cmpi eq, %21, %24 : vector<8x128xi32>
    %cst_12 = arith.constant 0.000000e+00 : f32
    %26 = vector.shape_cast %20 : vector<1x128xf32> to vector<1x128xf32>
    %27 = vector.broadcast %26 : vector<1x128xf32> to vector<8x128xf32>
    %28 = vector.broadcast %cst_12 : f32 to vector<8x128xf32>
    %29 = arith.select %25, %27, %28 : vector<8x128xi1>, vector<8x128xf32>
    %30 = vector.shape_cast %17 : vector<1x128xf32> to vector<1x128xf32>
    %31 = vector.broadcast %30 : vector<1x128xf32> to vector<8x128xf32>
    %32 = arith.select %23, %31, %29 : vector<8x128xi1>, vector<8x128xf32>
    %c0_13 = arith.constant 0 : index
    %c0_14 = arith.constant 0 : index
    %c0_15 = arith.constant 0 : index
    %33 = vector.load %arg8[%c0_13, %c0_14, %c0_15] : memref<1x8x128xf32, #tpu.memory_space<vmem>>, vector<1x8x128xf32>
    %34 = vector.shape_cast %33 : vector<1x8x128xf32> to vector<8x128xf32>
    %35 = vector.shape_cast %32 : vector<8x128xf32> to vector<1x8x128xf32>
    tpu.vector_store %arg8[%c0_13, %c0_14, %c0_15], %35 {strides = array<i32>} : memref<1x8x128xf32, #tpu.memory_space<vmem>>, vector<1x8x128xf32>,
    return
  }
  func.func @transform_0(%arg0: i32, %arg1: i32, %arg2: i32) -> (i32, i32) {
    %c0_i32 = arith.constant 0 : i32
    return %arg0, %arg2 : i32, i32
  }
  func.func @transform_1(%arg0: i32, %arg1: i32, %arg2: i32) -> (i32, i32) {
    %c0_i32 = arith.constant 0 : i32
    %c0_i32_0 = arith.constant 0 : i32
    return %c0_i32, %arg2 : i32, i32
  }
  func.func @transform_2(%arg0: i32, %arg1: i32, %arg2: i32) -> (i32, i32) {
    %c0_i32 = arith.constant 0 : i32
    %c0_i32_0 = arith.constant 0 : i32
    return %c0_i32, %arg2 : i32, i32
  }
  func.func @transform_3(%arg0: i32, %arg1: i32, %arg2: i32) -> (i32, i32) {
    %c0_i32 = arith.constant 0 : i32
    return %arg2, %arg1 : i32, i32
  }
  func.func @transform_4(%arg0: i32, %arg1: i32, %arg2: i32) -> (i32, i32) {
    %c0_i32 = arith.constant 0 : i32
    return %arg0, %arg1 : i32, i32
  }
  func.func @transform_5(%arg0: i32, %arg1: i32, %arg2: i32) -> (i32, i32, i32) {
    %c0_i32 = arith.constant 0 : i32
    %c0_i32_0 = arith.constant 0 : i32
    %c0_i32_1 = arith.constant 0 : i32
    return %arg0, %c0_i32, %c0_i32_0 : i32, i32, i32
  }
}

module attributes {stable_mosaic.version = 11 : i64} {
  func.func @kernel(%arg0: i32, %arg1: i32, %arg2: i32, %arg3: memref<16x1152xbf16, #tpu.memory_space<vmem>>, %arg4: memref<16x48xbf16, #tpu.memory_space<vmem>>, %arg5: memref<1152x32xbf16, #tpu.memory_space<vmem>>, %arg6: memref<16x80xbf16, #tpu.memory_space<vmem>>, %arg7: memref<1x8x32xf32, #tpu.memory_space<vmem>>) attributes {dimension_semantics = [#tpu.dimension_semantics<parallel>, #tpu.dimension_semantics<parallel>, #tpu.dimension_semantics<arbitrary>], iteration_bounds = array<i64: 2, 1, 1>, scalar_prefetch = 0 : i64, scratch_operands = 0 : i64, tpu.core_type = #tpu.core_type<tc>, window_params = [{transform_indices = @transform_0, window_bounds = array<i64: 16, 1152>}, {transform_indices = @transform_1, window_bounds = array<i64: 16, 48>}, {transform_indices = @transform_2, window_bounds = array<i64: 1152, 32>}, {transform_indices = @transform_3, window_bounds = array<i64: 16, 80>}, {transform_indices = @transform_4, window_bounds = array<i64: 1, 8, 32>}]} {
    %c0 = arith.constant 0 : index
    %c0_0 = arith.constant 0 : index
    %0 = vector.load %arg3[%c0, %c0_0] : memref<16x1152xbf16, #tpu.memory_space<vmem>>, vector<16x1152xbf16>
    %c0_1 = arith.constant 0 : index
    %c0_2 = arith.constant 0 : index
    %1 = vector.load %arg5[%c0_1, %c0_2] : memref<1152x32xbf16, #tpu.memory_space<vmem>>, vector<1152x32xbf16>
    %cst = arith.constant dense<0.000000e+00> : vector<16x32xf32>
    %2 = tpu.matmul %0, %1, %cst {dimension_numbers = #tpu.dot_dimension_numbers<[1], [0], [0], [1], [0, 0, 1, 1], [], []>} : vector<16x1152xbf16>, vector<1152x32xbf16>, vector<16x32xf32> -> vector<16x32xf32>
    %3 = arith.truncf %2 : vector<16x32xf32> to vector<16x32xbf16>
    %c0_3 = arith.constant 0 : index
    %c0_4 = arith.constant 0 : index
    %4 = vector.load %arg4[%c0_3, %c0_4] : memref<16x48xbf16, #tpu.memory_space<vmem>>, vector<16x48xbf16>
    %5 = tpu.concatenate %4, %3 in 1 : vector<16x48xbf16>, vector<16x32xbf16> -> vector<16x80xbf16>
    %c0_5 = arith.constant 0 : index
    %c0_6 = arith.constant 0 : index
    %6 = vector.load %arg6[%c0_5, %c0_6] : memref<16x80xbf16, #tpu.memory_space<vmem>>, vector<16x80xbf16>
    tpu.vector_store %arg6[%c0_5, %c0_6], %5 {strides = array<i32>} : memref<16x80xbf16, #tpu.memory_space<vmem>>, vector<16x80xbf16>,
    %7 = arith.extf %3 : vector<16x32xbf16> to vector<16x32xf32>
    %cst_7 = arith.constant dense<0.000000e+00> : vector<32xf32>
    %8 = vector.multi_reduction <add>, %7, %cst_7 [0] : vector<16x32xf32> to vector<32xf32>
    %9 = vector.shape_cast %8 : vector<32xf32> to vector<1x32xf32>
    %10 = arith.mulf %7, %7 : vector<16x32xf32>
    %cst_8 = arith.constant dense<0.000000e+00> : vector<32xf32>
    %11 = vector.multi_reduction <add>, %10, %cst_8 [0] : vector<16x32xf32> to vector<32xf32>
    %12 = vector.shape_cast %11 : vector<32xf32> to vector<1x32xf32>
    %13 = tpu.iota {dimensions = array<i32: 0>} : vector<8x32xi32>
    %c0_i32 = arith.constant 0 : i32
    %14 = vector.broadcast %c0_i32 : i32 to vector<8x32xi32>
    %15 = arith.cmpi eq, %13, %14 : vector<8x32xi32>
    %c1_i32 = arith.constant 1 : i32
    %16 = vector.broadcast %c1_i32 : i32 to vector<8x32xi32>
    %17 = arith.cmpi eq, %13, %16 : vector<8x32xi32>
    %cst_9 = arith.constant 0.000000e+00 : f32
    %18 = vector.shape_cast %12 : vector<1x32xf32> to vector<1x32xf32>
    %19 = vector.broadcast %18 : vector<1x32xf32> to vector<8x32xf32>
    %20 = vector.broadcast %cst_9 : f32 to vector<8x32xf32>
    %21 = arith.select %17, %19, %20 : vector<8x32xi1>, vector<8x32xf32>
    %22 = vector.shape_cast %9 : vector<1x32xf32> to vector<1x32xf32>
    %23 = vector.broadcast %22 : vector<1x32xf32> to vector<8x32xf32>
    %24 = arith.select %15, %23, %21 : vector<8x32xi1>, vector<8x32xf32>
    %c0_10 = arith.constant 0 : index
    %c0_11 = arith.constant 0 : index
    %c0_12 = arith.constant 0 : index
    %25 = vector.load %arg7[%c0_10, %c0_11, %c0_12] : memref<1x8x32xf32, #tpu.memory_space<vmem>>, vector<1x8x32xf32>
    %26 = vector.shape_cast %25 : vector<1x8x32xf32> to vector<8x32xf32>
    %27 = vector.shape_cast %24 : vector<8x32xf32> to vector<1x8x32xf32>
    tpu.vector_store %arg7[%c0_10, %c0_11, %c0_12], %27 {strides = array<i32>} : memref<1x8x32xf32, #tpu.memory_space<vmem>>, vector<1x8x32xf32>,
    return
  }
  func.func @transform_0(%arg0: i32, %arg1: i32, %arg2: i32) -> (i32, i32) {
    %c0_i32 = arith.constant 0 : i32
    return %arg0, %arg2 : i32, i32
  }
  func.func @transform_1(%arg0: i32, %arg1: i32, %arg2: i32) -> (i32, i32) {
    %c0_i32 = arith.constant 0 : i32
    %c0_i32_0 = arith.constant 0 : i32
    return %arg0, %c0_i32 : i32, i32
  }
  func.func @transform_2(%arg0: i32, %arg1: i32, %arg2: i32) -> (i32, i32) {
    %c0_i32 = arith.constant 0 : i32
    return %arg2, %arg1 : i32, i32
  }
  func.func @transform_3(%arg0: i32, %arg1: i32, %arg2: i32) -> (i32, i32) {
    %c0_i32 = arith.constant 0 : i32
    %c0_i32_0 = arith.constant 0 : i32
    return %arg0, %c0_i32 : i32, i32
  }
  func.func @transform_4(%arg0: i32, %arg1: i32, %arg2: i32) -> (i32, i32, i32) {
    %c0_i32 = arith.constant 0 : i32
    %c0_i32_0 = arith.constant 0 : i32
    %c0_i32_1 = arith.constant 0 : i32
    return %arg0, %c0_i32, %c0_i32_0 : i32, i32, i32
  }
}

module attributes {stable_mosaic.version = 11 : i64} {
  func.func @kernel(%arg0: i32, %arg1: i32, %arg2: i32, %arg3: memref<16x80xbf16, #tpu.memory_space<vmem>>, %arg4: memref<1x80xf32, #tpu.memory_space<vmem>>, %arg5: memref<1x80xf32, #tpu.memory_space<vmem>>, %arg6: memref<80x40xbf16, #tpu.memory_space<vmem>>, %arg7: memref<16x40xbf16, #tpu.memory_space<vmem>>) attributes {dimension_semantics = [#tpu.dimension_semantics<parallel>, #tpu.dimension_semantics<parallel>, #tpu.dimension_semantics<arbitrary>], iteration_bounds = array<i64: 2, 1, 1>, scalar_prefetch = 0 : i64, scratch_operands = 0 : i64, tpu.core_type = #tpu.core_type<tc>, window_params = [{transform_indices = @transform_0, window_bounds = array<i64: 16, 80>}, {transform_indices = @transform_1, window_bounds = array<i64: 1, 80>}, {transform_indices = @transform_2, window_bounds = array<i64: 1, 80>}, {transform_indices = @transform_3, window_bounds = array<i64: 80, 40>}, {transform_indices = @transform_4, window_bounds = array<i64: 16, 40>}]} {
    %c0 = arith.constant 0 : index
    %c0_0 = arith.constant 0 : index
    %0 = vector.load %arg3[%c0, %c0_0] : memref<16x80xbf16, #tpu.memory_space<vmem>>, vector<16x80xbf16>
    %1 = arith.extf %0 : vector<16x80xbf16> to vector<16x80xf32>
    %c0_1 = arith.constant 0 : index
    %c0_2 = arith.constant 0 : index
    %2 = vector.load %arg4[%c0_1, %c0_2] : memref<1x80xf32, #tpu.memory_space<vmem>>, vector<1x80xf32>
    %3 = vector.broadcast %2 : vector<1x80xf32> to vector<16x80xf32>
    %4 = arith.mulf %1, %3 : vector<16x80xf32>
    %c0_3 = arith.constant 0 : index
    %c0_4 = arith.constant 0 : index
    %5 = vector.load %arg5[%c0_3, %c0_4] : memref<1x80xf32, #tpu.memory_space<vmem>>, vector<1x80xf32>
    %6 = vector.broadcast %5 : vector<1x80xf32> to vector<16x80xf32>
    %7 = arith.addf %4, %6 : vector<16x80xf32>
    %cst = arith.constant 0.000000e+00 : f32
    %8 = vector.broadcast %cst : f32 to vector<16x80xf32>
    %9 = arith.maximumf %7, %8 : vector<16x80xf32>
    %10 = arith.truncf %9 : vector<16x80xf32> to vector<16x80xbf16>
    %c0_5 = arith.constant 0 : index
    %c0_6 = arith.constant 0 : index
    %11 = vector.load %arg6[%c0_5, %c0_6] : memref<80x40xbf16, #tpu.memory_space<vmem>>, vector<80x40xbf16>
    %cst_7 = arith.constant dense<0.000000e+00> : vector<16x40xf32>
    %12 = tpu.matmul %10, %11, %cst_7 {dimension_numbers = #tpu.dot_dimension_numbers<[1], [0], [0], [1], [0, 0, 1, 1], [], []>} : vector<16x80xbf16>, vector<80x40xbf16>, vector<16x40xf32> -> vector<16x40xf32>
    %13 = arith.truncf %12 : vector<16x40xf32> to vector<16x40xbf16>
    %c0_8 = arith.constant 0 : index
    %c0_9 = arith.constant 0 : index
    %14 = vector.load %arg7[%c0_8, %c0_9] : memref<16x40xbf16, #tpu.memory_space<vmem>>, vector<16x40xbf16>
    tpu.vector_store %arg7[%c0_8, %c0_9], %13 {strides = array<i32>} : memref<16x40xbf16, #tpu.memory_space<vmem>>, vector<16x40xbf16>,
    return
  }
  func.func @transform_0(%arg0: i32, %arg1: i32, %arg2: i32) -> (i32, i32) {
    %c0_i32 = arith.constant 0 : i32
    return %arg0, %arg2 : i32, i32
  }
  func.func @transform_1(%arg0: i32, %arg1: i32, %arg2: i32) -> (i32, i32) {
    %c0_i32 = arith.constant 0 : i32
    %c0_i32_0 = arith.constant 0 : i32
    return %c0_i32, %arg2 : i32, i32
  }
  func.func @transform_2(%arg0: i32, %arg1: i32, %arg2: i32) -> (i32, i32) {
    %c0_i32 = arith.constant 0 : i32
    %c0_i32_0 = arith.constant 0 : i32
    return %c0_i32, %arg2 : i32, i32
  }
  func.func @transform_3(%arg0: i32, %arg1: i32, %arg2: i32) -> (i32, i32) {
    %c0_i32 = arith.constant 0 : i32
    return %arg2, %arg1 : i32, i32
  }
  func.func @transform_4(%arg0: i32, %arg1: i32, %arg2: i32) -> (i32, i32) {
    %c0_i32 = arith.constant 0 : i32
    return %arg0, %arg1 : i32, i32
  }
}

module attributes {stable_mosaic.version = 11 : i64} {
  func.func @kernel(%arg0: i32, %arg1: i32, %arg2: i32, %arg3: memref<8x40xbf16, #tpu.memory_space<vmem>>, %arg4: memref<1x40xf32, #tpu.memory_space<vmem>>, %arg5: memref<1x40xf32, #tpu.memory_space<vmem>>, %arg6: memref<40x128xbf16, #tpu.memory_space<vmem>>, %arg7: memref<8x128xbf16, #tpu.memory_space<vmem>>, %arg8: memref<1x8x128xf32, #tpu.memory_space<vmem>>) attributes {dimension_semantics = [#tpu.dimension_semantics<parallel>, #tpu.dimension_semantics<parallel>, #tpu.dimension_semantics<arbitrary>], iteration_bounds = array<i64: 1, 1, 1>, scalar_prefetch = 0 : i64, scratch_operands = 0 : i64, tpu.core_type = #tpu.core_type<tc>, window_params = [{transform_indices = @transform_0, window_bounds = array<i64: 8, 40>}, {transform_indices = @transform_1, window_bounds = array<i64: 1, 40>}, {transform_indices = @transform_2, window_bounds = array<i64: 1, 40>}, {transform_indices = @transform_3, window_bounds = array<i64: 40, 128>}, {transform_indices = @transform_4, window_bounds = array<i64: 8, 128>}, {transform_indices = @transform_5, window_bounds = array<i64: 1, 8, 128>}]} {
    %c0 = arith.constant 0 : index
    %c0_0 = arith.constant 0 : index
    %0 = vector.load %arg3[%c0, %c0_0] : memref<8x40xbf16, #tpu.memory_space<vmem>>, vector<8x40xbf16>
    %1 = arith.extf %0 : vector<8x40xbf16> to vector<8x40xf32>
    %c0_1 = arith.constant 0 : index
    %c0_2 = arith.constant 0 : index
    %2 = vector.load %arg4[%c0_1, %c0_2] : memref<1x40xf32, #tpu.memory_space<vmem>>, vector<1x40xf32>
    %3 = vector.broadcast %2 : vector<1x40xf32> to vector<8x40xf32>
    %4 = arith.mulf %1, %3 : vector<8x40xf32>
    %c0_3 = arith.constant 0 : index
    %c0_4 = arith.constant 0 : index
    %5 = vector.load %arg5[%c0_3, %c0_4] : memref<1x40xf32, #tpu.memory_space<vmem>>, vector<1x40xf32>
    %6 = vector.broadcast %5 : vector<1x40xf32> to vector<8x40xf32>
    %7 = arith.addf %4, %6 : vector<8x40xf32>
    %cst = arith.constant 0.000000e+00 : f32
    %8 = vector.broadcast %cst : f32 to vector<8x40xf32>
    %9 = arith.maximumf %7, %8 : vector<8x40xf32>
    %10 = arith.truncf %9 : vector<8x40xf32> to vector<8x40xbf16>
    %c0_5 = arith.constant 0 : index
    %c0_6 = arith.constant 0 : index
    %11 = vector.load %arg6[%c0_5, %c0_6] : memref<40x128xbf16, #tpu.memory_space<vmem>>, vector<40x128xbf16>
    %cst_7 = arith.constant dense<0.000000e+00> : vector<8x128xf32>
    %12 = tpu.matmul %10, %11, %cst_7 {dimension_numbers = #tpu.dot_dimension_numbers<[1], [0], [0], [1], [0, 0, 1, 1], [], []>} : vector<8x40xbf16>, vector<40x128xbf16>, vector<8x128xf32> -> vector<8x128xf32>
    %13 = arith.truncf %12 : vector<8x128xf32> to vector<8x128xbf16>
    %c0_8 = arith.constant 0 : index
    %c0_9 = arith.constant 0 : index
    %14 = vector.load %arg7[%c0_8, %c0_9] : memref<8x128xbf16, #tpu.memory_space<vmem>>, vector<8x128xbf16>
    tpu.vector_store %arg7[%c0_8, %c0_9], %13 {strides = array<i32>} : memref<8x128xbf16, #tpu.memory_space<vmem>>, vector<8x128xbf16>,
    %15 = arith.extf %13 : vector<8x128xbf16> to vector<8x128xf32>
    %cst_10 = arith.constant dense<0.000000e+00> : vector<128xf32>
    %16 = vector.multi_reduction <add>, %15, %cst_10 [0] : vector<8x128xf32> to vector<128xf32>
    %17 = vector.shape_cast %16 : vector<128xf32> to vector<1x128xf32>
    %18 = arith.mulf %15, %15 : vector<8x128xf32>
    %cst_11 = arith.constant dense<0.000000e+00> : vector<128xf32>
    %19 = vector.multi_reduction <add>, %18, %cst_11 [0] : vector<8x128xf32> to vector<128xf32>
    %20 = vector.shape_cast %19 : vector<128xf32> to vector<1x128xf32>
    %21 = tpu.iota {dimensions = array<i32: 0>} : vector<8x128xi32>
    %c0_i32 = arith.constant 0 : i32
    %22 = vector.broadcast %c0_i32 : i32 to vector<8x128xi32>
    %23 = arith.cmpi eq, %21, %22 : vector<8x128xi32>
    %c1_i32 = arith.constant 1 : i32
    %24 = vector.broadcast %c1_i32 : i32 to vector<8x128xi32>
    %25 = arith.cmpi eq, %21, %24 : vector<8x128xi32>
    %cst_12 = arith.constant 0.000000e+00 : f32
    %26 = vector.shape_cast %20 : vector<1x128xf32> to vector<1x128xf32>
    %27 = vector.broadcast %26 : vector<1x128xf32> to vector<8x128xf32>
    %28 = vector.broadcast %cst_12 : f32 to vector<8x128xf32>
    %29 = arith.select %25, %27, %28 : vector<8x128xi1>, vector<8x128xf32>
    %30 = vector.shape_cast %17 : vector<1x128xf32> to vector<1x128xf32>
    %31 = vector.broadcast %30 : vector<1x128xf32> to vector<8x128xf32>
    %32 = arith.select %23, %31, %29 : vector<8x128xi1>, vector<8x128xf32>
    %c0_13 = arith.constant 0 : index
    %c0_14 = arith.constant 0 : index
    %c0_15 = arith.constant 0 : index
    %33 = vector.load %arg8[%c0_13, %c0_14, %c0_15] : memref<1x8x128xf32, #tpu.memory_space<vmem>>, vector<1x8x128xf32>
    %34 = vector.shape_cast %33 : vector<1x8x128xf32> to vector<8x128xf32>
    %35 = vector.shape_cast %32 : vector<8x128xf32> to vector<1x8x128xf32>
    tpu.vector_store %arg8[%c0_13, %c0_14, %c0_15], %35 {strides = array<i32>} : memref<1x8x128xf32, #tpu.memory_space<vmem>>, vector<1x8x128xf32>,
    return
  }
  func.func @transform_0(%arg0: i32, %arg1: i32, %arg2: i32) -> (i32, i32) {
    %c0_i32 = arith.constant 0 : i32
    return %arg0, %arg2 : i32, i32
  }
  func.func @transform_1(%arg0: i32, %arg1: i32, %arg2: i32) -> (i32, i32) {
    %c0_i32 = arith.constant 0 : i32
    %c0_i32_0 = arith.constant 0 : i32
    return %c0_i32, %arg2 : i32, i32
  }
  func.func @transform_2(%arg0: i32, %arg1: i32, %arg2: i32) -> (i32, i32) {
    %c0_i32 = arith.constant 0 : i32
    %c0_i32_0 = arith.constant 0 : i32
    return %c0_i32, %arg2 : i32, i32
  }
  func.func @transform_3(%arg0: i32, %arg1: i32, %arg2: i32) -> (i32, i32) {
    %c0_i32 = arith.constant 0 : i32
    return %arg2, %arg1 : i32, i32
  }
  func.func @transform_4(%arg0: i32, %arg1: i32, %arg2: i32) -> (i32, i32) {
    %c0_i32 = arith.constant 0 : i32
    return %arg0, %arg1 : i32, i32
  }
  func.func @transform_5(%arg0: i32, %arg1: i32, %arg2: i32) -> (i32, i32, i32) {
    %c0_i32 = arith.constant 0 : i32
    %c0_i32_0 = arith.constant 0 : i32
    %c0_i32_1 = arith.constant 0 : i32
    return %arg0, %c0_i32, %c0_i32_0 : i32, i32, i32
  }
}

module attributes {stable_mosaic.version = 11 : i64} {
  func.func @kernel(%arg0: i32, %arg1: i32, %arg2: i32, %arg3: memref<8x1152xbf16, #tpu.memory_space<vmem>>, %arg4: memref<8x40xbf16, #tpu.memory_space<vmem>>, %arg5: memref<1152x32xbf16, #tpu.memory_space<vmem>>, %arg6: memref<8x72xbf16, #tpu.memory_space<vmem>>, %arg7: memref<1x8x32xf32, #tpu.memory_space<vmem>>) attributes {dimension_semantics = [#tpu.dimension_semantics<parallel>, #tpu.dimension_semantics<parallel>, #tpu.dimension_semantics<arbitrary>], iteration_bounds = array<i64: 1, 1, 1>, scalar_prefetch = 0 : i64, scratch_operands = 0 : i64, tpu.core_type = #tpu.core_type<tc>, window_params = [{transform_indices = @transform_0, window_bounds = array<i64: 8, 1152>}, {transform_indices = @transform_1, window_bounds = array<i64: 8, 40>}, {transform_indices = @transform_2, window_bounds = array<i64: 1152, 32>}, {transform_indices = @transform_3, window_bounds = array<i64: 8, 72>}, {transform_indices = @transform_4, window_bounds = array<i64: 1, 8, 32>}]} {
    %c0 = arith.constant 0 : index
    %c0_0 = arith.constant 0 : index
    %0 = vector.load %arg3[%c0, %c0_0] : memref<8x1152xbf16, #tpu.memory_space<vmem>>, vector<8x1152xbf16>
    %c0_1 = arith.constant 0 : index
    %c0_2 = arith.constant 0 : index
    %1 = vector.load %arg5[%c0_1, %c0_2] : memref<1152x32xbf16, #tpu.memory_space<vmem>>, vector<1152x32xbf16>
    %cst = arith.constant dense<0.000000e+00> : vector<8x32xf32>
    %2 = tpu.matmul %0, %1, %cst {dimension_numbers = #tpu.dot_dimension_numbers<[1], [0], [0], [1], [0, 0, 1, 1], [], []>} : vector<8x1152xbf16>, vector<1152x32xbf16>, vector<8x32xf32> -> vector<8x32xf32>
    %3 = arith.truncf %2 : vector<8x32xf32> to vector<8x32xbf16>
    %c0_3 = arith.constant 0 : index
    %c0_4 = arith.constant 0 : index
    %4 = vector.load %arg4[%c0_3, %c0_4] : memref<8x40xbf16, #tpu.memory_space<vmem>>, vector<8x40xbf16>
    %5 = tpu.concatenate %4, %3 in 1 : vector<8x40xbf16>, vector<8x32xbf16> -> vector<8x72xbf16>
    %c0_5 = arith.constant 0 : index
    %c0_6 = arith.constant 0 : index
    %6 = vector.load %arg6[%c0_5, %c0_6] : memref<8x72xbf16, #tpu.memory_space<vmem>>, vector<8x72xbf16>
    tpu.vector_store %arg6[%c0_5, %c0_6], %5 {strides = array<i32>} : memref<8x72xbf16, #tpu.memory_space<vmem>>, vector<8x72xbf16>,
    %7 = arith.extf %3 : vector<8x32xbf16> to vector<8x32xf32>
    %cst_7 = arith.constant dense<0.000000e+00> : vector<32xf32>
    %8 = vector.multi_reduction <add>, %7, %cst_7 [0] : vector<8x32xf32> to vector<32xf32>
    %9 = vector.shape_cast %8 : vector<32xf32> to vector<1x32xf32>
    %10 = arith.mulf %7, %7 : vector<8x32xf32>
    %cst_8 = arith.constant dense<0.000000e+00> : vector<32xf32>
    %11 = vector.multi_reduction <add>, %10, %cst_8 [0] : vector<8x32xf32> to vector<32xf32>
    %12 = vector.shape_cast %11 : vector<32xf32> to vector<1x32xf32>
    %13 = tpu.iota {dimensions = array<i32: 0>} : vector<8x32xi32>
    %c0_i32 = arith.constant 0 : i32
    %14 = vector.broadcast %c0_i32 : i32 to vector<8x32xi32>
    %15 = arith.cmpi eq, %13, %14 : vector<8x32xi32>
    %c1_i32 = arith.constant 1 : i32
    %16 = vector.broadcast %c1_i32 : i32 to vector<8x32xi32>
    %17 = arith.cmpi eq, %13, %16 : vector<8x32xi32>
    %cst_9 = arith.constant 0.000000e+00 : f32
    %18 = vector.shape_cast %12 : vector<1x32xf32> to vector<1x32xf32>
    %19 = vector.broadcast %18 : vector<1x32xf32> to vector<8x32xf32>
    %20 = vector.broadcast %cst_9 : f32 to vector<8x32xf32>
    %21 = arith.select %17, %19, %20 : vector<8x32xi1>, vector<8x32xf32>
    %22 = vector.shape_cast %9 : vector<1x32xf32> to vector<1x32xf32>
    %23 = vector.broadcast %22 : vector<1x32xf32> to vector<8x32xf32>
    %24 = arith.select %15, %23, %21 : vector<8x32xi1>, vector<8x32xf32>
    %c0_10 = arith.constant 0 : index
    %c0_11 = arith.constant 0 : index
    %c0_12 = arith.constant 0 : index
    %25 = vector.load %arg7[%c0_10, %c0_11, %c0_12] : memref<1x8x32xf32, #tpu.memory_space<vmem>>, vector<1x8x32xf32>
    %26 = vector.shape_cast %25 : vector<1x8x32xf32> to vector<8x32xf32>
    %27 = vector.shape_cast %24 : vector<8x32xf32> to vector<1x8x32xf32>
    tpu.vector_store %arg7[%c0_10, %c0_11, %c0_12], %27 {strides = array<i32>} : memref<1x8x32xf32, #tpu.memory_space<vmem>>, vector<1x8x32xf32>,
    return
  }
  func.func @transform_0(%arg0: i32, %arg1: i32, %arg2: i32) -> (i32, i32) {
    %c0_i32 = arith.constant 0 : i32
    return %arg0, %arg2 : i32, i32
  }
  func.func @transform_1(%arg0: i32, %arg1: i32, %arg2: i32) -> (i32, i32) {
    %c0_i32 = arith.constant 0 : i32
    %c0_i32_0 = arith.constant 0 : i32
    return %arg0, %c0_i32 : i32, i32
  }
  func.func @transform_2(%arg0: i32, %arg1: i32, %arg2: i32) -> (i32, i32) {
    %c0_i32 = arith.constant 0 : i32
    return %arg2, %arg1 : i32, i32
  }
  func.func @transform_3(%arg0: i32, %arg1: i32, %arg2: i32) -> (i32, i32) {
    %c0_i32 = arith.constant 0 : i32
    %c0_i32_0 = arith.constant 0 : i32
    return %arg0, %c0_i32 : i32, i32
  }
  func.func @transform_4(%arg0: i32, %arg1: i32, %arg2: i32) -> (i32, i32, i32) {
    %c0_i32 = arith.constant 0 : i32
    %c0_i32_0 = arith.constant 0 : i32
    %c0_i32_1 = arith.constant 0 : i32
    return %arg0, %c0_i32, %c0_i32_0 : i32, i32, i32
  }
}

module attributes {stable_mosaic.version = 11 : i64} {
  func.func @kernel(%arg0: i32, %arg1: i32, %arg2: i32, %arg3: memref<8x72xbf16, #tpu.memory_space<vmem>>, %arg4: memref<1x72xf32, #tpu.memory_space<vmem>>, %arg5: memref<1x72xf32, #tpu.memory_space<vmem>>, %arg6: memref<72x36xbf16, #tpu.memory_space<vmem>>, %arg7: memref<8x36xbf16, #tpu.memory_space<vmem>>) attributes {dimension_semantics = [#tpu.dimension_semantics<parallel>, #tpu.dimension_semantics<parallel>, #tpu.dimension_semantics<arbitrary>], iteration_bounds = array<i64: 1, 1, 1>, scalar_prefetch = 0 : i64, scratch_operands = 0 : i64, tpu.core_type = #tpu.core_type<tc>, window_params = [{transform_indices = @transform_0, window_bounds = array<i64: 8, 72>}, {transform_indices = @transform_1, window_bounds = array<i64: 1, 72>}, {transform_indices = @transform_2, window_bounds = array<i64: 1, 72>}, {transform_indices = @transform_3, window_bounds = array<i64: 72, 36>}, {transform_indices = @transform_4, window_bounds = array<i64: 8, 36>}]} {
    %c0 = arith.constant 0 : index
    %c0_0 = arith.constant 0 : index
    %0 = vector.load %arg3[%c0, %c0_0] : memref<8x72xbf16, #tpu.memory_space<vmem>>, vector<8x72xbf16>
    %1 = arith.extf %0 : vector<8x72xbf16> to vector<8x72xf32>
    %c0_1 = arith.constant 0 : index
    %c0_2 = arith.constant 0 : index
    %2 = vector.load %arg4[%c0_1, %c0_2] : memref<1x72xf32, #tpu.memory_space<vmem>>, vector<1x72xf32>
    %3 = vector.broadcast %2 : vector<1x72xf32> to vector<8x72xf32>
    %4 = arith.mulf %1, %3 : vector<8x72xf32>
    %c0_3 = arith.constant 0 : index
    %c0_4 = arith.constant 0 : index
    %5 = vector.load %arg5[%c0_3, %c0_4] : memref<1x72xf32, #tpu.memory_space<vmem>>, vector<1x72xf32>
    %6 = vector.broadcast %5 : vector<1x72xf32> to vector<8x72xf32>
    %7 = arith.addf %4, %6 : vector<8x72xf32>
    %cst = arith.constant 0.000000e+00 : f32
    %8 = vector.broadcast %cst : f32 to vector<8x72xf32>
    %9 = arith.maximumf %7, %8 : vector<8x72xf32>
    %10 = arith.truncf %9 : vector<8x72xf32> to vector<8x72xbf16>
    %c0_5 = arith.constant 0 : index
    %c0_6 = arith.constant 0 : index
    %11 = vector.load %arg6[%c0_5, %c0_6] : memref<72x36xbf16, #tpu.memory_space<vmem>>, vector<72x36xbf16>
    %cst_7 = arith.constant dense<0.000000e+00> : vector<8x36xf32>
    %12 = tpu.matmul %10, %11, %cst_7 {dimension_numbers = #tpu.dot_dimension_numbers<[1], [0], [0], [1], [0, 0, 1, 1], [], []>} : vector<8x72xbf16>, vector<72x36xbf16>, vector<8x36xf32> -> vector<8x36xf32>
    %13 = arith.truncf %12 : vector<8x36xf32> to vector<8x36xbf16>
    %c0_8 = arith.constant 0 : index
    %c0_9 = arith.constant 0 : index
    %14 = vector.load %arg7[%c0_8, %c0_9] : memref<8x36xbf16, #tpu.memory_space<vmem>>, vector<8x36xbf16>
    tpu.vector_store %arg7[%c0_8, %c0_9], %13 {strides = array<i32>} : memref<8x36xbf16, #tpu.memory_space<vmem>>, vector<8x36xbf16>,
    return
  }
  func.func @transform_0(%arg0: i32, %arg1: i32, %arg2: i32) -> (i32, i32) {
    %c0_i32 = arith.constant 0 : i32
    return %arg0, %arg2 : i32, i32
  }
  func.func @transform_1(%arg0: i32, %arg1: i32, %arg2: i32) -> (i32, i32) {
    %c0_i32 = arith.constant 0 : i32
    %c0_i32_0 = arith.constant 0 : i32
    return %c0_i32, %arg2 : i32, i32
  }
  func.func @transform_2(%arg0: i32, %arg1: i32, %arg2: i32) -> (i32, i32) {
    %c0_i32 = arith.constant 0 : i32
    %c0_i32_0 = arith.constant 0 : i32
    return %c0_i32, %arg2 : i32, i32
  }
  func.func @transform_3(%arg0: i32, %arg1: i32, %arg2: i32) -> (i32, i32) {
    %c0_i32 = arith.constant 0 : i32
    return %arg2, %arg1 : i32, i32
  }
  func.func @transform_4(%arg0: i32, %arg1: i32, %arg2: i32) -> (i32, i32) {
    %c0_i32 = arith.constant 0 : i32
    return %arg0, %arg1 : i32, i32
  }
}

module attributes {stable_mosaic.version = 11 : i64} {
  func.func @kernel(%arg0: i32, %arg1: i32, %arg2: i32, %arg3: memref<8x36xbf16, #tpu.memory_space<vmem>>, %arg4: memref<1x36xf32, #tpu.memory_space<vmem>>, %arg5: memref<1x36xf32, #tpu.memory_space<vmem>>, %arg6: memref<36x128xbf16, #tpu.memory_space<vmem>>, %arg7: memref<8x128xbf16, #tpu.memory_space<vmem>>, %arg8: memref<1x8x128xf32, #tpu.memory_space<vmem>>) attributes {dimension_semantics = [#tpu.dimension_semantics<parallel>, #tpu.dimension_semantics<parallel>, #tpu.dimension_semantics<arbitrary>], iteration_bounds = array<i64: 1, 1, 1>, scalar_prefetch = 0 : i64, scratch_operands = 0 : i64, tpu.core_type = #tpu.core_type<tc>, window_params = [{transform_indices = @transform_0, window_bounds = array<i64: 8, 36>}, {transform_indices = @transform_1, window_bounds = array<i64: 1, 36>}, {transform_indices = @transform_2, window_bounds = array<i64: 1, 36>}, {transform_indices = @transform_3, window_bounds = array<i64: 36, 128>}, {transform_indices = @transform_4, window_bounds = array<i64: 8, 128>}, {transform_indices = @transform_5, window_bounds = array<i64: 1, 8, 128>}]} {
    %c0 = arith.constant 0 : index
    %c0_0 = arith.constant 0 : index
    %0 = vector.load %arg3[%c0, %c0_0] : memref<8x36xbf16, #tpu.memory_space<vmem>>, vector<8x36xbf16>
    %1 = arith.extf %0 : vector<8x36xbf16> to vector<8x36xf32>
    %c0_1 = arith.constant 0 : index
    %c0_2 = arith.constant 0 : index
    %2 = vector.load %arg4[%c0_1, %c0_2] : memref<1x36xf32, #tpu.memory_space<vmem>>, vector<1x36xf32>
    %3 = vector.broadcast %2 : vector<1x36xf32> to vector<8x36xf32>
    %4 = arith.mulf %1, %3 : vector<8x36xf32>
    %c0_3 = arith.constant 0 : index
    %c0_4 = arith.constant 0 : index
    %5 = vector.load %arg5[%c0_3, %c0_4] : memref<1x36xf32, #tpu.memory_space<vmem>>, vector<1x36xf32>
    %6 = vector.broadcast %5 : vector<1x36xf32> to vector<8x36xf32>
    %7 = arith.addf %4, %6 : vector<8x36xf32>
    %cst = arith.constant 0.000000e+00 : f32
    %8 = vector.broadcast %cst : f32 to vector<8x36xf32>
    %9 = arith.maximumf %7, %8 : vector<8x36xf32>
    %10 = arith.truncf %9 : vector<8x36xf32> to vector<8x36xbf16>
    %c0_5 = arith.constant 0 : index
    %c0_6 = arith.constant 0 : index
    %11 = vector.load %arg6[%c0_5, %c0_6] : memref<36x128xbf16, #tpu.memory_space<vmem>>, vector<36x128xbf16>
    %cst_7 = arith.constant dense<0.000000e+00> : vector<8x128xf32>
    %12 = tpu.matmul %10, %11, %cst_7 {dimension_numbers = #tpu.dot_dimension_numbers<[1], [0], [0], [1], [0, 0, 1, 1], [], []>} : vector<8x36xbf16>, vector<36x128xbf16>, vector<8x128xf32> -> vector<8x128xf32>
    %13 = arith.truncf %12 : vector<8x128xf32> to vector<8x128xbf16>
    %c0_8 = arith.constant 0 : index
    %c0_9 = arith.constant 0 : index
    %14 = vector.load %arg7[%c0_8, %c0_9] : memref<8x128xbf16, #tpu.memory_space<vmem>>, vector<8x128xbf16>
    tpu.vector_store %arg7[%c0_8, %c0_9], %13 {strides = array<i32>} : memref<8x128xbf16, #tpu.memory_space<vmem>>, vector<8x128xbf16>,
    %15 = arith.extf %13 : vector<8x128xbf16> to vector<8x128xf32>
    %16 = tpu.iota {dimensions = array<i32: 0>} : vector<8x128xi32>
    %c8_i32 = arith.constant 8 : i32
    %17 = arith.muli %arg0, %c8_i32 : i32
    %18 = vector.broadcast %17 : i32 to vector<8x128xi32>
    %19 = arith.addi %16, %18 : vector<8x128xi32>
    %c2_i32 = arith.constant 2 : i32
    %20 = vector.broadcast %c2_i32 : i32 to vector<8x128xi32>
    %21 = arith.cmpi slt, %19, %20 : vector<8x128xi32>
    %cst_10 = arith.constant 0.000000e+00 : f32
    %22 = vector.broadcast %cst_10 : f32 to vector<8x128xf32>
    %23 = arith.select %21, %15, %22 : vector<8x128xi1>, vector<8x128xf32>
    %cst_11 = arith.constant dense<0.000000e+00> : vector<128xf32>
    %24 = vector.multi_reduction <add>, %23, %cst_11 [0] : vector<8x128xf32> to vector<128xf32>
    %25 = vector.shape_cast %24 : vector<128xf32> to vector<1x128xf32>
    %26 = arith.mulf %23, %23 : vector<8x128xf32>
    %cst_12 = arith.constant dense<0.000000e+00> : vector<128xf32>
    %27 = vector.multi_reduction <add>, %26, %cst_12 [0] : vector<8x128xf32> to vector<128xf32>
    %28 = vector.shape_cast %27 : vector<128xf32> to vector<1x128xf32>
    %29 = tpu.iota {dimensions = array<i32: 0>} : vector<8x128xi32>
    %c0_i32 = arith.constant 0 : i32
    %30 = vector.broadcast %c0_i32 : i32 to vector<8x128xi32>
    %31 = arith.cmpi eq, %29, %30 : vector<8x128xi32>
    %c1_i32 = arith.constant 1 : i32
    %32 = vector.broadcast %c1_i32 : i32 to vector<8x128xi32>
    %33 = arith.cmpi eq, %29, %32 : vector<8x128xi32>
    %cst_13 = arith.constant 0.000000e+00 : f32
    %34 = vector.shape_cast %28 : vector<1x128xf32> to vector<1x128xf32>
    %35 = vector.broadcast %34 : vector<1x128xf32> to vector<8x128xf32>
    %36 = vector.broadcast %cst_13 : f32 to vector<8x128xf32>
    %37 = arith.select %33, %35, %36 : vector<8x128xi1>, vector<8x128xf32>
    %38 = vector.shape_cast %25 : vector<1x128xf32> to vector<1x128xf32>
    %39 = vector.broadcast %38 : vector<1x128xf32> to vector<8x128xf32>
    %40 = arith.select %31, %39, %37 : vector<8x128xi1>, vector<8x128xf32>
    %c0_14 = arith.constant 0 : index
    %c0_15 = arith.constant 0 : index
    %c0_16 = arith.constant 0 : index
    %41 = vector.load %arg8[%c0_14, %c0_15, %c0_16] : memref<1x8x128xf32, #tpu.memory_space<vmem>>, vector<1x8x128xf32>
    %42 = vector.shape_cast %41 : vector<1x8x128xf32> to vector<8x128xf32>
    %43 = vector.shape_cast %40 : vector<8x128xf32> to vector<1x8x128xf32>
    tpu.vector_store %arg8[%c0_14, %c0_15, %c0_16], %43 {strides = array<i32>} : memref<1x8x128xf32, #tpu.memory_space<vmem>>, vector<1x8x128xf32>,
    return
  }
  func.func @transform_0(%arg0: i32, %arg1: i32, %arg2: i32) -> (i32, i32) {
    %c0_i32 = arith.constant 0 : i32
    return %arg0, %arg2 : i32, i32
  }
  func.func @transform_1(%arg0: i32, %arg1: i32, %arg2: i32) -> (i32, i32) {
    %c0_i32 = arith.constant 0 : i32
    %c0_i32_0 = arith.constant 0 : i32
    return %c0_i32, %arg2 : i32, i32
  }
  func.func @transform_2(%arg0: i32, %arg1: i32, %arg2: i32) -> (i32, i32) {
    %c0_i32 = arith.constant 0 : i32
    %c0_i32_0 = arith.constant 0 : i32
    return %c0_i32, %arg2 : i32, i32
  }
  func.func @transform_3(%arg0: i32, %arg1: i32, %arg2: i32) -> (i32, i32) {
    %c0_i32 = arith.constant 0 : i32
    return %arg2, %arg1 : i32, i32
  }
  func.func @transform_4(%arg0: i32, %arg1: i32, %arg2: i32) -> (i32, i32) {
    %c0_i32 = arith.constant 0 : i32
    return %arg0, %arg1 : i32, i32
  }
  func.func @transform_5(%arg0: i32, %arg1: i32, %arg2: i32) -> (i32, i32, i32) {
    %c0_i32 = arith.constant 0 : i32
    %c0_i32_0 = arith.constant 0 : i32
    %c0_i32_1 = arith.constant 0 : i32
    return %arg0, %c0_i32, %c0_i32_0 : i32, i32, i32
  }
}

module attributes {stable_mosaic.version = 11 : i64} {
  func.func @kernel(%arg0: i32, %arg1: i32, %arg2: i32, %arg3: memref<8x1152xbf16, #tpu.memory_space<vmem>>, %arg4: memref<8x36xbf16, #tpu.memory_space<vmem>>, %arg5: memref<1152x32xbf16, #tpu.memory_space<vmem>>, %arg6: memref<8x68xbf16, #tpu.memory_space<vmem>>, %arg7: memref<1x8x32xf32, #tpu.memory_space<vmem>>) attributes {dimension_semantics = [#tpu.dimension_semantics<parallel>, #tpu.dimension_semantics<parallel>, #tpu.dimension_semantics<arbitrary>], iteration_bounds = array<i64: 1, 1, 1>, scalar_prefetch = 0 : i64, scratch_operands = 0 : i64, tpu.core_type = #tpu.core_type<tc>, window_params = [{transform_indices = @transform_0, window_bounds = array<i64: 8, 1152>}, {transform_indices = @transform_1, window_bounds = array<i64: 8, 36>}, {transform_indices = @transform_2, window_bounds = array<i64: 1152, 32>}, {transform_indices = @transform_3, window_bounds = array<i64: 8, 68>}, {transform_indices = @transform_4, window_bounds = array<i64: 1, 8, 32>}]} {
    %c0 = arith.constant 0 : index
    %c0_0 = arith.constant 0 : index
    %0 = vector.load %arg3[%c0, %c0_0] : memref<8x1152xbf16, #tpu.memory_space<vmem>>, vector<8x1152xbf16>
    %c0_1 = arith.constant 0 : index
    %c0_2 = arith.constant 0 : index
    %1 = vector.load %arg5[%c0_1, %c0_2] : memref<1152x32xbf16, #tpu.memory_space<vmem>>, vector<1152x32xbf16>
    %cst = arith.constant dense<0.000000e+00> : vector<8x32xf32>
    %2 = tpu.matmul %0, %1, %cst {dimension_numbers = #tpu.dot_dimension_numbers<[1], [0], [0], [1], [0, 0, 1, 1], [], []>} : vector<8x1152xbf16>, vector<1152x32xbf16>, vector<8x32xf32> -> vector<8x32xf32>
    %3 = arith.truncf %2 : vector<8x32xf32> to vector<8x32xbf16>
    %c0_3 = arith.constant 0 : index
    %c0_4 = arith.constant 0 : index
    %4 = vector.load %arg4[%c0_3, %c0_4] : memref<8x36xbf16, #tpu.memory_space<vmem>>, vector<8x36xbf16>
    %5 = tpu.concatenate %4, %3 in 1 : vector<8x36xbf16>, vector<8x32xbf16> -> vector<8x68xbf16>
    %c0_5 = arith.constant 0 : index
    %c0_6 = arith.constant 0 : index
    %6 = vector.load %arg6[%c0_5, %c0_6] : memref<8x68xbf16, #tpu.memory_space<vmem>>, vector<8x68xbf16>
    tpu.vector_store %arg6[%c0_5, %c0_6], %5 {strides = array<i32>} : memref<8x68xbf16, #tpu.memory_space<vmem>>, vector<8x68xbf16>,
    %7 = arith.extf %3 : vector<8x32xbf16> to vector<8x32xf32>
    %8 = tpu.iota {dimensions = array<i32: 0>} : vector<8x32xi32>
    %c8_i32 = arith.constant 8 : i32
    %9 = arith.muli %arg0, %c8_i32 : i32
    %10 = vector.broadcast %9 : i32 to vector<8x32xi32>
    %11 = arith.addi %8, %10 : vector<8x32xi32>
    %c2_i32 = arith.constant 2 : i32
    %12 = vector.broadcast %c2_i32 : i32 to vector<8x32xi32>
    %13 = arith.cmpi slt, %11, %12 : vector<8x32xi32>
    %cst_7 = arith.constant 0.000000e+00 : f32
    %14 = vector.broadcast %cst_7 : f32 to vector<8x32xf32>
    %15 = arith.select %13, %7, %14 : vector<8x32xi1>, vector<8x32xf32>
    %cst_8 = arith.constant dense<0.000000e+00> : vector<32xf32>
    %16 = vector.multi_reduction <add>, %15, %cst_8 [0] : vector<8x32xf32> to vector<32xf32>
    %17 = vector.shape_cast %16 : vector<32xf32> to vector<1x32xf32>
    %18 = arith.mulf %15, %15 : vector<8x32xf32>
    %cst_9 = arith.constant dense<0.000000e+00> : vector<32xf32>
    %19 = vector.multi_reduction <add>, %18, %cst_9 [0] : vector<8x32xf32> to vector<32xf32>
    %20 = vector.shape_cast %19 : vector<32xf32> to vector<1x32xf32>
    %21 = tpu.iota {dimensions = array<i32: 0>} : vector<8x32xi32>
    %c0_i32 = arith.constant 0 : i32
    %22 = vector.broadcast %c0_i32 : i32 to vector<8x32xi32>
    %23 = arith.cmpi eq, %21, %22 : vector<8x32xi32>
    %c1_i32 = arith.constant 1 : i32
    %24 = vector.broadcast %c1_i32 : i32 to vector<8x32xi32>
    %25 = arith.cmpi eq, %21, %24 : vector<8x32xi32>
    %cst_10 = arith.constant 0.000000e+00 : f32
    %26 = vector.shape_cast %20 : vector<1x32xf32> to vector<1x32xf32>
    %27 = vector.broadcast %26 : vector<1x32xf32> to vector<8x32xf32>
    %28 = vector.broadcast %cst_10 : f32 to vector<8x32xf32>
    %29 = arith.select %25, %27, %28 : vector<8x32xi1>, vector<8x32xf32>
    %30 = vector.shape_cast %17 : vector<1x32xf32> to vector<1x32xf32>
    %31 = vector.broadcast %30 : vector<1x32xf32> to vector<8x32xf32>
    %32 = arith.select %23, %31, %29 : vector<8x32xi1>, vector<8x32xf32>
    %c0_11 = arith.constant 0 : index
    %c0_12 = arith.constant 0 : index
    %c0_13 = arith.constant 0 : index
    %33 = vector.load %arg7[%c0_11, %c0_12, %c0_13] : memref<1x8x32xf32, #tpu.memory_space<vmem>>, vector<1x8x32xf32>
    %34 = vector.shape_cast %33 : vector<1x8x32xf32> to vector<8x32xf32>
    %35 = vector.shape_cast %32 : vector<8x32xf32> to vector<1x8x32xf32>
    tpu.vector_store %arg7[%c0_11, %c0_12, %c0_13], %35 {strides = array<i32>} : memref<1x8x32xf32, #tpu.memory_space<vmem>>, vector<1x8x32xf32>,
    return
  }
  func.func @transform_0(%arg0: i32, %arg1: i32, %arg2: i32) -> (i32, i32) {
    %c0_i32 = arith.constant 0 : i32
    return %arg0, %arg2 : i32, i32
  }
  func.func @transform_1(%arg0: i32, %arg1: i32, %arg2: i32) -> (i32, i32) {
    %c0_i32 = arith.constant 0 : i32
    %c0_i32_0 = arith.constant 0 : i32
    return %arg0, %c0_i32 : i32, i32
  }
  func.func @transform_2(%arg0: i32, %arg1: i32, %arg2: i32) -> (i32, i32) {
    %c0_i32 = arith.constant 0 : i32
    return %arg2, %arg1 : i32, i32
  }
  func.func @transform_3(%arg0: i32, %arg1: i32, %arg2: i32) -> (i32, i32) {
    %c0_i32 = arith.constant 0 : i32
    %c0_i32_0 = arith.constant 0 : i32
    return %arg0, %c0_i32 : i32, i32
  }
  func.func @transform_4(%arg0: i32, %arg1: i32, %arg2: i32) -> (i32, i32, i32) {
    %c0_i32 = arith.constant 0 : i32
    %c0_i32_0 = arith.constant 0 : i32
    %c0_i32_1 = arith.constant 0 : i32
    return %arg0, %c0_i32, %c0_i32_0 : i32, i32, i32
  }
}

module attributes {stable_mosaic.version = 11 : i64} {
  func.func @kernel(%arg0: i32, %arg1: i32, %arg2: i32, %arg3: memref<8x128xbf16, #tpu.memory_space<vmem>>, %arg4: memref<1x128xf32, #tpu.memory_space<vmem>>, %arg5: memref<1x128xf32, #tpu.memory_space<vmem>>, %arg6: memref<128x128xbf16, #tpu.memory_space<vmem>>, %arg7: memref<8x128xf32, #tpu.memory_space<vmem>>) attributes {dimension_semantics = [#tpu.dimension_semantics<parallel>, #tpu.dimension_semantics<parallel>, #tpu.dimension_semantics<arbitrary>], iteration_bounds = array<i64: 1, 1, 1>, scalar_prefetch = 0 : i64, scratch_operands = 0 : i64, tpu.core_type = #tpu.core_type<tc>, window_params = [{transform_indices = @transform_0, window_bounds = array<i64: 8, 128>}, {transform_indices = @transform_1, window_bounds = array<i64: 1, 128>}, {transform_indices = @transform_2, window_bounds = array<i64: 1, 128>}, {transform_indices = @transform_3, window_bounds = array<i64: 128, 128>}, {transform_indices = @transform_4, window_bounds = array<i64: 8, 128>}]} {
    %c0 = arith.constant 0 : index
    %c0_0 = arith.constant 0 : index
    %0 = vector.load %arg3[%c0, %c0_0] : memref<8x128xbf16, #tpu.memory_space<vmem>>, vector<8x128xbf16>
    %1 = arith.extf %0 : vector<8x128xbf16> to vector<8x128xf32>
    %c0_1 = arith.constant 0 : index
    %c0_2 = arith.constant 0 : index
    %2 = vector.load %arg4[%c0_1, %c0_2] : memref<1x128xf32, #tpu.memory_space<vmem>>, vector<1x128xf32>
    %3 = vector.broadcast %2 : vector<1x128xf32> to vector<8x128xf32>
    %4 = arith.mulf %1, %3 : vector<8x128xf32>
    %c0_3 = arith.constant 0 : index
    %c0_4 = arith.constant 0 : index
    %5 = vector.load %arg5[%c0_3, %c0_4] : memref<1x128xf32, #tpu.memory_space<vmem>>, vector<1x128xf32>
    %6 = vector.broadcast %5 : vector<1x128xf32> to vector<8x128xf32>
    %7 = arith.addf %4, %6 : vector<8x128xf32>
    %8 = arith.truncf %7 : vector<8x128xf32> to vector<8x128xbf16>
    %c0_5 = arith.constant 0 : index
    %c0_6 = arith.constant 0 : index
    %9 = vector.load %arg6[%c0_5, %c0_6] : memref<128x128xbf16, #tpu.memory_space<vmem>>, vector<128x128xbf16>
    %cst = arith.constant dense<0.000000e+00> : vector<8x128xf32>
    %10 = tpu.matmul %8, %9, %cst {dimension_numbers = #tpu.dot_dimension_numbers<[1], [0], [0], [1], [0, 0, 1, 1], [], []>} : vector<8x128xbf16>, vector<128x128xbf16>, vector<8x128xf32> -> vector<8x128xf32>
    %c0_7 = arith.constant 0 : index
    %c0_8 = arith.constant 0 : index
    %11 = vector.load %arg7[%c0_7, %c0_8] : memref<8x128xf32, #tpu.memory_space<vmem>>, vector<8x128xf32>
    tpu.vector_store %arg7[%c0_7, %c0_8], %10 {strides = array<i32>} : memref<8x128xf32, #tpu.memory_space<vmem>>, vector<8x128xf32>,
    return
  }
  func.func @transform_0(%arg0: i32, %arg1: i32, %arg2: i32) -> (i32, i32) {
    %c0_i32 = arith.constant 0 : i32
    return %arg0, %arg2 : i32, i32
  }
  func.func @transform_1(%arg0: i32, %arg1: i32, %arg2: i32) -> (i32, i32) {
    %c0_i32 = arith.constant 0 : i32
    %c0_i32_0 = arith.constant 0 : i32
    return %c0_i32, %arg2 : i32, i32
  }
  func.func @transform_2(%arg0: i32, %arg1: i32, %arg2: i32) -> (i32, i32) {
    %c0_i32 = arith.constant 0 : i32
    %c0_i32_0 = arith.constant 0 : i32
    return %c0_i32, %arg2 : i32, i32
  }
  func.func @transform_3(%arg0: i32, %arg1: i32, %arg2: i32) -> (i32, i32) {
    %c0_i32 = arith.constant 0 : i32
    return %arg2, %arg1 : i32, i32
  }
  func.func @transform_4(%arg0: i32, %arg1: i32, %arg2: i32) -> (i32, i32) {
    %c0_i32 = arith.constant 0 : i32
    return %arg0, %arg1 : i32, i32
  }
}

</mosaic_0001>

<llo_original>
// kernel: densenet2_forward.24
$region0: #{densenet2_forward.24}
  #allocation0 [shape = 'u32[]', space=smem, size = 0x4, offset = 0x4, fixed_abs, tag = 'smem constant byte address 0x4 - core index']
  #allocation1 [shape = 'u32[72,128]{1,0:T(1,128)}', space=vmem, size = 0x9000, scoped, tag = 'internal scratch']
  %s0 = inlined_call_operand.vmem [shape: bf16[128,64], index: 0, kind: input, shape index: {}]
  %s1 = inlined_call_operand.vmem [shape: f32[1,64], index: 1, kind: input, shape index: {}]
  %s2 = inlined_call_operand.vmem [shape: f32[1,64], index: 2, kind: input, shape index: {}]
  %s3 = inlined_call_operand.vmem [shape: bf16[64,128], index: 3, kind: input, shape index: {}]
  %s4 = inlined_call_operand.vmem [shape: bf16[128,128], index: 4, kind: output, shape index: {0}]
  %s5 = inlined_call_operand.vmem [shape: f32[2,8,128], index: 5, kind: output, shape index: {1}]
  %6 = xla_tuple %s4, %s5
  %s7 = sld [smem:[#allocation0]]
  $region57: #{densenet2_forward.24} parent=0
    _
  %s9 = ssub.s32 1, %s7
  %s10 = scalar_select 0, %s9, %s7
  loop: start=0, step=1, limit=4
  $region2: #{densenet2_forward.24} parent=0 // loop_pre_header
    _
  $region3: #{densenet2_forward.24} parent=0 // loop_header
    %s12 = sphi 0, %s16
    %p13 = scmp.ge.s32.totalorder %s12, 4
    %s19 = sphi 0, %s38
    %s20 = sphi 0, %s34
    %s21 = sphi 0, %s30
    %s22 = sphi 0, %s19
    %s23 = sphi 0, %s20
    %s24 = sphi 0, %s21
    %s25 = sphi 0, %s22
    %s26 = sphi 0, %s23
    %s27 = sphi 0, %s24
    %s43 = sphi 0, %s45
    %s46 = sphi 0, %s43
    %s47 = sphi 0, %s46
    %s63 = sphi 0, %s47
    %s69 = sphi 0, %s71
    %s72 = sphi 0, %s69
    %s73 = sphi 0, %s72
    %s89 = sphi 0, %s73
    %s95 = sphi 0, %s97
    %s98 = sphi 0, %s95
    %s99 = sphi 0, %s98
    %s115 = sphi 0, %s99
    %s123 = sphi 0, %s125
    %s126 = sphi 0, %s123
    %s127 = sphi 0, %s126
    %s143 = sphi 0, %s127
    %s151 = sphi 0, %s153
    %s154 = sphi 0, %s151
    %s155 = sphi 0, %s154
    %s171 = sphi 0, %s155
    %s177 = sphi 0, %s179
    %s180 = sphi 0, %s177
    %s181 = sphi 0, %s180
    %s197 = sphi 0, %s181
  $region4: #{densenet2_forward.24} parent=0 // loop_header_branch
    %15 = sbr.rel (%p13) target = $region8
  $region5: #{densenet2_forward.24} parent=0 // loop_body
    %s17 = ssub.s32 %s12, 1
    %s18 = ssub.s32 %s12, 2
    %s28 = sadd.s32 1, %s21
    %p29 = scmp.ge.s32.totalorder %s28, 1
    %s30 = scalar_select %p29, 0, %s28
    %s31 = sadd.s32 1, %s20
    %s32 = scalar_select %p29, %s31, %s20
    %p33 = scmp.ge.s32.totalorder %s32, 1
    %s34 = scalar_select %p33, 0, %s32
    %s35 = sadd.s32 1, %s19
    %s36 = scalar_select %p33, %s35, %s19
    %p37 = scmp.ge.s32.totalorder %s36, 2
    %s38 = scalar_select %p37, 0, %s36
    %s39 = ssub.s32 %s19, %s38
    %s40 = ssub.s32 %s21, %s30
    %s41 = sor.u32 %s39, %s40
    %p42 = scmp.eq.s32.totalorder %s41, 0
    %s44 = sadd.s32 %s43, 1
    %s45 = scalar_select %p42, %s43, %s44
    %p48 = pneg %p42
    %p49 = scmp.eq.s32.totalorder %s12, 1
    %p50 = por %p48, %p49
    %p51 = scmp.ne.s32.totalorder %s43, %s46
    %p52 = scmp.eq.s32.totalorder %s12, 0
    %p53 = por %p51, %p52
    %p54 = scmp.ne.s32.totalorder %s43, %s46
    %p55 = scmp.eq.s32.totalorder %s17, 1
    %p56 = por %p54, %p55
    %p57 = scmp.ne.s32.totalorder %s46, %s47
    %p58 = scmp.eq.s32.totalorder %s17, 0
    %p59 = por %p57, %p58
    %p60 = scmp.ne.s32.totalorder %s46, %s47
    %p61 = scmp.eq.s32.totalorder %s18, 1
    %p62 = por %p60, %p61
    %p64 = scmp.ne.s32.totalorder %s47, %s63
    %p65 = scmp.eq.s32.totalorder %s18, 0
    %p66 = por %p64, %p65
    %s67 = ssub.s32 %s21, %s30
    %p68 = scmp.eq.s32.totalorder %s67, 0
    %s70 = sadd.s32 %s69, 1
    %s71 = scalar_select %p68, %s69, %s70
    %p74 = pneg %p68
    %p75 = scmp.eq.s32.totalorder %s12, 1
    %p76 = por %p74, %p75
    %p77 = scmp.ne.s32.totalorder %s69, %s72
    %p78 = scmp.eq.s32.totalorder %s12, 0
    %p79 = por %p77, %p78
    %p80 = scmp.ne.s32.totalorder %s69, %s72
    %p81 = scmp.eq.s32.totalorder %s17, 1
    %p82 = por %p80, %p81
    %p83 = scmp.ne.s32.totalorder %s72, %s73
    %p84 = scmp.eq.s32.totalorder %s17, 0
    %p85 = por %p83, %p84
    %p86 = scmp.ne.s32.totalorder %s72, %s73
    %p87 = scmp.eq.s32.totalorder %s18, 1
    %p88 = por %p86, %p87
    %p90 = scmp.ne.s32.totalorder %s73, %s89
    %p91 = scmp.eq.s32.totalorder %s18, 0
    %p92 = por %p90, %p91
    %s93 = ssub.s32 %s21, %s30
    %p94 = scmp.eq.s32.totalorder %s93, 0
    %s96 = sadd.s32 %s95, 1
    %s97 = scalar_select %p94, %s95, %s96
    %p100 = pneg %p94
    %p101 = scmp.eq.s32.totalorder %s12, 1
    %p102 = por %p100, %p101
    %p103 = scmp.ne.s32.totalorder %s95, %s98
    %p104 = scmp.eq.s32.totalorder %s12, 0
    %p105 = por %p103, %p104
    %p106 = scmp.ne.s32.totalorder %s95, %s98
    %p107 = scmp.eq.s32.totalorder %s17, 1
    %p108 = por %p106, %p107
    %p109 = scmp.ne.s32.totalorder %s98, %s99
    %p110 = scmp.eq.s32.totalorder %s17, 0
    %p111 = por %p109, %p110
    %p112 = scmp.ne.s32.totalorder %s98, %s99
    %p113 = scmp.eq.s32.totalorder %s18, 1
    %p114 = por %p112, %p113
    %p116 = scmp.ne.s32.totalorder %s99, %s115
    %p117 = scmp.eq.s32.totalorder %s18, 0
    %p118 = por %p116, %p117
    %s119 = ssub.s32 %s21, %s30
    %s120 = ssub.s32 %s20, %s34
    %s121 = sor.u32 %s119, %s120
    %p122 = scmp.eq.s32.totalorder %s121, 0
    %s124 = sadd.s32 %s123, 1
    %s125 = scalar_select %p122, %s123, %s124
    %p128 = pneg %p122
    %p129 = scmp.eq.s32.totalorder %s12, 1
    %p130 = por %p128, %p129
    %p131 = scmp.ne.s32.totalorder %s123, %s126
    %p132 = scmp.eq.s32.totalorder %s12, 0
    %p133 = por %p131, %p132
    %p134 = scmp.ne.s32.totalorder %s123, %s126
    %p135 = scmp.eq.s32.totalorder %s17, 1
    %p136 = por %p134, %p135
    %p137 = scmp.ne.s32.totalorder %s126, %s127
    %p138 = scmp.eq.s32.totalorder %s17, 0
    %p139 = por %p137, %p138
    %p140 = scmp.ne.s32.totalorder %s126, %s127
    %p141 = scmp.eq.s32.totalorder %s18, 1
    %p142 = por %p140, %p141
    %p144 = scmp.ne.s32.totalorder %s127, %s143
    %p145 = scmp.eq.s32.totalorder %s18, 0
    %p146 = por %p144, %p145
    %s147 = ssub.s32 %s19, %s38
    %s148 = ssub.s32 %s20, %s34
    %s149 = sor.u32 %s147, %s148
    %p150 = scmp.eq.s32.totalorder %s149, 0
    %s152 = sadd.s32 %s151, 1
    %s153 = scalar_select %p150, %s151, %s152
    %p156 = pneg %p150
    %p157 = scmp.eq.s32.totalorder %s12, 1
    %p158 = por %p156, %p157
    %p159 = scmp.ne.s32.totalorder %s151, %s154
    %p160 = scmp.eq.s32.totalorder %s12, 0
    %p161 = por %p159, %p160
    %p162 = scmp.ne.s32.totalorder %s151, %s154
    %p163 = scmp.eq.s32.totalorder %s17, 1
    %p164 = por %p162, %p163
    %p165 = scmp.ne.s32.totalorder %s154, %s155
    %p166 = scmp.eq.s32.totalorder %s17, 0
    %p167 = por %p165, %p166
    %p168 = scmp.ne.s32.totalorder %s154, %s155
    %p169 = scmp.eq.s32.totalorder %s18, 1
    %p170 = por %p168, %p169
    %p172 = scmp.ne.s32.totalorder %s155, %s171
    %p173 = scmp.eq.s32.totalorder %s18, 0
    %p174 = por %p172, %p173
    %s175 = ssub.s32 %s19, %s38
    %p176 = scmp.eq.s32.totalorder %s175, 0
    %s178 = sadd.s32 %s177, 1
    %s179 = scalar_select %p176, %s177, %s178
    %p182 = pneg %p176
    %p183 = scmp.eq.s32.totalorder %s12, 1
    %p184 = por %p182, %p183
    %p185 = scmp.ne.s32.totalorder %s177, %s180
    %p186 = scmp.eq.s32.totalorder %s12, 0
    %p187 = por %p185, %p186
    %p188 = scmp.ne.s32.totalorder %s177, %s180
    %p189 = scmp.eq.s32.totalorder %s17, 1
    %p190 = por %p188, %p189
    %p191 = scmp.ne.s32.totalorder %s180, %s181
    %p192 = scmp.eq.s32.totalorder %s17, 0
    %p193 = por %p191, %p192
    %p194 = scmp.ne.s32.totalorder %s180, %s181
    %p195 = scmp.eq.s32.totalorder %s18, 1
    %p196 = por %p194, %p195
    %p198 = scmp.ne.s32.totalorder %s181, %s197
    %p199 = scmp.eq.s32.totalorder %s18, 0
    %p200 = por %p198, %p199
    %p201 = scmp.le.s32.totalorder 1, %s12
    %p202 = scmp.lt.s32.totalorder %s12, 3
    %p203 = pnand %p201, %p202
    %p204 = pneg %p203
    // Predicated region
    $region9: #{densenet2_forward.24} parent=5 // pred_check
      _
    $region10: #{densenet2_forward.24} parent=5 // pred_check_branch
      %206 = sbr.rel (%p203) target = $region12
    $region11: #{densenet2_forward.24} parent=5 // pred_region
      %s207 = ssub.s32 %s12, 1
      // Predicated region
      $region13: #{densenet2_forward.24} parent=11 // pred_check
        %p208 = pneg %p85
      $region14: #{densenet2_forward.24} parent=11 // pred_check_branch
        %210 = sbr.rel (%p208) target = $region16
      $region15: #{densenet2_forward.24} parent=11 // pred_region
        %p211 = scmp.lt.s32.totalorder %s24, 0
        %s212 = scalar_select %p211, %s24, 0
        %s213 = scalar_lea.vmem %s1, %s212
      $region16: #{densenet2_forward.24} parent=11 // pred_fallthru
        _
      // Predicated region
      $region17: #{densenet2_forward.24} parent=11 // pred_check
        %p214 = pneg %p111
      $region18: #{densenet2_forward.24} parent=11 // pred_check_branch
        %216 = sbr.rel (%p214) target = $region20
      $region19: #{densenet2_forward.24} parent=11 // pred_region
        %p217 = scmp.lt.s32.totalorder %s24, 0
        %s218 = scalar_select %p217, %s24, 0
        %s219 = scalar_lea.vmem %s2, %s218
      $region20: #{densenet2_forward.24} parent=11 // pred_fallthru
        _
      // Predicated region
      $region21: #{densenet2_forward.24} parent=11 // pred_check
        %p220 = pneg %p139
      $region22: #{densenet2_forward.24} parent=11 // pred_check_branch
        %222 = sbr.rel (%p220) target = $region24
      $region23: #{densenet2_forward.24} parent=11 // pred_region
        %s223 = smul.u32 8, %s24
        %p224 = scmp.lt.s32.totalorder %s223, 7
        %s225 = scalar_select %p224, %s223, 7
        %p226 = scmp.lt.s32.totalorder %s23, 0
        %s227 = scalar_select %p226, %s23, 0
        %s228 = sadd.s32 %s227, %s225
        %s229 = smul.addr %s228, 4
        %s230 = scalar_lea.vmem %s3, %s229
        %s231 = smul.u32 8, %s24
      $region24: #{densenet2_forward.24} parent=11 // pred_fallthru
        _
    $region12: #{densenet2_forward.24} parent=5 // pred_fallthru
      _
    %p232 = scmp.lt.s32.totalorder %s12, 2
    // Predicated region
    $region25: #{densenet2_forward.24} parent=5 // pred_check
      %p233 = pneg %p232
    $region26: #{densenet2_forward.24} parent=5 // pred_check_branch
      %235 = sbr.rel (%p233) target = $region28
    $region27: #{densenet2_forward.24} parent=5 // pred_region
      // Predicated region
      $region29: #{densenet2_forward.24} parent=27 // pred_check
        %p236 = pneg %p53
      $region30: #{densenet2_forward.24} parent=27 // pred_check_branch
        %238 = sbr.rel (%p236) target = $region32
      $region31: #{densenet2_forward.24} parent=27 // pred_region
        %s239 = smul.u32 8, %s19
        %p240 = scmp.lt.s32.totalorder %s239, 15
        %s241 = scalar_select %p240, %s239, 15
        %p242 = scmp.lt.s32.totalorder %s21, 0
        %s243 = scalar_select %p242, %s21, 0
        %s244 = sadd.s32 %s243, %s241
        %s245 = smul.addr %s244, 4
        %s246 = scalar_lea.vmem %s0, %s245
        %s247 = smul.u32 8, %s19
      $region32: #{densenet2_forward.24} parent=27 // pred_fallthru
        _
    $region28: #{densenet2_forward.24} parent=5 // pred_fallthru
      _
    %p248 = scmp.le.s32.totalorder 1, %s12
    %p249 = scmp.lt.s32.totalorder %s12, 3
    %p250 = pnand %p248, %p249
    %p251 = pneg %p250
    // Predicated region
    $region33: #{densenet2_forward.24} parent=5 // pred_check
      _
    $region34: #{densenet2_forward.24} parent=5 // pred_check_branch
      %253 = sbr.rel (%p250) target = $region36
    $region35: #{densenet2_forward.24} parent=5 // pred_region
      %s254 = ssub.s32 %s12, 1
      %s255 = smul.u32 8, %s22
      %p256 = scmp.lt.s32.totalorder %s255, 15
      %s257 = scalar_select %p256, %s255, 15
      %p258 = scmp.lt.s32.totalorder %s24, 0
      %s259 = scalar_select %p258, %s24, 0
      %s260 = sadd.s32 %s259, %s257
      %s261 = smul.addr %s260, 4
      %s262 = scalar_lea.vmem %s0, %s261
      %p263 = pneg %p59
      %p264 = pneg %p56
      %p265 = scmp.lt.s32.totalorder %s24, 0
      %s266 = scalar_select %p265, %s24, 0
      %s267 = scalar_lea.vmem %s1, %s266
      %p268 = pneg %p85
      %p269 = pneg %p82
      %p270 = scmp.lt.s32.totalorder %s24, 0
      %s271 = scalar_select %p270, %s24, 0
      %s272 = scalar_lea.vmem %s2, %s271
      %p273 = pneg %p111
      %p274 = pneg %p108
      %s275 = smul.u32 8, %s24
      %p276 = scmp.lt.s32.totalorder %s275, 7
      %s277 = scalar_select %p276, %s275, 7
      %p278 = scmp.lt.s32.totalorder %s23, 0
      %s279 = scalar_select %p278, %s23, 0
      %s280 = sadd.s32 %s279, %s277
      %s281 = smul.addr %s280, 4
      %s282 = scalar_lea.vmem %s3, %s281
      %p283 = pneg %p139
      %p284 = pneg %p136
      %p285 = pneg %p167
      %p286 = pneg %p164
      %s287 = smul.u32 8, %s22
      %p288 = scmp.lt.s32.totalorder %s287, 15
      %s289 = scalar_select %p288, %s287, 15
      %p290 = scmp.lt.s32.totalorder %s23, 0
      %s291 = scalar_select %p290, %s23, 0
      %s292 = sadd.s32 %s291, %s289
      %s293 = smul.addr %s292, 4
      %s294 = scalar_lea.vmem %s4, %s293
      %p295 = pneg %p193
      %p296 = pneg %p190
      %p297 = scmp.lt.s32.totalorder %s22, 1
      %s298 = scalar_select %p297, %s22, 1
      %s299 = smul.addr %s298, 8
      %s300 = scalar_lea.vmem %s5, %s299
      %s301 = smul.u32 8, %s22
      %p302 = scmp.lt.s32.totalorder %s301, 15
      %s303 = scalar_select %p302, %s301, 15
      %p304 = scmp.lt.s32.totalorder %s24, 0
      %s305 = scalar_select %p304, %s24, 0
      %s306 = sadd.s32 %s305, %s303
      %s307 = smul.addr %s306, 4
      %s308 = scalar_lea.vmem %s0, %s307
      %s309 = smul.u32 8, %s22
      %p310 = scmp.lt.s32.totalorder %s24, 0
      %s311 = scalar_select %p310, %s24, 0
      %s312 = scalar_lea.vmem %s1, %s311
      %p313 = scmp.lt.s32.totalorder %s24, 0
      %s314 = scalar_select %p313, %s24, 0
      %s315 = scalar_lea.vmem %s2, %s314
      %s316 = smul.u32 8, %s24
      %p317 = scmp.lt.s32.totalorder %s316, 7
      %s318 = scalar_select %p317, %s316, 7
      %p319 = scmp.lt.s32.totalorder %s23, 0
      %s320 = scalar_select %p319, %s23, 0
      %s321 = sadd.s32 %s320, %s318
      %s322 = smul.addr %s321, 4
      %s323 = scalar_lea.vmem %s3, %s322
      %s324 = smul.u32 8, %s24
      %s325 = smul.u32 8, %s22
      %p326 = scmp.lt.s32.totalorder %s325, 15
      %s327 = scalar_select %p326, %s325, 15
      %p328 = scmp.lt.s32.totalorder %s23, 0
      %s329 = scalar_select %p328, %s23, 0
      %s330 = sadd.s32 %s329, %s327
      %s331 = smul.addr %s330, 4
      %s332 = scalar_lea.vmem %s4, %s331
      %s333 = smul.u32 8, %s22
      %p334 = scmp.lt.s32.totalorder %s22, 1
      %s335 = scalar_select %p334, %s22, 1
      %s336 = smul.addr %s335, 8
      %s337 = scalar_lea.vmem %s5, %s336
      %v339 = vld [vmem:[%s308] sm:$0xf]
      %v340 = vld [vmem:[%s308 + $0x4] sm:$0xf]
      %v341 = vld [vmem:[%s308 + $0x8] sm:$0xf]
      %v342 = vld [vmem:[%s308 + $0xc] sm:$0xf]
      %v343 = vld [vmem:[%s308 + $0x10] sm:$0xf]
      %v344 = vld [vmem:[%s308 + $0x14] sm:$0xf]
      %v345 = vld [vmem:[%s308 + $0x18] sm:$0xf]
      %v346 = vld [vmem:[%s308 + $0x1c] sm:$0xf]
      %v347 = vunpack.c.l.bf16 %v339
      %v348 = vunpack.c.l.bf16 %v340
      %v349 = vunpack.c.l.bf16 %v341
      %v350 = vunpack.c.l.bf16 %v342
      %v351 = vunpack.c.l.bf16 %v343
      %v352 = vunpack.c.l.bf16 %v344
      %v353 = vunpack.c.l.bf16 %v345
      %v354 = vunpack.c.l.bf16 %v346
      %v355 = vld [vmem:[%s312] sm:$0x1]
      %v357 = vperm.slane %v355, 0
      %v359 = vmul.f32 %v347, %v357
      %v360 = vmul.f32 %v348, %v357
      %v361 = vmul.f32 %v349, %v357
      %v362 = vmul.f32 %v350, %v357
      %v363 = vmul.f32 %v351, %v357
      %v364 = vmul.f32 %v352, %v357
      %v365 = vmul.f32 %v353, %v357
      %v366 = vmul.f32 %v354, %v357
      %v367 = vld [vmem:[%s315] sm:$0x1]
      %v369 = vperm.slane %v367, 0
      %v371 = vadd.f32 %v359, %v369
      %v372 = vadd.f32 %v360, %v369
      %v373 = vadd.f32 %v361, %v369
      %v374 = vadd.f32 %v362, %v369
      %v375 = vadd.f32 %v363, %v369
      %v376 = vadd.f32 %v364, %v369
      %v377 = vadd.f32 %v365, %v369
      %v378 = vadd.f32 %v366, %v369
      %v379 = vmax.f32 %v371, 0.0
      %v380 = vmax.f32 %v372, 0.0
      %v381 = vmax.f32 %v373, 0.0
      %v382 = vmax.f32 %v374, 0.0
      %v383 = vmax.f32 %v375, 0.0
      %v384 = vmax.f32 %v376, 0.0
      %v385 = vmax.f32 %v377, 0.0
      %v386 = vmax.f32 %v378, 0.0
      %v387 = vpack.c.bf16 %v380, %v379
      %v388 = vpack.c.bf16 %v382, %v381
      %v389 = vpack.c.bf16 %v384, %v383
      %v390 = vpack.c.bf16 %v386, %v385
      %v391 = vld [vmem:[%s323] sm:$0xf]
      %v392 = vld [vmem:[%s323 + $0x4] sm:$0xf]
      %v393 = vld [vmem:[%s323 + $0x8] sm:$0xf]
      %v394 = vld [vmem:[%s323 + $0xc] sm:$0xf]
      %v395 = vld [vmem:[%s323 + $0x10] sm:$0xf]
      %v396 = vld [vmem:[%s323 + $0x14] sm:$0xf]
      %v397 = vld [vmem:[%s323 + $0x18] sm:$0xf]
      %v398 = vld [vmem:[%s323 + $0x1c] sm:$0xf]
      %v407 = vunpack.c.l.b16 %v391
      %v408 = vunpack.c.l.b16 %v392
      %v409 = vunpack.c.l.b16 %v393
      %v410 = vunpack.c.l.b16 %v394
      %v411 = vunpack.c.l.b16 %v395
      %v412 = vunpack.c.l.b16 %v396
      %v413 = vunpack.c.l.b16 %v397
      %v414 = vunpack.c.l.b16 %v398
      %v415 = vpack.c.b16 %v408, %v407
      %v416 = vpack.c.b16 %v410, %v409
      %v417 = vpack.c.b16 %v412, %v411
      %v418 = vpack.c.b16 %v414, %v413
      %vm423 = vcmask 523264
      %v425 = vsel %vm423, %v387, 0
      %v428 = vsel %vm423, %v388, 0
      %v431 = vsel %vm423, %v389, 0
      %v434 = vsel %vm423, %v390, 0
      %436 = vmatpush.bf16.msra.mxu0 0
      %437 = vmatpush.bf16.msra.mxu0 0
      %438 = vmatpush.bf16.msra.mxu0 0
      %439 = vmatpush.bf16.msra.mxu0 0
      %440 = vmatpush.bf16.msra.mxu0 %v418
      %441 = vmatpush.bf16.msra.mxu0 %v417
      %442 = vmatpush.bf16.msra.mxu0 %v416
      %443 = vmatpush.bf16.msra.mxu0 %v415
      %444 = vmatmul.bf16.gmra.mxu0 %v425
      %v445 = vpop.f32.mrf.mxu0
      %v446 = vadd.f32 0.0, %v445
      %v447 = vpop.f32.mrf.mxu0
      %v448 = vadd.f32 0.0, %v447
      %449 = vmatmul.bf16.gmra.mxu0 %v428
      %v450 = vpop.f32.mrf.mxu0
      %v451 = vadd.f32 0.0, %v450
      %v452 = vpop.f32.mrf.mxu0
      %v453 = vadd.f32 0.0, %v452
      %454 = vmatmul.bf16.gmra.mxu0 %v431
      %v455 = vpop.f32.mrf.mxu0
      %v456 = vadd.f32 0.0, %v455
      %v457 = vpop.f32.mrf.mxu0
      %v458 = vadd.f32 0.0, %v457
      %459 = vmatmul.bf16.gmra.mxu0 %v434
      %v460 = vpop.f32.mrf.mxu0
      %v461 = vadd.f32 0.0, %v460
      %v462 = vpop.f32.mrf.mxu0
      %v463 = vadd.f32 0.0, %v462
      %464 = vdwg.mxu0
      %v465 = vpack.c.bf16 %v446, %v446
      %v466 = vpack.c.bf16 %v448, %v448
      %v467 = vpack.c.bf16 %v451, %v451
      %v468 = vpack.c.bf16 %v453, %v453
      %v469 = vpack.c.bf16 %v456, %v456
      %v470 = vpack.c.bf16 %v458, %v458
      %v471 = vpack.c.bf16 %v461, %v461
      %v472 = vpack.c.bf16 %v463, %v463
      %473 = vst [vmem:[%s332] sm:$0xf] %v465
      %474 = vst [vmem:[%s332 + $0x4] sm:$0xf] %v466
      %475 = vst [vmem:[%s332 + $0x8] sm:$0xf] %v467
      %476 = vst [vmem:[%s332 + $0xc] sm:$0xf] %v468
      %477 = vst [vmem:[%s332 + $0x10] sm:$0xf] %v469
      %478 = vst [vmem:[%s332 + $0x14] sm:$0xf] %v470
      %479 = vst [vmem:[%s332 + $0x18] sm:$0xf] %v471
      %480 = vst [vmem:[%s332 + $0x1c] sm:$0xf] %v472
      %v481 = vunpack.c.l.bf16 %v465
      %v482 = vunpack.c.l.bf16 %v466
      %v483 = vunpack.c.l.bf16 %v467
      %v484 = vunpack.c.l.bf16 %v468
      %v485 = vunpack.c.l.bf16 %v469
      %v486 = vunpack.c.l.bf16 %v470
      %v487 = vunpack.c.l.bf16 %v471
      %v488 = vunpack.c.l.bf16 %v472
      %v489 = vadd.f32 %v481, %v482
      %v490 = vadd.f32 %v489, %v483
      %v491 = vadd.f32 %v490, %v484
      %v492 = vadd.f32 %v491, %v485
      %v493 = vadd.f32 %v492, %v486
      %v494 = vadd.f32 %v493, %v487
      %v495 = vadd.f32 %v494, %v488
      %v496 = vrot.slane %v495, 4
      %v497 = vadd.f32 %v495, %v496
      %v498 = vrot.slane %v497, 2
      %v499 = vadd.f32 %v497, %v498
      %v500 = vrot.slane %v499, 1
      %v501 = vadd.f32 %v499, %v500
      %v502 = vmul.f32 %v481, %v481
      %v503 = vmul.f32 %v482, %v482
      %v504 = vmul.f32 %v483, %v483
      %v505 = vmul.f32 %v484, %v484
      %v506 = vmul.f32 %v485, %v485
      %v507 = vmul.f32 %v486, %v486
      %v508 = vmul.f32 %v487, %v487
      %v509 = vmul.f32 %v488, %v488
      %v510 = vadd.f32 %v502, %v503
      %v511 = vadd.f32 %v510, %v504
      %v512 = vadd.f32 %v511, %v505
      %v513 = vadd.f32 %v512, %v506
      %v514 = vadd.f32 %v513, %v507
      %v515 = vadd.f32 %v514, %v508
      %v516 = vadd.f32 %v515, %v509
      %v517 = vrot.slane %v516, 4
      %v518 = vadd.f32 %v516, %v517
      %v519 = vrot.slane %v518, 2
      %v520 = vadd.f32 %v518, %v519
      %v521 = vrot.slane %v520, 1
      %v522 = vadd.f32 %v520, %v521
      %v523 = vlaneseq
      %v524 = vshrl.u32 %v523, 7
      %vm525 = vcmp.eq.s32.totalorder %v524, 0
      %vm526 = vcmp.eq.s32.totalorder %v524, 1
      %v527 = vsel %vm526, %v522, 0.0
      %v528 = vsel %vm525, %v501, %v527
      %529 = vst [vmem:[%s337] sm:$0xff] %v528
      %s530 = smul.u32 8, %s22
      %p531 = scmp.lt.s32.totalorder %s530, 15
      %s532 = scalar_select %p531, %s530, 15
      %p533 = scmp.lt.s32.totalorder %s23, 0
      %s534 = scalar_select %p533, %s23, 0
      %s535 = sadd.s32 %s534, %s532
      %s536 = smul.addr %s535, 4
      %s537 = scalar_lea.vmem %s4, %s536
      %p538 = scmp.lt.s32.totalorder %s22, 1
      %s539 = scalar_select %p538, %s22, 1
      %s540 = smul.addr %s539, 8
      %s541 = scalar_lea.vmem %s5, %s540
      // Predicated region
      $region37: #{densenet2_forward.24} parent=35 // pred_check
        %p542 = pneg %p164
      $region38: #{densenet2_forward.24} parent=35 // pred_check_branch
        %544 = sbr.rel (%p542) target = $region40
      $region39: #{densenet2_forward.24} parent=35 // pred_region
        %s545 = smul.u32 8, %s22
      $region40: #{densenet2_forward.24} parent=35 // pred_fallthru
        _
      // Predicated region
      $region41: #{densenet2_forward.24} parent=35 // pred_check
        %p546 = pneg %p190
      $region42: #{densenet2_forward.24} parent=35 // pred_check_branch
        %548 = sbr.rel (%p546) target = $region44
      $region43: #{densenet2_forward.24} parent=35 // pred_region
        _
      $region44: #{densenet2_forward.24} parent=35 // pred_fallthru
        _
    $region36: #{densenet2_forward.24} parent=5 // pred_fallthru
      _
    %p549 = scmp.le.s32.totalorder 2, %s12
    // Predicated region
    $region45: #{densenet2_forward.24} parent=5 // pred_check
      %p550 = pneg %p549
    $region46: #{densenet2_forward.24} parent=5 // pred_check_branch
      %552 = sbr.rel (%p550) target = $region48
    $region47: #{densenet2_forward.24} parent=5 // pred_region
      %s553 = ssub.s32 %s12, 2
      // Predicated region
      $region49: #{densenet2_forward.24} parent=47 // pred_check
        %p554 = pneg %p170
      $region50: #{densenet2_forward.24} parent=47 // pred_check_branch
        %556 = sbr.rel (%p554) target = $region52
      $region51: #{densenet2_forward.24} parent=47 // pred_region
        %s557 = smul.u32 8, %s25
        %p558 = scmp.lt.s32.totalorder %s557, 15
        %s559 = scalar_select %p558, %s557, 15
        %p560 = scmp.lt.s32.totalorder %s26, 0
        %s561 = scalar_select %p560, %s26, 0
        %s562 = sadd.s32 %s561, %s559
        %s563 = smul.addr %s562, 4
        %s564 = scalar_lea.vmem %s4, %s563
      $region52: #{densenet2_forward.24} parent=47 // pred_fallthru
        _
      // Predicated region
      $region53: #{densenet2_forward.24} parent=47 // pred_check
        %p565 = pneg %p196
      $region54: #{densenet2_forward.24} parent=47 // pred_check_branch
        %567 = sbr.rel (%p565) target = $region56
      $region55: #{densenet2_forward.24} parent=47 // pred_region
        %p568 = scmp.lt.s32.totalorder %s25, 1
        %s569 = scalar_select %p568, %s25, 1
        %s570 = smul.addr %s569, 8
        %s571 = scalar_lea.vmem %s5, %s570
      $region56: #{densenet2_forward.24} parent=47 // pred_fallthru
        _
    $region48: #{densenet2_forward.24} parent=5 // pred_fallthru
      _
  $region6: #{densenet2_forward.24} parent=0 // loop_footer
    %s16 = sadd.s32 1, %s12
  $region7: #{densenet2_forward.24} parent=0 // loop_footer_branch
    %11 = sbr.rel target = $region3
  $region8: #{densenet2_forward.24} parent=0 // loop_exit
    _

// kernel: densenet2_forward.23
$region0: #{densenet2_forward.23}
  #allocation0 [shape = 'u32[]', space=smem, size = 0x4, offset = 0x4, fixed_abs, tag = 'smem constant byte address 0x4 - core index']
  #allocation1 [shape = 'u32[72,128]{1,0:T(1,128)}', space=vmem, size = 0x9000, scoped, tag = 'internal scratch']
  %s0 = inlined_call_operand.vmem [shape: bf16[512,128], index: 0, kind: input, shape index: {}]
  %s1 = inlined_call_operand.vmem [shape: bf16[128,64], index: 1, kind: input, shape index: {}]
  %s2 = inlined_call_operand.vmem [shape: bf16[512,64], index: 2, kind: output, shape index: {0}]
  %s3 = inlined_call_operand.vmem [shape: f32[2,8,64], index: 3, kind: output, shape index: {1}]
  %4 = xla_tuple %s2, %s3
  %s5 = sld [smem:[#allocation0]]
  $region49: #{densenet2_forward.23} parent=0
    _
  %s7 = ssub.s32 1, %s5
  %s8 = scalar_select 0, %s7, %s5
  loop: start=0, step=1, limit=4
  $region2: #{densenet2_forward.23} parent=0 // loop_pre_header
    _
  $region3: #{densenet2_forward.23} parent=0 // loop_header
    %s10 = sphi 0, %s14
    %p11 = scmp.ge.s32.totalorder %s10, 4
    %s17 = sphi 0, %s36
    %s18 = sphi 0, %s32
    %s19 = sphi 0, %s28
    %s20 = sphi 0, %s17
    %s21 = sphi 0, %s18
    %s22 = sphi 0, %s19
    %s23 = sphi 0, %s20
    %s24 = sphi 0, %s21
    %s25 = sphi 0, %s22
    %s41 = sphi 0, %s43
    %s44 = sphi 0, %s41
    %s45 = sphi 0, %s44
    %s61 = sphi 0, %s45
    %s69 = sphi 0, %s71
    %s72 = sphi 0, %s69
    %s73 = sphi 0, %s72
    %s89 = sphi 0, %s73
    %s97 = sphi 0, %s99
    %s100 = sphi 0, %s97
    %s101 = sphi 0, %s100
    %s117 = sphi 0, %s101
    %s123 = sphi 0, %s125
    %s126 = sphi 0, %s123
    %s127 = sphi 0, %s126
    %s143 = sphi 0, %s127
  $region4: #{densenet2_forward.23} parent=0 // loop_header_branch
    %13 = sbr.rel (%p11) target = $region8
  $region5: #{densenet2_forward.23} parent=0 // loop_body
    %s15 = ssub.s32 %s10, 1
    %s16 = ssub.s32 %s10, 2
    %s26 = sadd.s32 1, %s19
    %p27 = scmp.ge.s32.totalorder %s26, 1
    %s28 = scalar_select %p27, 0, %s26
    %s29 = sadd.s32 1, %s18
    %s30 = scalar_select %p27, %s29, %s18
    %p31 = scmp.ge.s32.totalorder %s30, 1
    %s32 = scalar_select %p31, 0, %s30
    %s33 = sadd.s32 1, %s17
    %s34 = scalar_select %p31, %s33, %s17
    %p35 = scmp.ge.s32.totalorder %s34, 2
    %s36 = scalar_select %p35, 0, %s34
    %s37 = ssub.s32 %s17, %s36
    %s38 = ssub.s32 %s19, %s28
    %s39 = sor.u32 %s37, %s38
    %p40 = scmp.eq.s32.totalorder %s39, 0
    %s42 = sadd.s32 %s41, 1
    %s43 = scalar_select %p40, %s41, %s42
    %p46 = pneg %p40
    %p47 = scmp.eq.s32.totalorder %s10, 1
    %p48 = por %p46, %p47
    %p49 = scmp.ne.s32.totalorder %s41, %s44
    %p50 = scmp.eq.s32.totalorder %s10, 0
    %p51 = por %p49, %p50
    %p52 = scmp.ne.s32.totalorder %s41, %s44
    %p53 = scmp.eq.s32.totalorder %s15, 1
    %p54 = por %p52, %p53
    %p55 = scmp.ne.s32.totalorder %s44, %s45
    %p56 = scmp.eq.s32.totalorder %s15, 0
    %p57 = por %p55, %p56
    %p58 = scmp.ne.s32.totalorder %s44, %s45
    %p59 = scmp.eq.s32.totalorder %s16, 1
    %p60 = por %p58, %p59
    %p62 = scmp.ne.s32.totalorder %s45, %s61
    %p63 = scmp.eq.s32.totalorder %s16, 0
    %p64 = por %p62, %p63
    %s65 = ssub.s32 %s19, %s28
    %s66 = ssub.s32 %s18, %s32
    %s67 = sor.u32 %s65, %s66
    %p68 = scmp.eq.s32.totalorder %s67, 0
    %s70 = sadd.s32 %s69, 1
    %s71 = scalar_select %p68, %s69, %s70
    %p74 = pneg %p68
    %p75 = scmp.eq.s32.totalorder %s10, 1
    %p76 = por %p74, %p75
    %p77 = scmp.ne.s32.totalorder %s69, %s72
    %p78 = scmp.eq.s32.totalorder %s10, 0
    %p79 = por %p77, %p78
    %p80 = scmp.ne.s32.totalorder %s69, %s72
    %p81 = scmp.eq.s32.totalorder %s15, 1
    %p82 = por %p80, %p81
    %p83 = scmp.ne.s32.totalorder %s72, %s73
    %p84 = scmp.eq.s32.totalorder %s15, 0
    %p85 = por %p83, %p84
    %p86 = scmp.ne.s32.totalorder %s72, %s73
    %p87 = scmp.eq.s32.totalorder %s16, 1
    %p88 = por %p86, %p87
    %p90 = scmp.ne.s32.totalorder %s73, %s89
    %p91 = scmp.eq.s32.totalorder %s16, 0
    %p92 = por %p90, %p91
    %s93 = ssub.s32 %s17, %s36
    %s94 = ssub.s32 %s18, %s32
    %s95 = sor.u32 %s93, %s94
    %p96 = scmp.eq.s32.totalorder %s95, 0
    %s98 = sadd.s32 %s97, 1
    %s99 = scalar_select %p96, %s97, %s98
    %p102 = pneg %p96
    %p103 = scmp.eq.s32.totalorder %s10, 1
    %p104 = por %p102, %p103
    %p105 = scmp.ne.s32.totalorder %s97, %s100
    %p106 = scmp.eq.s32.totalorder %s10, 0
    %p107 = por %p105, %p106
    %p108 = scmp.ne.s32.totalorder %s97, %s100
    %p109 = scmp.eq.s32.totalorder %s15, 1
    %p110 = por %p108, %p109
    %p111 = scmp.ne.s32.totalorder %s100, %s101
    %p112 = scmp.eq.s32.totalorder %s15, 0
    %p113 = por %p111, %p112
    %p114 = scmp.ne.s32.totalorder %s100, %s101
    %p115 = scmp.eq.s32.totalorder %s16, 1
    %p116 = por %p114, %p115
    %p118 = scmp.ne.s32.totalorder %s101, %s117
    %p119 = scmp.eq.s32.totalorder %s16, 0
    %p120 = por %p118, %p119
    %s121 = ssub.s32 %s17, %s36
    %p122 = scmp.eq.s32.totalorder %s121, 0
    %s124 = sadd.s32 %s123, 1
    %s125 = scalar_select %p122, %s123, %s124
    %p128 = pneg %p122
    %p129 = scmp.eq.s32.totalorder %s10, 1
    %p130 = por %p128, %p129
    %p131 = scmp.ne.s32.totalorder %s123, %s126
    %p132 = scmp.eq.s32.totalorder %s10, 0
    %p133 = por %p131, %p132
    %p134 = scmp.ne.s32.totalorder %s123, %s126
    %p135 = scmp.eq.s32.totalorder %s15, 1
    %p136 = por %p134, %p135
    %p137 = scmp.ne.s32.totalorder %s126, %s127
    %p138 = scmp.eq.s32.totalorder %s15, 0
    %p139 = por %p137, %p138
    %p140 = scmp.ne.s32.totalorder %s126, %s127
    %p141 = scmp.eq.s32.totalorder %s16, 1
    %p142 = por %p140, %p141
    %p144 = scmp.ne.s32.totalorder %s127, %s143
    %p145 = scmp.eq.s32.totalorder %s16, 0
    %p146 = por %p144, %p145
    %p147 = scmp.le.s32.totalorder 1, %s10
    %p148 = scmp.lt.s32.totalorder %s10, 3
    %p149 = pnand %p147, %p148
    %p150 = pneg %p149
    // Predicated region
    $region9: #{densenet2_forward.23} parent=5 // pred_check
      _
    $region10: #{densenet2_forward.23} parent=5 // pred_check_branch
      %152 = sbr.rel (%p149) target = $region12
    $region11: #{densenet2_forward.23} parent=5 // pred_region
      %s153 = ssub.s32 %s10, 1
      // Predicated region
      $region13: #{densenet2_forward.23} parent=11 // pred_check
        %p154 = pneg %p85
      $region14: #{densenet2_forward.23} parent=11 // pred_check_branch
        %156 = sbr.rel (%p154) target = $region16
      $region15: #{densenet2_forward.23} parent=11 // pred_region
        %s157 = smul.u32 16, %s22
        %p158 = scmp.lt.s32.totalorder %s157, 15
        %s159 = scalar_select %p158, %s157, 15
        %p160 = scmp.lt.s32.totalorder %s21, 0
        %s161 = scalar_select %p160, %s21, 0
        %s162 = sadd.s32 %s161, %s159
        %s163 = smul.addr %s162, 4
        %s164 = scalar_lea.vmem %s1, %s163
        %s165 = smul.u32 16, %s22
      $region16: #{densenet2_forward.23} parent=11 // pred_fallthru
        _
    $region12: #{densenet2_forward.23} parent=5 // pred_fallthru
      _
    %p166 = scmp.lt.s32.totalorder %s10, 2
    // Predicated region
    $region17: #{densenet2_forward.23} parent=5 // pred_check
      %p167 = pneg %p166
    $region18: #{densenet2_forward.23} parent=5 // pred_check_branch
      %169 = sbr.rel (%p167) target = $region20
    $region19: #{densenet2_forward.23} parent=5 // pred_region
      // Predicated region
      $region21: #{densenet2_forward.23} parent=19 // pred_check
        %p170 = pneg %p51
      $region22: #{densenet2_forward.23} parent=19 // pred_check_branch
        %172 = sbr.rel (%p170) target = $region24
      $region23: #{densenet2_forward.23} parent=19 // pred_region
        %s173 = smul.u32 32, %s17
        %p174 = scmp.lt.s32.totalorder %s173, 63
        %s175 = scalar_select %p174, %s173, 63
        %p176 = scmp.lt.s32.totalorder %s19, 0
        %s177 = scalar_select %p176, %s19, 0
        %s178 = sadd.s32 %s177, %s175
        %s179 = smul.addr %s178, 4
        %s180 = scalar_lea.vmem %s0, %s179
        %s181 = smul.u32 32, %s17
      $region24: #{densenet2_forward.23} parent=19 // pred_fallthru
        _
    $region20: #{densenet2_forward.23} parent=5 // pred_fallthru
      _
    %p182 = scmp.le.s32.totalorder 1, %s10
    %p183 = scmp.lt.s32.totalorder %s10, 3
    %p184 = pnand %p182, %p183
    %p185 = pneg %p184
    // Predicated region
    $region25: #{densenet2_forward.23} parent=5 // pred_check
      _
    $region26: #{densenet2_forward.23} parent=5 // pred_check_branch
      %187 = sbr.rel (%p184) target = $region28
    $region27: #{densenet2_forward.23} parent=5 // pred_region
      %s188 = ssub.s32 %s10, 1
      %s189 = smul.u32 32, %s20
      %p190 = scmp.lt.s32.totalorder %s189, 63
      %s191 = scalar_select %p190, %s189, 63
      %p192 = scmp.lt.s32.totalorder %s22, 0
      %s193 = scalar_select %p192, %s22, 0
      %s194 = sadd.s32 %s193, %s191
      %s195 = smul.addr %s194, 4
      %s196 = scalar_lea.vmem %s0, %s195
      %p197 = pneg %p57
      %p198 = pneg %p54
      %s199 = smul.u32 16, %s22
      %p200 = scmp.lt.s32.totalorder %s199, 15
      %s201 = scalar_select %p200, %s199, 15
      %p202 = scmp.lt.s32.totalorder %s21, 0
      %s203 = scalar_select %p202, %s21, 0
      %s204 = sadd.s32 %s203, %s201
      %s205 = smul.addr %s204, 4
      %s206 = scalar_lea.vmem %s1, %s205
      %p207 = pneg %p85
      %p208 = pneg %p82
      %p209 = pneg %p113
      %p210 = pneg %p110
      %s211 = smul.u32 32, %s20
      %p212 = scmp.lt.s32.totalorder %s211, 63
      %s213 = scalar_select %p212, %s211, 63
      %p214 = scmp.lt.s32.totalorder %s21, 0
      %s215 = scalar_select %p214, %s21, 0
      %s216 = sadd.s32 %s215, %s213
      %s217 = smul.addr %s216, 4
      %s218 = scalar_lea.vmem %s2, %s217
      %p219 = pneg %p139
      %p220 = pneg %p136
      %p221 = scmp.lt.s32.totalorder %s20, 1
      %s222 = scalar_select %p221, %s20, 1
      %s223 = smul.addr %s222, 8
      %s224 = scalar_lea.vmem %s3, %s223
      %s225 = smul.u32 32, %s20
      %p226 = scmp.lt.s32.totalorder %s225, 63
      %s227 = scalar_select %p226, %s225, 63
      %p228 = scmp.lt.s32.totalorder %s22, 0
      %s229 = scalar_select %p228, %s22, 0
      %s230 = sadd.s32 %s229, %s227
      %s231 = smul.addr %s230, 4
      %s232 = scalar_lea.vmem %s0, %s231
      %s233 = smul.u32 32, %s20
      %s234 = smul.u32 16, %s22
      %p235 = scmp.lt.s32.totalorder %s234, 15
      %s236 = scalar_select %p235, %s234, 15
      %p237 = scmp.lt.s32.totalorder %s21, 0
      %s238 = scalar_select %p237, %s21, 0
      %s239 = sadd.s32 %s238, %s236
      %s240 = smul.addr %s239, 4
      %s241 = scalar_lea.vmem %s1, %s240
      %s242 = smul.u32 16, %s22
      %s243 = smul.u32 32, %s20
      %p244 = scmp.lt.s32.totalorder %s243, 63
      %s245 = scalar_select %p244, %s243, 63
      %p246 = scmp.lt.s32.totalorder %s21, 0
      %s247 = scalar_select %p246, %s21, 0
      %s248 = sadd.s32 %s247, %s245
      %s249 = smul.addr %s248, 4
      %s250 = scalar_lea.vmem %s2, %s249
      %s251 = smul.u32 32, %s20
      %p252 = scmp.lt.s32.totalorder %s20, 1
      %s253 = scalar_select %p252, %s20, 1
      %s254 = smul.addr %s253, 8
      %s255 = scalar_lea.vmem %s3, %s254
      %v256 = vld [vmem:[%s232] sm:$0xf]
      %v257 = vld [vmem:[%s232 + $0x4] sm:$0xf]
      %v258 = vld [vmem:[%s232 + $0x8] sm:$0xf]
      %v259 = vld [vmem:[%s232 + $0xc] sm:$0xf]
      %v260 = vld [vmem:[%s232 + $0x10] sm:$0xf]
      %v261 = vld [vmem:[%s232 + $0x14] sm:$0xf]
      %v262 = vld [vmem:[%s232 + $0x18] sm:$0xf]
      %v263 = vld [vmem:[%s232 + $0x1c] sm:$0xf]
      %v264 = vld [vmem:[%s232 + $0x20] sm:$0xf]
      %v265 = vld [vmem:[%s232 + $0x24] sm:$0xf]
      %v266 = vld [vmem:[%s232 + $0x28] sm:$0xf]
      %v267 = vld [vmem:[%s232 + $0x2c] sm:$0xf]
      %v268 = vld [vmem:[%s232 + $0x30] sm:$0xf]
      %v269 = vld [vmem:[%s232 + $0x34] sm:$0xf]
      %v270 = vld [vmem:[%s232 + $0x38] sm:$0xf]
      %v271 = vld [vmem:[%s232 + $0x3c] sm:$0xf]
      %v272 = vld [vmem:[%s232 + $0x40] sm:$0xf]
      %v273 = vld [vmem:[%s232 + $0x44] sm:$0xf]
      %v274 = vld [vmem:[%s232 + $0x48] sm:$0xf]
      %v275 = vld [vmem:[%s232 + $0x4c] sm:$0xf]
      %v276 = vld [vmem:[%s232 + $0x50] sm:$0xf]
      %v277 = vld [vmem:[%s232 + $0x54] sm:$0xf]
      %v278 = vld [vmem:[%s232 + $0x58] sm:$0xf]
      %v279 = vld [vmem:[%s232 + $0x5c] sm:$0xf]
      %v280 = vld [vmem:[%s232 + $0x60] sm:$0xf]
      %v281 = vld [vmem:[%s232 + $0x64] sm:$0xf]
      %v282 = vld [vmem:[%s232 + $0x68] sm:$0xf]
      %v283 = vld [vmem:[%s232 + $0x6c] sm:$0xf]
      %v284 = vld [vmem:[%s232 + $0x70] sm:$0xf]
      %v285 = vld [vmem:[%s232 + $0x74] sm:$0xf]
      %v286 = vld [vmem:[%s232 + $0x78] sm:$0xf]
      %v287 = vld [vmem:[%s232 + $0x7c] sm:$0xf]
      %v288 = vld [vmem:[%s241] sm:$0xf]
      %v289 = vld [vmem:[%s241 + $0x4] sm:$0xf]
      %v290 = vld [vmem:[%s241 + $0x8] sm:$0xf]
      %v291 = vld [vmem:[%s241 + $0xc] sm:$0xf]
      %v292 = vld [vmem:[%s241 + $0x10] sm:$0xf]
      %v293 = vld [vmem:[%s241 + $0x14] sm:$0xf]
      %v294 = vld [vmem:[%s241 + $0x18] sm:$0xf]
      %v295 = vld [vmem:[%s241 + $0x1c] sm:$0xf]
      %v296 = vld [vmem:[%s241 + $0x20] sm:$0xf]
      %v297 = vld [vmem:[%s241 + $0x24] sm:$0xf]
      %v298 = vld [vmem:[%s241 + $0x28] sm:$0xf]
      %v299 = vld [vmem:[%s241 + $0x2c] sm:$0xf]
      %v300 = vld [vmem:[%s241 + $0x30] sm:$0xf]
      %v301 = vld [vmem:[%s241 + $0x34] sm:$0xf]
      %v302 = vld [vmem:[%s241 + $0x38] sm:$0xf]
      %v303 = vld [vmem:[%s241 + $0x3c] sm:$0xf]
      %v336 = vunpack.c.l.b16 %v256
      %v337 = vunpack.c.l.b16 %v257
      %v338 = vunpack.c.l.b16 %v258
      %v339 = vunpack.c.l.b16 %v259
      %v340 = vunpack.c.l.b16 %v260
      %v341 = vunpack.c.l.b16 %v261
      %v342 = vunpack.c.l.b16 %v262
      %v343 = vunpack.c.l.b16 %v263
      %v344 = vunpack.c.l.b16 %v264
      %v345 = vunpack.c.l.b16 %v265
      %v346 = vunpack.c.l.b16 %v266
      %v347 = vunpack.c.l.b16 %v267
      %v348 = vunpack.c.l.b16 %v268
      %v349 = vunpack.c.l.b16 %v269
      %v350 = vunpack.c.l.b16 %v270
      %v351 = vunpack.c.l.b16 %v271
      %v352 = vunpack.c.l.b16 %v272
      %v353 = vunpack.c.l.b16 %v273
      %v354 = vunpack.c.l.b16 %v274
      %v355 = vunpack.c.l.b16 %v275
      %v356 = vunpack.c.l.b16 %v276
      %v357 = vunpack.c.l.b16 %v277
      %v358 = vunpack.c.l.b16 %v278
      %v359 = vunpack.c.l.b16 %v279
      %v360 = vunpack.c.l.b16 %v280
      %v361 = vunpack.c.l.b16 %v281
      %v362 = vunpack.c.l.b16 %v282
      %v363 = vunpack.c.l.b16 %v283
      %v364 = vunpack.c.l.b16 %v284
      %v365 = vunpack.c.l.b16 %v285
      %v366 = vunpack.c.l.b16 %v286
      %v367 = vunpack.c.l.b16 %v287
      %v368 = vpack.c.b16 %v337, %v336
      %v369 = vpack.c.b16 %v339, %v338
      %v370 = vpack.c.b16 %v341, %v340
      %v371 = vpack.c.b16 %v343, %v342
      %v372 = vpack.c.b16 %v345, %v344
      %v373 = vpack.c.b16 %v347, %v346
      %v374 = vpack.c.b16 %v349, %v348
      %v375 = vpack.c.b16 %v351, %v350
      %v376 = vpack.c.b16 %v353, %v352
      %v377 = vpack.c.b16 %v355, %v354
      %v378 = vpack.c.b16 %v357, %v356
      %v379 = vpack.c.b16 %v359, %v358
      %v380 = vpack.c.b16 %v361, %v360
      %v381 = vpack.c.b16 %v363, %v362
      %v382 = vpack.c.b16 %v365, %v364
      %v383 = vpack.c.b16 %v367, %v366
      %v416 = vunpack.c.l.b16 %v288
      %v417 = vunpack.c.l.b16 %v289
      %v418 = vunpack.c.l.b16 %v290
      %v419 = vunpack.c.l.b16 %v291
      %v420 = vunpack.c.l.b16 %v292
      %v421 = vunpack.c.l.b16 %v293
      %v422 = vunpack.c.l.b16 %v294
      %v423 = vunpack.c.l.b16 %v295
      %v424 = vunpack.c.l.b16 %v296
      %v425 = vunpack.c.l.b16 %v297
      %v426 = vunpack.c.l.b16 %v298
      %v427 = vunpack.c.l.b16 %v299
      %v428 = vunpack.c.l.b16 %v300
      %v429 = vunpack.c.l.b16 %v301
      %v430 = vunpack.c.l.b16 %v302
      %v431 = vunpack.c.l.b16 %v303
      %v432 = vpack.c.b16 %v417, %v416
      %v433 = vpack.c.b16 %v419, %v418
      %v434 = vpack.c.b16 %v421, %v420
      %v435 = vpack.c.b16 %v423, %v422
      %v436 = vpack.c.b16 %v425, %v424
      %v437 = vpack.c.b16 %v427, %v426
      %v438 = vpack.c.b16 %v429, %v428
      %v439 = vpack.c.b16 %v431, %v430
      %448 = vmatpush.bf16.msra.mxu0 %v439
      %449 = vmatpush.bf16.msra.mxu0 %v438
      %450 = vmatpush.bf16.msra.mxu0 %v437
      %451 = vmatpush.bf16.msra.mxu0 %v436
      %452 = vmatpush.bf16.msra.mxu0 %v435
      %453 = vmatpush.bf16.msra.mxu0 %v434
      %454 = vmatpush.bf16.msra.mxu0 %v433
      %455 = vmatpush.bf16.msra.mxu0 %v432
      %456 = vmatmul.bf16.gmra.mxu0 %v368
      %v457 = vpop.f32.mrf.mxu0
      %v458 = vadd.f32 0.0, %v457
      %v459 = vpop.f32.mrf.mxu0
      %v460 = vadd.f32 0.0, %v459
      %461 = vmatmul.bf16.gmra.mxu0 %v369
      %v462 = vpop.f32.mrf.mxu0
      %v463 = vadd.f32 0.0, %v462
      %v464 = vpop.f32.mrf.mxu0
      %v465 = vadd.f32 0.0, %v464
      %466 = vmatmul.bf16.gmra.mxu0 %v370
      %v467 = vpop.f32.mrf.mxu0
      %v468 = vadd.f32 0.0, %v467
      %v469 = vpop.f32.mrf.mxu0
      %v470 = vadd.f32 0.0, %v469
      %471 = vmatmul.bf16.gmra.mxu0 %v371
      %v472 = vpop.f32.mrf.mxu0
      %v473 = vadd.f32 0.0, %v472
      %v474 = vpop.f32.mrf.mxu0
      %v475 = vadd.f32 0.0, %v474
      %476 = vmatmul.bf16.gmra.mxu0 %v372
      %v477 = vpop.f32.mrf.mxu0
      %v478 = vadd.f32 0.0, %v477
      %v479 = vpop.f32.mrf.mxu0
      %v480 = vadd.f32 0.0, %v479
      %481 = vmatmul.bf16.gmra.mxu0 %v373
      %v482 = vpop.f32.mrf.mxu0
      %v483 = vadd.f32 0.0, %v482
      %v484 = vpop.f32.mrf.mxu0
      %v485 = vadd.f32 0.0, %v484
      %486 = vmatmul.bf16.gmra.mxu0 %v374
      %v487 = vpop.f32.mrf.mxu0
      %v488 = vadd.f32 0.0, %v487
      %v489 = vpop.f32.mrf.mxu0
      %v490 = vadd.f32 0.0, %v489
      %491 = vmatmul.bf16.gmra.mxu0 %v375
      %v492 = vpop.f32.mrf.mxu0
      %v493 = vadd.f32 0.0, %v492
      %v494 = vpop.f32.mrf.mxu0
      %v495 = vadd.f32 0.0, %v494
      %496 = vmatmul.bf16.gmra.mxu0 %v376
      %v497 = vpop.f32.mrf.mxu0
      %v498 = vadd.f32 0.0, %v497
      %v499 = vpop.f32.mrf.mxu0
      %v500 = vadd.f32 0.0, %v499
      %501 = vmatmul.bf16.gmra.mxu0 %v377
      %v502 = vpop.f32.mrf.mxu0
      %v503 = vadd.f32 0.0, %v502
      %v504 = vpop.f32.mrf.mxu0
      %v505 = vadd.f32 0.0, %v504
      %506 = vmatmul.bf16.gmra.mxu0 %v378
      %v507 = vpop.f32.mrf.mxu0
      %v508 = vadd.f32 0.0, %v507
      %v509 = vpop.f32.mrf.mxu0
      %v510 = vadd.f32 0.0, %v509
      %511 = vmatmul.bf16.gmra.mxu0 %v379
      %v512 = vpop.f32.mrf.mxu0
      %v513 = vadd.f32 0.0, %v512
      %v514 = vpop.f32.mrf.mxu0
      %v515 = vadd.f32 0.0, %v514
      %516 = vmatmul.bf16.gmra.mxu0 %v380
      %v517 = vpop.f32.mrf.mxu0
      %v518 = vadd.f32 0.0, %v517
      %v519 = vpop.f32.mrf.mxu0
      %v520 = vadd.f32 0.0, %v519
      %521 = vmatmul.bf16.gmra.mxu0 %v381
      %v522 = vpop.f32.mrf.mxu0
      %v523 = vadd.f32 0.0, %v522
      %v524 = vpop.f32.mrf.mxu0
      %v525 = vadd.f32 0.0, %v524
      %526 = vmatmul.bf16.gmra.mxu0 %v382
      %v527 = vpop.f32.mrf.mxu0
      %v528 = vadd.f32 0.0, %v527
      %v529 = vpop.f32.mrf.mxu0
      %v530 = vadd.f32 0.0, %v529
      %531 = vmatmul.bf16.gmra.mxu0 %v383
      %v532 = vpop.f32.mrf.mxu0
      %v533 = vadd.f32 0.0, %v532
      %v534 = vpop.f32.mrf.mxu0
      %v535 = vadd.f32 0.0, %v534
      %536 = vdwg.mxu0
      %v537 = vpack.c.bf16 %v458, %v458
      %v538 = vpack.c.bf16 %v460, %v460
      %v539 = vpack.c.bf16 %v463, %v463
      %v540 = vpack.c.bf16 %v465, %v465
      %v541 = vpack.c.bf16 %v468, %v468
      %v542 = vpack.c.bf16 %v470, %v470
      %v543 = vpack.c.bf16 %v473, %v473
      %v544 = vpack.c.bf16 %v475, %v475
      %v545 = vpack.c.bf16 %v478, %v478
      %v546 = vpack.c.bf16 %v480, %v480
      %v547 = vpack.c.bf16 %v483, %v483
      %v548 = vpack.c.bf16 %v485, %v485
      %v549 = vpack.c.bf16 %v488, %v488
      %v550 = vpack.c.bf16 %v490, %v490
      %v551 = vpack.c.bf16 %v493, %v493
      %v552 = vpack.c.bf16 %v495, %v495
      %v553 = vpack.c.bf16 %v498, %v498
      %v554 = vpack.c.bf16 %v500, %v500
      %v555 = vpack.c.bf16 %v503, %v503
      %v556 = vpack.c.bf16 %v505, %v505
      %v557 = vpack.c.bf16 %v508, %v508
      %v558 = vpack.c.bf16 %v510, %v510
      %v559 = vpack.c.bf16 %v513, %v513
      %v560 = vpack.c.bf16 %v515, %v515
      %v561 = vpack.c.bf16 %v518, %v518
      %v562 = vpack.c.bf16 %v520, %v520
      %v563 = vpack.c.bf16 %v523, %v523
      %v564 = vpack.c.bf16 %v525, %v525
      %v565 = vpack.c.bf16 %v528, %v528
      %v566 = vpack.c.bf16 %v530, %v530
      %v567 = vpack.c.bf16 %v533, %v533
      %v568 = vpack.c.bf16 %v535, %v535
      %vm569 = vcmask 519168
      %570 = vst.msk [vmem:[%s250] sm:$0xf] %vm569, %v537
      %571 = vst.msk [vmem:[%s250 + $0x4] sm:$0xf] %vm569, %v538
      %572 = vst.msk [vmem:[%s250 + $0x8] sm:$0xf] %vm569, %v539
      %573 = vst.msk [vmem:[%s250 + $0xc] sm:$0xf] %vm569, %v540
      %574 = vst.msk [vmem:[%s250 + $0x10] sm:$0xf] %vm569, %v541
      %575 = vst.msk [vmem:[%s250 + $0x14] sm:$0xf] %vm569, %v542
      %576 = vst.msk [vmem:[%s250 + $0x18] sm:$0xf] %vm569, %v543
      %577 = vst.msk [vmem:[%s250 + $0x1c] sm:$0xf] %vm569, %v544
      %578 = vst.msk [vmem:[%s250 + $0x20] sm:$0xf] %vm569, %v545
      %579 = vst.msk [vmem:[%s250 + $0x24] sm:$0xf] %vm569, %v546
      %580 = vst.msk [vmem:[%s250 + $0x28] sm:$0xf] %vm569, %v547
      %581 = vst.msk [vmem:[%s250 + $0x2c] sm:$0xf] %vm569, %v548
      %582 = vst.msk [vmem:[%s250 + $0x30] sm:$0xf] %vm569, %v549
      %583 = vst.msk [vmem:[%s250 + $0x34] sm:$0xf] %vm569, %v550
      %584 = vst.msk [vmem:[%s250 + $0x38] sm:$0xf] %vm569, %v551
      %585 = vst.msk [vmem:[%s250 + $0x3c] sm:$0xf] %vm569, %v552
      %586 = vst.msk [vmem:[%s250 + $0x40] sm:$0xf] %vm569, %v553
      %587 = vst.msk [vmem:[%s250 + $0x44] sm:$0xf] %vm569, %v554
      %588 = vst.msk [vmem:[%s250 + $0x48] sm:$0xf] %vm569, %v555
      %589 = vst.msk [vmem:[%s250 + $0x4c] sm:$0xf] %vm569, %v556
      %590 = vst.msk [vmem:[%s250 + $0x50] sm:$0xf] %vm569, %v557
      %591 = vst.msk [vmem:[%s250 + $0x54] sm:$0xf] %vm569, %v558
      %592 = vst.msk [vmem:[%s250 + $0x58] sm:$0xf] %vm569, %v559
      %593 = vst.msk [vmem:[%s250 + $0x5c] sm:$0xf] %vm569, %v560
      %594 = vst.msk [vmem:[%s250 + $0x60] sm:$0xf] %vm569, %v561
      %595 = vst.msk [vmem:[%s250 + $0x64] sm:$0xf] %vm569, %v562
      %596 = vst.msk [vmem:[%s250 + $0x68] sm:$0xf] %vm569, %v563
      %597 = vst.msk [vmem:[%s250 + $0x6c] sm:$0xf] %vm569, %v564
      %598 = vst.msk [vmem:[%s250 + $0x70] sm:$0xf] %vm569, %v565
      %599 = vst.msk [vmem:[%s250 + $0x74] sm:$0xf] %vm569, %v566
      %600 = vst.msk [vmem:[%s250 + $0x78] sm:$0xf] %vm569, %v567
      %601 = vst.msk [vmem:[%s250 + $0x7c] sm:$0xf] %vm569, %v568
      %v602 = vunpack.c.l.bf16 %v537
      %v603 = vunpack.c.l.bf16 %v538
      %v604 = vunpack.c.l.bf16 %v539
      %v605 = vunpack.c.l.bf16 %v540
      %v606 = vunpack.c.l.bf16 %v541
      %v607 = vunpack.c.l.bf16 %v542
      %v608 = vunpack.c.l.bf16 %v543
      %v609 = vunpack.c.l.bf16 %v544
      %v610 = vunpack.c.l.bf16 %v545
      %v611 = vunpack.c.l.bf16 %v546
      %v612 = vunpack.c.l.bf16 %v547
      %v613 = vunpack.c.l.bf16 %v548
      %v614 = vunpack.c.l.bf16 %v549
      %v615 = vunpack.c.l.bf16 %v550
      %v616 = vunpack.c.l.bf16 %v551
      %v617 = vunpack.c.l.bf16 %v552
      %v618 = vunpack.c.l.bf16 %v553
      %v619 = vunpack.c.l.bf16 %v554
      %v620 = vunpack.c.l.bf16 %v555
      %v621 = vunpack.c.l.bf16 %v556
      %v622 = vunpack.c.l.bf16 %v557
      %v623 = vunpack.c.l.bf16 %v558
      %v624 = vunpack.c.l.bf16 %v559
      %v625 = vunpack.c.l.bf16 %v560
      %v626 = vunpack.c.l.bf16 %v561
      %v627 = vunpack.c.l.bf16 %v562
      %v628 = vunpack.c.l.bf16 %v563
      %v629 = vunpack.c.l.bf16 %v564
      %v630 = vunpack.c.l.bf16 %v565
      %v631 = vunpack.c.l.bf16 %v566
      %v632 = vunpack.c.l.bf16 %v567
      %v633 = vunpack.c.l.bf16 %v568
      %vm634 = vcmask 523264
      %v635 = vsel %vm634, %v602, 0.0
      %v636 = vsel %vm634, %v603, 0.0
      %v637 = vadd.f32 %v635, %v636
      %v638 = vsel %vm634, %v604, 0.0
      %v639 = vadd.f32 %v637, %v638
      %v640 = vsel %vm634, %v605, 0.0
      %v641 = vadd.f32 %v639, %v640
      %v642 = vsel %vm634, %v606, 0.0
      %v643 = vadd.f32 %v641, %v642
      %v644 = vsel %vm634, %v607, 0.0
      %v645 = vadd.f32 %v643, %v644
      %v646 = vsel %vm634, %v608, 0.0
      %v647 = vadd.f32 %v645, %v646
      %v648 = vsel %vm634, %v609, 0.0
      %v649 = vadd.f32 %v647, %v648
      %v650 = vsel %vm634, %v610, 0.0
      %v651 = vadd.f32 %v649, %v650
      %v652 = vsel %vm634, %v611, 0.0
      %v653 = vadd.f32 %v651, %v652
      %v654 = vsel %vm634, %v612, 0.0
      %v655 = vadd.f32 %v653, %v654
      %v656 = vsel %vm634, %v613, 0.0
      %v657 = vadd.f32 %v655, %v656
      %v658 = vsel %vm634, %v614, 0.0
      %v659 = vadd.f32 %v657, %v658
      %v660 = vsel %vm634, %v615, 0.0
      %v661 = vadd.f32 %v659, %v660
      %v662 = vsel %vm634, %v616, 0.0
      %v663 = vadd.f32 %v661, %v662
      %v664 = vsel %vm634, %v617, 0.0
      %v665 = vadd.f32 %v663, %v664
      %v666 = vsel %vm634, %v618, 0.0
      %v667 = vadd.f32 %v665, %v666
      %v668 = vsel %vm634, %v619, 0.0
      %v669 = vadd.f32 %v667, %v668
      %v670 = vsel %vm634, %v620, 0.0
      %v671 = vadd.f32 %v669, %v670
      %v672 = vsel %vm634, %v621, 0.0
      %v673 = vadd.f32 %v671, %v672
      %v674 = vsel %vm634, %v622, 0.0
      %v675 = vadd.f32 %v673, %v674
      %v676 = vsel %vm634, %v623, 0.0
      %v677 = vadd.f32 %v675, %v676
      %v678 = vsel %vm634, %v624, 0.0
      %v679 = vadd.f32 %v677, %v678
      %v680 = vsel %vm634, %v625, 0.0
      %v681 = vadd.f32 %v679, %v680
      %v682 = vsel %vm634, %v626, 0.0
      %v683 = vadd.f32 %v681, %v682
      %v684 = vsel %vm634, %v627, 0.0
      %v685 = vadd.f32 %v683, %v684
      %v686 = vsel %vm634, %v628, 0.0
      %v687 = vadd.f32 %v685, %v686
      %v688 = vsel %vm634, %v629, 0.0
      %v689 = vadd.f32 %v687, %v688
      %v690 = vsel %vm634, %v630, 0.0
      %v691 = vadd.f32 %v689, %v690
      %v692 = vsel %vm634, %v631, 0.0
      %v693 = vadd.f32 %v691, %v692
      %v694 = vsel %vm634, %v632, 0.0
      %v695 = vadd.f32 %v693, %v694
      %v696 = vsel %vm634, %v633, 0.0
      %v697 = vadd.f32 %v695, %v696
      %v698 = vrot.slane %v697, 4
      %v699 = vadd.f32 %v697, %v698
      %v700 = vrot.slane %v699, 2
      %v701 = vadd.f32 %v699, %v700
      %v702 = vrot.slane %v701, 1
      %v703 = vadd.f32 %v701, %v702
      %v704 = vmul.f32 %v602, %v602
      %v705 = vmul.f32 %v603, %v603
      %v706 = vmul.f32 %v604, %v604
      %v707 = vmul.f32 %v605, %v605
      %v708 = vmul.f32 %v606, %v606
      %v709 = vmul.f32 %v607, %v607
      %v710 = vmul.f32 %v608, %v608
      %v711 = vmul.f32 %v609, %v609
      %v712 = vmul.f32 %v610, %v610
      %v713 = vmul.f32 %v611, %v611
      %v714 = vmul.f32 %v612, %v612
      %v715 = vmul.f32 %v613, %v613
      %v716 = vmul.f32 %v614, %v614
      %v717 = vmul.f32 %v615, %v615
      %v718 = vmul.f32 %v616, %v616
      %v719 = vmul.f32 %v617, %v617
      %v720 = vmul.f32 %v618, %v618
      %v721 = vmul.f32 %v619, %v619
      %v722 = vmul.f32 %v620, %v620
      %v723 = vmul.f32 %v621, %v621
      %v724 = vmul.f32 %v622, %v622
      %v725 = vmul.f32 %v623, %v623
      %v726 = vmul.f32 %v624, %v624
      %v727 = vmul.f32 %v625, %v625
      %v728 = vmul.f32 %v626, %v626
      %v729 = vmul.f32 %v627, %v627
      %v730 = vmul.f32 %v628, %v628
      %v731 = vmul.f32 %v629, %v629
      %v732 = vmul.f32 %v630, %v630
      %v733 = vmul.f32 %v631, %v631
      %v734 = vmul.f32 %v632, %v632
      %v735 = vmul.f32 %v633, %v633
      %v736 = vsel %vm634, %v704, 0.0
      %v737 = vsel %vm634, %v705, 0.0
      %v738 = vadd.f32 %v736, %v737
      %v739 = vsel %vm634, %v706, 0.0
      %v740 = vadd.f32 %v738, %v739
      %v741 = vsel %vm634, %v707, 0.0
      %v742 = vadd.f32 %v740, %v741
      %v743 = vsel %vm634, %v708, 0.0
      %v744 = vadd.f32 %v742, %v743
      %v745 = vsel %vm634, %v709, 0.0
      %v746 = vadd.f32 %v744, %v745
      %v747 = vsel %vm634, %v710, 0.0
      %v748 = vadd.f32 %v746, %v747
      %v749 = vsel %vm634, %v711, 0.0
      %v750 = vadd.f32 %v748, %v749
      %v751 = vsel %vm634, %v712, 0.0
      %v752 = vadd.f32 %v750, %v751
      %v753 = vsel %vm634, %v713, 0.0
      %v754 = vadd.f32 %v752, %v753
      %v755 = vsel %vm634, %v714, 0.0
      %v756 = vadd.f32 %v754, %v755
      %v757 = vsel %vm634, %v715, 0.0
      %v758 = vadd.f32 %v756, %v757
      %v759 = vsel %vm634, %v716, 0.0
      %v760 = vadd.f32 %v758, %v759
      %v761 = vsel %vm634, %v717, 0.0
      %v762 = vadd.f32 %v760, %v761
      %v763 = vsel %vm634, %v718, 0.0
      %v764 = vadd.f32 %v762, %v763
      %v765 = vsel %vm634, %v719, 0.0
      %v766 = vadd.f32 %v764, %v765
      %v767 = vsel %vm634, %v720, 0.0
      %v768 = vadd.f32 %v766, %v767
      %v769 = vsel %vm634, %v721, 0.0
      %v770 = vadd.f32 %v768, %v769
      %v771 = vsel %vm634, %v722, 0.0
      %v772 = vadd.f32 %v770, %v771
      %v773 = vsel %vm634, %v723, 0.0
      %v774 = vadd.f32 %v772, %v773
      %v775 = vsel %vm634, %v724, 0.0
      %v776 = vadd.f32 %v774, %v775
      %v777 = vsel %vm634, %v725, 0.0
      %v778 = vadd.f32 %v776, %v777
      %v779 = vsel %vm634, %v726, 0.0
      %v780 = vadd.f32 %v778, %v779
      %v781 = vsel %vm634, %v727, 0.0
      %v782 = vadd.f32 %v780, %v781
      %v783 = vsel %vm634, %v728, 0.0
      %v784 = vadd.f32 %v782, %v783
      %v785 = vsel %vm634, %v729, 0.0
      %v786 = vadd.f32 %v784, %v785
      %v787 = vsel %vm634, %v730, 0.0
      %v788 = vadd.f32 %v786, %v787
      %v789 = vsel %vm634, %v731, 0.0
      %v790 = vadd.f32 %v788, %v789
      %v791 = vsel %vm634, %v732, 0.0
      %v792 = vadd.f32 %v790, %v791
      %v793 = vsel %vm634, %v733, 0.0
      %v794 = vadd.f32 %v792, %v793
      %v795 = vsel %vm634, %v734, 0.0
      %v796 = vadd.f32 %v794, %v795
      %v797 = vsel %vm634, %v735, 0.0
      %v798 = vadd.f32 %v796, %v797
      %v799 = vrot.slane %v798, 4
      %v800 = vadd.f32 %v798, %v799
      %v801 = vrot.slane %v800, 2
      %v802 = vadd.f32 %v800, %v801
      %v803 = vrot.slane %v802, 1
      %v804 = vadd.f32 %v802, %v803
      %v805 = vlaneseq
      %v806 = vshrl.u32 %v805, 7
      %vm807 = vcmp.eq.s32.totalorder %v806, 0
      %vm808 = vcmp.eq.s32.totalorder %v806, 1
      %v809 = vsel %vm808, %v804, 0.0
      %v810 = vsel %vm807, %v703, %v809
      %811 = vst.msk [vmem:[%s255] sm:$0xff] %vm634, %v810
      %s812 = smul.u32 32, %s20
      %p813 = scmp.lt.s32.totalorder %s812, 63
      %s814 = scalar_select %p813, %s812, 63
      %p815 = scmp.lt.s32.totalorder %s21, 0
      %s816 = scalar_select %p815, %s21, 0
      %s817 = sadd.s32 %s816, %s814
      %s818 = smul.addr %s817, 4
      %s819 = scalar_lea.vmem %s2, %s818
      %p820 = scmp.lt.s32.totalorder %s20, 1
      %s821 = scalar_select %p820, %s20, 1
      %s822 = smul.addr %s821, 8
      %s823 = scalar_lea.vmem %s3, %s822
      // Predicated region
      $region29: #{densenet2_forward.23} parent=27 // pred_check
        %p824 = pneg %p110
      $region30: #{densenet2_forward.23} parent=27 // pred_check_branch
        %826 = sbr.rel (%p824) target = $region32
      $region31: #{densenet2_forward.23} parent=27 // pred_region
        %s827 = smul.u32 32, %s20
      $region32: #{densenet2_forward.23} parent=27 // pred_fallthru
        _
      // Predicated region
      $region33: #{densenet2_forward.23} parent=27 // pred_check
        %p828 = pneg %p136
      $region34: #{densenet2_forward.23} parent=27 // pred_check_branch
        %830 = sbr.rel (%p828) target = $region36
      $region35: #{densenet2_forward.23} parent=27 // pred_region
        _
      $region36: #{densenet2_forward.23} parent=27 // pred_fallthru
        _
    $region28: #{densenet2_forward.23} parent=5 // pred_fallthru
      _
    %p831 = scmp.le.s32.totalorder 2, %s10
    // Predicated region
    $region37: #{densenet2_forward.23} parent=5 // pred_check
      %p832 = pneg %p831
    $region38: #{densenet2_forward.23} parent=5 // pred_check_branch
      %834 = sbr.rel (%p832) target = $region40
    $region39: #{densenet2_forward.23} parent=5 // pred_region
      %s835 = ssub.s32 %s10, 2
      // Predicated region
      $region41: #{densenet2_forward.23} parent=39 // pred_check
        %p836 = pneg %p116
      $region42: #{densenet2_forward.23} parent=39 // pred_check_branch
        %838 = sbr.rel (%p836) target = $region44
      $region43: #{densenet2_forward.23} parent=39 // pred_region
        %s839 = smul.u32 32, %s23
        %p840 = scmp.lt.s32.totalorder %s839, 63
        %s841 = scalar_select %p840, %s839, 63
        %p842 = scmp.lt.s32.totalorder %s24, 0
        %s843 = scalar_select %p842, %s24, 0
        %s844 = sadd.s32 %s843, %s841
        %s845 = smul.addr %s844, 4
        %s846 = scalar_lea.vmem %s2, %s845
      $region44: #{densenet2_forward.23} parent=39 // pred_fallthru
        _
      // Predicated region
      $region45: #{densenet2_forward.23} parent=39 // pred_check
        %p847 = pneg %p142
      $region46: #{densenet2_forward.23} parent=39 // pred_check_branch
        %849 = sbr.rel (%p847) target = $region48
      $region47: #{densenet2_forward.23} parent=39 // pred_region
        %p850 = scmp.lt.s32.totalorder %s23, 1
        %s851 = scalar_select %p850, %s23, 1
        %s852 = smul.addr %s851, 8
        %s853 = scalar_lea.vmem %s3, %s852
      $region48: #{densenet2_forward.23} parent=39 // pred_fallthru
        _
    $region40: #{densenet2_forward.23} parent=5 // pred_fallthru
      _
  $region6: #{densenet2_forward.23} parent=0 // loop_footer
    %s14 = sadd.s32 1, %s10
  $region7: #{densenet2_forward.23} parent=0 // loop_footer_branch
    %9 = sbr.rel target = $region3
  $region8: #{densenet2_forward.23} parent=0 // loop_exit
    _

// kernel: densenet2_forward.26
$region0: #{densenet2_forward.26}
  #allocation0 [shape = 'u32[]', space=smem, size = 0x4, offset = 0x4, fixed_abs, tag = 'smem constant byte address 0x4 - core index']
  #allocation1 [shape = 'u32[72,128]{1,0:T(1,128)}', space=vmem, size = 0x9000, scoped, tag = 'internal scratch']
  %s0 = inlined_call_operand.vmem [shape: bf16[128,96], index: 0, kind: input, shape index: {}]
  %s1 = inlined_call_operand.vmem [shape: f32[1,96], index: 1, kind: input, shape index: {}]
  %s2 = inlined_call_operand.vmem [shape: f32[1,96], index: 2, kind: input, shape index: {}]
  %s3 = inlined_call_operand.vmem [shape: bf16[96,48], index: 3, kind: input, shape index: {}]
  %s4 = inlined_call_operand.vmem [shape: bf16[128,48], index: 4, kind: output, shape index: {}]
  %s5 = sld [smem:[#allocation0]]
  $region49: #{densenet2_forward.26} parent=0
    _
  %s7 = ssub.s32 1, %s5
  %s8 = scalar_select 0, %s7, %s5
  loop: start=0, step=1, limit=4
  $region2: #{densenet2_forward.26} parent=0 // loop_pre_header
    _
  $region3: #{densenet2_forward.26} parent=0 // loop_header
    %s10 = sphi 0, %s14
    %p11 = scmp.ge.s32.totalorder %s10, 4
    %s17 = sphi 0, %s36
    %s18 = sphi 0, %s32
    %s19 = sphi 0, %s28
    %s20 = sphi 0, %s17
    %s21 = sphi 0, %s18
    %s22 = sphi 0, %s19
    %s23 = sphi 0, %s20
    %s24 = sphi 0, %s21
    %s25 = sphi 0, %s22
    %s41 = sphi 0, %s43
    %s44 = sphi 0, %s41
    %s45 = sphi 0, %s44
    %s61 = sphi 0, %s45
    %s67 = sphi 0, %s69
    %s70 = sphi 0, %s67
    %s71 = sphi 0, %s70
    %s87 = sphi 0, %s71
    %s93 = sphi 0, %s95
    %s96 = sphi 0, %s93
    %s97 = sphi 0, %s96
    %s113 = sphi 0, %s97
    %s121 = sphi 0, %s123
    %s124 = sphi 0, %s121
    %s125 = sphi 0, %s124
    %s141 = sphi 0, %s125
    %s149 = sphi 0, %s151
    %s152 = sphi 0, %s149
    %s153 = sphi 0, %s152
    %s169 = sphi 0, %s153
  $region4: #{densenet2_forward.26} parent=0 // loop_header_branch
    %13 = sbr.rel (%p11) target = $region8
  $region5: #{densenet2_forward.26} parent=0 // loop_body
    %s15 = ssub.s32 %s10, 1
    %s16 = ssub.s32 %s10, 2
    %s26 = sadd.s32 1, %s19
    %p27 = scmp.ge.s32.totalorder %s26, 1
    %s28 = scalar_select %p27, 0, %s26
    %s29 = sadd.s32 1, %s18
    %s30 = scalar_select %p27, %s29, %s18
    %p31 = scmp.ge.s32.totalorder %s30, 1
    %s32 = scalar_select %p31, 0, %s30
    %s33 = sadd.s32 1, %s17
    %s34 = scalar_select %p31, %s33, %s17
    %p35 = scmp.ge.s32.totalorder %s34, 2
    %s36 = scalar_select %p35, 0, %s34
    %s37 = ssub.s32 %s17, %s36
    %s38 = ssub.s32 %s19, %s28
    %s39 = sor.u32 %s37, %s38
    %p40 = scmp.eq.s32.totalorder %s39, 0
    %s42 = sadd.s32 %s41, 1
    %s43 = scalar_select %p40, %s41, %s42
    %p46 = pneg %p40
    %p47 = scmp.eq.s32.totalorder %s10, 1
    %p48 = por %p46, %p47
    %p49 = scmp.ne.s32.totalorder %s41, %s44
    %p50 = scmp.eq.s32.totalorder %s10, 0
    %p51 = por %p49, %p50
    %p52 = scmp.ne.s32.totalorder %s41, %s44
    %p53 = scmp.eq.s32.totalorder %s15, 1
    %p54 = por %p52, %p53
    %p55 = scmp.ne.s32.totalorder %s44, %s45
    %p56 = scmp.eq.s32.totalorder %s15, 0
    %p57 = por %p55, %p56
    %p58 = scmp.ne.s32.totalorder %s44, %s45
    %p59 = scmp.eq.s32.totalorder %s16, 1
    %p60 = por %p58, %p59
    %p62 = scmp.ne.s32.totalorder %s45, %s61
    %p63 = scmp.eq.s32.totalorder %s16, 0
    %p64 = por %p62, %p63
    %s65 = ssub.s32 %s19, %s28
    %p66 = scmp.eq.s32.totalorder %s65, 0
    %s68 = sadd.s32 %s67, 1
    %s69 = scalar_select %p66, %s67, %s68
    %p72 = pneg %p66
    %p73 = scmp.eq.s32.totalorder %s10, 1
    %p74 = por %p72, %p73
    %p75 = scmp.ne.s32.totalorder %s67, %s70
    %p76 = scmp.eq.s32.totalorder %s10, 0
    %p77 = por %p75, %p76
    %p78 = scmp.ne.s32.totalorder %s67, %s70
    %p79 = scmp.eq.s32.totalorder %s15, 1
    %p80 = por %p78, %p79
    %p81 = scmp.ne.s32.totalorder %s70, %s71
    %p82 = scmp.eq.s32.totalorder %s15, 0
    %p83 = por %p81, %p82
    %p84 = scmp.ne.s32.totalorder %s70, %s71
    %p85 = scmp.eq.s32.totalorder %s16, 1
    %p86 = por %p84, %p85
    %p88 = scmp.ne.s32.totalorder %s71, %s87
    %p89 = scmp.eq.s32.totalorder %s16, 0
    %p90 = por %p88, %p89
    %s91 = ssub.s32 %s19, %s28
    %p92 = scmp.eq.s32.totalorder %s91, 0
    %s94 = sadd.s32 %s93, 1
    %s95 = scalar_select %p92, %s93, %s94
    %p98 = pneg %p92
    %p99 = scmp.eq.s32.totalorder %s10, 1
    %p100 = por %p98, %p99
    %p101 = scmp.ne.s32.totalorder %s93, %s96
    %p102 = scmp.eq.s32.totalorder %s10, 0
    %p103 = por %p101, %p102
    %p104 = scmp.ne.s32.totalorder %s93, %s96
    %p105 = scmp.eq.s32.totalorder %s15, 1
    %p106 = por %p104, %p105
    %p107 = scmp.ne.s32.totalorder %s96, %s97
    %p108 = scmp.eq.s32.totalorder %s15, 0
    %p109 = por %p107, %p108
    %p110 = scmp.ne.s32.totalorder %s96, %s97
    %p111 = scmp.eq.s32.totalorder %s16, 1
    %p112 = por %p110, %p111
    %p114 = scmp.ne.s32.totalorder %s97, %s113
    %p115 = scmp.eq.s32.totalorder %s16, 0
    %p116 = por %p114, %p115
    %s117 = ssub.s32 %s19, %s28
    %s118 = ssub.s32 %s18, %s32
    %s119 = sor.u32 %s117, %s118
    %p120 = scmp.eq.s32.totalorder %s119, 0
    %s122 = sadd.s32 %s121, 1
    %s123 = scalar_select %p120, %s121, %s122
    %p126 = pneg %p120
    %p127 = scmp.eq.s32.totalorder %s10, 1
    %p128 = por %p126, %p127
    %p129 = scmp.ne.s32.totalorder %s121, %s124
    %p130 = scmp.eq.s32.totalorder %s10, 0
    %p131 = por %p129, %p130
    %p132 = scmp.ne.s32.totalorder %s121, %s124
    %p133 = scmp.eq.s32.totalorder %s15, 1
    %p134 = por %p132, %p133
    %p135 = scmp.ne.s32.totalorder %s124, %s125
    %p136 = scmp.eq.s32.totalorder %s15, 0
    %p137 = por %p135, %p136
    %p138 = scmp.ne.s32.totalorder %s124, %s125
    %p139 = scmp.eq.s32.totalorder %s16, 1
    %p140 = por %p138, %p139
    %p142 = scmp.ne.s32.totalorder %s125, %s141
    %p143 = scmp.eq.s32.totalorder %s16, 0
    %p144 = por %p142, %p143
    %s145 = ssub.s32 %s17, %s36
    %s146 = ssub.s32 %s18, %s32
    %s147 = sor.u32 %s145, %s146
    %p148 = scmp.eq.s32.totalorder %s147, 0
    %s150 = sadd.s32 %s149, 1
    %s151 = scalar_select %p148, %s149, %s150
    %p154 = pneg %p148
    %p155 = scmp.eq.s32.totalorder %s10, 1
    %p156 = por %p154, %p155
    %p157 = scmp.ne.s32.totalorder %s149, %s152
    %p158 = scmp.eq.s32.totalorder %s10, 0
    %p159 = por %p157, %p158
    %p160 = scmp.ne.s32.totalorder %s149, %s152
    %p161 = scmp.eq.s32.totalorder %s15, 1
    %p162 = por %p160, %p161
    %p163 = scmp.ne.s32.totalorder %s152, %s153
    %p164 = scmp.eq.s32.totalorder %s15, 0
    %p165 = por %p163, %p164
    %p166 = scmp.ne.s32.totalorder %s152, %s153
    %p167 = scmp.eq.s32.totalorder %s16, 1
    %p168 = por %p166, %p167
    %p170 = scmp.ne.s32.totalorder %s153, %s169
    %p171 = scmp.eq.s32.totalorder %s16, 0
    %p172 = por %p170, %p171
    %p173 = scmp.le.s32.totalorder 1, %s10
    %p174 = scmp.lt.s32.totalorder %s10, 3
    %p175 = pnand %p173, %p174
    %p176 = pneg %p175
    // Predicated region
    $region9: #{densenet2_forward.26} parent=5 // pred_check
      _
    $region10: #{densenet2_forward.26} parent=5 // pred_check_branch
      %178 = sbr.rel (%p175) target = $region12
    $region11: #{densenet2_forward.26} parent=5 // pred_region
      %s179 = ssub.s32 %s10, 1
      // Predicated region
      $region13: #{densenet2_forward.26} parent=11 // pred_check
        %p180 = pneg %p83
      $region14: #{densenet2_forward.26} parent=11 // pred_check_branch
        %182 = sbr.rel (%p180) target = $region16
      $region15: #{densenet2_forward.26} parent=11 // pred_region
        %p183 = scmp.lt.s32.totalorder %s22, 0
        %s184 = scalar_select %p183, %s22, 0
        %s185 = scalar_lea.vmem %s1, %s184
      $region16: #{densenet2_forward.26} parent=11 // pred_fallthru
        _
      // Predicated region
      $region17: #{densenet2_forward.26} parent=11 // pred_check
        %p186 = pneg %p109
      $region18: #{densenet2_forward.26} parent=11 // pred_check_branch
        %188 = sbr.rel (%p186) target = $region20
      $region19: #{densenet2_forward.26} parent=11 // pred_region
        %p189 = scmp.lt.s32.totalorder %s22, 0
        %s190 = scalar_select %p189, %s22, 0
        %s191 = scalar_lea.vmem %s2, %s190
      $region20: #{densenet2_forward.26} parent=11 // pred_fallthru
        _
      // Predicated region
      $region21: #{densenet2_forward.26} parent=11 // pred_check
        %p192 = pneg %p137
      $region22: #{densenet2_forward.26} parent=11 // pred_check_branch
        %194 = sbr.rel (%p192) target = $region24
      $region23: #{densenet2_forward.26} parent=11 // pred_region
        %s195 = smul.u32 12, %s22
        %p196 = scmp.lt.s32.totalorder %s195, 11
        %s197 = scalar_select %p196, %s195, 11
        %p198 = scmp.lt.s32.totalorder %s21, 0
        %s199 = scalar_select %p198, %s21, 0
        %s200 = sadd.s32 %s199, %s197
        %s201 = smul.addr %s200, 4
        %s202 = scalar_lea.vmem %s3, %s201
        %s203 = smul.u32 12, %s22
      $region24: #{densenet2_forward.26} parent=11 // pred_fallthru
        _
    $region12: #{densenet2_forward.26} parent=5 // pred_fallthru
      _
    %p204 = scmp.lt.s32.totalorder %s10, 2
    // Predicated region
    $region25: #{densenet2_forward.26} parent=5 // pred_check
      %p205 = pneg %p204
    $region26: #{densenet2_forward.26} parent=5 // pred_check_branch
      %207 = sbr.rel (%p205) target = $region28
    $region27: #{densenet2_forward.26} parent=5 // pred_region
      // Predicated region
      $region29: #{densenet2_forward.26} parent=27 // pred_check
        %p208 = pneg %p51
      $region30: #{densenet2_forward.26} parent=27 // pred_check_branch
        %210 = sbr.rel (%p208) target = $region32
      $region31: #{densenet2_forward.26} parent=27 // pred_region
        %s211 = smul.u32 8, %s17
        %p212 = scmp.lt.s32.totalorder %s211, 15
        %s213 = scalar_select %p212, %s211, 15
        %p214 = scmp.lt.s32.totalorder %s19, 0
        %s215 = scalar_select %p214, %s19, 0
        %s216 = sadd.s32 %s215, %s213
        %s217 = smul.addr %s216, 4
        %s218 = scalar_lea.vmem %s0, %s217
        %s219 = smul.u32 8, %s17
      $region32: #{densenet2_forward.26} parent=27 // pred_fallthru
        _
    $region28: #{densenet2_forward.26} parent=5 // pred_fallthru
      _
    %p220 = scmp.le.s32.totalorder 1, %s10
    %p221 = scmp.lt.s32.totalorder %s10, 3
    %p222 = pnand %p220, %p221
    %p223 = pneg %p222
    // Predicated region
    $region33: #{densenet2_forward.26} parent=5 // pred_check
      _
    $region34: #{densenet2_forward.26} parent=5 // pred_check_branch
      %225 = sbr.rel (%p222) target = $region36
    $region35: #{densenet2_forward.26} parent=5 // pred_region
      %s226 = ssub.s32 %s10, 1
      %s227 = smul.u32 8, %s20
      %p228 = scmp.lt.s32.totalorder %s227, 15
      %s229 = scalar_select %p228, %s227, 15
      %p230 = scmp.lt.s32.totalorder %s22, 0
      %s231 = scalar_select %p230, %s22, 0
      %s232 = sadd.s32 %s231, %s229
      %s233 = smul.addr %s232, 4
      %s234 = scalar_lea.vmem %s0, %s233
      %p235 = pneg %p57
      %p236 = pneg %p54
      %p237 = scmp.lt.s32.totalorder %s22, 0
      %s238 = scalar_select %p237, %s22, 0
      %s239 = scalar_lea.vmem %s1, %s238
      %p240 = pneg %p83
      %p241 = pneg %p80
      %p242 = scmp.lt.s32.totalorder %s22, 0
      %s243 = scalar_select %p242, %s22, 0
      %s244 = scalar_lea.vmem %s2, %s243
      %p245 = pneg %p109
      %p246 = pneg %p106
      %s247 = smul.u32 12, %s22
      %p248 = scmp.lt.s32.totalorder %s247, 11
      %s249 = scalar_select %p248, %s247, 11
      %p250 = scmp.lt.s32.totalorder %s21, 0
      %s251 = scalar_select %p250, %s21, 0
      %s252 = sadd.s32 %s251, %s249
      %s253 = smul.addr %s252, 4
      %s254 = scalar_lea.vmem %s3, %s253
      %p255 = pneg %p137
      %p256 = pneg %p134
      %p257 = pneg %p165
      %p258 = pneg %p162
      %s259 = smul.u32 8, %s20
      %p260 = scmp.lt.s32.totalorder %s259, 15
      %s261 = scalar_select %p260, %s259, 15
      %p262 = scmp.lt.s32.totalorder %s21, 0
      %s263 = scalar_select %p262, %s21, 0
      %s264 = sadd.s32 %s263, %s261
      %s265 = smul.addr %s264, 4
      %s266 = scalar_lea.vmem %s4, %s265
      %s267 = smul.u32 8, %s20
      %p268 = scmp.lt.s32.totalorder %s267, 15
      %s269 = scalar_select %p268, %s267, 15
      %p270 = scmp.lt.s32.totalorder %s22, 0
      %s271 = scalar_select %p270, %s22, 0
      %s272 = sadd.s32 %s271, %s269
      %s273 = smul.addr %s272, 4
      %s274 = scalar_lea.vmem %s0, %s273
      %s275 = smul.u32 8, %s20
      %p276 = scmp.lt.s32.totalorder %s22, 0
      %s277 = scalar_select %p276, %s22, 0
      %s278 = scalar_lea.vmem %s1, %s277
      %p279 = scmp.lt.s32.totalorder %s22, 0
      %s280 = scalar_select %p279, %s22, 0
      %s281 = scalar_lea.vmem %s2, %s280
      %s282 = smul.u32 12, %s22
      %p283 = scmp.lt.s32.totalorder %s282, 11
      %s284 = scalar_select %p283, %s282, 11
      %p285 = scmp.lt.s32.totalorder %s21, 0
      %s286 = scalar_select %p285, %s21, 0
      %s287 = sadd.s32 %s286, %s284
      %s288 = smul.addr %s287, 4
      %s289 = scalar_lea.vmem %s3, %s288
      %s290 = smul.u32 12, %s22
      %s291 = smul.u32 8, %s20
      %p292 = scmp.lt.s32.totalorder %s291, 15
      %s293 = scalar_select %p292, %s291, 15
      %p294 = scmp.lt.s32.totalorder %s21, 0
      %s295 = scalar_select %p294, %s21, 0
      %s296 = sadd.s32 %s295, %s293
      %s297 = smul.addr %s296, 4
      %s298 = scalar_lea.vmem %s4, %s297
      %s299 = smul.u32 8, %s20
      %v301 = vld [vmem:[%s274] sm:$0xf]
      %v302 = vld [vmem:[%s274 + $0x4] sm:$0xf]
      %v303 = vld [vmem:[%s274 + $0x8] sm:$0xf]
      %v304 = vld [vmem:[%s274 + $0xc] sm:$0xf]
      %v305 = vld [vmem:[%s274 + $0x10] sm:$0xf]
      %v306 = vld [vmem:[%s274 + $0x14] sm:$0xf]
      %v307 = vld [vmem:[%s274 + $0x18] sm:$0xf]
      %v308 = vld [vmem:[%s274 + $0x1c] sm:$0xf]
      %v309 = vunpack.c.l.bf16 %v301
      %v310 = vunpack.c.l.bf16 %v302
      %v311 = vunpack.c.l.bf16 %v303
      %v312 = vunpack.c.l.bf16 %v304
      %v313 = vunpack.c.l.bf16 %v305
      %v314 = vunpack.c.l.bf16 %v306
      %v315 = vunpack.c.l.bf16 %v307
      %v316 = vunpack.c.l.bf16 %v308
      %v317 = vld [vmem:[%s278] sm:$0x1]
      %v319 = vperm.slane %v317, 0
      %v321 = vmul.f32 %v309, %v319
      %v322 = vmul.f32 %v310, %v319
      %v323 = vmul.f32 %v311, %v319
      %v324 = vmul.f32 %v312, %v319
      %v325 = vmul.f32 %v313, %v319
      %v326 = vmul.f32 %v314, %v319
      %v327 = vmul.f32 %v315, %v319
      %v328 = vmul.f32 %v316, %v319
      %v329 = vld [vmem:[%s281] sm:$0x1]
      %v331 = vperm.slane %v329, 0
      %v333 = vadd.f32 %v321, %v331
      %v334 = vadd.f32 %v322, %v331
      %v335 = vadd.f32 %v323, %v331
      %v336 = vadd.f32 %v324, %v331
      %v337 = vadd.f32 %v325, %v331
      %v338 = vadd.f32 %v326, %v331
      %v339 = vadd.f32 %v327, %v331
      %v340 = vadd.f32 %v328, %v331
      %v341 = vmax.f32 %v333, 0.0
      %v342 = vmax.f32 %v334, 0.0
      %v343 = vmax.f32 %v335, 0.0
      %v344 = vmax.f32 %v336, 0.0
      %v345 = vmax.f32 %v337, 0.0
      %v346 = vmax.f32 %v338, 0.0
      %v347 = vmax.f32 %v339, 0.0
      %v348 = vmax.f32 %v340, 0.0
      %v349 = vpack.c.bf16 %v342, %v341
      %v350 = vpack.c.bf16 %v344, %v343
      %v351 = vpack.c.bf16 %v346, %v345
      %v352 = vpack.c.bf16 %v348, %v347
      %v353 = vld [vmem:[%s289] sm:$0xf]
      %v354 = vld [vmem:[%s289 + $0x4] sm:$0xf]
      %v355 = vld [vmem:[%s289 + $0x8] sm:$0xf]
      %v356 = vld [vmem:[%s289 + $0xc] sm:$0xf]
      %v357 = vld [vmem:[%s289 + $0x10] sm:$0xf]
      %v358 = vld [vmem:[%s289 + $0x14] sm:$0xf]
      %v359 = vld [vmem:[%s289 + $0x18] sm:$0xf]
      %v360 = vld [vmem:[%s289 + $0x1c] sm:$0xf]
      %v361 = vld [vmem:[%s289 + $0x20] sm:$0xf]
      %v362 = vld [vmem:[%s289 + $0x24] sm:$0xf]
      %v363 = vld [vmem:[%s289 + $0x28] sm:$0xf]
      %v364 = vld [vmem:[%s289 + $0x2c] sm:$0xf]
      %v377 = vunpack.c.l.b16 %v353
      %v378 = vunpack.c.l.b16 %v354
      %v379 = vunpack.c.l.b16 %v355
      %v380 = vunpack.c.l.b16 %v356
      %v381 = vunpack.c.l.b16 %v357
      %v382 = vunpack.c.l.b16 %v358
      %v383 = vunpack.c.l.b16 %v359
      %v384 = vunpack.c.l.b16 %v360
      %v385 = vunpack.c.l.b16 %v361
      %v386 = vunpack.c.l.b16 %v362
      %v387 = vunpack.c.l.b16 %v363
      %v388 = vunpack.c.l.b16 %v364
      %v389 = vpack.c.b16 %v378, %v377
      %v390 = vpack.c.b16 %v380, %v379
      %v391 = vpack.c.b16 %v382, %v381
      %v392 = vpack.c.b16 %v384, %v383
      %v393 = vpack.c.b16 %v386, %v385
      %v394 = vpack.c.b16 %v388, %v387
      %vm401 = vcmask 785408
      %v403 = vsel %vm401, %v349, 0
      %v406 = vsel %vm401, %v350, 0
      %v409 = vsel %vm401, %v351, 0
      %v412 = vsel %vm401, %v352, 0
      %414 = vmatpush.bf16.msra.mxu0 0
      %415 = vmatpush.bf16.msra.mxu0 0
      %416 = vmatpush.bf16.msra.mxu0 %v394
      %417 = vmatpush.bf16.msra.mxu0 %v393
      %418 = vmatpush.bf16.msra.mxu0 %v392
      %419 = vmatpush.bf16.msra.mxu0 %v391
      %420 = vmatpush.bf16.msra.mxu0 %v390
      %421 = vmatpush.bf16.msra.mxu0 %v389
      %422 = vmatmul.bf16.gmra.mxu0 %v403
      %v423 = vpop.f32.mrf.mxu0
      %v424 = vadd.f32 0.0, %v423
      %v425 = vpop.f32.mrf.mxu0
      %v426 = vadd.f32 0.0, %v425
      %427 = vmatmul.bf16.gmra.mxu0 %v406
      %v428 = vpop.f32.mrf.mxu0
      %v429 = vadd.f32 0.0, %v428
      %v430 = vpop.f32.mrf.mxu0
      %v431 = vadd.f32 0.0, %v430
      %432 = vmatmul.bf16.gmra.mxu0 %v409
      %v433 = vpop.f32.mrf.mxu0
      %v434 = vadd.f32 0.0, %v433
      %v435 = vpop.f32.mrf.mxu0
      %v436 = vadd.f32 0.0, %v435
      %437 = vmatmul.bf16.gmra.mxu0 %v412
      %v438 = vpop.f32.mrf.mxu0
      %v439 = vadd.f32 0.0, %v438
      %v440 = vpop.f32.mrf.mxu0
      %v441 = vadd.f32 0.0, %v440
      %442 = vdwg.mxu0
      %v443 = vpack.c.bf16 %v424, %v424
      %v444 = vpack.c.bf16 %v426, %v426
      %v445 = vpack.c.bf16 %v429, %v429
      %v446 = vpack.c.bf16 %v431, %v431
      %v447 = vpack.c.bf16 %v434, %v434
      %v448 = vpack.c.bf16 %v436, %v436
      %v449 = vpack.c.bf16 %v439, %v439
      %v450 = vpack.c.bf16 %v441, %v441
      %vm451 = vcmask 388096
      %452 = vst.msk [vmem:[%s298] sm:$0xf] %vm451, %v443
      %453 = vst.msk [vmem:[%s298 + $0x4] sm:$0xf] %vm451, %v444
      %454 = vst.msk [vmem:[%s298 + $0x8] sm:$0xf] %vm451, %v445
      %455 = vst.msk [vmem:[%s298 + $0xc] sm:$0xf] %vm451, %v446
      %456 = vst.msk [vmem:[%s298 + $0x10] sm:$0xf] %vm451, %v447
      %457 = vst.msk [vmem:[%s298 + $0x14] sm:$0xf] %vm451, %v448
      %458 = vst.msk [vmem:[%s298 + $0x18] sm:$0xf] %vm451, %v449
      %459 = vst.msk [vmem:[%s298 + $0x1c] sm:$0xf] %vm451, %v450
      %s460 = smul.u32 8, %s20
      %p461 = scmp.lt.s32.totalorder %s460, 15
      %s462 = scalar_select %p461, %s460, 15
      %p463 = scmp.lt.s32.totalorder %s21, 0
      %s464 = scalar_select %p463, %s21, 0
      %s465 = sadd.s32 %s464, %s462
      %s466 = smul.addr %s465, 4
      %s467 = scalar_lea.vmem %s4, %s466
      // Predicated region
      $region37: #{densenet2_forward.26} parent=35 // pred_check
        %p468 = pneg %p162
      $region38: #{densenet2_forward.26} parent=35 // pred_check_branch
        %470 = sbr.rel (%p468) target = $region40
      $region39: #{densenet2_forward.26} parent=35 // pred_region
        %s471 = smul.u32 8, %s20
      $region40: #{densenet2_forward.26} parent=35 // pred_fallthru
        _
    $region36: #{densenet2_forward.26} parent=5 // pred_fallthru
      _
    %p472 = scmp.le.s32.totalorder 2, %s10
    // Predicated region
    $region41: #{densenet2_forward.26} parent=5 // pred_check
      %p473 = pneg %p472
    $region42: #{densenet2_forward.26} parent=5 // pred_check_branch
      %475 = sbr.rel (%p473) target = $region44
    $region43: #{densenet2_forward.26} parent=5 // pred_region
      %s476 = ssub.s32 %s10, 2
      // Predicated region
      $region45: #{densenet2_forward.26} parent=43 // pred_check
        %p477 = pneg %p168
      $region46: #{densenet2_forward.26} parent=43 // pred_check_branch
        %479 = sbr.rel (%p477) target = $region48
      $region47: #{densenet2_forward.26} parent=43 // pred_region
        %s480 = smul.u32 8, %s23
        %p481 = scmp.lt.s32.totalorder %s480, 15
        %s482 = scalar_select %p481, %s480, 15
        %p483 = scmp.lt.s32.totalorder %s24, 0
        %s484 = scalar_select %p483, %s24, 0
        %s485 = sadd.s32 %s484, %s482
        %s486 = smul.addr %s485, 4
        %s487 = scalar_lea.vmem %s4, %s486
      $region48: #{densenet2_forward.26} parent=43 // pred_fallthru
        _
    $region44: #{densenet2_forward.26} parent=5 // pred_fallthru
      _
  $region6: #{densenet2_forward.26} parent=0 // loop_footer
    %s14 = sadd.s32 1, %s10
  $region7: #{densenet2_forward.26} parent=0 // loop_footer_branch
    %9 = sbr.rel target = $region3
  $region8: #{densenet2_forward.26} parent=0 // loop_exit
    _

// kernel: densenet2_forward.27
$region0: #{densenet2_forward.27}
  #allocation0 [shape = 'u32[]', space=smem, size = 0x4, offset = 0x4, fixed_abs, tag = 'smem constant byte address 0x4 - core index']
  #allocation1 [shape = 'u32[72,128]{1,0:T(1,128)}', space=vmem, size = 0x9000, scoped, tag = 'internal scratch']
  %s0 = inlined_call_operand.vmem [shape: bf16[32,48], index: 0, kind: input, shape index: {}]
  %s1 = inlined_call_operand.vmem [shape: f32[1,48], index: 1, kind: input, shape index: {}]
  %s2 = inlined_call_operand.vmem [shape: f32[1,48], index: 2, kind: input, shape index: {}]
  %s3 = inlined_call_operand.vmem [shape: bf16[48,128], index: 3, kind: input, shape index: {}]
  %s4 = inlined_call_operand.vmem [shape: bf16[32,128], index: 4, kind: output, shape index: {0}]
  %s5 = inlined_call_operand.vmem [shape: f32[2,8,128], index: 5, kind: output, shape index: {1}]
  %6 = xla_tuple %s4, %s5
  %s7 = sld [smem:[#allocation0]]
  $region57: #{densenet2_forward.27} parent=0
    _
  %s9 = ssub.s32 1, %s7
  %s10 = scalar_select 0, %s9, %s7
  loop: start=0, step=1, limit=4
  $region2: #{densenet2_forward.27} parent=0 // loop_pre_header
    _
  $region3: #{densenet2_forward.27} parent=0 // loop_header
    %s12 = sphi 0, %s16
    %p13 = scmp.ge.s32.totalorder %s12, 4
    %s19 = sphi 0, %s38
    %s20 = sphi 0, %s34
    %s21 = sphi 0, %s30
    %s22 = sphi 0, %s19
    %s23 = sphi 0, %s20
    %s24 = sphi 0, %s21
    %s25 = sphi 0, %s22
    %s26 = sphi 0, %s23
    %s27 = sphi 0, %s24
    %s43 = sphi 0, %s45
    %s46 = sphi 0, %s43
    %s47 = sphi 0, %s46
    %s63 = sphi 0, %s47
    %s69 = sphi 0, %s71
    %s72 = sphi 0, %s69
    %s73 = sphi 0, %s72
    %s89 = sphi 0, %s73
    %s95 = sphi 0, %s97
    %s98 = sphi 0, %s95
    %s99 = sphi 0, %s98
    %s115 = sphi 0, %s99
    %s123 = sphi 0, %s125
    %s126 = sphi 0, %s123
    %s127 = sphi 0, %s126
    %s143 = sphi 0, %s127
    %s151 = sphi 0, %s153
    %s154 = sphi 0, %s151
    %s155 = sphi 0, %s154
    %s171 = sphi 0, %s155
    %s177 = sphi 0, %s179
    %s180 = sphi 0, %s177
    %s181 = sphi 0, %s180
    %s197 = sphi 0, %s181
  $region4: #{densenet2_forward.27} parent=0 // loop_header_branch
    %15 = sbr.rel (%p13) target = $region8
  $region5: #{densenet2_forward.27} parent=0 // loop_body
    %s17 = ssub.s32 %s12, 1
    %s18 = ssub.s32 %s12, 2
    %s28 = sadd.s32 1, %s21
    %p29 = scmp.ge.s32.totalorder %s28, 1
    %s30 = scalar_select %p29, 0, %s28
    %s31 = sadd.s32 1, %s20
    %s32 = scalar_select %p29, %s31, %s20
    %p33 = scmp.ge.s32.totalorder %s32, 1
    %s34 = scalar_select %p33, 0, %s32
    %s35 = sadd.s32 1, %s19
    %s36 = scalar_select %p33, %s35, %s19
    %p37 = scmp.ge.s32.totalorder %s36, 2
    %s38 = scalar_select %p37, 0, %s36
    %s39 = ssub.s32 %s19, %s38
    %s40 = ssub.s32 %s21, %s30
    %s41 = sor.u32 %s39, %s40
    %p42 = scmp.eq.s32.totalorder %s41, 0
    %s44 = sadd.s32 %s43, 1
    %s45 = scalar_select %p42, %s43, %s44
    %p48 = pneg %p42
    %p49 = scmp.eq.s32.totalorder %s12, 1
    %p50 = por %p48, %p49
    %p51 = scmp.ne.s32.totalorder %s43, %s46
    %p52 = scmp.eq.s32.totalorder %s12, 0
    %p53 = por %p51, %p52
    %p54 = scmp.ne.s32.totalorder %s43, %s46
    %p55 = scmp.eq.s32.totalorder %s17, 1
    %p56 = por %p54, %p55
    %p57 = scmp.ne.s32.totalorder %s46, %s47
    %p58 = scmp.eq.s32.totalorder %s17, 0
    %p59 = por %p57, %p58
    %p60 = scmp.ne.s32.totalorder %s46, %s47
    %p61 = scmp.eq.s32.totalorder %s18, 1
    %p62 = por %p60, %p61
    %p64 = scmp.ne.s32.totalorder %s47, %s63
    %p65 = scmp.eq.s32.totalorder %s18, 0
    %p66 = por %p64, %p65
    %s67 = ssub.s32 %s21, %s30
    %p68 = scmp.eq.s32.totalorder %s67, 0
    %s70 = sadd.s32 %s69, 1
    %s71 = scalar_select %p68, %s69, %s70
    %p74 = pneg %p68
    %p75 = scmp.eq.s32.totalorder %s12, 1
    %p76 = por %p74, %p75
    %p77 = scmp.ne.s32.totalorder %s69, %s72
    %p78 = scmp.eq.s32.totalorder %s12, 0
    %p79 = por %p77, %p78
    %p80 = scmp.ne.s32.totalorder %s69, %s72
    %p81 = scmp.eq.s32.totalorder %s17, 1
    %p82 = por %p80, %p81
    %p83 = scmp.ne.s32.totalorder %s72, %s73
    %p84 = scmp.eq.s32.totalorder %s17, 0
    %p85 = por %p83, %p84
    %p86 = scmp.ne.s32.totalorder %s72, %s73
    %p87 = scmp.eq.s32.totalorder %s18, 1
    %p88 = por %p86, %p87
    %p90 = scmp.ne.s32.totalorder %s73, %s89
    %p91 = scmp.eq.s32.totalorder %s18, 0
    %p92 = por %p90, %p91
    %s93 = ssub.s32 %s21, %s30
    %p94 = scmp.eq.s32.totalorder %s93, 0
    %s96 = sadd.s32 %s95, 1
    %s97 = scalar_select %p94, %s95, %s96
    %p100 = pneg %p94
    %p101 = scmp.eq.s32.totalorder %s12, 1
    %p102 = por %p100, %p101
    %p103 = scmp.ne.s32.totalorder %s95, %s98
    %p104 = scmp.eq.s32.totalorder %s12, 0
    %p105 = por %p103, %p104
    %p106 = scmp.ne.s32.totalorder %s95, %s98
    %p107 = scmp.eq.s32.totalorder %s17, 1
    %p108 = por %p106, %p107
    %p109 = scmp.ne.s32.totalorder %s98, %s99
    %p110 = scmp.eq.s32.totalorder %s17, 0
    %p111 = por %p109, %p110
    %p112 = scmp.ne.s32.totalorder %s98, %s99
    %p113 = scmp.eq.s32.totalorder %s18, 1
    %p114 = por %p112, %p113
    %p116 = scmp.ne.s32.totalorder %s99, %s115
    %p117 = scmp.eq.s32.totalorder %s18, 0
    %p118 = por %p116, %p117
    %s119 = ssub.s32 %s21, %s30
    %s120 = ssub.s32 %s20, %s34
    %s121 = sor.u32 %s119, %s120
    %p122 = scmp.eq.s32.totalorder %s121, 0
    %s124 = sadd.s32 %s123, 1
    %s125 = scalar_select %p122, %s123, %s124
    %p128 = pneg %p122
    %p129 = scmp.eq.s32.totalorder %s12, 1
    %p130 = por %p128, %p129
    %p131 = scmp.ne.s32.totalorder %s123, %s126
    %p132 = scmp.eq.s32.totalorder %s12, 0
    %p133 = por %p131, %p132
    %p134 = scmp.ne.s32.totalorder %s123, %s126
    %p135 = scmp.eq.s32.totalorder %s17, 1
    %p136 = por %p134, %p135
    %p137 = scmp.ne.s32.totalorder %s126, %s127
    %p138 = scmp.eq.s32.totalorder %s17, 0
    %p139 = por %p137, %p138
    %p140 = scmp.ne.s32.totalorder %s126, %s127
    %p141 = scmp.eq.s32.totalorder %s18, 1
    %p142 = por %p140, %p141
    %p144 = scmp.ne.s32.totalorder %s127, %s143
    %p145 = scmp.eq.s32.totalorder %s18, 0
    %p146 = por %p144, %p145
    %s147 = ssub.s32 %s19, %s38
    %s148 = ssub.s32 %s20, %s34
    %s149 = sor.u32 %s147, %s148
    %p150 = scmp.eq.s32.totalorder %s149, 0
    %s152 = sadd.s32 %s151, 1
    %s153 = scalar_select %p150, %s151, %s152
    %p156 = pneg %p150
    %p157 = scmp.eq.s32.totalorder %s12, 1
    %p158 = por %p156, %p157
    %p159 = scmp.ne.s32.totalorder %s151, %s154
    %p160 = scmp.eq.s32.totalorder %s12, 0
    %p161 = por %p159, %p160
    %p162 = scmp.ne.s32.totalorder %s151, %s154
    %p163 = scmp.eq.s32.totalorder %s17, 1
    %p164 = por %p162, %p163
    %p165 = scmp.ne.s32.totalorder %s154, %s155
    %p166 = scmp.eq.s32.totalorder %s17, 0
    %p167 = por %p165, %p166
    %p168 = scmp.ne.s32.totalorder %s154, %s155
    %p169 = scmp.eq.s32.totalorder %s18, 1
    %p170 = por %p168, %p169
    %p172 = scmp.ne.s32.totalorder %s155, %s171
    %p173 = scmp.eq.s32.totalorder %s18, 0
    %p174 = por %p172, %p173
    %s175 = ssub.s32 %s19, %s38
    %p176 = scmp.eq.s32.totalorder %s175, 0
    %s178 = sadd.s32 %s177, 1
    %s179 = scalar_select %p176, %s177, %s178
    %p182 = pneg %p176
    %p183 = scmp.eq.s32.totalorder %s12, 1
    %p184 = por %p182, %p183
    %p185 = scmp.ne.s32.totalorder %s177, %s180
    %p186 = scmp.eq.s32.totalorder %s12, 0
    %p187 = por %p185, %p186
    %p188 = scmp.ne.s32.totalorder %s177, %s180
    %p189 = scmp.eq.s32.totalorder %s17, 1
    %p190 = por %p188, %p189
    %p191 = scmp.ne.s32.totalorder %s180, %s181
    %p192 = scmp.eq.s32.totalorder %s17, 0
    %p193 = por %p191, %p192
    %p194 = scmp.ne.s32.totalorder %s180, %s181
    %p195 = scmp.eq.s32.totalorder %s18, 1
    %p196 = por %p194, %p195
    %p198 = scmp.ne.s32.totalorder %s181, %s197
    %p199 = scmp.eq.s32.totalorder %s18, 0
    %p200 = por %p198, %p199
    %p201 = scmp.le.s32.totalorder 1, %s12
    %p202 = scmp.lt.s32.totalorder %s12, 3
    %p203 = pnand %p201, %p202
    %p204 = pneg %p203
    // Predicated region
    $region9: #{densenet2_forward.27} parent=5 // pred_check
      _
    $region10: #{densenet2_forward.27} parent=5 // pred_check_branch
      %206 = sbr.rel (%p203) target = $region12
    $region11: #{densenet2_forward.27} parent=5 // pred_region
      %s207 = ssub.s32 %s12, 1
      // Predicated region
      $region13: #{densenet2_forward.27} parent=11 // pred_check
        %p208 = pneg %p85
      $region14: #{densenet2_forward.27} parent=11 // pred_check_branch
        %210 = sbr.rel (%p208) target = $region16
      $region15: #{densenet2_forward.27} parent=11 // pred_region
        %p211 = scmp.lt.s32.totalorder %s24, 0
        %s212 = scalar_select %p211, %s24, 0
        %s213 = scalar_lea.vmem %s1, %s212
      $region16: #{densenet2_forward.27} parent=11 // pred_fallthru
        _
      // Predicated region
      $region17: #{densenet2_forward.27} parent=11 // pred_check
        %p214 = pneg %p111
      $region18: #{densenet2_forward.27} parent=11 // pred_check_branch
        %216 = sbr.rel (%p214) target = $region20
      $region19: #{densenet2_forward.27} parent=11 // pred_region
        %p217 = scmp.lt.s32.totalorder %s24, 0
        %s218 = scalar_select %p217, %s24, 0
        %s219 = scalar_lea.vmem %s2, %s218
      $region20: #{densenet2_forward.27} parent=11 // pred_fallthru
        _
      // Predicated region
      $region21: #{densenet2_forward.27} parent=11 // pred_check
        %p220 = pneg %p139
      $region22: #{densenet2_forward.27} parent=11 // pred_check_branch
        %222 = sbr.rel (%p220) target = $region24
      $region23: #{densenet2_forward.27} parent=11 // pred_region
        %s223 = smul.u32 6, %s24
        %p224 = scmp.lt.s32.totalorder %s223, 5
        %s225 = scalar_select %p224, %s223, 5
        %p226 = scmp.lt.s32.totalorder %s23, 0
        %s227 = scalar_select %p226, %s23, 0
        %s228 = sadd.s32 %s227, %s225
        %s229 = smul.addr %s228, 4
        %s230 = scalar_lea.vmem %s3, %s229
        %s231 = smul.u32 6, %s24
      $region24: #{densenet2_forward.27} parent=11 // pred_fallthru
        _
    $region12: #{densenet2_forward.27} parent=5 // pred_fallthru
      _
    %p232 = scmp.lt.s32.totalorder %s12, 2
    // Predicated region
    $region25: #{densenet2_forward.27} parent=5 // pred_check
      %p233 = pneg %p232
    $region26: #{densenet2_forward.27} parent=5 // pred_check_branch
      %235 = sbr.rel (%p233) target = $region28
    $region27: #{densenet2_forward.27} parent=5 // pred_region
      // Predicated region
      $region29: #{densenet2_forward.27} parent=27 // pred_check
        %p236 = pneg %p53
      $region30: #{densenet2_forward.27} parent=27 // pred_check_branch
        %238 = sbr.rel (%p236) target = $region32
      $region31: #{densenet2_forward.27} parent=27 // pred_region
        %s239 = smul.u32 2, %s19
        %p240 = scmp.lt.s32.totalorder %s239, 3
        %s241 = scalar_select %p240, %s239, 3
        %p242 = scmp.lt.s32.totalorder %s21, 0
        %s243 = scalar_select %p242, %s21, 0
        %s244 = sadd.s32 %s243, %s241
        %s245 = smul.addr %s244, 4
        %s246 = scalar_lea.vmem %s0, %s245
        %s247 = smul.u32 2, %s19
      $region32: #{densenet2_forward.27} parent=27 // pred_fallthru
        _
    $region28: #{densenet2_forward.27} parent=5 // pred_fallthru
      _
    %p248 = scmp.le.s32.totalorder 1, %s12
    %p249 = scmp.lt.s32.totalorder %s12, 3
    %p250 = pnand %p248, %p249
    %p251 = pneg %p250
    // Predicated region
    $region33: #{densenet2_forward.27} parent=5 // pred_check
      _
    $region34: #{densenet2_forward.27} parent=5 // pred_check_branch
      %253 = sbr.rel (%p250) target = $region36
    $region35: #{densenet2_forward.27} parent=5 // pred_region
      %s254 = ssub.s32 %s12, 1
      %s255 = smul.u32 2, %s22
      %p256 = scmp.lt.s32.totalorder %s255, 3
      %s257 = scalar_select %p256, %s255, 3
      %p258 = scmp.lt.s32.totalorder %s24, 0
      %s259 = scalar_select %p258, %s24, 0
      %s260 = sadd.s32 %s259, %s257
      %s261 = smul.addr %s260, 4
      %s262 = scalar_lea.vmem %s0, %s261
      %p263 = pneg %p59
      %p264 = pneg %p56
      %p265 = scmp.lt.s32.totalorder %s24, 0
      %s266 = scalar_select %p265, %s24, 0
      %s267 = scalar_lea.vmem %s1, %s266
      %p268 = pneg %p85
      %p269 = pneg %p82
      %p270 = scmp.lt.s32.totalorder %s24, 0
      %s271 = scalar_select %p270, %s24, 0
      %s272 = scalar_lea.vmem %s2, %s271
      %p273 = pneg %p111
      %p274 = pneg %p108
      %s275 = smul.u32 6, %s24
      %p276 = scmp.lt.s32.totalorder %s275, 5
      %s277 = scalar_select %p276, %s275, 5
      %p278 = scmp.lt.s32.totalorder %s23, 0
      %s279 = scalar_select %p278, %s23, 0
      %s280 = sadd.s32 %s279, %s277
      %s281 = smul.addr %s280, 4
      %s282 = scalar_lea.vmem %s3, %s281
      %p283 = pneg %p139
      %p284 = pneg %p136
      %p285 = pneg %p167
      %p286 = pneg %p164
      %s287 = smul.u32 2, %s22
      %p288 = scmp.lt.s32.totalorder %s287, 3
      %s289 = scalar_select %p288, %s287, 3
      %p290 = scmp.lt.s32.totalorder %s23, 0
      %s291 = scalar_select %p290, %s23, 0
      %s292 = sadd.s32 %s291, %s289
      %s293 = smul.addr %s292, 4
      %s294 = scalar_lea.vmem %s4, %s293
      %p295 = pneg %p193
      %p296 = pneg %p190
      %p297 = scmp.lt.s32.totalorder %s22, 1
      %s298 = scalar_select %p297, %s22, 1
      %s299 = smul.addr %s298, 8
      %s300 = scalar_lea.vmem %s5, %s299
      %s301 = smul.u32 2, %s22
      %p302 = scmp.lt.s32.totalorder %s301, 3
      %s303 = scalar_select %p302, %s301, 3
      %p304 = scmp.lt.s32.totalorder %s24, 0
      %s305 = scalar_select %p304, %s24, 0
      %s306 = sadd.s32 %s305, %s303
      %s307 = smul.addr %s306, 4
      %s308 = scalar_lea.vmem %s0, %s307
      %s309 = smul.u32 2, %s22
      %p310 = scmp.lt.s32.totalorder %s24, 0
      %s311 = scalar_select %p310, %s24, 0
      %s312 = scalar_lea.vmem %s1, %s311
      %p313 = scmp.lt.s32.totalorder %s24, 0
      %s314 = scalar_select %p313, %s24, 0
      %s315 = scalar_lea.vmem %s2, %s314
      %s316 = smul.u32 6, %s24
      %p317 = scmp.lt.s32.totalorder %s316, 5
      %s318 = scalar_select %p317, %s316, 5
      %p319 = scmp.lt.s32.totalorder %s23, 0
      %s320 = scalar_select %p319, %s23, 0
      %s321 = sadd.s32 %s320, %s318
      %s322 = smul.addr %s321, 4
      %s323 = scalar_lea.vmem %s3, %s322
      %s324 = smul.u32 6, %s24
      %s325 = smul.u32 2, %s22
      %p326 = scmp.lt.s32.totalorder %s325, 3
      %s327 = scalar_select %p326, %s325, 3
      %p328 = scmp.lt.s32.totalorder %s23, 0
      %s329 = scalar_select %p328, %s23, 0
      %s330 = sadd.s32 %s329, %s327
      %s331 = smul.addr %s330, 4
      %s332 = scalar_lea.vmem %s4, %s331
      %s333 = smul.u32 2, %s22
      %p334 = scmp.lt.s32.totalorder %s22, 1
      %s335 = scalar_select %p334, %s22, 1
      %s336 = smul.addr %s335, 8
      %s337 = scalar_lea.vmem %s5, %s336
      %v339 = vld [vmem:[%s308] sm:$0xf]
      %v340 = vld [vmem:[%s308 + $0x4] sm:$0xf]
      %v341 = vunpack.c.l.bf16 %v339
      %v342 = vunpack.c.l.bf16 %v340
      %v343 = vld [vmem:[%s312] sm:$0x1]
      %v345 = vperm.slane %v343, 0
      %v347 = vmul.f32 %v341, %v345
      %v348 = vmul.f32 %v342, %v345
      %v349 = vld [vmem:[%s315] sm:$0x1]
      %v351 = vperm.slane %v349, 0
      %v353 = vadd.f32 %v347, %v351
      %v354 = vadd.f32 %v348, %v351
      %v355 = vmax.f32 %v353, 0.0
      %v356 = vmax.f32 %v354, 0.0
      %v357 = vpack.c.bf16 %v356, %v355
      %v358 = vld [vmem:[%s323] sm:$0xf]
      %v359 = vld [vmem:[%s323 + $0x4] sm:$0xf]
      %v360 = vld [vmem:[%s323 + $0x8] sm:$0xf]
      %v361 = vld [vmem:[%s323 + $0xc] sm:$0xf]
      %v362 = vld [vmem:[%s323 + $0x10] sm:$0xf]
      %v363 = vld [vmem:[%s323 + $0x14] sm:$0xf]
      %v370 = vunpack.c.l.b16 %v358
      %v371 = vunpack.c.l.b16 %v359
      %v372 = vunpack.c.l.b16 %v360
      %v373 = vunpack.c.l.b16 %v361
      %v374 = vunpack.c.l.b16 %v362
      %v375 = vunpack.c.l.b16 %v363
      %v376 = vpack.c.b16 %v371, %v370
      %v377 = vpack.c.b16 %v373, %v372
      %v378 = vpack.c.b16 %v375, %v374
      %vm382 = vcmask 392192
      %v384 = vsel %vm382, %v357, 0
      %386 = vmatpush.bf16.msra.mxu0 0
      %387 = vmatpush.bf16.msra.mxu0 0
      %388 = vmatpush.bf16.msra.mxu0 0
      %389 = vmatpush.bf16.msra.mxu0 0
      %390 = vmatpush.bf16.msra.mxu0 0
      %391 = vmatpush.bf16.msra.mxu0 %v378
      %392 = vmatpush.bf16.msra.mxu0 %v377
      %393 = vmatpush.bf16.msra.mxu0 %v376
      %394 = vmatmul.bf16.gmra.mxu0 %v384
      %v395 = vpop.f32.mrf.mxu0
      %v396 = vadd.f32 0.0, %v395
      %v397 = vpop.f32.mrf.mxu0
      %v398 = vadd.f32 0.0, %v397
      %399 = vdwg.mxu0
      %v400 = vpack.c.bf16 %v396, %v396
      %v401 = vpack.c.bf16 %v398, %v398
      %402 = vst [vmem:[%s332] sm:$0xf] %v400
      %403 = vst [vmem:[%s332 + $0x4] sm:$0xf] %v401
      %v404 = vunpack.c.l.bf16 %v400
      %v405 = vunpack.c.l.bf16 %v401
      %v406 = vadd.f32 %v404, %v405
      %v407 = vrot.slane %v406, 4
      %v408 = vadd.f32 %v406, %v407
      %v409 = vrot.slane %v408, 2
      %v410 = vadd.f32 %v408, %v409
      %v411 = vrot.slane %v410, 1
      %v412 = vadd.f32 %v410, %v411
      %v413 = vmul.f32 %v404, %v404
      %v414 = vmul.f32 %v405, %v405
      %v415 = vadd.f32 %v413, %v414
      %v416 = vrot.slane %v415, 4
      %v417 = vadd.f32 %v415, %v416
      %v418 = vrot.slane %v417, 2
      %v419 = vadd.f32 %v417, %v418
      %v420 = vrot.slane %v419, 1
      %v421 = vadd.f32 %v419, %v420
      %v422 = vlaneseq
      %v423 = vshrl.u32 %v422, 7
      %vm424 = vcmp.eq.s32.totalorder %v423, 0
      %vm425 = vcmp.eq.s32.totalorder %v423, 1
      %v426 = vsel %vm425, %v421, 0.0
      %v427 = vsel %vm424, %v412, %v426
      %428 = vst [vmem:[%s337] sm:$0xff] %v427
      %s429 = smul.u32 2, %s22
      %p430 = scmp.lt.s32.totalorder %s429, 3
      %s431 = scalar_select %p430, %s429, 3
      %p432 = scmp.lt.s32.totalorder %s23, 0
      %s433 = scalar_select %p432, %s23, 0
      %s434 = sadd.s32 %s433, %s431
      %s435 = smul.addr %s434, 4
      %s436 = scalar_lea.vmem %s4, %s435
      %p437 = scmp.lt.s32.totalorder %s22, 1
      %s438 = scalar_select %p437, %s22, 1
      %s439 = smul.addr %s438, 8
      %s440 = scalar_lea.vmem %s5, %s439
      // Predicated region
      $region37: #{densenet2_forward.27} parent=35 // pred_check
        %p441 = pneg %p164
      $region38: #{densenet2_forward.27} parent=35 // pred_check_branch
        %443 = sbr.rel (%p441) target = $region40
      $region39: #{densenet2_forward.27} parent=35 // pred_region
        %s444 = smul.u32 2, %s22
      $region40: #{densenet2_forward.27} parent=35 // pred_fallthru
        _
      // Predicated region
      $region41: #{densenet2_forward.27} parent=35 // pred_check
        %p445 = pneg %p190
      $region42: #{densenet2_forward.27} parent=35 // pred_check_branch
        %447 = sbr.rel (%p445) target = $region44
      $region43: #{densenet2_forward.27} parent=35 // pred_region
        _
      $region44: #{densenet2_forward.27} parent=35 // pred_fallthru
        _
    $region36: #{densenet2_forward.27} parent=5 // pred_fallthru
      _
    %p448 = scmp.le.s32.totalorder 2, %s12
    // Predicated region
    $region45: #{densenet2_forward.27} parent=5 // pred_check
      %p449 = pneg %p448
    $region46: #{densenet2_forward.27} parent=5 // pred_check_branch
      %451 = sbr.rel (%p449) target = $region48
    $region47: #{densenet2_forward.27} parent=5 // pred_region
      %s452 = ssub.s32 %s12, 2
      // Predicated region
      $region49: #{densenet2_forward.27} parent=47 // pred_check
        %p453 = pneg %p170
      $region50: #{densenet2_forward.27} parent=47 // pred_check_branch
        %455 = sbr.rel (%p453) target = $region52
      $region51: #{densenet2_forward.27} parent=47 // pred_region
        %s456 = smul.u32 2, %s25
        %p457 = scmp.lt.s32.totalorder %s456, 3
        %s458 = scalar_select %p457, %s456, 3
        %p459 = scmp.lt.s32.totalorder %s26, 0
        %s460 = scalar_select %p459, %s26, 0
        %s461 = sadd.s32 %s460, %s458
        %s462 = smul.addr %s461, 4
        %s463 = scalar_lea.vmem %s4, %s462
      $region52: #{densenet2_forward.27} parent=47 // pred_fallthru
        _
      // Predicated region
      $region53: #{densenet2_forward.27} parent=47 // pred_check
        %p464 = pneg %p196
      $region54: #{densenet2_forward.27} parent=47 // pred_check_branch
        %466 = sbr.rel (%p464) target = $region56
      $region55: #{densenet2_forward.27} parent=47 // pred_region
        %p467 = scmp.lt.s32.totalorder %s25, 1
        %s468 = scalar_select %p467, %s25, 1
        %s469 = smul.addr %s468, 8
        %s470 = scalar_lea.vmem %s5, %s469
      $region56: #{densenet2_forward.27} parent=47 // pred_fallthru
        _
    $region48: #{densenet2_forward.27} parent=5 // pred_fallthru
      _
  $region6: #{densenet2_forward.27} parent=0 // loop_footer
    %s16 = sadd.s32 1, %s12
  $region7: #{densenet2_forward.27} parent=0 // loop_footer_branch
    %11 = sbr.rel target = $region3
  $region8: #{densenet2_forward.27} parent=0 // loop_exit
    _

// kernel: densenet2_forward.25
$region0: #{densenet2_forward.25}
  #allocation0 [shape = 'u32[]', space=smem, size = 0x4, offset = 0x4, fixed_abs, tag = 'smem constant byte address 0x4 - core index']
  #allocation1 [shape = 'u32[72,128]{1,0:T(1,128)}', space=vmem, size = 0x9000, scoped, tag = 'internal scratch']
  %s0 = inlined_call_operand.vmem [shape: bf16[128,1152], index: 0, kind: input, shape index: {}]
  %s1 = inlined_call_operand.vmem [shape: bf16[128,64], index: 1, kind: input, shape index: {}]
  %s2 = inlined_call_operand.vmem [shape: bf16[1152,32], index: 2, kind: input, shape index: {}]
  %s3 = inlined_call_operand.vmem [shape: bf16[128,96], index: 3, kind: output, shape index: {0}]
  %s4 = inlined_call_operand.vmem [shape: f32[2,8,32], index: 4, kind: output, shape index: {1}]
  %5 = xla_tuple %s3, %s4
  %s6 = sld [smem:[#allocation0]]
  $region53: #{densenet2_forward.25} parent=0
    _
  %s8 = ssub.s32 1, %s6
  %s9 = scalar_select 0, %s8, %s6
  loop: start=0, step=1, limit=4
  $region2: #{densenet2_forward.25} parent=0 // loop_pre_header
    _
  $region3: #{densenet2_forward.25} parent=0 // loop_header
    %s11 = sphi 0, %s15
    %p12 = scmp.ge.s32.totalorder %s11, 4
    %s18 = sphi 0, %s37
    %s19 = sphi 0, %s33
    %s20 = sphi 0, %s29
    %s21 = sphi 0, %s18
    %s22 = sphi 0, %s19
    %s23 = sphi 0, %s20
    %s24 = sphi 0, %s21
    %s25 = sphi 0, %s22
    %s26 = sphi 0, %s23
    %s42 = sphi 0, %s44
    %s45 = sphi 0, %s42
    %s46 = sphi 0, %s45
    %s62 = sphi 0, %s46
    %s68 = sphi 0, %s70
    %s71 = sphi 0, %s68
    %s72 = sphi 0, %s71
    %s88 = sphi 0, %s72
    %s96 = sphi 0, %s98
    %s99 = sphi 0, %s96
    %s100 = sphi 0, %s99
    %s116 = sphi 0, %s100
    %s122 = sphi 0, %s124
    %s125 = sphi 0, %s122
    %s126 = sphi 0, %s125
    %s142 = sphi 0, %s126
    %s148 = sphi 0, %s150
    %s151 = sphi 0, %s148
    %s152 = sphi 0, %s151
    %s168 = sphi 0, %s152
  $region4: #{densenet2_forward.25} parent=0 // loop_header_branch
    %14 = sbr.rel (%p12) target = $region8
  $region5: #{densenet2_forward.25} parent=0 // loop_body
    %s16 = ssub.s32 %s11, 1
    %s17 = ssub.s32 %s11, 2
    %s27 = sadd.s32 1, %s20
    %p28 = scmp.ge.s32.totalorder %s27, 1
    %s29 = scalar_select %p28, 0, %s27
    %s30 = sadd.s32 1, %s19
    %s31 = scalar_select %p28, %s30, %s19
    %p32 = scmp.ge.s32.totalorder %s31, 1
    %s33 = scalar_select %p32, 0, %s31
    %s34 = sadd.s32 1, %s18
    %s35 = scalar_select %p32, %s34, %s18
    %p36 = scmp.ge.s32.totalorder %s35, 2
    %s37 = scalar_select %p36, 0, %s35
    %s38 = ssub.s32 %s18, %s37
    %s39 = ssub.s32 %s20, %s29
    %s40 = sor.u32 %s38, %s39
    %p41 = scmp.eq.s32.totalorder %s40, 0
    %s43 = sadd.s32 %s42, 1
    %s44 = scalar_select %p41, %s42, %s43
    %p47 = pneg %p41
    %p48 = scmp.eq.s32.totalorder %s11, 1
    %p49 = por %p47, %p48
    %p50 = scmp.ne.s32.totalorder %s42, %s45
    %p51 = scmp.eq.s32.totalorder %s11, 0
    %p52 = por %p50, %p51
    %p53 = scmp.ne.s32.totalorder %s42, %s45
    %p54 = scmp.eq.s32.totalorder %s16, 1
    %p55 = por %p53, %p54
    %p56 = scmp.ne.s32.totalorder %s45, %s46
    %p57 = scmp.eq.s32.totalorder %s16, 0
    %p58 = por %p56, %p57
    %p59 = scmp.ne.s32.totalorder %s45, %s46
    %p60 = scmp.eq.s32.totalorder %s17, 1
    %p61 = por %p59, %p60
    %p63 = scmp.ne.s32.totalorder %s46, %s62
    %p64 = scmp.eq.s32.totalorder %s17, 0
    %p65 = por %p63, %p64
    %s66 = ssub.s32 %s18, %s37
    %p67 = scmp.eq.s32.totalorder %s66, 0
    %s69 = sadd.s32 %s68, 1
    %s70 = scalar_select %p67, %s68, %s69
    %p73 = pneg %p67
    %p74 = scmp.eq.s32.totalorder %s11, 1
    %p75 = por %p73, %p74
    %p76 = scmp.ne.s32.totalorder %s68, %s71
    %p77 = scmp.eq.s32.totalorder %s11, 0
    %p78 = por %p76, %p77
    %p79 = scmp.ne.s32.totalorder %s68, %s71
    %p80 = scmp.eq.s32.totalorder %s16, 1
    %p81 = por %p79, %p80
    %p82 = scmp.ne.s32.totalorder %s71, %s72
    %p83 = scmp.eq.s32.totalorder %s16, 0
    %p84 = por %p82, %p83
    %p85 = scmp.ne.s32.totalorder %s71, %s72
    %p86 = scmp.eq.s32.totalorder %s17, 1
    %p87 = por %p85, %p86
    %p89 = scmp.ne.s32.totalorder %s72, %s88
    %p90 = scmp.eq.s32.totalorder %s17, 0
    %p91 = por %p89, %p90
    %s92 = ssub.s32 %s20, %s29
    %s93 = ssub.s32 %s19, %s33
    %s94 = sor.u32 %s92, %s93
    %p95 = scmp.eq.s32.totalorder %s94, 0
    %s97 = sadd.s32 %s96, 1
    %s98 = scalar_select %p95, %s96, %s97
    %p101 = pneg %p95
    %p102 = scmp.eq.s32.totalorder %s11, 1
    %p103 = por %p101, %p102
    %p104 = scmp.ne.s32.totalorder %s96, %s99
    %p105 = scmp.eq.s32.totalorder %s11, 0
    %p106 = por %p104, %p105
    %p107 = scmp.ne.s32.totalorder %s96, %s99
    %p108 = scmp.eq.s32.totalorder %s16, 1
    %p109 = por %p107, %p108
    %p110 = scmp.ne.s32.totalorder %s99, %s100
    %p111 = scmp.eq.s32.totalorder %s16, 0
    %p112 = por %p110, %p111
    %p113 = scmp.ne.s32.totalorder %s99, %s100
    %p114 = scmp.eq.s32.totalorder %s17, 1
    %p115 = por %p113, %p114
    %p117 = scmp.ne.s32.totalorder %s100, %s116
    %p118 = scmp.eq.s32.totalorder %s17, 0
    %p119 = por %p117, %p118
    %s120 = ssub.s32 %s18, %s37
    %p121 = scmp.eq.s32.totalorder %s120, 0
    %s123 = sadd.s32 %s122, 1
    %s124 = scalar_select %p121, %s122, %s123
    %p127 = pneg %p121
    %p128 = scmp.eq.s32.totalorder %s11, 1
    %p129 = por %p127, %p128
    %p130 = scmp.ne.s32.totalorder %s122, %s125
    %p131 = scmp.eq.s32.totalorder %s11, 0
    %p132 = por %p130, %p131
    %p133 = scmp.ne.s32.totalorder %s122, %s125
    %p134 = scmp.eq.s32.totalorder %s16, 1
    %p135 = por %p133, %p134
    %p136 = scmp.ne.s32.totalorder %s125, %s126
    %p137 = scmp.eq.s32.totalorder %s16, 0
    %p138 = por %p136, %p137
    %p139 = scmp.ne.s32.totalorder %s125, %s126
    %p140 = scmp.eq.s32.totalorder %s17, 1
    %p141 = por %p139, %p140
    %p143 = scmp.ne.s32.totalorder %s126, %s142
    %p144 = scmp.eq.s32.totalorder %s17, 0
    %p145 = por %p143, %p144
    %s146 = ssub.s32 %s18, %s37
    %p147 = scmp.eq.s32.totalorder %s146, 0
    %s149 = sadd.s32 %s148, 1
    %s150 = scalar_select %p147, %s148, %s149
    %p153 = pneg %p147
    %p154 = scmp.eq.s32.totalorder %s11, 1
    %p155 = por %p153, %p154
    %p156 = scmp.ne.s32.totalorder %s148, %s151
    %p157 = scmp.eq.s32.totalorder %s11, 0
    %p158 = por %p156, %p157
    %p159 = scmp.ne.s32.totalorder %s148, %s151
    %p160 = scmp.eq.s32.totalorder %s16, 1
    %p161 = por %p159, %p160
    %p162 = scmp.ne.s32.totalorder %s151, %s152
    %p163 = scmp.eq.s32.totalorder %s16, 0
    %p164 = por %p162, %p163
    %p165 = scmp.ne.s32.totalorder %s151, %s152
    %p166 = scmp.eq.s32.totalorder %s17, 1
    %p167 = por %p165, %p166
    %p169 = scmp.ne.s32.totalorder %s152, %s168
    %p170 = scmp.eq.s32.totalorder %s17, 0
    %p171 = por %p169, %p170
    %p172 = scmp.le.s32.totalorder 1, %s11
    %p173 = scmp.lt.s32.totalorder %s11, 3
    %p174 = pnand %p172, %p173
    %p175 = pneg %p174
    // Predicated region
    $region9: #{densenet2_forward.25} parent=5 // pred_check
      _
    $region10: #{densenet2_forward.25} parent=5 // pred_check_branch
      %177 = sbr.rel (%p174) target = $region12
    $region11: #{densenet2_forward.25} parent=5 // pred_region
      %s178 = ssub.s32 %s11, 1
      // Predicated region
      $region13: #{densenet2_forward.25} parent=11 // pred_check
        %p179 = pneg %p112
      $region14: #{densenet2_forward.25} parent=11 // pred_check_branch
        %181 = sbr.rel (%p179) target = $region16
      $region15: #{densenet2_forward.25} parent=11 // pred_region
        %s182 = smul.u32 144, %s23
        %p183 = scmp.lt.s32.totalorder %s182, 143
        %s184 = scalar_select %p183, %s182, 143
        %p185 = scmp.lt.s32.totalorder %s22, 0
        %s186 = scalar_select %p185, %s22, 0
        %s187 = sadd.s32 %s186, %s184
        %s188 = smul.addr %s187, 4
        %s189 = scalar_lea.vmem %s2, %s188
        %s190 = smul.u32 144, %s23
      $region16: #{densenet2_forward.25} parent=11 // pred_fallthru
        _
    $region12: #{densenet2_forward.25} parent=5 // pred_fallthru
      _
    %p191 = scmp.lt.s32.totalorder %s11, 2
    // Predicated region
    $region17: #{densenet2_forward.25} parent=5 // pred_check
      %p192 = pneg %p191
    $region18: #{densenet2_forward.25} parent=5 // pred_check_branch
      %194 = sbr.rel (%p192) target = $region20
    $region19: #{densenet2_forward.25} parent=5 // pred_region
      // Predicated region
      $region21: #{densenet2_forward.25} parent=19 // pred_check
        %p195 = pneg %p52
      $region22: #{densenet2_forward.25} parent=19 // pred_check_branch
        %197 = sbr.rel (%p195) target = $region24
      $region23: #{densenet2_forward.25} parent=19 // pred_region
        %s198 = smul.u32 8, %s18
        %s199 = smul.u32 9, %s20
        %p200 = scmp.lt.s32.totalorder %s198, 15
        %s201 = scalar_select %p200, %s198, 15
        %p202 = scmp.lt.s32.totalorder %s199, 8
        %s203 = scalar_select %p202, %s199, 8
        %s204 = smul.addr %s201, 9
        %s205 = sadd.s32 %s203, %s204
        %s206 = smul.addr %s205, 4
        %s207 = scalar_lea.vmem %s0, %s206
        %s208 = smul.u32 8, %s18
        %s209 = smul.u32 9, %s20
      $region24: #{densenet2_forward.25} parent=19 // pred_fallthru
        _
      // Predicated region
      $region25: #{densenet2_forward.25} parent=19 // pred_check
        %p210 = pneg %p78
      $region26: #{densenet2_forward.25} parent=19 // pred_check_branch
        %212 = sbr.rel (%p210) target = $region28
      $region27: #{densenet2_forward.25} parent=19 // pred_region
        %s213 = smul.u32 8, %s18
        %p214 = scmp.lt.s32.totalorder %s213, 15
        %s215 = scalar_select %p214, %s213, 15
        %s216 = smul.addr %s215, 4
        %s217 = scalar_lea.vmem %s1, %s216
        %s218 = smul.u32 8, %s18
      $region28: #{densenet2_forward.25} parent=19 // pred_fallthru
        _
    $region20: #{densenet2_forward.25} parent=5 // pred_fallthru
      _
    %p219 = scmp.le.s32.totalorder 1, %s11
    %p220 = scmp.lt.s32.totalorder %s11, 3
    %p221 = pnand %p219, %p220
    %p222 = pneg %p221
    // Predicated region
    $region29: #{densenet2_forward.25} parent=5 // pred_check
      _
    $region30: #{densenet2_forward.25} parent=5 // pred_check_branch
      %224 = sbr.rel (%p221) target = $region32
    $region31: #{densenet2_forward.25} parent=5 // pred_region
      %s225 = ssub.s32 %s11, 1
      %s226 = smul.u32 8, %s21
      %s227 = smul.u32 9, %s23
      %p228 = scmp.lt.s32.totalorder %s226, 15
      %s229 = scalar_select %p228, %s226, 15
      %p230 = scmp.lt.s32.totalorder %s227, 8
      %s231 = scalar_select %p230, %s227, 8
      %s232 = smul.addr %s229, 9
      %s233 = sadd.s32 %s231, %s232
      %s234 = smul.addr %s233, 4
      %s235 = scalar_lea.vmem %s0, %s234
      %p236 = pneg %p58
      %p237 = pneg %p55
      %s238 = smul.u32 8, %s21
      %p239 = scmp.lt.s32.totalorder %s238, 15
      %s240 = scalar_select %p239, %s238, 15
      %s241 = smul.addr %s240, 4
      %s242 = scalar_lea.vmem %s1, %s241
      %p243 = pneg %p84
      %p244 = pneg %p81
      %s245 = smul.u32 144, %s23
      %p246 = scmp.lt.s32.totalorder %s245, 143
      %s247 = scalar_select %p246, %s245, 143
      %p248 = scmp.lt.s32.totalorder %s22, 0
      %s249 = scalar_select %p248, %s22, 0
      %s250 = sadd.s32 %s249, %s247
      %s251 = smul.addr %s250, 4
      %s252 = scalar_lea.vmem %s2, %s251
      %p253 = pneg %p112
      %p254 = pneg %p109
      %p255 = pneg %p138
      %p256 = pneg %p135
      %s257 = smul.u32 8, %s21
      %p258 = scmp.lt.s32.totalorder %s257, 15
      %s259 = scalar_select %p258, %s257, 15
      %s260 = smul.addr %s259, 4
      %s261 = scalar_lea.vmem %s3, %s260
      %p262 = pneg %p164
      %p263 = pneg %p161
      %p264 = scmp.lt.s32.totalorder %s21, 1
      %s265 = scalar_select %p264, %s21, 1
      %s266 = smul.addr %s265, 8
      %s267 = scalar_lea.vmem %s4, %s266
      %s268 = smul.u32 8, %s21
      %s269 = smul.u32 9, %s23
      %p270 = scmp.lt.s32.totalorder %s268, 15
      %s271 = scalar_select %p270, %s268, 15
      %p272 = scmp.lt.s32.totalorder %s269, 8
      %s273 = scalar_select %p272, %s269, 8
      %s274 = smul.addr %s271, 9
      %s275 = sadd.s32 %s273, %s274
      %s276 = smul.addr %s275, 4
      %s277 = scalar_lea.vmem %s0, %s276
      %s278 = smul.u32 8, %s21
      %s279 = smul.u32 9, %s23
      %s280 = smul.u32 8, %s21
      %p281 = scmp.lt.s32.totalorder %s280, 15
      %s282 = scalar_select %p281, %s280, 15
      %s283 = smul.addr %s282, 4
      %s284 = scalar_lea.vmem %s1, %s283
      %s285 = smul.u32 8, %s21
      %s286 = smul.u32 144, %s23
      %p287 = scmp.lt.s32.totalorder %s286, 143
      %s288 = scalar_select %p287, %s286, 143
      %p289 = scmp.lt.s32.totalorder %s22, 0
      %s290 = scalar_select %p289, %s22, 0
      %s291 = sadd.s32 %s290, %s288
      %s292 = smul.addr %s291, 4
      %s293 = scalar_lea.vmem %s2, %s292
      %s294 = smul.u32 144, %s23
      %s295 = smul.u32 8, %s21
      %p296 = scmp.lt.s32.totalorder %s295, 15
      %s297 = scalar_select %p296, %s295, 15
      %s298 = smul.addr %s297, 4
      %s299 = scalar_lea.vmem %s3, %s298
      %s300 = smul.u32 8, %s21
      %p301 = scmp.lt.s32.totalorder %s21, 1
      %s302 = scalar_select %p301, %s21, 1
      %s303 = smul.addr %s302, 8
      %s304 = scalar_lea.vmem %s4, %s303
      %v305 = vld [vmem:[%s277] sm:$0xff]
      %v306 = vld [vmem:[%s277 + $0x8] sm:$0xff]
      %v307 = vld [vmem:[%s277 + $0x10] sm:$0xff]
      %v308 = vld [vmem:[%s277 + $0x18] sm:$0xff]
      %v309 = vld [vmem:[%s277 + $0x20] sm:$0xf]
      %v310 = vld [vmem:[%s277 + $0x24] sm:$0xff]
      %v311 = vld [vmem:[%s277 + $0x2c] sm:$0xff]
      %v312 = vld [vmem:[%s277 + $0x34] sm:$0xff]
      %v313 = vld [vmem:[%s277 + $0x3c] sm:$0xff]
      %v314 = vld [vmem:[%s277 + $0x44] sm:$0xf]
      %v315 = vld [vmem:[%s277 + $0x48] sm:$0xff]
      %v316 = vld [vmem:[%s277 + $0x50] sm:$0xff]
      %v317 = vld [vmem:[%s277 + $0x58] sm:$0xff]
      %v318 = vld [vmem:[%s277 + $0x60] sm:$0xff]
      %v319 = vld [vmem:[%s277 + $0x68] sm:$0xf]
      %v320 = vld [vmem:[%s277 + $0x6c] sm:$0xff]
      %v321 = vld [vmem:[%s277 + $0x74] sm:$0xff]
      %v322 = vld [vmem:[%s277 + $0x7c] sm:$0xff]
      %v323 = vld [vmem:[%s277 + $0x84] sm:$0xff]
      %v324 = vld [vmem:[%s277 + $0x8c] sm:$0xf]
      %v325 = vld [vmem:[%s277 + $0x90] sm:$0xff]
      %v326 = vld [vmem:[%s277 + $0x98] sm:$0xff]
      %v327 = vld [vmem:[%s277 + $0xa0] sm:$0xff]
      %v328 = vld [vmem:[%s277 + $0xa8] sm:$0xff]
      %v329 = vld [vmem:[%s277 + $0xb0] sm:$0xf]
      %v330 = vld [vmem:[%s277 + $0xb4] sm:$0xff]
      %v331 = vld [vmem:[%s277 + $0xbc] sm:$0xff]
      %v332 = vld [vmem:[%s277 + $0xc4] sm:$0xff]
      %v333 = vld [vmem:[%s277 + $0xcc] sm:$0xff]
      %v334 = vld [vmem:[%s277 + $0xd4] sm:$0xf]
      %v335 = vld [vmem:[%s277 + $0xd8] sm:$0xff]
      %v336 = vld [vmem:[%s277 + $0xe0] sm:$0xff]
      %v337 = vld [vmem:[%s277 + $0xe8] sm:$0xff]
      %v338 = vld [vmem:[%s277 + $0xf0] sm:$0xff]
      %v339 = vld [vmem:[%s277 + $0xf8] sm:$0xf]
      %v340 = vld [vmem:[%s277 + $0xfc] sm:$0xff]
      %v341 = vld [vmem:[%s277 + $0x104] sm:$0xff]
      %v342 = vld [vmem:[%s277 + $0x10c] sm:$0xff]
      %v343 = vld [vmem:[%s277 + $0x114] sm:$0xff]
      %v344 = vld [vmem:[%s277 + $0x11c] sm:$0xf]
      %v345 = vld [vmem:[%s293] sm:$0xf]
      %v346 = vld [vmem:[%s293 + $0x4] sm:$0xf]
      %v347 = vld [vmem:[%s293 + $0x8] sm:$0xf]
      %v348 = vld [vmem:[%s293 + $0xc] sm:$0xf]
      %v349 = vld [vmem:[%s293 + $0x10] sm:$0xf]
      %v350 = vld [vmem:[%s293 + $0x14] sm:$0xf]
      %v351 = vld [vmem:[%s293 + $0x18] sm:$0xf]
      %v352 = vld [vmem:[%s293 + $0x1c] sm:$0xf]
      %v353 = vld [vmem:[%s293 + $0x20] sm:$0xf]
      %v354 = vld [vmem:[%s293 + $0x24] sm:$0xf]
      %v355 = vld [vmem:[%s293 + $0x28] sm:$0xf]
      %v356 = vld [vmem:[%s293 + $0x2c] sm:$0xf]
      %v357 = vld [vmem:[%s293 + $0x30] sm:$0xf]
      %v358 = vld [vmem:[%s293 + $0x34] sm:$0xf]
      %v359 = vld [vmem:[%s293 + $0x38] sm:$0xf]
      %v360 = vld [vmem:[%s293 + $0x3c] sm:$0xf]
      %v361 = vld [vmem:[%s293 + $0x40] sm:$0xf]
      %v362 = vld [vmem:[%s293 + $0x44] sm:$0xf]
      %v363 = vld [vmem:[%s293 + $0x48] sm:$0xf]
      %v364 = vld [vmem:[%s293 + $0x4c] sm:$0xf]
      %v365 = vld [vmem:[%s293 + $0x50] sm:$0xf]
      %v366 = vld [vmem:[%s293 + $0x54] sm:$0xf]
      %v367 = vld [vmem:[%s293 + $0x58] sm:$0xf]
      %v368 = vld [vmem:[%s293 + $0x5c] sm:$0xf]
      %v369 = vld [vmem:[%s293 + $0x60] sm:$0xf]
      %v370 = vld [vmem:[%s293 + $0x64] sm:$0xf]
      %v371 = vld [vmem:[%s293 + $0x68] sm:$0xf]
      %v372 = vld [vmem:[%s293 + $0x6c] sm:$0xf]
      %v373 = vld [vmem:[%s293 + $0x70] sm:$0xf]
      %v374 = vld [vmem:[%s293 + $0x74] sm:$0xf]
      %v375 = vld [vmem:[%s293 + $0x78] sm:$0xf]
      %v376 = vld [vmem:[%s293 + $0x7c] sm:$0xf]
      %v377 = vld [vmem:[%s293 + $0x80] sm:$0xf]
      %v378 = vld [vmem:[%s293 + $0x84] sm:$0xf]
      %v379 = vld [vmem:[%s293 + $0x88] sm:$0xf]
      %v380 = vld [vmem:[%s293 + $0x8c] sm:$0xf]
      %v381 = vld [vmem:[%s293 + $0x90] sm:$0xf]
      %v382 = vld [vmem:[%s293 + $0x94] sm:$0xf]
      %v383 = vld [vmem:[%s293 + $0x98] sm:$0xf]
      %v384 = vld [vmem:[%s293 + $0x9c] sm:$0xf]
      %v385 = vld [vmem:[%s293 + $0xa0] sm:$0xf]
      %v386 = vld [vmem:[%s293 + $0xa4] sm:$0xf]
      %v387 = vld [vmem:[%s293 + $0xa8] sm:$0xf]
      %v388 = vld [vmem:[%s293 + $0xac] sm:$0xf]
      %v389 = vld [vmem:[%s293 + $0xb0] sm:$0xf]
      %v390 = vld [vmem:[%s293 + $0xb4] sm:$0xf]
      %v391 = vld [vmem:[%s293 + $0xb8] sm:$0xf]
      %v392 = vld [vmem:[%s293 + $0xbc] sm:$0xf]
      %v393 = vld [vmem:[%s293 + $0xc0] sm:$0xf]
      %v394 = vld [vmem:[%s293 + $0xc4] sm:$0xf]
      %v395 = vld [vmem:[%s293 + $0xc8] sm:$0xf]
      %v396 = vld [vmem:[%s293 + $0xcc] sm:$0xf]
      %v397 = vld [vmem:[%s293 + $0xd0] sm:$0xf]
      %v398 = vld [vmem:[%s293 + $0xd4] sm:$0xf]
      %v399 = vld [vmem:[%s293 + $0xd8] sm:$0xf]
      %v400 = vld [vmem:[%s293 + $0xdc] sm:$0xf]
      %v401 = vld [vmem:[%s293 + $0xe0] sm:$0xf]
      %v402 = vld [vmem:[%s293 + $0xe4] sm:$0xf]
      %v403 = vld [vmem:[%s293 + $0xe8] sm:$0xf]
      %v404 = vld [vmem:[%s293 + $0xec] sm:$0xf]
      %v405 = vld [vmem:[%s293 + $0xf0] sm:$0xf]
      %v406 = vld [vmem:[%s293 + $0xf4] sm:$0xf]
      %v407 = vld [vmem:[%s293 + $0xf8] sm:$0xf]
      %v408 = vld [vmem:[%s293 + $0xfc] sm:$0xf]
      %v409 = vld [vmem:[%s293 + $0x100] sm:$0xf]
      %v410 = vld [vmem:[%s293 + $0x104] sm:$0xf]
      %v411 = vld [vmem:[%s293 + $0x108] sm:$0xf]
      %v412 = vld [vmem:[%s293 + $0x10c] sm:$0xf]
      %v413 = vld [vmem:[%s293 + $0x110] sm:$0xf]
      %v414 = vld [vmem:[%s293 + $0x114] sm:$0xf]
      %v415 = vld [vmem:[%s293 + $0x118] sm:$0xf]
      %v416 = vld [vmem:[%s293 + $0x11c] sm:$0xf]
      %v417 = vld [vmem:[%s293 + $0x120] sm:$0xf]
      %v418 = vld [vmem:[%s293 + $0x124] sm:$0xf]
      %v419 = vld [vmem:[%s293 + $0x128] sm:$0xf]
      %v420 = vld [vmem:[%s293 + $0x12c] sm:$0xf]
      %v421 = vld [vmem:[%s293 + $0x130] sm:$0xf]
      %v422 = vld [vmem:[%s293 + $0x134] sm:$0xf]
      %v423 = vld [vmem:[%s293 + $0x138] sm:$0xf]
      %v424 = vld [vmem:[%s293 + $0x13c] sm:$0xf]
      %v425 = vld [vmem:[%s293 + $0x140] sm:$0xf]
      %v426 = vld [vmem:[%s293 + $0x144] sm:$0xf]
      %v427 = vld [vmem:[%s293 + $0x148] sm:$0xf]
      %v428 = vld [vmem:[%s293 + $0x14c] sm:$0xf]
      %v429 = vld [vmem:[%s293 + $0x150] sm:$0xf]
      %v430 = vld [vmem:[%s293 + $0x154] sm:$0xf]
      %v431 = vld [vmem:[%s293 + $0x158] sm:$0xf]
      %v432 = vld [vmem:[%s293 + $0x15c] sm:$0xf]
      %v433 = vld [vmem:[%s293 + $0x160] sm:$0xf]
      %v434 = vld [vmem:[%s293 + $0x164] sm:$0xf]
      %v435 = vld [vmem:[%s293 + $0x168] sm:$0xf]
      %v436 = vld [vmem:[%s293 + $0x16c] sm:$0xf]
      %v437 = vld [vmem:[%s293 + $0x170] sm:$0xf]
      %v438 = vld [vmem:[%s293 + $0x174] sm:$0xf]
      %v439 = vld [vmem:[%s293 + $0x178] sm:$0xf]
      %v440 = vld [vmem:[%s293 + $0x17c] sm:$0xf]
      %v441 = vld [vmem:[%s293 + $0x180] sm:$0xf]
      %v442 = vld [vmem:[%s293 + $0x184] sm:$0xf]
      %v443 = vld [vmem:[%s293 + $0x188] sm:$0xf]
      %v444 = vld [vmem:[%s293 + $0x18c] sm:$0xf]
      %v445 = vld [vmem:[%s293 + $0x190] sm:$0xf]
      %v446 = vld [vmem:[%s293 + $0x194] sm:$0xf]
      %v447 = vld [vmem:[%s293 + $0x198] sm:$0xf]
      %v448 = vld [vmem:[%s293 + $0x19c] sm:$0xf]
      %v449 = vld [vmem:[%s293 + $0x1a0] sm:$0xf]
      %v450 = vld [vmem:[%s293 + $0x1a4] sm:$0xf]
      %v451 = vld [vmem:[%s293 + $0x1a8] sm:$0xf]
      %v452 = vld [vmem:[%s293 + $0x1ac] sm:$0xf]
      %v453 = vld [vmem:[%s293 + $0x1b0] sm:$0xf]
      %v454 = vld [vmem:[%s293 + $0x1b4] sm:$0xf]
      %v455 = vld [vmem:[%s293 + $0x1b8] sm:$0xf]
      %v456 = vld [vmem:[%s293 + $0x1bc] sm:$0xf]
      %v457 = vld [vmem:[%s293 + $0x1c0] sm:$0xf]
      %v458 = vld [vmem:[%s293 + $0x1c4] sm:$0xf]
      %v459 = vld [vmem:[%s293 + $0x1c8] sm:$0xf]
      %v460 = vld [vmem:[%s293 + $0x1cc] sm:$0xf]
      %v461 = vld [vmem:[%s293 + $0x1d0] sm:$0xf]
      %v462 = vld [vmem:[%s293 + $0x1d4] sm:$0xf]
      %v463 = vld [vmem:[%s293 + $0x1d8] sm:$0xf]
      %v464 = vld [vmem:[%s293 + $0x1dc] sm:$0xf]
      %v465 = vld [vmem:[%s293 + $0x1e0] sm:$0xf]
      %v466 = vld [vmem:[%s293 + $0x1e4] sm:$0xf]
      %v467 = vld [vmem:[%s293 + $0x1e8] sm:$0xf]
      %v468 = vld [vmem:[%s293 + $0x1ec] sm:$0xf]
      %v469 = vld [vmem:[%s293 + $0x1f0] sm:$0xf]
      %v470 = vld [vmem:[%s293 + $0x1f4] sm:$0xf]
      %v471 = vld [vmem:[%s293 + $0x1f8] sm:$0xf]
      %v472 = vld [vmem:[%s293 + $0x1fc] sm:$0xf]
      %v473 = vld [vmem:[%s293 + $0x200] sm:$0xf]
      %v474 = vld [vmem:[%s293 + $0x204] sm:$0xf]
      %v475 = vld [vmem:[%s293 + $0x208] sm:$0xf]
      %v476 = vld [vmem:[%s293 + $0x20c] sm:$0xf]
      %v477 = vld [vmem:[%s293 + $0x210] sm:$0xf]
      %v478 = vld [vmem:[%s293 + $0x214] sm:$0xf]
      %v479 = vld [vmem:[%s293 + $0x218] sm:$0xf]
      %v480 = vld [vmem:[%s293 + $0x21c] sm:$0xf]
      %v481 = vld [vmem:[%s293 + $0x220] sm:$0xf]
      %v482 = vld [vmem:[%s293 + $0x224] sm:$0xf]
      %v483 = vld [vmem:[%s293 + $0x228] sm:$0xf]
      %v484 = vld [vmem:[%s293 + $0x22c] sm:$0xf]
      %v485 = vld [vmem:[%s293 + $0x230] sm:$0xf]
      %v486 = vld [vmem:[%s293 + $0x234] sm:$0xf]
      %v487 = vld [vmem:[%s293 + $0x238] sm:$0xf]
      %v488 = vld [vmem:[%s293 + $0x23c] sm:$0xf]
      %v529 = vunpack.c.l.b16 %v305
      %v530 = vunpack.c.h.b16 %v305
      %v531 = vunpack.c.l.b16 %v306
      %v532 = vunpack.c.h.b16 %v306
      %v533 = vunpack.c.l.b16 %v307
      %v534 = vunpack.c.h.b16 %v307
      %v535 = vunpack.c.l.b16 %v308
      %v536 = vunpack.c.h.b16 %v308
      %v537 = vunpack.c.l.b16 %v309
      %v538 = vunpack.c.l.b16 %v310
      %v539 = vunpack.c.h.b16 %v310
      %v540 = vunpack.c.l.b16 %v311
      %v541 = vunpack.c.h.b16 %v311
      %v542 = vunpack.c.l.b16 %v312
      %v543 = vunpack.c.h.b16 %v312
      %v544 = vunpack.c.l.b16 %v313
      %v545 = vunpack.c.h.b16 %v313
      %v546 = vunpack.c.l.b16 %v314
      %v547 = vunpack.c.l.b16 %v315
      %v548 = vunpack.c.h.b16 %v315
      %v549 = vunpack.c.l.b16 %v316
      %v550 = vunpack.c.h.b16 %v316
      %v551 = vunpack.c.l.b16 %v317
      %v552 = vunpack.c.h.b16 %v317
      %v553 = vunpack.c.l.b16 %v318
      %v554 = vunpack.c.h.b16 %v318
      %v555 = vunpack.c.l.b16 %v319
      %v556 = vunpack.c.l.b16 %v320
      %v557 = vunpack.c.h.b16 %v320
      %v558 = vunpack.c.l.b16 %v321
      %v559 = vunpack.c.h.b16 %v321
      %v560 = vunpack.c.l.b16 %v322
      %v561 = vunpack.c.h.b16 %v322
      %v562 = vunpack.c.l.b16 %v323
      %v563 = vunpack.c.h.b16 %v323
      %v564 = vunpack.c.l.b16 %v324
      %v565 = vunpack.c.l.b16 %v325
      %v566 = vunpack.c.h.b16 %v325
      %v567 = vunpack.c.l.b16 %v326
      %v568 = vunpack.c.h.b16 %v326
      %v569 = vunpack.c.l.b16 %v327
      %v570 = vunpack.c.h.b16 %v327
      %v571 = vunpack.c.l.b16 %v328
      %v572 = vunpack.c.h.b16 %v328
      %v573 = vunpack.c.l.b16 %v329
      %v574 = vunpack.c.l.b16 %v330
      %v575 = vunpack.c.h.b16 %v330
      %v576 = vunpack.c.l.b16 %v331
      %v577 = vunpack.c.h.b16 %v331
      %v578 = vunpack.c.l.b16 %v332
      %v579 = vunpack.c.h.b16 %v332
      %v580 = vunpack.c.l.b16 %v333
      %v581 = vunpack.c.h.b16 %v333
      %v582 = vunpack.c.l.b16 %v334
      %v583 = vunpack.c.l.b16 %v335
      %v584 = vunpack.c.h.b16 %v335
      %v585 = vunpack.c.l.b16 %v336
      %v586 = vunpack.c.h.b16 %v336
      %v587 = vunpack.c.l.b16 %v337
      %v588 = vunpack.c.h.b16 %v337
      %v589 = vunpack.c.l.b16 %v338
      %v590 = vunpack.c.h.b16 %v338
      %v591 = vunpack.c.l.b16 %v339
      %v592 = vunpack.c.l.b16 %v340
      %v593 = vunpack.c.h.b16 %v340
      %v594 = vunpack.c.l.b16 %v341
      %v595 = vunpack.c.h.b16 %v341
      %v596 = vunpack.c.l.b16 %v342
      %v597 = vunpack.c.h.b16 %v342
      %v598 = vunpack.c.l.b16 %v343
      %v599 = vunpack.c.h.b16 %v343
      %v600 = vunpack.c.l.b16 %v344
      %v601 = vpack.c.b16 %v538, %v529
      %v602 = vpack.c.b16 %v539, %v530
      %v603 = vpack.c.b16 %v540, %v531
      %v604 = vpack.c.b16 %v541, %v532
      %v605 = vpack.c.b16 %v542, %v533
      %v606 = vpack.c.b16 %v543, %v534
      %v607 = vpack.c.b16 %v544, %v535
      %v608 = vpack.c.b16 %v545, %v536
      %v609 = vpack.c.b16 %v546, %v537
      %v610 = vpack.c.b16 %v556, %v547
      %v611 = vpack.c.b16 %v557, %v548
      %v612 = vpack.c.b16 %v558, %v549
      %v613 = vpack.c.b16 %v559, %v550
      %v614 = vpack.c.b16 %v560, %v551
      %v615 = vpack.c.b16 %v561, %v552
      %v616 = vpack.c.b16 %v562, %v553
      %v617 = vpack.c.b16 %v563, %v554
      %v618 = vpack.c.b16 %v564, %v555
      %v619 = vpack.c.b16 %v574, %v565
      %v620 = vpack.c.b16 %v575, %v566
      %v621 = vpack.c.b16 %v576, %v567
      %v622 = vpack.c.b16 %v577, %v568
      %v623 = vpack.c.b16 %v578, %v569
      %v624 = vpack.c.b16 %v579, %v570
      %v625 = vpack.c.b16 %v580, %v571
      %v626 = vpack.c.b16 %v581, %v572
      %v627 = vpack.c.b16 %v582, %v573
      %v628 = vpack.c.b16 %v592, %v583
      %v629 = vpack.c.b16 %v593, %v584
      %v630 = vpack.c.b16 %v594, %v585
      %v631 = vpack.c.b16 %v595, %v586
      %v632 = vpack.c.b16 %v596, %v587
      %v633 = vpack.c.b16 %v597, %v588
      %v634 = vpack.c.b16 %v598, %v589
      %v635 = vpack.c.b16 %v599, %v590
      %v636 = vpack.c.b16 %v600, %v591
      %v817 = vunpack.c.l.b16 %v345
      %v818 = vunpack.c.l.b16 %v346
      %v819 = vunpack.c.l.b16 %v347
      %v820 = vunpack.c.l.b16 %v348
      %v821 = vunpack.c.l.b16 %v349
      %v822 = vunpack.c.l.b16 %v350
      %v823 = vunpack.c.l.b16 %v351
      %v824 = vunpack.c.l.b16 %v352
      %v825 = vunpack.c.l.b16 %v353
      %v826 = vunpack.c.l.b16 %v354
      %v827 = vunpack.c.l.b16 %v355
      %v828 = vunpack.c.l.b16 %v356
      %v829 = vunpack.c.l.b16 %v357
      %v830 = vunpack.c.l.b16 %v358
      %v831 = vunpack.c.l.b16 %v359
      %v832 = vunpack.c.l.b16 %v360
      %v833 = vunpack.c.l.b16 %v361
      %v834 = vunpack.c.l.b16 %v362
      %v835 = vunpack.c.l.b16 %v363
      %v836 = vunpack.c.l.b16 %v364
      %v837 = vunpack.c.l.b16 %v365
      %v838 = vunpack.c.l.b16 %v366
      %v839 = vunpack.c.l.b16 %v367
      %v840 = vunpack.c.l.b16 %v368
      %v841 = vunpack.c.l.b16 %v369
      %v842 = vunpack.c.l.b16 %v370
      %v843 = vunpack.c.l.b16 %v371
      %v844 = vunpack.c.l.b16 %v372
      %v845 = vunpack.c.l.b16 %v373
      %v846 = vunpack.c.l.b16 %v374
      %v847 = vunpack.c.l.b16 %v375
      %v848 = vunpack.c.l.b16 %v376
      %v849 = vunpack.c.l.b16 %v377
      %v850 = vunpack.c.l.b16 %v378
      %v851 = vunpack.c.l.b16 %v379
      %v852 = vunpack.c.l.b16 %v380
      %v853 = vunpack.c.l.b16 %v381
      %v854 = vunpack.c.l.b16 %v382
      %v855 = vunpack.c.l.b16 %v383
      %v856 = vunpack.c.l.b16 %v384
      %v857 = vunpack.c.l.b16 %v385
      %v858 = vunpack.c.l.b16 %v386
      %v859 = vunpack.c.l.b16 %v387
      %v860 = vunpack.c.l.b16 %v388
      %v861 = vunpack.c.l.b16 %v389
      %v862 = vunpack.c.l.b16 %v390
      %v863 = vunpack.c.l.b16 %v391
      %v864 = vunpack.c.l.b16 %v392
      %v865 = vunpack.c.l.b16 %v393
      %v866 = vunpack.c.l.b16 %v394
      %v867 = vunpack.c.l.b16 %v395
      %v868 = vunpack.c.l.b16 %v396
      %v869 = vunpack.c.l.b16 %v397
      %v870 = vunpack.c.l.b16 %v398
      %v871 = vunpack.c.l.b16 %v399
      %v872 = vunpack.c.l.b16 %v400
      %v873 = vunpack.c.l.b16 %v401
      %v874 = vunpack.c.l.b16 %v402
      %v875 = vunpack.c.l.b16 %v403
      %v876 = vunpack.c.l.b16 %v404
      %v877 = vunpack.c.l.b16 %v405
      %v878 = vunpack.c.l.b16 %v406
      %v879 = vunpack.c.l.b16 %v407
      %v880 = vunpack.c.l.b16 %v408
      %v881 = vunpack.c.l.b16 %v409
      %v882 = vunpack.c.l.b16 %v410
      %v883 = vunpack.c.l.b16 %v411
      %v884 = vunpack.c.l.b16 %v412
      %v885 = vunpack.c.l.b16 %v413
      %v886 = vunpack.c.l.b16 %v414
      %v887 = vunpack.c.l.b16 %v415
      %v888 = vunpack.c.l.b16 %v416
      %v889 = vunpack.c.l.b16 %v417
      %v890 = vunpack.c.l.b16 %v418
      %v891 = vunpack.c.l.b16 %v419
      %v892 = vunpack.c.l.b16 %v420
      %v893 = vunpack.c.l.b16 %v421
      %v894 = vunpack.c.l.b16 %v422
      %v895 = vunpack.c.l.b16 %v423
      %v896 = vunpack.c.l.b16 %v424
      %v897 = vunpack.c.l.b16 %v425
      %v898 = vunpack.c.l.b16 %v426
      %v899 = vunpack.c.l.b16 %v427
      %v900 = vunpack.c.l.b16 %v428
      %v901 = vunpack.c.l.b16 %v429
      %v902 = vunpack.c.l.b16 %v430
      %v903 = vunpack.c.l.b16 %v431
      %v904 = vunpack.c.l.b16 %v432
      %v905 = vunpack.c.l.b16 %v433
      %v906 = vunpack.c.l.b16 %v434
      %v907 = vunpack.c.l.b16 %v435
      %v908 = vunpack.c.l.b16 %v436
      %v909 = vunpack.c.l.b16 %v437
      %v910 = vunpack.c.l.b16 %v438
      %v911 = vunpack.c.l.b16 %v439
      %v912 = vunpack.c.l.b16 %v440
      %v913 = vunpack.c.l.b16 %v441
      %v914 = vunpack.c.l.b16 %v442
      %v915 = vunpack.c.l.b16 %v443
      %v916 = vunpack.c.l.b16 %v444
      %v917 = vunpack.c.l.b16 %v445
      %v918 = vunpack.c.l.b16 %v446
      %v919 = vunpack.c.l.b16 %v447
      %v920 = vunpack.c.l.b16 %v448
      %v921 = vunpack.c.l.b16 %v449
      %v922 = vunpack.c.l.b16 %v450
      %v923 = vunpack.c.l.b16 %v451
      %v924 = vunpack.c.l.b16 %v452
      %v925 = vunpack.c.l.b16 %v453
      %v926 = vunpack.c.l.b16 %v454
      %v927 = vunpack.c.l.b16 %v455
      %v928 = vunpack.c.l.b16 %v456
      %v929 = vunpack.c.l.b16 %v457
      %v930 = vunpack.c.l.b16 %v458
      %v931 = vunpack.c.l.b16 %v459
      %v932 = vunpack.c.l.b16 %v460
      %v933 = vunpack.c.l.b16 %v461
      %v934 = vunpack.c.l.b16 %v462
      %v935 = vunpack.c.l.b16 %v463
      %v936 = vunpack.c.l.b16 %v464
      %v937 = vunpack.c.l.b16 %v465
      %v938 = vunpack.c.l.b16 %v466
      %v939 = vunpack.c.l.b16 %v467
      %v940 = vunpack.c.l.b16 %v468
      %v941 = vunpack.c.l.b16 %v469
      %v942 = vunpack.c.l.b16 %v470
      %v943 = vunpack.c.l.b16 %v471
      %v944 = vunpack.c.l.b16 %v472
      %v945 = vunpack.c.l.b16 %v473
      %v946 = vunpack.c.l.b16 %v474
      %v947 = vunpack.c.l.b16 %v475
      %v948 = vunpack.c.l.b16 %v476
      %v949 = vunpack.c.l.b16 %v477
      %v950 = vunpack.c.l.b16 %v478
      %v951 = vunpack.c.l.b16 %v479
      %v952 = vunpack.c.l.b16 %v480
      %v953 = vunpack.c.l.b16 %v481
      %v954 = vunpack.c.l.b16 %v482
      %v955 = vunpack.c.l.b16 %v483
      %v956 = vunpack.c.l.b16 %v484
      %v957 = vunpack.c.l.b16 %v485
      %v958 = vunpack.c.l.b16 %v486
      %v959 = vunpack.c.l.b16 %v487
      %v960 = vunpack.c.l.b16 %v488
      %v961 = vpack.c.b16 %v818, %v817
      %v962 = vpack.c.b16 %v820, %v819
      %v963 = vpack.c.b16 %v822, %v821
      %v964 = vpack.c.b16 %v824, %v823
      %v965 = vpack.c.b16 %v826, %v825
      %v966 = vpack.c.b16 %v828, %v827
      %v967 = vpack.c.b16 %v830, %v829
      %v968 = vpack.c.b16 %v832, %v831
      %v969 = vpack.c.b16 %v834, %v833
      %v970 = vpack.c.b16 %v836, %v835
      %v971 = vpack.c.b16 %v838, %v837
      %v972 = vpack.c.b16 %v840, %v839
      %v973 = vpack.c.b16 %v842, %v841
      %v974 = vpack.c.b16 %v844, %v843
      %v975 = vpack.c.b16 %v846, %v845
      %v976 = vpack.c.b16 %v848, %v847
      %v977 = vpack.c.b16 %v850, %v849
      %v978 = vpack.c.b16 %v852, %v851
      %v979 = vpack.c.b16 %v854, %v853
      %v980 = vpack.c.b16 %v856, %v855
      %v981 = vpack.c.b16 %v858, %v857
      %v982 = vpack.c.b16 %v860, %v859
      %v983 = vpack.c.b16 %v862, %v861
      %v984 = vpack.c.b16 %v864, %v863
      %v985 = vpack.c.b16 %v866, %v865
      %v986 = vpack.c.b16 %v868, %v867
      %v987 = vpack.c.b16 %v870, %v869
      %v988 = vpack.c.b16 %v872, %v871
      %v989 = vpack.c.b16 %v874, %v873
      %v990 = vpack.c.b16 %v876, %v875
      %v991 = vpack.c.b16 %v878, %v877
      %v992 = vpack.c.b16 %v880, %v879
      %v993 = vpack.c.b16 %v882, %v881
      %v994 = vpack.c.b16 %v884, %v883
      %v995 = vpack.c.b16 %v886, %v885
      %v996 = vpack.c.b16 %v888, %v887
      %v997 = vpack.c.b16 %v890, %v889
      %v998 = vpack.c.b16 %v892, %v891
      %v999 = vpack.c.b16 %v894, %v893
      %v1000 = vpack.c.b16 %v896, %v895
      %v1001 = vpack.c.b16 %v898, %v897
      %v1002 = vpack.c.b16 %v900, %v899
      %v1003 = vpack.c.b16 %v902, %v901
      %v1004 = vpack.c.b16 %v904, %v903
      %v1005 = vpack.c.b16 %v906, %v905
      %v1006 = vpack.c.b16 %v908, %v907
      %v1007 = vpack.c.b16 %v910, %v909
      %v1008 = vpack.c.b16 %v912, %v911
      %v1009 = vpack.c.b16 %v914, %v913
      %v1010 = vpack.c.b16 %v916, %v915
      %v1011 = vpack.c.b16 %v918, %v917
      %v1012 = vpack.c.b16 %v920, %v919
      %v1013 = vpack.c.b16 %v922, %v921
      %v1014 = vpack.c.b16 %v924, %v923
      %v1015 = vpack.c.b16 %v926, %v925
      %v1016 = vpack.c.b16 %v928, %v927
      %v1017 = vpack.c.b16 %v930, %v929
      %v1018 = vpack.c.b16 %v932, %v931
      %v1019 = vpack.c.b16 %v934, %v933
      %v1020 = vpack.c.b16 %v936, %v935
      %v1021 = vpack.c.b16 %v938, %v937
      %v1022 = vpack.c.b16 %v940, %v939
      %v1023 = vpack.c.b16 %v942, %v941
      %v1024 = vpack.c.b16 %v944, %v943
      %v1025 = vpack.c.b16 %v946, %v945
      %v1026 = vpack.c.b16 %v948, %v947
      %v1027 = vpack.c.b16 %v950, %v949
      %v1028 = vpack.c.b16 %v952, %v951
      %v1029 = vpack.c.b16 %v954, %v953
      %v1030 = vpack.c.b16 %v956, %v955
      %v1031 = vpack.c.b16 %v958, %v957
      %v1032 = vpack.c.b16 %v960, %v959
      %1105 = vmatpush.bf16.msra.mxu0 %v968
      %1106 = vmatpush.bf16.msra.mxu0 %v967
      %1107 = vmatpush.bf16.msra.mxu0 %v966
      %1108 = vmatpush.bf16.msra.mxu0 %v965
      %1109 = vmatpush.bf16.msra.mxu0 %v964
      %1110 = vmatpush.bf16.msra.mxu0 %v963
      %1111 = vmatpush.bf16.msra.mxu0 %v962
      %1112 = vmatpush.bf16.msra.mxu0 %v961
      %1113 = vmatmul.bf16.gmra.mxu0 %v601
      %v1114 = vpop.f32.mrf.mxu0
      %v1115 = vadd.f32 0.0, %v1114
      %v1116 = vpop.f32.mrf.mxu0
      %v1117 = vadd.f32 0.0, %v1116
      %1118 = vmatmul.bf16.gmra.mxu0 %v610
      %v1119 = vpop.f32.mrf.mxu0
      %v1120 = vadd.f32 0.0, %v1119
      %v1121 = vpop.f32.mrf.mxu0
      %v1122 = vadd.f32 0.0, %v1121
      %1123 = vmatmul.bf16.gmra.mxu0 %v619
      %v1124 = vpop.f32.mrf.mxu0
      %v1125 = vadd.f32 0.0, %v1124
      %v1126 = vpop.f32.mrf.mxu0
      %v1127 = vadd.f32 0.0, %v1126
      %1128 = vmatmul.bf16.gmra.mxu0 %v628
      %v1129 = vpop.f32.mrf.mxu0
      %v1130 = vadd.f32 0.0, %v1129
      %v1131 = vpop.f32.mrf.mxu0
      %v1132 = vadd.f32 0.0, %v1131
      %1133 = vdwg.mxu0
      %1134 = vmatpush.bf16.msra.mxu0 %v976
      %1135 = vmatpush.bf16.msra.mxu0 %v975
      %1136 = vmatpush.bf16.msra.mxu0 %v974
      %1137 = vmatpush.bf16.msra.mxu0 %v973
      %1138 = vmatpush.bf16.msra.mxu0 %v972
      %1139 = vmatpush.bf16.msra.mxu0 %v971
      %1140 = vmatpush.bf16.msra.mxu0 %v970
      %1141 = vmatpush.bf16.msra.mxu0 %v969
      %1142 = vmatmul.bf16.gmra.mxu0 %v602
      %v1143 = vpop.f32.mrf.mxu0
      %v1144 = vadd.f32 %v1115, %v1143
      %v1145 = vpop.f32.mrf.mxu0
      %v1146 = vadd.f32 %v1117, %v1145
      %1147 = vmatmul.bf16.gmra.mxu0 %v611
      %v1148 = vpop.f32.mrf.mxu0
      %v1149 = vadd.f32 %v1120, %v1148
      %v1150 = vpop.f32.mrf.mxu0
      %v1151 = vadd.f32 %v1122, %v1150
      %1152 = vmatmul.bf16.gmra.mxu0 %v620
      %v1153 = vpop.f32.mrf.mxu0
      %v1154 = vadd.f32 %v1125, %v1153
      %v1155 = vpop.f32.mrf.mxu0
      %v1156 = vadd.f32 %v1127, %v1155
      %1157 = vmatmul.bf16.gmra.mxu0 %v629
      %v1158 = vpop.f32.mrf.mxu0
      %v1159 = vadd.f32 %v1130, %v1158
      %v1160 = vpop.f32.mrf.mxu0
      %v1161 = vadd.f32 %v1132, %v1160
      %1162 = vdwg.mxu0
      %1163 = vmatpush.bf16.msra.mxu0 %v984
      %1164 = vmatpush.bf16.msra.mxu0 %v983
      %1165 = vmatpush.bf16.msra.mxu0 %v982
      %1166 = vmatpush.bf16.msra.mxu0 %v981
      %1167 = vmatpush.bf16.msra.mxu0 %v980
      %1168 = vmatpush.bf16.msra.mxu0 %v979
      %1169 = vmatpush.bf16.msra.mxu0 %v978
      %1170 = vmatpush.bf16.msra.mxu0 %v977
      %1171 = vmatmul.bf16.gmra.mxu0 %v603
      %v1172 = vpop.f32.mrf.mxu0
      %v1173 = vadd.f32 %v1144, %v1172
      %v1174 = vpop.f32.mrf.mxu0
      %v1175 = vadd.f32 %v1146, %v1174
      %1176 = vmatmul.bf16.gmra.mxu0 %v612
      %v1177 = vpop.f32.mrf.mxu0
      %v1178 = vadd.f32 %v1149, %v1177
      %v1179 = vpop.f32.mrf.mxu0
      %v1180 = vadd.f32 %v1151, %v1179
      %1181 = vmatmul.bf16.gmra.mxu0 %v621
      %v1182 = vpop.f32.mrf.mxu0
      %v1183 = vadd.f32 %v1154, %v1182
      %v1184 = vpop.f32.mrf.mxu0
      %v1185 = vadd.f32 %v1156, %v1184
      %1186 = vmatmul.bf16.gmra.mxu0 %v630
      %v1187 = vpop.f32.mrf.mxu0
      %v1188 = vadd.f32 %v1159, %v1187
      %v1189 = vpop.f32.mrf.mxu0
      %v1190 = vadd.f32 %v1161, %v1189
      %1191 = vdwg.mxu0
      %1192 = vmatpush.bf16.msra.mxu0 %v992
      %1193 = vmatpush.bf16.msra.mxu0 %v991
      %1194 = vmatpush.bf16.msra.mxu0 %v990
      %1195 = vmatpush.bf16.msra.mxu0 %v989
      %1196 = vmatpush.bf16.msra.mxu0 %v988
      %1197 = vmatpush.bf16.msra.mxu0 %v987
      %1198 = vmatpush.bf16.msra.mxu0 %v986
      %1199 = vmatpush.bf16.msra.mxu0 %v985
      %1200 = vmatmul.bf16.gmra.mxu0 %v604
      %v1201 = vpop.f32.mrf.mxu0
      %v1202 = vadd.f32 %v1173, %v1201
      %v1203 = vpop.f32.mrf.mxu0
      %v1204 = vadd.f32 %v1175, %v1203
      %1205 = vmatmul.bf16.gmra.mxu0 %v613
      %v1206 = vpop.f32.mrf.mxu0
      %v1207 = vadd.f32 %v1178, %v1206
      %v1208 = vpop.f32.mrf.mxu0
      %v1209 = vadd.f32 %v1180, %v1208
      %1210 = vmatmul.bf16.gmra.mxu0 %v622
      %v1211 = vpop.f32.mrf.mxu0
      %v1212 = vadd.f32 %v1183, %v1211
      %v1213 = vpop.f32.mrf.mxu0
      %v1214 = vadd.f32 %v1185, %v1213
      %1215 = vmatmul.bf16.gmra.mxu0 %v631
      %v1216 = vpop.f32.mrf.mxu0
      %v1217 = vadd.f32 %v1188, %v1216
      %v1218 = vpop.f32.mrf.mxu0
      %v1219 = vadd.f32 %v1190, %v1218
      %1220 = vdwg.mxu0
      %1221 = vmatpush.bf16.msra.mxu0 %v1000
      %1222 = vmatpush.bf16.msra.mxu0 %v999
      %1223 = vmatpush.bf16.msra.mxu0 %v998
      %1224 = vmatpush.bf16.msra.mxu0 %v997
      %1225 = vmatpush.bf16.msra.mxu0 %v996
      %1226 = vmatpush.bf16.msra.mxu0 %v995
      %1227 = vmatpush.bf16.msra.mxu0 %v994
      %1228 = vmatpush.bf16.msra.mxu0 %v993
      %1229 = vmatmul.bf16.gmra.mxu0 %v605
      %v1230 = vpop.f32.mrf.mxu0
      %v1231 = vadd.f32 %v1202, %v1230
      %v1232 = vpop.f32.mrf.mxu0
      %v1233 = vadd.f32 %v1204, %v1232
      %1234 = vmatmul.bf16.gmra.mxu0 %v614
      %v1235 = vpop.f32.mrf.mxu0
      %v1236 = vadd.f32 %v1207, %v1235
      %v1237 = vpop.f32.mrf.mxu0
      %v1238 = vadd.f32 %v1209, %v1237
      %1239 = vmatmul.bf16.gmra.mxu0 %v623
      %v1240 = vpop.f32.mrf.mxu0
      %v1241 = vadd.f32 %v1212, %v1240
      %v1242 = vpop.f32.mrf.mxu0
      %v1243 = vadd.f32 %v1214, %v1242
      %1244 = vmatmul.bf16.gmra.mxu0 %v632
      %v1245 = vpop.f32.mrf.mxu0
      %v1246 = vadd.f32 %v1217, %v1245
      %v1247 = vpop.f32.mrf.mxu0
      %v1248 = vadd.f32 %v1219, %v1247
      %1249 = vdwg.mxu0
      %1250 = vmatpush.bf16.msra.mxu0 %v1008
      %1251 = vmatpush.bf16.msra.mxu0 %v1007
      %1252 = vmatpush.bf16.msra.mxu0 %v1006
      %1253 = vmatpush.bf16.msra.mxu0 %v1005
      %1254 = vmatpush.bf16.msra.mxu0 %v1004
      %1255 = vmatpush.bf16.msra.mxu0 %v1003
      %1256 = vmatpush.bf16.msra.mxu0 %v1002
      %1257 = vmatpush.bf16.msra.mxu0 %v1001
      %1258 = vmatmul.bf16.gmra.mxu0 %v606
      %v1259 = vpop.f32.mrf.mxu0
      %v1260 = vadd.f32 %v1231, %v1259
      %v1261 = vpop.f32.mrf.mxu0
      %v1262 = vadd.f32 %v1233, %v1261
      %1263 = vmatmul.bf16.gmra.mxu0 %v615
      %v1264 = vpop.f32.mrf.mxu0
      %v1265 = vadd.f32 %v1236, %v1264
      %v1266 = vpop.f32.mrf.mxu0
      %v1267 = vadd.f32 %v1238, %v1266
      %1268 = vmatmul.bf16.gmra.mxu0 %v624
      %v1269 = vpop.f32.mrf.mxu0
      %v1270 = vadd.f32 %v1241, %v1269
      %v1271 = vpop.f32.mrf.mxu0
      %v1272 = vadd.f32 %v1243, %v1271
      %1273 = vmatmul.bf16.gmra.mxu0 %v633
      %v1274 = vpop.f32.mrf.mxu0
      %v1275 = vadd.f32 %v1246, %v1274
      %v1276 = vpop.f32.mrf.mxu0
      %v1277 = vadd.f32 %v1248, %v1276
      %1278 = vdwg.mxu0
      %1279 = vmatpush.bf16.msra.mxu0 %v1016
      %1280 = vmatpush.bf16.msra.mxu0 %v1015
      %1281 = vmatpush.bf16.msra.mxu0 %v1014
      %1282 = vmatpush.bf16.msra.mxu0 %v1013
      %1283 = vmatpush.bf16.msra.mxu0 %v1012
      %1284 = vmatpush.bf16.msra.mxu0 %v1011
      %1285 = vmatpush.bf16.msra.mxu0 %v1010
      %1286 = vmatpush.bf16.msra.mxu0 %v1009
      %1287 = vmatmul.bf16.gmra.mxu0 %v607
      %v1288 = vpop.f32.mrf.mxu0
      %v1289 = vadd.f32 %v1260, %v1288
      %v1290 = vpop.f32.mrf.mxu0
      %v1291 = vadd.f32 %v1262, %v1290
      %1292 = vmatmul.bf16.gmra.mxu0 %v616
      %v1293 = vpop.f32.mrf.mxu0
      %v1294 = vadd.f32 %v1265, %v1293
      %v1295 = vpop.f32.mrf.mxu0
      %v1296 = vadd.f32 %v1267, %v1295
      %1297 = vmatmul.bf16.gmra.mxu0 %v625
      %v1298 = vpop.f32.mrf.mxu0
      %v1299 = vadd.f32 %v1270, %v1298
      %v1300 = vpop.f32.mrf.mxu0
      %v1301 = vadd.f32 %v1272, %v1300
      %1302 = vmatmul.bf16.gmra.mxu0 %v634
      %v1303 = vpop.f32.mrf.mxu0
      %v1304 = vadd.f32 %v1275, %v1303
      %v1305 = vpop.f32.mrf.mxu0
      %v1306 = vadd.f32 %v1277, %v1305
      %1307 = vdwg.mxu0
      %1308 = vmatpush.bf16.msra.mxu0 %v1024
      %1309 = vmatpush.bf16.msra.mxu0 %v1023
      %1310 = vmatpush.bf16.msra.mxu0 %v1022
      %1311 = vmatpush.bf16.msra.mxu0 %v1021
      %1312 = vmatpush.bf16.msra.mxu0 %v1020
      %1313 = vmatpush.bf16.msra.mxu0 %v1019
      %1314 = vmatpush.bf16.msra.mxu0 %v1018
      %1315 = vmatpush.bf16.msra.mxu0 %v1017
      %1316 = vmatmul.bf16.gmra.mxu0 %v608
      %v1317 = vpop.f32.mrf.mxu0
      %v1318 = vadd.f32 %v1289, %v1317
      %v1319 = vpop.f32.mrf.mxu0
      %v1320 = vadd.f32 %v1291, %v1319
      %1321 = vmatmul.bf16.gmra.mxu0 %v617
      %v1322 = vpop.f32.mrf.mxu0
      %v1323 = vadd.f32 %v1294, %v1322
      %v1324 = vpop.f32.mrf.mxu0
      %v1325 = vadd.f32 %v1296, %v1324
      %1326 = vmatmul.bf16.gmra.mxu0 %v626
      %v1327 = vpop.f32.mrf.mxu0
      %v1328 = vadd.f32 %v1299, %v1327
      %v1329 = vpop.f32.mrf.mxu0
      %v1330 = vadd.f32 %v1301, %v1329
      %1331 = vmatmul.bf16.gmra.mxu0 %v635
      %v1332 = vpop.f32.mrf.mxu0
      %v1333 = vadd.f32 %v1304, %v1332
      %v1334 = vpop.f32.mrf.mxu0
      %v1335 = vadd.f32 %v1306, %v1334
      %1336 = vdwg.mxu0
      %1337 = vmatpush.bf16.msra.mxu0 %v1032
      %1338 = vmatpush.bf16.msra.mxu0 %v1031
      %1339 = vmatpush.bf16.msra.mxu0 %v1030
      %1340 = vmatpush.bf16.msra.mxu0 %v1029
      %1341 = vmatpush.bf16.msra.mxu0 %v1028
      %1342 = vmatpush.bf16.msra.mxu0 %v1027
      %1343 = vmatpush.bf16.msra.mxu0 %v1026
      %1344 = vmatpush.bf16.msra.mxu0 %v1025
      %1345 = vmatmul.bf16.gmra.mxu0 %v609
      %v1346 = vpop.f32.mrf.mxu0
      %v1347 = vadd.f32 %v1318, %v1346
      %v1348 = vpop.f32.mrf.mxu0
      %v1349 = vadd.f32 %v1320, %v1348
      %1350 = vmatmul.bf16.gmra.mxu0 %v618
      %v1351 = vpop.f32.mrf.mxu0
      %v1352 = vadd.f32 %v1323, %v1351
      %v1353 = vpop.f32.mrf.mxu0
      %v1354 = vadd.f32 %v1325, %v1353
      %1355 = vmatmul.bf16.gmra.mxu0 %v627
      %v1356 = vpop.f32.mrf.mxu0
      %v1357 = vadd.f32 %v1328, %v1356
      %v1358 = vpop.f32.mrf.mxu0
      %v1359 = vadd.f32 %v1330, %v1358
      %1360 = vmatmul.bf16.gmra.mxu0 %v636
      %v1361 = vpop.f32.mrf.mxu0
      %v1362 = vadd.f32 %v1333, %v1361
      %v1363 = vpop.f32.mrf.mxu0
      %v1364 = vadd.f32 %v1335, %v1363
      %1365 = vdwg.mxu0
      %v1366 = vpack.c.bf16 %v1347, %v1347
      %v1367 = vpack.c.bf16 %v1349, %v1349
      %v1368 = vpack.c.bf16 %v1352, %v1352
      %v1369 = vpack.c.bf16 %v1354, %v1354
      %v1370 = vpack.c.bf16 %v1357, %v1357
      %v1371 = vpack.c.bf16 %v1359, %v1359
      %v1372 = vpack.c.bf16 %v1362, %v1362
      %v1373 = vpack.c.bf16 %v1364, %v1364
      %v1374 = vld [vmem:[%s284] sm:$0xf]
      %v1375 = vld [vmem:[%s284 + $0x4] sm:$0xf]
      %v1376 = vld [vmem:[%s284 + $0x8] sm:$0xf]
      %v1377 = vld [vmem:[%s284 + $0xc] sm:$0xf]
      %v1378 = vld [vmem:[%s284 + $0x10] sm:$0xf]
      %v1379 = vld [vmem:[%s284 + $0x14] sm:$0xf]
      %v1380 = vld [vmem:[%s284 + $0x18] sm:$0xf]
      %v1381 = vld [vmem:[%s284 + $0x1c] sm:$0xf]
      %v1390 = vunpack.c.l.b16 %v1374
      %v1391 = vunpack.c.l.b16 %v1375
      %v1392 = vunpack.c.l.b16 %v1376
      %v1393 = vunpack.c.l.b16 %v1377
      %v1394 = vunpack.c.l.b16 %v1378
      %v1395 = vunpack.c.l.b16 %v1379
      %v1396 = vunpack.c.l.b16 %v1380
      %v1397 = vunpack.c.l.b16 %v1381
      %v1398 = vpack.c.b16 %v1391, %v1390
      %v1399 = vpack.c.b16 %v1393, %v1392
      %v1400 = vpack.c.b16 %v1395, %v1394
      %v1401 = vpack.c.b16 %v1397, %v1396
      %v1410 = vunpack.c.l.b16 %v1366
      %v1411 = vunpack.c.l.b16 %v1367
      %v1412 = vunpack.c.l.b16 %v1368
      %v1413 = vunpack.c.l.b16 %v1369
      %v1414 = vunpack.c.l.b16 %v1370
      %v1415 = vunpack.c.l.b16 %v1371
      %v1416 = vunpack.c.l.b16 %v1372
      %v1417 = vunpack.c.l.b16 %v1373
      %v1418 = vpack.c.b16 %v1411, %v1410
      %v1419 = vpack.c.b16 %v1413, %v1412
      %v1420 = vpack.c.b16 %v1415, %v1414
      %v1421 = vpack.c.b16 %v1417, %v1416
      %1422 = vrot.lane.b32.xlu0 %v1418, 64
      %v1423 = vpop.permute.xlu0 %1422
      %1424 = vrot.lane.b32.xlu0 %v1419, 64
      %v1425 = vpop.permute.xlu0 %1424
      %1426 = vrot.lane.b32.xlu0 %v1420, 64
      %v1427 = vpop.permute.xlu0 %1426
      %1428 = vrot.lane.b32.xlu0 %v1421, 64
      %v1429 = vpop.permute.xlu0 %1428
      %vm1430 = vcmask 523264
      %v1433 = vsel %vm1430, %v1398, %v1423
      %v1436 = vsel %vm1430, %v1399, %v1425
      %v1439 = vsel %vm1430, %v1400, %v1427
      %v1442 = vsel %vm1430, %v1401, %v1429
      %v1447 = vunpack.c.l.b16 %v1433
      %v1448 = vunpack.c.h.b16 %v1433
      %v1449 = vunpack.c.l.b16 %v1436
      %v1450 = vunpack.c.h.b16 %v1436
      %v1451 = vunpack.c.l.b16 %v1439
      %v1452 = vunpack.c.h.b16 %v1439
      %v1453 = vunpack.c.l.b16 %v1442
      %v1454 = vunpack.c.h.b16 %v1442
      %v1455 = vpack.c.b16 %v1447, %v1447
      %v1456 = vpack.c.b16 %v1448, %v1448
      %v1457 = vpack.c.b16 %v1449, %v1449
      %v1458 = vpack.c.b16 %v1450, %v1450
      %v1459 = vpack.c.b16 %v1451, %v1451
      %v1460 = vpack.c.b16 %v1452, %v1452
      %v1461 = vpack.c.b16 %v1453, %v1453
      %v1462 = vpack.c.b16 %v1454, %v1454
      %vm1471 = vcmask 781312
      %1472 = vst.msk [vmem:[%s299] sm:$0xf] %vm1471, %v1455
      %1473 = vst.msk [vmem:[%s299 + $0x4] sm:$0xf] %vm1471, %v1456
      %1474 = vst.msk [vmem:[%s299 + $0x8] sm:$0xf] %vm1471, %v1457
      %1475 = vst.msk [vmem:[%s299 + $0xc] sm:$0xf] %vm1471, %v1458
      %1476 = vst.msk [vmem:[%s299 + $0x10] sm:$0xf] %vm1471, %v1459
      %1477 = vst.msk [vmem:[%s299 + $0x14] sm:$0xf] %vm1471, %v1460
      %1478 = vst.msk [vmem:[%s299 + $0x18] sm:$0xf] %vm1471, %v1461
      %1479 = vst.msk [vmem:[%s299 + $0x1c] sm:$0xf] %vm1471, %v1462
      %v1480 = vunpack.c.l.bf16 %v1366
      %v1481 = vunpack.c.l.bf16 %v1367
      %v1482 = vunpack.c.l.bf16 %v1368
      %v1483 = vunpack.c.l.bf16 %v1369
      %v1484 = vunpack.c.l.bf16 %v1370
      %v1485 = vunpack.c.l.bf16 %v1371
      %v1486 = vunpack.c.l.bf16 %v1372
      %v1487 = vunpack.c.l.bf16 %v1373
      %vm1488 = vcmask 261120
      %v1489 = vsel %vm1488, %v1480, 0.0
      %v1490 = vsel %vm1488, %v1481, 0.0
      %v1491 = vadd.f32 %v1489, %v1490
      %v1492 = vsel %vm1488, %v1482, 0.0
      %v1493 = vadd.f32 %v1491, %v1492
      %v1494 = vsel %vm1488, %v1483, 0.0
      %v1495 = vadd.f32 %v1493, %v1494
      %v1496 = vsel %vm1488, %v1484, 0.0
      %v1497 = vadd.f32 %v1495, %v1496
      %v1498 = vsel %vm1488, %v1485, 0.0
      %v1499 = vadd.f32 %v1497, %v1498
      %v1500 = vsel %vm1488, %v1486, 0.0
      %v1501 = vadd.f32 %v1499, %v1500
      %v1502 = vsel %vm1488, %v1487, 0.0
      %v1503 = vadd.f32 %v1501, %v1502
      %v1504 = vrot.slane %v1503, 4
      %v1505 = vadd.f32 %v1503, %v1504
      %v1506 = vrot.slane %v1505, 2
      %v1507 = vadd.f32 %v1505, %v1506
      %v1508 = vrot.slane %v1507, 1
      %v1509 = vadd.f32 %v1507, %v1508
      %v1510 = vmul.f32 %v1480, %v1480
      %v1511 = vmul.f32 %v1481, %v1481
      %v1512 = vmul.f32 %v1482, %v1482
      %v1513 = vmul.f32 %v1483, %v1483
      %v1514 = vmul.f32 %v1484, %v1484
      %v1515 = vmul.f32 %v1485, %v1485
      %v1516 = vmul.f32 %v1486, %v1486
      %v1517 = vmul.f32 %v1487, %v1487
      %v1518 = vsel %vm1488, %v1510, 0.0
      %v1519 = vsel %vm1488, %v1511, 0.0
      %v1520 = vadd.f32 %v1518, %v1519
      %v1521 = vsel %vm1488, %v1512, 0.0
      %v1522 = vadd.f32 %v1520, %v1521
      %v1523 = vsel %vm1488, %v1513, 0.0
      %v1524 = vadd.f32 %v1522, %v1523
      %v1525 = vsel %vm1488, %v1514, 0.0
      %v1526 = vadd.f32 %v1524, %v1525
      %v1527 = vsel %vm1488, %v1515, 0.0
      %v1528 = vadd.f32 %v1526, %v1527
      %v1529 = vsel %vm1488, %v1516, 0.0
      %v1530 = vadd.f32 %v1528, %v1529
      %v1531 = vsel %vm1488, %v1517, 0.0
      %v1532 = vadd.f32 %v1530, %v1531
      %v1533 = vrot.slane %v1532, 4
      %v1534 = vadd.f32 %v1532, %v1533
      %v1535 = vrot.slane %v1534, 2
      %v1536 = vadd.f32 %v1534, %v1535
      %v1537 = vrot.slane %v1536, 1
      %v1538 = vadd.f32 %v1536, %v1537
      %v1539 = vlaneseq
      %v1540 = vshrl.u32 %v1539, 7
      %vm1541 = vcmp.eq.s32.totalorder %v1540, 0
      %vm1542 = vcmp.eq.s32.totalorder %v1540, 1
      %v1543 = vsel %vm1542, %v1538, 0.0
      %v1544 = vsel %vm1541, %v1509, %v1543
      %1545 = vst.msk [vmem:[%s304] sm:$0xff] %vm1488, %v1544
      %s1546 = smul.u32 8, %s21
      %p1547 = scmp.lt.s32.totalorder %s1546, 15
      %s1548 = scalar_select %p1547, %s1546, 15
      %s1549 = smul.addr %s1548, 4
      %s1550 = scalar_lea.vmem %s3, %s1549
      %p1551 = scmp.lt.s32.totalorder %s21, 1
      %s1552 = scalar_select %p1551, %s21, 1
      %s1553 = smul.addr %s1552, 8
      %s1554 = scalar_lea.vmem %s4, %s1553
      // Predicated region
      $region33: #{densenet2_forward.25} parent=31 // pred_check
        %p1555 = pneg %p135
      $region34: #{densenet2_forward.25} parent=31 // pred_check_branch
        %1557 = sbr.rel (%p1555) target = $region36
      $region35: #{densenet2_forward.25} parent=31 // pred_region
        %s1558 = smul.u32 8, %s21
      $region36: #{densenet2_forward.25} parent=31 // pred_fallthru
        _
      // Predicated region
      $region37: #{densenet2_forward.25} parent=31 // pred_check
        %p1559 = pneg %p161
      $region38: #{densenet2_forward.25} parent=31 // pred_check_branch
        %1561 = sbr.rel (%p1559) target = $region40
      $region39: #{densenet2_forward.25} parent=31 // pred_region
        _
      $region40: #{densenet2_forward.25} parent=31 // pred_fallthru
        _
    $region32: #{densenet2_forward.25} parent=5 // pred_fallthru
      _
    %p1562 = scmp.le.s32.totalorder 2, %s11
    // Predicated region
    $region41: #{densenet2_forward.25} parent=5 // pred_check
      %p1563 = pneg %p1562
    $region42: #{densenet2_forward.25} parent=5 // pred_check_branch
      %1565 = sbr.rel (%p1563) target = $region44
    $region43: #{densenet2_forward.25} parent=5 // pred_region
      %s1566 = ssub.s32 %s11, 2
      // Predicated region
      $region45: #{densenet2_forward.25} parent=43 // pred_check
        %p1567 = pneg %p141
      $region46: #{densenet2_forward.25} parent=43 // pred_check_branch
        %1569 = sbr.rel (%p1567) target = $region48
      $region47: #{densenet2_forward.25} parent=43 // pred_region
        %s1570 = smul.u32 8, %s24
        %p1571 = scmp.lt.s32.totalorder %s1570, 15
        %s1572 = scalar_select %p1571, %s1570, 15
        %s1573 = smul.addr %s1572, 4
        %s1574 = scalar_lea.vmem %s3, %s1573
      $region48: #{densenet2_forward.25} parent=43 // pred_fallthru
        _
      // Predicated region
      $region49: #{densenet2_forward.25} parent=43 // pred_check
        %p1575 = pneg %p167
      $region50: #{densenet2_forward.25} parent=43 // pred_check_branch
        %1577 = sbr.rel (%p1575) target = $region52
      $region51: #{densenet2_forward.25} parent=43 // pred_region
        %p1578 = scmp.lt.s32.totalorder %s24, 1
        %s1579 = scalar_select %p1578, %s24, 1
        %s1580 = smul.addr %s1579, 8
        %s1581 = scalar_lea.vmem %s4, %s1580
      $region52: #{densenet2_forward.25} parent=43 // pred_fallthru
        _
    $region44: #{densenet2_forward.25} parent=5 // pred_fallthru
      _
  $region6: #{densenet2_forward.25} parent=0 // loop_footer
    %s15 = sadd.s32 1, %s11
  $region7: #{densenet2_forward.25} parent=0 // loop_footer_branch
    %10 = sbr.rel target = $region3
  $region8: #{densenet2_forward.25} parent=0 // loop_exit
    _

// kernel: densenet2_forward.29
$region0: #{densenet2_forward.29}
  #allocation0 [shape = 'u32[]', space=smem, size = 0x4, offset = 0x4, fixed_abs, tag = 'smem constant byte address 0x4 - core index']
  #allocation1 [shape = 'u32[72,128]{1,0:T(1,128)}', space=vmem, size = 0x9000, scoped, tag = 'internal scratch']
  %s0 = inlined_call_operand.vmem [shape: bf16[32,80], index: 0, kind: input, shape index: {}]
  %s1 = inlined_call_operand.vmem [shape: f32[1,80], index: 1, kind: input, shape index: {}]
  %s2 = inlined_call_operand.vmem [shape: f32[1,80], index: 2, kind: input, shape index: {}]
  %s3 = inlined_call_operand.vmem [shape: bf16[80,40], index: 3, kind: input, shape index: {}]
  %s4 = inlined_call_operand.vmem [shape: bf16[32,40], index: 4, kind: output, shape index: {}]
  %s5 = sld [smem:[#allocation0]]
  $region49: #{densenet2_forward.29} parent=0
    _
  %s7 = ssub.s32 1, %s5
  %s8 = scalar_select 0, %s7, %s5
  loop: start=0, step=1, limit=4
  $region2: #{densenet2_forward.29} parent=0 // loop_pre_header
    _
  $region3: #{densenet2_forward.29} parent=0 // loop_header
    %s10 = sphi 0, %s14
    %p11 = scmp.ge.s32.totalorder %s10, 4
    %s17 = sphi 0, %s36
    %s18 = sphi 0, %s32
    %s19 = sphi 0, %s28
    %s20 = sphi 0, %s17
    %s21 = sphi 0, %s18
    %s22 = sphi 0, %s19
    %s23 = sphi 0, %s20
    %s24 = sphi 0, %s21
    %s25 = sphi 0, %s22
    %s41 = sphi 0, %s43
    %s44 = sphi 0, %s41
    %s45 = sphi 0, %s44
    %s61 = sphi 0, %s45
    %s67 = sphi 0, %s69
    %s70 = sphi 0, %s67
    %s71 = sphi 0, %s70
    %s87 = sphi 0, %s71
    %s93 = sphi 0, %s95
    %s96 = sphi 0, %s93
    %s97 = sphi 0, %s96
    %s113 = sphi 0, %s97
    %s121 = sphi 0, %s123
    %s124 = sphi 0, %s121
    %s125 = sphi 0, %s124
    %s141 = sphi 0, %s125
    %s149 = sphi 0, %s151
    %s152 = sphi 0, %s149
    %s153 = sphi 0, %s152
    %s169 = sphi 0, %s153
  $region4: #{densenet2_forward.29} parent=0 // loop_header_branch
    %13 = sbr.rel (%p11) target = $region8
  $region5: #{densenet2_forward.29} parent=0 // loop_body
    %s15 = ssub.s32 %s10, 1
    %s16 = ssub.s32 %s10, 2
    %s26 = sadd.s32 1, %s19
    %p27 = scmp.ge.s32.totalorder %s26, 1
    %s28 = scalar_select %p27, 0, %s26
    %s29 = sadd.s32 1, %s18
    %s30 = scalar_select %p27, %s29, %s18
    %p31 = scmp.ge.s32.totalorder %s30, 1
    %s32 = scalar_select %p31, 0, %s30
    %s33 = sadd.s32 1, %s17
    %s34 = scalar_select %p31, %s33, %s17
    %p35 = scmp.ge.s32.totalorder %s34, 2
    %s36 = scalar_select %p35, 0, %s34
    %s37 = ssub.s32 %s17, %s36
    %s38 = ssub.s32 %s19, %s28
    %s39 = sor.u32 %s37, %s38
    %p40 = scmp.eq.s32.totalorder %s39, 0
    %s42 = sadd.s32 %s41, 1
    %s43 = scalar_select %p40, %s41, %s42
    %p46 = pneg %p40
    %p47 = scmp.eq.s32.totalorder %s10, 1
    %p48 = por %p46, %p47
    %p49 = scmp.ne.s32.totalorder %s41, %s44
    %p50 = scmp.eq.s32.totalorder %s10, 0
    %p51 = por %p49, %p50
    %p52 = scmp.ne.s32.totalorder %s41, %s44
    %p53 = scmp.eq.s32.totalorder %s15, 1
    %p54 = por %p52, %p53
    %p55 = scmp.ne.s32.totalorder %s44, %s45
    %p56 = scmp.eq.s32.totalorder %s15, 0
    %p57 = por %p55, %p56
    %p58 = scmp.ne.s32.totalorder %s44, %s45
    %p59 = scmp.eq.s32.totalorder %s16, 1
    %p60 = por %p58, %p59
    %p62 = scmp.ne.s32.totalorder %s45, %s61
    %p63 = scmp.eq.s32.totalorder %s16, 0
    %p64 = por %p62, %p63
    %s65 = ssub.s32 %s19, %s28
    %p66 = scmp.eq.s32.totalorder %s65, 0
    %s68 = sadd.s32 %s67, 1
    %s69 = scalar_select %p66, %s67, %s68
    %p72 = pneg %p66
    %p73 = scmp.eq.s32.totalorder %s10, 1
    %p74 = por %p72, %p73
    %p75 = scmp.ne.s32.totalorder %s67, %s70
    %p76 = scmp.eq.s32.totalorder %s10, 0
    %p77 = por %p75, %p76
    %p78 = scmp.ne.s32.totalorder %s67, %s70
    %p79 = scmp.eq.s32.totalorder %s15, 1
    %p80 = por %p78, %p79
    %p81 = scmp.ne.s32.totalorder %s70, %s71
    %p82 = scmp.eq.s32.totalorder %s15, 0
    %p83 = por %p81, %p82
    %p84 = scmp.ne.s32.totalorder %s70, %s71
    %p85 = scmp.eq.s32.totalorder %s16, 1
    %p86 = por %p84, %p85
    %p88 = scmp.ne.s32.totalorder %s71, %s87
    %p89 = scmp.eq.s32.totalorder %s16, 0
    %p90 = por %p88, %p89
    %s91 = ssub.s32 %s19, %s28
    %p92 = scmp.eq.s32.totalorder %s91, 0
    %s94 = sadd.s32 %s93, 1
    %s95 = scalar_select %p92, %s93, %s94
    %p98 = pneg %p92
    %p99 = scmp.eq.s32.totalorder %s10, 1
    %p100 = por %p98, %p99
    %p101 = scmp.ne.s32.totalorder %s93, %s96
    %p102 = scmp.eq.s32.totalorder %s10, 0
    %p103 = por %p101, %p102
    %p104 = scmp.ne.s32.totalorder %s93, %s96
    %p105 = scmp.eq.s32.totalorder %s15, 1
    %p106 = por %p104, %p105
    %p107 = scmp.ne.s32.totalorder %s96, %s97
    %p108 = scmp.eq.s32.totalorder %s15, 0
    %p109 = por %p107, %p108
    %p110 = scmp.ne.s32.totalorder %s96, %s97
    %p111 = scmp.eq.s32.totalorder %s16, 1
    %p112 = por %p110, %p111
    %p114 = scmp.ne.s32.totalorder %s97, %s113
    %p115 = scmp.eq.s32.totalorder %s16, 0
    %p116 = por %p114, %p115
    %s117 = ssub.s32 %s19, %s28
    %s118 = ssub.s32 %s18, %s32
    %s119 = sor.u32 %s117, %s118
    %p120 = scmp.eq.s32.totalorder %s119, 0
    %s122 = sadd.s32 %s121, 1
    %s123 = scalar_select %p120, %s121, %s122
    %p126 = pneg %p120
    %p127 = scmp.eq.s32.totalorder %s10, 1
    %p128 = por %p126, %p127
    %p129 = scmp.ne.s32.totalorder %s121, %s124
    %p130 = scmp.eq.s32.totalorder %s10, 0
    %p131 = por %p129, %p130
    %p132 = scmp.ne.s32.totalorder %s121, %s124
    %p133 = scmp.eq.s32.totalorder %s15, 1
    %p134 = por %p132, %p133
    %p135 = scmp.ne.s32.totalorder %s124, %s125
    %p136 = scmp.eq.s32.totalorder %s15, 0
    %p137 = por %p135, %p136
    %p138 = scmp.ne.s32.totalorder %s124, %s125
    %p139 = scmp.eq.s32.totalorder %s16, 1
    %p140 = por %p138, %p139
    %p142 = scmp.ne.s32.totalorder %s125, %s141
    %p143 = scmp.eq.s32.totalorder %s16, 0
    %p144 = por %p142, %p143
    %s145 = ssub.s32 %s17, %s36
    %s146 = ssub.s32 %s18, %s32
    %s147 = sor.u32 %s145, %s146
    %p148 = scmp.eq.s32.totalorder %s147, 0
    %s150 = sadd.s32 %s149, 1
    %s151 = scalar_select %p148, %s149, %s150
    %p154 = pneg %p148
    %p155 = scmp.eq.s32.totalorder %s10, 1
    %p156 = por %p154, %p155
    %p157 = scmp.ne.s32.totalorder %s149, %s152
    %p158 = scmp.eq.s32.totalorder %s10, 0
    %p159 = por %p157, %p158
    %p160 = scmp.ne.s32.totalorder %s149, %s152
    %p161 = scmp.eq.s32.totalorder %s15, 1
    %p162 = por %p160, %p161
    %p163 = scmp.ne.s32.totalorder %s152, %s153
    %p164 = scmp.eq.s32.totalorder %s15, 0
    %p165 = por %p163, %p164
    %p166 = scmp.ne.s32.totalorder %s152, %s153
    %p167 = scmp.eq.s32.totalorder %s16, 1
    %p168 = por %p166, %p167
    %p170 = scmp.ne.s32.totalorder %s153, %s169
    %p171 = scmp.eq.s32.totalorder %s16, 0
    %p172 = por %p170, %p171
    %p173 = scmp.le.s32.totalorder 1, %s10
    %p174 = scmp.lt.s32.totalorder %s10, 3
    %p175 = pnand %p173, %p174
    %p176 = pneg %p175
    // Predicated region
    $region9: #{densenet2_forward.29} parent=5 // pred_check
      _
    $region10: #{densenet2_forward.29} parent=5 // pred_check_branch
      %178 = sbr.rel (%p175) target = $region12
    $region11: #{densenet2_forward.29} parent=5 // pred_region
      %s179 = ssub.s32 %s10, 1
      // Predicated region
      $region13: #{densenet2_forward.29} parent=11 // pred_check
        %p180 = pneg %p83
      $region14: #{densenet2_forward.29} parent=11 // pred_check_branch
        %182 = sbr.rel (%p180) target = $region16
      $region15: #{densenet2_forward.29} parent=11 // pred_region
        %p183 = scmp.lt.s32.totalorder %s22, 0
        %s184 = scalar_select %p183, %s22, 0
        %s185 = scalar_lea.vmem %s1, %s184
      $region16: #{densenet2_forward.29} parent=11 // pred_fallthru
        _
      // Predicated region
      $region17: #{densenet2_forward.29} parent=11 // pred_check
        %p186 = pneg %p109
      $region18: #{densenet2_forward.29} parent=11 // pred_check_branch
        %188 = sbr.rel (%p186) target = $region20
      $region19: #{densenet2_forward.29} parent=11 // pred_region
        %p189 = scmp.lt.s32.totalorder %s22, 0
        %s190 = scalar_select %p189, %s22, 0
        %s191 = scalar_lea.vmem %s2, %s190
      $region20: #{densenet2_forward.29} parent=11 // pred_fallthru
        _
      // Predicated region
      $region21: #{densenet2_forward.29} parent=11 // pred_check
        %p192 = pneg %p137
      $region22: #{densenet2_forward.29} parent=11 // pred_check_branch
        %194 = sbr.rel (%p192) target = $region24
      $region23: #{densenet2_forward.29} parent=11 // pred_region
        %s195 = smul.u32 10, %s22
        %p196 = scmp.lt.s32.totalorder %s195, 9
        %s197 = scalar_select %p196, %s195, 9
        %p198 = scmp.lt.s32.totalorder %s21, 0
        %s199 = scalar_select %p198, %s21, 0
        %s200 = sadd.s32 %s199, %s197
        %s201 = smul.addr %s200, 4
        %s202 = scalar_lea.vmem %s3, %s201
        %s203 = smul.u32 10, %s22
      $region24: #{densenet2_forward.29} parent=11 // pred_fallthru
        _
    $region12: #{densenet2_forward.29} parent=5 // pred_fallthru
      _
    %p204 = scmp.lt.s32.totalorder %s10, 2
    // Predicated region
    $region25: #{densenet2_forward.29} parent=5 // pred_check
      %p205 = pneg %p204
    $region26: #{densenet2_forward.29} parent=5 // pred_check_branch
      %207 = sbr.rel (%p205) target = $region28
    $region27: #{densenet2_forward.29} parent=5 // pred_region
      // Predicated region
      $region29: #{densenet2_forward.29} parent=27 // pred_check
        %p208 = pneg %p51
      $region30: #{densenet2_forward.29} parent=27 // pred_check_branch
        %210 = sbr.rel (%p208) target = $region32
      $region31: #{densenet2_forward.29} parent=27 // pred_region
        %s211 = smul.u32 2, %s17
        %p212 = scmp.lt.s32.totalorder %s211, 3
        %s213 = scalar_select %p212, %s211, 3
        %p214 = scmp.lt.s32.totalorder %s19, 0
        %s215 = scalar_select %p214, %s19, 0
        %s216 = sadd.s32 %s215, %s213
        %s217 = smul.addr %s216, 4
        %s218 = scalar_lea.vmem %s0, %s217
        %s219 = smul.u32 2, %s17
      $region32: #{densenet2_forward.29} parent=27 // pred_fallthru
        _
    $region28: #{densenet2_forward.29} parent=5 // pred_fallthru
      _
    %p220 = scmp.le.s32.totalorder 1, %s10
    %p221 = scmp.lt.s32.totalorder %s10, 3
    %p222 = pnand %p220, %p221
    %p223 = pneg %p222
    // Predicated region
    $region33: #{densenet2_forward.29} parent=5 // pred_check
      _
    $region34: #{densenet2_forward.29} parent=5 // pred_check_branch
      %225 = sbr.rel (%p222) target = $region36
    $region35: #{densenet2_forward.29} parent=5 // pred_region
      %s226 = ssub.s32 %s10, 1
      %s227 = smul.u32 2, %s20
      %p228 = scmp.lt.s32.totalorder %s227, 3
      %s229 = scalar_select %p228, %s227, 3
      %p230 = scmp.lt.s32.totalorder %s22, 0
      %s231 = scalar_select %p230, %s22, 0
      %s232 = sadd.s32 %s231, %s229
      %s233 = smul.addr %s232, 4
      %s234 = scalar_lea.vmem %s0, %s233
      %p235 = pneg %p57
      %p236 = pneg %p54
      %p237 = scmp.lt.s32.totalorder %s22, 0
      %s238 = scalar_select %p237, %s22, 0
      %s239 = scalar_lea.vmem %s1, %s238
      %p240 = pneg %p83
      %p241 = pneg %p80
      %p242 = scmp.lt.s32.totalorder %s22, 0
      %s243 = scalar_select %p242, %s22, 0
      %s244 = scalar_lea.vmem %s2, %s243
      %p245 = pneg %p109
      %p246 = pneg %p106
      %s247 = smul.u32 10, %s22
      %p248 = scmp.lt.s32.totalorder %s247, 9
      %s249 = scalar_select %p248, %s247, 9
      %p250 = scmp.lt.s32.totalorder %s21, 0
      %s251 = scalar_select %p250, %s21, 0
      %s252 = sadd.s32 %s251, %s249
      %s253 = smul.addr %s252, 4
      %s254 = scalar_lea.vmem %s3, %s253
      %p255 = pneg %p137
      %p256 = pneg %p134
      %p257 = pneg %p165
      %p258 = pneg %p162
      %s259 = smul.u32 2, %s20
      %p260 = scmp.lt.s32.totalorder %s259, 3
      %s261 = scalar_select %p260, %s259, 3
      %p262 = scmp.lt.s32.totalorder %s21, 0
      %s263 = scalar_select %p262, %s21, 0
      %s264 = sadd.s32 %s263, %s261
      %s265 = smul.addr %s264, 4
      %s266 = scalar_lea.vmem %s4, %s265
      %s267 = smul.u32 2, %s20
      %p268 = scmp.lt.s32.totalorder %s267, 3
      %s269 = scalar_select %p268, %s267, 3
      %p270 = scmp.lt.s32.totalorder %s22, 0
      %s271 = scalar_select %p270, %s22, 0
      %s272 = sadd.s32 %s271, %s269
      %s273 = smul.addr %s272, 4
      %s274 = scalar_lea.vmem %s0, %s273
      %s275 = smul.u32 2, %s20
      %p276 = scmp.lt.s32.totalorder %s22, 0
      %s277 = scalar_select %p276, %s22, 0
      %s278 = scalar_lea.vmem %s1, %s277
      %p279 = scmp.lt.s32.totalorder %s22, 0
      %s280 = scalar_select %p279, %s22, 0
      %s281 = scalar_lea.vmem %s2, %s280
      %s282 = smul.u32 10, %s22
      %p283 = scmp.lt.s32.totalorder %s282, 9
      %s284 = scalar_select %p283, %s282, 9
      %p285 = scmp.lt.s32.totalorder %s21, 0
      %s286 = scalar_select %p285, %s21, 0
      %s287 = sadd.s32 %s286, %s284
      %s288 = smul.addr %s287, 4
      %s289 = scalar_lea.vmem %s3, %s288
      %s290 = smul.u32 10, %s22
      %s291 = smul.u32 2, %s20
      %p292 = scmp.lt.s32.totalorder %s291, 3
      %s293 = scalar_select %p292, %s291, 3
      %p294 = scmp.lt.s32.totalorder %s21, 0
      %s295 = scalar_select %p294, %s21, 0
      %s296 = sadd.s32 %s295, %s293
      %s297 = smul.addr %s296, 4
      %s298 = scalar_lea.vmem %s4, %s297
      %s299 = smul.u32 2, %s20
      %v301 = vld [vmem:[%s274] sm:$0xf]
      %v302 = vld [vmem:[%s274 + $0x4] sm:$0xf]
      %v303 = vunpack.c.l.bf16 %v301
      %v304 = vunpack.c.l.bf16 %v302
      %v305 = vld [vmem:[%s278] sm:$0x1]
      %v307 = vperm.slane %v305, 0
      %v309 = vmul.f32 %v303, %v307
      %v310 = vmul.f32 %v304, %v307
      %v311 = vld [vmem:[%s281] sm:$0x1]
      %v313 = vperm.slane %v311, 0
      %v315 = vadd.f32 %v309, %v313
      %v316 = vadd.f32 %v310, %v313
      %v317 = vmax.f32 %v315, 0.0
      %v318 = vmax.f32 %v316, 0.0
      %v319 = vpack.c.bf16 %v318, %v317
      %v320 = vld [vmem:[%s289] sm:$0xf]
      %v321 = vld [vmem:[%s289 + $0x4] sm:$0xf]
      %v322 = vld [vmem:[%s289 + $0x8] sm:$0xf]
      %v323 = vld [vmem:[%s289 + $0xc] sm:$0xf]
      %v324 = vld [vmem:[%s289 + $0x10] sm:$0xf]
      %v325 = vld [vmem:[%s289 + $0x14] sm:$0xf]
      %v326 = vld [vmem:[%s289 + $0x18] sm:$0xf]
      %v327 = vld [vmem:[%s289 + $0x1c] sm:$0xf]
      %v328 = vld [vmem:[%s289 + $0x20] sm:$0xf]
      %v329 = vld [vmem:[%s289 + $0x24] sm:$0xf]
      %v340 = vunpack.c.l.b16 %v320
      %v341 = vunpack.c.l.b16 %v321
      %v342 = vunpack.c.l.b16 %v322
      %v343 = vunpack.c.l.b16 %v323
      %v344 = vunpack.c.l.b16 %v324
      %v345 = vunpack.c.l.b16 %v325
      %v346 = vunpack.c.l.b16 %v326
      %v347 = vunpack.c.l.b16 %v327
      %v348 = vunpack.c.l.b16 %v328
      %v349 = vunpack.c.l.b16 %v329
      %v350 = vpack.c.b16 %v341, %v340
      %v351 = vpack.c.b16 %v343, %v342
      %v352 = vpack.c.b16 %v345, %v344
      %v353 = vpack.c.b16 %v347, %v346
      %v354 = vpack.c.b16 %v349, %v348
      %vm360 = vcmask 654336
      %v362 = vsel %vm360, %v319, 0
      %364 = vmatpush.bf16.msra.mxu0 0
      %365 = vmatpush.bf16.msra.mxu0 0
      %366 = vmatpush.bf16.msra.mxu0 0
      %367 = vmatpush.bf16.msra.mxu0 %v354
      %368 = vmatpush.bf16.msra.mxu0 %v353
      %369 = vmatpush.bf16.msra.mxu0 %v352
      %370 = vmatpush.bf16.msra.mxu0 %v351
      %371 = vmatpush.bf16.msra.mxu0 %v350
      %372 = vmatmul.bf16.gmra.mxu0 %v362
      %v373 = vpop.f32.mrf.mxu0
      %v374 = vadd.f32 0.0, %v373
      %v375 = vpop.f32.mrf.mxu0
      %v376 = vadd.f32 0.0, %v375
      %377 = vdwg.mxu0
      %v378 = vpack.c.bf16 %v374, %v374
      %v379 = vpack.c.bf16 %v376, %v376
      %vm380 = vcmask 322560
      %381 = vst.msk [vmem:[%s298] sm:$0xf] %vm380, %v378
      %382 = vst.msk [vmem:[%s298 + $0x4] sm:$0xf] %vm380, %v379
      %s383 = smul.u32 2, %s20
      %p384 = scmp.lt.s32.totalorder %s383, 3
      %s385 = scalar_select %p384, %s383, 3
      %p386 = scmp.lt.s32.totalorder %s21, 0
      %s387 = scalar_select %p386, %s21, 0
      %s388 = sadd.s32 %s387, %s385
      %s389 = smul.addr %s388, 4
      %s390 = scalar_lea.vmem %s4, %s389
      // Predicated region
      $region37: #{densenet2_forward.29} parent=35 // pred_check
        %p391 = pneg %p162
      $region38: #{densenet2_forward.29} parent=35 // pred_check_branch
        %393 = sbr.rel (%p391) target = $region40
      $region39: #{densenet2_forward.29} parent=35 // pred_region
        %s394 = smul.u32 2, %s20
      $region40: #{densenet2_forward.29} parent=35 // pred_fallthru
        _
    $region36: #{densenet2_forward.29} parent=5 // pred_fallthru
      _
    %p395 = scmp.le.s32.totalorder 2, %s10
    // Predicated region
    $region41: #{densenet2_forward.29} parent=5 // pred_check
      %p396 = pneg %p395
    $region42: #{densenet2_forward.29} parent=5 // pred_check_branch
      %398 = sbr.rel (%p396) target = $region44
    $region43: #{densenet2_forward.29} parent=5 // pred_region
      %s399 = ssub.s32 %s10, 2
      // Predicated region
      $region45: #{densenet2_forward.29} parent=43 // pred_check
        %p400 = pneg %p168
      $region46: #{densenet2_forward.29} parent=43 // pred_check_branch
        %402 = sbr.rel (%p400) target = $region48
      $region47: #{densenet2_forward.29} parent=43 // pred_region
        %s403 = smul.u32 2, %s23
        %p404 = scmp.lt.s32.totalorder %s403, 3
        %s405 = scalar_select %p404, %s403, 3
        %p406 = scmp.lt.s32.totalorder %s24, 0
        %s407 = scalar_select %p406, %s24, 0
        %s408 = sadd.s32 %s407, %s405
        %s409 = smul.addr %s408, 4
        %s410 = scalar_lea.vmem %s4, %s409
      $region48: #{densenet2_forward.29} parent=43 // pred_fallthru
        _
    $region44: #{densenet2_forward.29} parent=5 // pred_fallthru
      _
  $region6: #{densenet2_forward.29} parent=0 // loop_footer
    %s14 = sadd.s32 1, %s10
  $region7: #{densenet2_forward.29} parent=0 // loop_footer_branch
    %9 = sbr.rel target = $region3
  $region8: #{densenet2_forward.29} parent=0 // loop_exit
    _

// kernel: densenet2_forward.28
$region0: #{densenet2_forward.28}
  #allocation0 [shape = 'u32[]', space=smem, size = 0x4, offset = 0x4, fixed_abs, tag = 'smem constant byte address 0x4 - core index']
  #allocation1 [shape = 'u32[72,128]{1,0:T(1,128)}', space=vmem, size = 0x9000, scoped, tag = 'internal scratch']
  %s0 = inlined_call_operand.vmem [shape: bf16[32,1152], index: 0, kind: input, shape index: {}]
  %s1 = inlined_call_operand.vmem [shape: bf16[32,48], index: 1, kind: input, shape index: {}]
  %s2 = inlined_call_operand.vmem [shape: bf16[1152,32], index: 2, kind: input, shape index: {}]
  %s3 = inlined_call_operand.vmem [shape: bf16[32,80], index: 3, kind: output, shape index: {0}]
  %s4 = inlined_call_operand.vmem [shape: f32[2,8,32], index: 4, kind: output, shape index: {1}]
  %5 = xla_tuple %s3, %s4
  %s6 = sld [smem:[#allocation0]]
  $region53: #{densenet2_forward.28} parent=0
    _
  %s8 = ssub.s32 1, %s6
  %s9 = scalar_select 0, %s8, %s6
  loop: start=0, step=1, limit=4
  $region2: #{densenet2_forward.28} parent=0 // loop_pre_header
    _
  $region3: #{densenet2_forward.28} parent=0 // loop_header
    %s11 = sphi 0, %s15
    %p12 = scmp.ge.s32.totalorder %s11, 4
    %s18 = sphi 0, %s37
    %s19 = sphi 0, %s33
    %s20 = sphi 0, %s29
    %s21 = sphi 0, %s18
    %s22 = sphi 0, %s19
    %s23 = sphi 0, %s20
    %s24 = sphi 0, %s21
    %s25 = sphi 0, %s22
    %s26 = sphi 0, %s23
    %s42 = sphi 0, %s44
    %s45 = sphi 0, %s42
    %s46 = sphi 0, %s45
    %s62 = sphi 0, %s46
    %s68 = sphi 0, %s70
    %s71 = sphi 0, %s68
    %s72 = sphi 0, %s71
    %s88 = sphi 0, %s72
    %s96 = sphi 0, %s98
    %s99 = sphi 0, %s96
    %s100 = sphi 0, %s99
    %s116 = sphi 0, %s100
    %s122 = sphi 0, %s124
    %s125 = sphi 0, %s122
    %s126 = sphi 0, %s125
    %s142 = sphi 0, %s126
    %s148 = sphi 0, %s150
    %s151 = sphi 0, %s148
    %s152 = sphi 0, %s151
    %s168 = sphi 0, %s152
  $region4: #{densenet2_forward.28} parent=0 // loop_header_branch
    %14 = sbr.rel (%p12) target = $region8
  $region5: #{densenet2_forward.28} parent=0 // loop_body
    %s16 = ssub.s32 %s11, 1
    %s17 = ssub.s32 %s11, 2
    %s27 = sadd.s32 1, %s20
    %p28 = scmp.ge.s32.totalorder %s27, 1
    %s29 = scalar_select %p28, 0, %s27
    %s30 = sadd.s32 1, %s19
    %s31 = scalar_select %p28, %s30, %s19
    %p32 = scmp.ge.s32.totalorder %s31, 1
    %s33 = scalar_select %p32, 0, %s31
    %s34 = sadd.s32 1, %s18
    %s35 = scalar_select %p32, %s34, %s18
    %p36 = scmp.ge.s32.totalorder %s35, 2
    %s37 = scalar_select %p36, 0, %s35
    %s38 = ssub.s32 %s18, %s37
    %s39 = ssub.s32 %s20, %s29
    %s40 = sor.u32 %s38, %s39
    %p41 = scmp.eq.s32.totalorder %s40, 0
    %s43 = sadd.s32 %s42, 1
    %s44 = scalar_select %p41, %s42, %s43
    %p47 = pneg %p41
    %p48 = scmp.eq.s32.totalorder %s11, 1
    %p49 = por %p47, %p48
    %p50 = scmp.ne.s32.totalorder %s42, %s45
    %p51 = scmp.eq.s32.totalorder %s11, 0
    %p52 = por %p50, %p51
    %p53 = scmp.ne.s32.totalorder %s42, %s45
    %p54 = scmp.eq.s32.totalorder %s16, 1
    %p55 = por %p53, %p54
    %p56 = scmp.ne.s32.totalorder %s45, %s46
    %p57 = scmp.eq.s32.totalorder %s16, 0
    %p58 = por %p56, %p57
    %p59 = scmp.ne.s32.totalorder %s45, %s46
    %p60 = scmp.eq.s32.totalorder %s17, 1
    %p61 = por %p59, %p60
    %p63 = scmp.ne.s32.totalorder %s46, %s62
    %p64 = scmp.eq.s32.totalorder %s17, 0
    %p65 = por %p63, %p64
    %s66 = ssub.s32 %s18, %s37
    %p67 = scmp.eq.s32.totalorder %s66, 0
    %s69 = sadd.s32 %s68, 1
    %s70 = scalar_select %p67, %s68, %s69
    %p73 = pneg %p67
    %p74 = scmp.eq.s32.totalorder %s11, 1
    %p75 = por %p73, %p74
    %p76 = scmp.ne.s32.totalorder %s68, %s71
    %p77 = scmp.eq.s32.totalorder %s11, 0
    %p78 = por %p76, %p77
    %p79 = scmp.ne.s32.totalorder %s68, %s71
    %p80 = scmp.eq.s32.totalorder %s16, 1
    %p81 = por %p79, %p80
    %p82 = scmp.ne.s32.totalorder %s71, %s72
    %p83 = scmp.eq.s32.totalorder %s16, 0
    %p84 = por %p82, %p83
    %p85 = scmp.ne.s32.totalorder %s71, %s72
    %p86 = scmp.eq.s32.totalorder %s17, 1
    %p87 = por %p85, %p86
    %p89 = scmp.ne.s32.totalorder %s72, %s88
    %p90 = scmp.eq.s32.totalorder %s17, 0
    %p91 = por %p89, %p90
    %s92 = ssub.s32 %s20, %s29
    %s93 = ssub.s32 %s19, %s33
    %s94 = sor.u32 %s92, %s93
    %p95 = scmp.eq.s32.totalorder %s94, 0
    %s97 = sadd.s32 %s96, 1
    %s98 = scalar_select %p95, %s96, %s97
    %p101 = pneg %p95
    %p102 = scmp.eq.s32.totalorder %s11, 1
    %p103 = por %p101, %p102
    %p104 = scmp.ne.s32.totalorder %s96, %s99
    %p105 = scmp.eq.s32.totalorder %s11, 0
    %p106 = por %p104, %p105
    %p107 = scmp.ne.s32.totalorder %s96, %s99
    %p108 = scmp.eq.s32.totalorder %s16, 1
    %p109 = por %p107, %p108
    %p110 = scmp.ne.s32.totalorder %s99, %s100
    %p111 = scmp.eq.s32.totalorder %s16, 0
    %p112 = por %p110, %p111
    %p113 = scmp.ne.s32.totalorder %s99, %s100
    %p114 = scmp.eq.s32.totalorder %s17, 1
    %p115 = por %p113, %p114
    %p117 = scmp.ne.s32.totalorder %s100, %s116
    %p118 = scmp.eq.s32.totalorder %s17, 0
    %p119 = por %p117, %p118
    %s120 = ssub.s32 %s18, %s37
    %p121 = scmp.eq.s32.totalorder %s120, 0
    %s123 = sadd.s32 %s122, 1
    %s124 = scalar_select %p121, %s122, %s123
    %p127 = pneg %p121
    %p128 = scmp.eq.s32.totalorder %s11, 1
    %p129 = por %p127, %p128
    %p130 = scmp.ne.s32.totalorder %s122, %s125
    %p131 = scmp.eq.s32.totalorder %s11, 0
    %p132 = por %p130, %p131
    %p133 = scmp.ne.s32.totalorder %s122, %s125
    %p134 = scmp.eq.s32.totalorder %s16, 1
    %p135 = por %p133, %p134
    %p136 = scmp.ne.s32.totalorder %s125, %s126
    %p137 = scmp.eq.s32.totalorder %s16, 0
    %p138 = por %p136, %p137
    %p139 = scmp.ne.s32.totalorder %s125, %s126
    %p140 = scmp.eq.s32.totalorder %s17, 1
    %p141 = por %p139, %p140
    %p143 = scmp.ne.s32.totalorder %s126, %s142
    %p144 = scmp.eq.s32.totalorder %s17, 0
    %p145 = por %p143, %p144
    %s146 = ssub.s32 %s18, %s37
    %p147 = scmp.eq.s32.totalorder %s146, 0
    %s149 = sadd.s32 %s148, 1
    %s150 = scalar_select %p147, %s148, %s149
    %p153 = pneg %p147
    %p154 = scmp.eq.s32.totalorder %s11, 1
    %p155 = por %p153, %p154
    %p156 = scmp.ne.s32.totalorder %s148, %s151
    %p157 = scmp.eq.s32.totalorder %s11, 0
    %p158 = por %p156, %p157
    %p159 = scmp.ne.s32.totalorder %s148, %s151
    %p160 = scmp.eq.s32.totalorder %s16, 1
    %p161 = por %p159, %p160
    %p162 = scmp.ne.s32.totalorder %s151, %s152
    %p163 = scmp.eq.s32.totalorder %s16, 0
    %p164 = por %p162, %p163
    %p165 = scmp.ne.s32.totalorder %s151, %s152
    %p166 = scmp.eq.s32.totalorder %s17, 1
    %p167 = por %p165, %p166
    %p169 = scmp.ne.s32.totalorder %s152, %s168
    %p170 = scmp.eq.s32.totalorder %s17, 0
    %p171 = por %p169, %p170
    %p172 = scmp.le.s32.totalorder 1, %s11
    %p173 = scmp.lt.s32.totalorder %s11, 3
    %p174 = pnand %p172, %p173
    %p175 = pneg %p174
    // Predicated region
    $region9: #{densenet2_forward.28} parent=5 // pred_check
      _
    $region10: #{densenet2_forward.28} parent=5 // pred_check_branch
      %177 = sbr.rel (%p174) target = $region12
    $region11: #{densenet2_forward.28} parent=5 // pred_region
      %s178 = ssub.s32 %s11, 1
      // Predicated region
      $region13: #{densenet2_forward.28} parent=11 // pred_check
        %p179 = pneg %p112
      $region14: #{densenet2_forward.28} parent=11 // pred_check_branch
        %181 = sbr.rel (%p179) target = $region16
      $region15: #{densenet2_forward.28} parent=11 // pred_region
        %s182 = smul.u32 144, %s23
        %p183 = scmp.lt.s32.totalorder %s182, 143
        %s184 = scalar_select %p183, %s182, 143
        %p185 = scmp.lt.s32.totalorder %s22, 0
        %s186 = scalar_select %p185, %s22, 0
        %s187 = sadd.s32 %s186, %s184
        %s188 = smul.addr %s187, 4
        %s189 = scalar_lea.vmem %s2, %s188
        %s190 = smul.u32 144, %s23
      $region16: #{densenet2_forward.28} parent=11 // pred_fallthru
        _
    $region12: #{densenet2_forward.28} parent=5 // pred_fallthru
      _
    %p191 = scmp.lt.s32.totalorder %s11, 2
    // Predicated region
    $region17: #{densenet2_forward.28} parent=5 // pred_check
      %p192 = pneg %p191
    $region18: #{densenet2_forward.28} parent=5 // pred_check_branch
      %194 = sbr.rel (%p192) target = $region20
    $region19: #{densenet2_forward.28} parent=5 // pred_region
      // Predicated region
      $region21: #{densenet2_forward.28} parent=19 // pred_check
        %p195 = pneg %p52
      $region22: #{densenet2_forward.28} parent=19 // pred_check_branch
        %197 = sbr.rel (%p195) target = $region24
      $region23: #{densenet2_forward.28} parent=19 // pred_region
        %s198 = smul.u32 2, %s18
        %s199 = smul.u32 9, %s20
        %p200 = scmp.lt.s32.totalorder %s198, 3
        %s201 = scalar_select %p200, %s198, 3
        %p202 = scmp.lt.s32.totalorder %s199, 8
        %s203 = scalar_select %p202, %s199, 8
        %s204 = smul.addr %s201, 9
        %s205 = sadd.s32 %s203, %s204
        %s206 = smul.addr %s205, 4
        %s207 = scalar_lea.vmem %s0, %s206
        %s208 = smul.u32 2, %s18
        %s209 = smul.u32 9, %s20
      $region24: #{densenet2_forward.28} parent=19 // pred_fallthru
        _
      // Predicated region
      $region25: #{densenet2_forward.28} parent=19 // pred_check
        %p210 = pneg %p78
      $region26: #{densenet2_forward.28} parent=19 // pred_check_branch
        %212 = sbr.rel (%p210) target = $region28
      $region27: #{densenet2_forward.28} parent=19 // pred_region
        %s213 = smul.u32 2, %s18
        %p214 = scmp.lt.s32.totalorder %s213, 3
        %s215 = scalar_select %p214, %s213, 3
        %s216 = smul.addr %s215, 4
        %s217 = scalar_lea.vmem %s1, %s216
        %s218 = smul.u32 2, %s18
      $region28: #{densenet2_forward.28} parent=19 // pred_fallthru
        _
    $region20: #{densenet2_forward.28} parent=5 // pred_fallthru
      _
    %p219 = scmp.le.s32.totalorder 1, %s11
    %p220 = scmp.lt.s32.totalorder %s11, 3
    %p221 = pnand %p219, %p220
    %p222 = pneg %p221
    // Predicated region
    $region29: #{densenet2_forward.28} parent=5 // pred_check
      _
    $region30: #{densenet2_forward.28} parent=5 // pred_check_branch
      %224 = sbr.rel (%p221) target = $region32
    $region31: #{densenet2_forward.28} parent=5 // pred_region
      %s225 = ssub.s32 %s11, 1
      %s226 = smul.u32 2, %s21
      %s227 = smul.u32 9, %s23
      %p228 = scmp.lt.s32.totalorder %s226, 3
      %s229 = scalar_select %p228, %s226, 3
      %p230 = scmp.lt.s32.totalorder %s227, 8
      %s231 = scalar_select %p230, %s227, 8
      %s232 = smul.addr %s229, 9
      %s233 = sadd.s32 %s231, %s232
      %s234 = smul.addr %s233, 4
      %s235 = scalar_lea.vmem %s0, %s234
      %p236 = pneg %p58
      %p237 = pneg %p55
      %s238 = smul.u32 2, %s21
      %p239 = scmp.lt.s32.totalorder %s238, 3
      %s240 = scalar_select %p239, %s238, 3
      %s241 = smul.addr %s240, 4
      %s242 = scalar_lea.vmem %s1, %s241
      %p243 = pneg %p84
      %p244 = pneg %p81
      %s245 = smul.u32 144, %s23
      %p246 = scmp.lt.s32.totalorder %s245, 143
      %s247 = scalar_select %p246, %s245, 143
      %p248 = scmp.lt.s32.totalorder %s22, 0
      %s249 = scalar_select %p248, %s22, 0
      %s250 = sadd.s32 %s249, %s247
      %s251 = smul.addr %s250, 4
      %s252 = scalar_lea.vmem %s2, %s251
      %p253 = pneg %p112
      %p254 = pneg %p109
      %p255 = pneg %p138
      %p256 = pneg %p135
      %s257 = smul.u32 2, %s21
      %p258 = scmp.lt.s32.totalorder %s257, 3
      %s259 = scalar_select %p258, %s257, 3
      %s260 = smul.addr %s259, 4
      %s261 = scalar_lea.vmem %s3, %s260
      %p262 = pneg %p164
      %p263 = pneg %p161
      %p264 = scmp.lt.s32.totalorder %s21, 1
      %s265 = scalar_select %p264, %s21, 1
      %s266 = smul.addr %s265, 8
      %s267 = scalar_lea.vmem %s4, %s266
      %s268 = smul.u32 2, %s21
      %s269 = smul.u32 9, %s23
      %p270 = scmp.lt.s32.totalorder %s268, 3
      %s271 = scalar_select %p270, %s268, 3
      %p272 = scmp.lt.s32.totalorder %s269, 8
      %s273 = scalar_select %p272, %s269, 8
      %s274 = smul.addr %s271, 9
      %s275 = sadd.s32 %s273, %s274
      %s276 = smul.addr %s275, 4
      %s277 = scalar_lea.vmem %s0, %s276
      %s278 = smul.u32 2, %s21
      %s279 = smul.u32 9, %s23
      %s280 = smul.u32 2, %s21
      %p281 = scmp.lt.s32.totalorder %s280, 3
      %s282 = scalar_select %p281, %s280, 3
      %s283 = smul.addr %s282, 4
      %s284 = scalar_lea.vmem %s1, %s283
      %s285 = smul.u32 2, %s21
      %s286 = smul.u32 144, %s23
      %p287 = scmp.lt.s32.totalorder %s286, 143
      %s288 = scalar_select %p287, %s286, 143
      %p289 = scmp.lt.s32.totalorder %s22, 0
      %s290 = scalar_select %p289, %s22, 0
      %s291 = sadd.s32 %s290, %s288
      %s292 = smul.addr %s291, 4
      %s293 = scalar_lea.vmem %s2, %s292
      %s294 = smul.u32 144, %s23
      %s295 = smul.u32 2, %s21
      %p296 = scmp.lt.s32.totalorder %s295, 3
      %s297 = scalar_select %p296, %s295, 3
      %s298 = smul.addr %s297, 4
      %s299 = scalar_lea.vmem %s3, %s298
      %s300 = smul.u32 2, %s21
      %p301 = scmp.lt.s32.totalorder %s21, 1
      %s302 = scalar_select %p301, %s21, 1
      %s303 = smul.addr %s302, 8
      %s304 = scalar_lea.vmem %s4, %s303
      %v305 = vld [vmem:[%s277] sm:$0xff]
      %v306 = vld [vmem:[%s277 + $0x8] sm:$0xff]
      %v307 = vld [vmem:[%s277 + $0x10] sm:$0xff]
      %v308 = vld [vmem:[%s277 + $0x18] sm:$0xff]
      %v309 = vld [vmem:[%s277 + $0x20] sm:$0xf]
      %v310 = vld [vmem:[%s277 + $0x24] sm:$0xff]
      %v311 = vld [vmem:[%s277 + $0x2c] sm:$0xff]
      %v312 = vld [vmem:[%s277 + $0x34] sm:$0xff]
      %v313 = vld [vmem:[%s277 + $0x3c] sm:$0xff]
      %v314 = vld [vmem:[%s277 + $0x44] sm:$0xf]
      %v315 = vld [vmem:[%s293] sm:$0xf]
      %v316 = vld [vmem:[%s293 + $0x4] sm:$0xf]
      %v317 = vld [vmem:[%s293 + $0x8] sm:$0xf]
      %v318 = vld [vmem:[%s293 + $0xc] sm:$0xf]
      %v319 = vld [vmem:[%s293 + $0x10] sm:$0xf]
      %v320 = vld [vmem:[%s293 + $0x14] sm:$0xf]
      %v321 = vld [vmem:[%s293 + $0x18] sm:$0xf]
      %v322 = vld [vmem:[%s293 + $0x1c] sm:$0xf]
      %v323 = vld [vmem:[%s293 + $0x20] sm:$0xf]
      %v324 = vld [vmem:[%s293 + $0x24] sm:$0xf]
      %v325 = vld [vmem:[%s293 + $0x28] sm:$0xf]
      %v326 = vld [vmem:[%s293 + $0x2c] sm:$0xf]
      %v327 = vld [vmem:[%s293 + $0x30] sm:$0xf]
      %v328 = vld [vmem:[%s293 + $0x34] sm:$0xf]
      %v329 = vld [vmem:[%s293 + $0x38] sm:$0xf]
      %v330 = vld [vmem:[%s293 + $0x3c] sm:$0xf]
      %v331 = vld [vmem:[%s293 + $0x40] sm:$0xf]
      %v332 = vld [vmem:[%s293 + $0x44] sm:$0xf]
      %v333 = vld [vmem:[%s293 + $0x48] sm:$0xf]
      %v334 = vld [vmem:[%s293 + $0x4c] sm:$0xf]
      %v335 = vld [vmem:[%s293 + $0x50] sm:$0xf]
      %v336 = vld [vmem:[%s293 + $0x54] sm:$0xf]
      %v337 = vld [vmem:[%s293 + $0x58] sm:$0xf]
      %v338 = vld [vmem:[%s293 + $0x5c] sm:$0xf]
      %v339 = vld [vmem:[%s293 + $0x60] sm:$0xf]
      %v340 = vld [vmem:[%s293 + $0x64] sm:$0xf]
      %v341 = vld [vmem:[%s293 + $0x68] sm:$0xf]
      %v342 = vld [vmem:[%s293 + $0x6c] sm:$0xf]
      %v343 = vld [vmem:[%s293 + $0x70] sm:$0xf]
      %v344 = vld [vmem:[%s293 + $0x74] sm:$0xf]
      %v345 = vld [vmem:[%s293 + $0x78] sm:$0xf]
      %v346 = vld [vmem:[%s293 + $0x7c] sm:$0xf]
      %v347 = vld [vmem:[%s293 + $0x80] sm:$0xf]
      %v348 = vld [vmem:[%s293 + $0x84] sm:$0xf]
      %v349 = vld [vmem:[%s293 + $0x88] sm:$0xf]
      %v350 = vld [vmem:[%s293 + $0x8c] sm:$0xf]
      %v351 = vld [vmem:[%s293 + $0x90] sm:$0xf]
      %v352 = vld [vmem:[%s293 + $0x94] sm:$0xf]
      %v353 = vld [vmem:[%s293 + $0x98] sm:$0xf]
      %v354 = vld [vmem:[%s293 + $0x9c] sm:$0xf]
      %v355 = vld [vmem:[%s293 + $0xa0] sm:$0xf]
      %v356 = vld [vmem:[%s293 + $0xa4] sm:$0xf]
      %v357 = vld [vmem:[%s293 + $0xa8] sm:$0xf]
      %v358 = vld [vmem:[%s293 + $0xac] sm:$0xf]
      %v359 = vld [vmem:[%s293 + $0xb0] sm:$0xf]
      %v360 = vld [vmem:[%s293 + $0xb4] sm:$0xf]
      %v361 = vld [vmem:[%s293 + $0xb8] sm:$0xf]
      %v362 = vld [vmem:[%s293 + $0xbc] sm:$0xf]
      %v363 = vld [vmem:[%s293 + $0xc0] sm:$0xf]
      %v364 = vld [vmem:[%s293 + $0xc4] sm:$0xf]
      %v365 = vld [vmem:[%s293 + $0xc8] sm:$0xf]
      %v366 = vld [vmem:[%s293 + $0xcc] sm:$0xf]
      %v367 = vld [vmem:[%s293 + $0xd0] sm:$0xf]
      %v368 = vld [vmem:[%s293 + $0xd4] sm:$0xf]
      %v369 = vld [vmem:[%s293 + $0xd8] sm:$0xf]
      %v370 = vld [vmem:[%s293 + $0xdc] sm:$0xf]
      %v371 = vld [vmem:[%s293 + $0xe0] sm:$0xf]
      %v372 = vld [vmem:[%s293 + $0xe4] sm:$0xf]
      %v373 = vld [vmem:[%s293 + $0xe8] sm:$0xf]
      %v374 = vld [vmem:[%s293 + $0xec] sm:$0xf]
      %v375 = vld [vmem:[%s293 + $0xf0] sm:$0xf]
      %v376 = vld [vmem:[%s293 + $0xf4] sm:$0xf]
      %v377 = vld [vmem:[%s293 + $0xf8] sm:$0xf]
      %v378 = vld [vmem:[%s293 + $0xfc] sm:$0xf]
      %v379 = vld [vmem:[%s293 + $0x100] sm:$0xf]
      %v380 = vld [vmem:[%s293 + $0x104] sm:$0xf]
      %v381 = vld [vmem:[%s293 + $0x108] sm:$0xf]
      %v382 = vld [vmem:[%s293 + $0x10c] sm:$0xf]
      %v383 = vld [vmem:[%s293 + $0x110] sm:$0xf]
      %v384 = vld [vmem:[%s293 + $0x114] sm:$0xf]
      %v385 = vld [vmem:[%s293 + $0x118] sm:$0xf]
      %v386 = vld [vmem:[%s293 + $0x11c] sm:$0xf]
      %v387 = vld [vmem:[%s293 + $0x120] sm:$0xf]
      %v388 = vld [vmem:[%s293 + $0x124] sm:$0xf]
      %v389 = vld [vmem:[%s293 + $0x128] sm:$0xf]
      %v390 = vld [vmem:[%s293 + $0x12c] sm:$0xf]
      %v391 = vld [vmem:[%s293 + $0x130] sm:$0xf]
      %v392 = vld [vmem:[%s293 + $0x134] sm:$0xf]
      %v393 = vld [vmem:[%s293 + $0x138] sm:$0xf]
      %v394 = vld [vmem:[%s293 + $0x13c] sm:$0xf]
      %v395 = vld [vmem:[%s293 + $0x140] sm:$0xf]
      %v396 = vld [vmem:[%s293 + $0x144] sm:$0xf]
      %v397 = vld [vmem:[%s293 + $0x148] sm:$0xf]
      %v398 = vld [vmem:[%s293 + $0x14c] sm:$0xf]
      %v399 = vld [vmem:[%s293 + $0x150] sm:$0xf]
      %v400 = vld [vmem:[%s293 + $0x154] sm:$0xf]
      %v401 = vld [vmem:[%s293 + $0x158] sm:$0xf]
      %v402 = vld [vmem:[%s293 + $0x15c] sm:$0xf]
      %v403 = vld [vmem:[%s293 + $0x160] sm:$0xf]
      %v404 = vld [vmem:[%s293 + $0x164] sm:$0xf]
      %v405 = vld [vmem:[%s293 + $0x168] sm:$0xf]
      %v406 = vld [vmem:[%s293 + $0x16c] sm:$0xf]
      %v407 = vld [vmem:[%s293 + $0x170] sm:$0xf]
      %v408 = vld [vmem:[%s293 + $0x174] sm:$0xf]
      %v409 = vld [vmem:[%s293 + $0x178] sm:$0xf]
      %v410 = vld [vmem:[%s293 + $0x17c] sm:$0xf]
      %v411 = vld [vmem:[%s293 + $0x180] sm:$0xf]
      %v412 = vld [vmem:[%s293 + $0x184] sm:$0xf]
      %v413 = vld [vmem:[%s293 + $0x188] sm:$0xf]
      %v414 = vld [vmem:[%s293 + $0x18c] sm:$0xf]
      %v415 = vld [vmem:[%s293 + $0x190] sm:$0xf]
      %v416 = vld [vmem:[%s293 + $0x194] sm:$0xf]
      %v417 = vld [vmem:[%s293 + $0x198] sm:$0xf]
      %v418 = vld [vmem:[%s293 + $0x19c] sm:$0xf]
      %v419 = vld [vmem:[%s293 + $0x1a0] sm:$0xf]
      %v420 = vld [vmem:[%s293 + $0x1a4] sm:$0xf]
      %v421 = vld [vmem:[%s293 + $0x1a8] sm:$0xf]
      %v422 = vld [vmem:[%s293 + $0x1ac] sm:$0xf]
      %v423 = vld [vmem:[%s293 + $0x1b0] sm:$0xf]
      %v424 = vld [vmem:[%s293 + $0x1b4] sm:$0xf]
      %v425 = vld [vmem:[%s293 + $0x1b8] sm:$0xf]
      %v426 = vld [vmem:[%s293 + $0x1bc] sm:$0xf]
      %v427 = vld [vmem:[%s293 + $0x1c0] sm:$0xf]
      %v428 = vld [vmem:[%s293 + $0x1c4] sm:$0xf]
      %v429 = vld [vmem:[%s293 + $0x1c8] sm:$0xf]
      %v430 = vld [vmem:[%s293 + $0x1cc] sm:$0xf]
      %v431 = vld [vmem:[%s293 + $0x1d0] sm:$0xf]
      %v432 = vld [vmem:[%s293 + $0x1d4] sm:$0xf]
      %v433 = vld [vmem:[%s293 + $0x1d8] sm:$0xf]
      %v434 = vld [vmem:[%s293 + $0x1dc] sm:$0xf]
      %v435 = vld [vmem:[%s293 + $0x1e0] sm:$0xf]
      %v436 = vld [vmem:[%s293 + $0x1e4] sm:$0xf]
      %v437 = vld [vmem:[%s293 + $0x1e8] sm:$0xf]
      %v438 = vld [vmem:[%s293 + $0x1ec] sm:$0xf]
      %v439 = vld [vmem:[%s293 + $0x1f0] sm:$0xf]
      %v440 = vld [vmem:[%s293 + $0x1f4] sm:$0xf]
      %v441 = vld [vmem:[%s293 + $0x1f8] sm:$0xf]
      %v442 = vld [vmem:[%s293 + $0x1fc] sm:$0xf]
      %v443 = vld [vmem:[%s293 + $0x200] sm:$0xf]
      %v444 = vld [vmem:[%s293 + $0x204] sm:$0xf]
      %v445 = vld [vmem:[%s293 + $0x208] sm:$0xf]
      %v446 = vld [vmem:[%s293 + $0x20c] sm:$0xf]
      %v447 = vld [vmem:[%s293 + $0x210] sm:$0xf]
      %v448 = vld [vmem:[%s293 + $0x214] sm:$0xf]
      %v449 = vld [vmem:[%s293 + $0x218] sm:$0xf]
      %v450 = vld [vmem:[%s293 + $0x21c] sm:$0xf]
      %v451 = vld [vmem:[%s293 + $0x220] sm:$0xf]
      %v452 = vld [vmem:[%s293 + $0x224] sm:$0xf]
      %v453 = vld [vmem:[%s293 + $0x228] sm:$0xf]
      %v454 = vld [vmem:[%s293 + $0x22c] sm:$0xf]
      %v455 = vld [vmem:[%s293 + $0x230] sm:$0xf]
      %v456 = vld [vmem:[%s293 + $0x234] sm:$0xf]
      %v457 = vld [vmem:[%s293 + $0x238] sm:$0xf]
      %v458 = vld [vmem:[%s293 + $0x23c] sm:$0xf]
      %v469 = vunpack.c.l.b16 %v305
      %v470 = vunpack.c.h.b16 %v305
      %v471 = vunpack.c.l.b16 %v306
      %v472 = vunpack.c.h.b16 %v306
      %v473 = vunpack.c.l.b16 %v307
      %v474 = vunpack.c.h.b16 %v307
      %v475 = vunpack.c.l.b16 %v308
      %v476 = vunpack.c.h.b16 %v308
      %v477 = vunpack.c.l.b16 %v309
      %v478 = vunpack.c.l.b16 %v310
      %v479 = vunpack.c.h.b16 %v310
      %v480 = vunpack.c.l.b16 %v311
      %v481 = vunpack.c.h.b16 %v311
      %v482 = vunpack.c.l.b16 %v312
      %v483 = vunpack.c.h.b16 %v312
      %v484 = vunpack.c.l.b16 %v313
      %v485 = vunpack.c.h.b16 %v313
      %v486 = vunpack.c.l.b16 %v314
      %v487 = vpack.c.b16 %v478, %v469
      %v488 = vpack.c.b16 %v479, %v470
      %v489 = vpack.c.b16 %v480, %v471
      %v490 = vpack.c.b16 %v481, %v472
      %v491 = vpack.c.b16 %v482, %v473
      %v492 = vpack.c.b16 %v483, %v474
      %v493 = vpack.c.b16 %v484, %v475
      %v494 = vpack.c.b16 %v485, %v476
      %v495 = vpack.c.b16 %v486, %v477
      %v649 = vunpack.c.l.b16 %v315
      %v650 = vunpack.c.l.b16 %v316
      %v651 = vunpack.c.l.b16 %v317
      %v652 = vunpack.c.l.b16 %v318
      %v653 = vunpack.c.l.b16 %v319
      %v654 = vunpack.c.l.b16 %v320
      %v655 = vunpack.c.l.b16 %v321
      %v656 = vunpack.c.l.b16 %v322
      %v657 = vunpack.c.l.b16 %v323
      %v658 = vunpack.c.l.b16 %v324
      %v659 = vunpack.c.l.b16 %v325
      %v660 = vunpack.c.l.b16 %v326
      %v661 = vunpack.c.l.b16 %v327
      %v662 = vunpack.c.l.b16 %v328
      %v663 = vunpack.c.l.b16 %v329
      %v664 = vunpack.c.l.b16 %v330
      %v665 = vunpack.c.l.b16 %v331
      %v666 = vunpack.c.l.b16 %v332
      %v667 = vunpack.c.l.b16 %v333
      %v668 = vunpack.c.l.b16 %v334
      %v669 = vunpack.c.l.b16 %v335
      %v670 = vunpack.c.l.b16 %v336
      %v671 = vunpack.c.l.b16 %v337
      %v672 = vunpack.c.l.b16 %v338
      %v673 = vunpack.c.l.b16 %v339
      %v674 = vunpack.c.l.b16 %v340
      %v675 = vunpack.c.l.b16 %v341
      %v676 = vunpack.c.l.b16 %v342
      %v677 = vunpack.c.l.b16 %v343
      %v678 = vunpack.c.l.b16 %v344
      %v679 = vunpack.c.l.b16 %v345
      %v680 = vunpack.c.l.b16 %v346
      %v681 = vunpack.c.l.b16 %v347
      %v682 = vunpack.c.l.b16 %v348
      %v683 = vunpack.c.l.b16 %v349
      %v684 = vunpack.c.l.b16 %v350
      %v685 = vunpack.c.l.b16 %v351
      %v686 = vunpack.c.l.b16 %v352
      %v687 = vunpack.c.l.b16 %v353
      %v688 = vunpack.c.l.b16 %v354
      %v689 = vunpack.c.l.b16 %v355
      %v690 = vunpack.c.l.b16 %v356
      %v691 = vunpack.c.l.b16 %v357
      %v692 = vunpack.c.l.b16 %v358
      %v693 = vunpack.c.l.b16 %v359
      %v694 = vunpack.c.l.b16 %v360
      %v695 = vunpack.c.l.b16 %v361
      %v696 = vunpack.c.l.b16 %v362
      %v697 = vunpack.c.l.b16 %v363
      %v698 = vunpack.c.l.b16 %v364
      %v699 = vunpack.c.l.b16 %v365
      %v700 = vunpack.c.l.b16 %v366
      %v701 = vunpack.c.l.b16 %v367
      %v702 = vunpack.c.l.b16 %v368
      %v703 = vunpack.c.l.b16 %v369
      %v704 = vunpack.c.l.b16 %v370
      %v705 = vunpack.c.l.b16 %v371
      %v706 = vunpack.c.l.b16 %v372
      %v707 = vunpack.c.l.b16 %v373
      %v708 = vunpack.c.l.b16 %v374
      %v709 = vunpack.c.l.b16 %v375
      %v710 = vunpack.c.l.b16 %v376
      %v711 = vunpack.c.l.b16 %v377
      %v712 = vunpack.c.l.b16 %v378
      %v713 = vunpack.c.l.b16 %v379
      %v714 = vunpack.c.l.b16 %v380
      %v715 = vunpack.c.l.b16 %v381
      %v716 = vunpack.c.l.b16 %v382
      %v717 = vunpack.c.l.b16 %v383
      %v718 = vunpack.c.l.b16 %v384
      %v719 = vunpack.c.l.b16 %v385
      %v720 = vunpack.c.l.b16 %v386
      %v721 = vunpack.c.l.b16 %v387
      %v722 = vunpack.c.l.b16 %v388
      %v723 = vunpack.c.l.b16 %v389
      %v724 = vunpack.c.l.b16 %v390
      %v725 = vunpack.c.l.b16 %v391
      %v726 = vunpack.c.l.b16 %v392
      %v727 = vunpack.c.l.b16 %v393
      %v728 = vunpack.c.l.b16 %v394
      %v729 = vunpack.c.l.b16 %v395
      %v730 = vunpack.c.l.b16 %v396
      %v731 = vunpack.c.l.b16 %v397
      %v732 = vunpack.c.l.b16 %v398
      %v733 = vunpack.c.l.b16 %v399
      %v734 = vunpack.c.l.b16 %v400
      %v735 = vunpack.c.l.b16 %v401
      %v736 = vunpack.c.l.b16 %v402
      %v737 = vunpack.c.l.b16 %v403
      %v738 = vunpack.c.l.b16 %v404
      %v739 = vunpack.c.l.b16 %v405
      %v740 = vunpack.c.l.b16 %v406
      %v741 = vunpack.c.l.b16 %v407
      %v742 = vunpack.c.l.b16 %v408
      %v743 = vunpack.c.l.b16 %v409
      %v744 = vunpack.c.l.b16 %v410
      %v745 = vunpack.c.l.b16 %v411
      %v746 = vunpack.c.l.b16 %v412
      %v747 = vunpack.c.l.b16 %v413
      %v748 = vunpack.c.l.b16 %v414
      %v749 = vunpack.c.l.b16 %v415
      %v750 = vunpack.c.l.b16 %v416
      %v751 = vunpack.c.l.b16 %v417
      %v752 = vunpack.c.l.b16 %v418
      %v753 = vunpack.c.l.b16 %v419
      %v754 = vunpack.c.l.b16 %v420
      %v755 = vunpack.c.l.b16 %v421
      %v756 = vunpack.c.l.b16 %v422
      %v757 = vunpack.c.l.b16 %v423
      %v758 = vunpack.c.l.b16 %v424
      %v759 = vunpack.c.l.b16 %v425
      %v760 = vunpack.c.l.b16 %v426
      %v761 = vunpack.c.l.b16 %v427
      %v762 = vunpack.c.l.b16 %v428
      %v763 = vunpack.c.l.b16 %v429
      %v764 = vunpack.c.l.b16 %v430
      %v765 = vunpack.c.l.b16 %v431
      %v766 = vunpack.c.l.b16 %v432
      %v767 = vunpack.c.l.b16 %v433
      %v768 = vunpack.c.l.b16 %v434
      %v769 = vunpack.c.l.b16 %v435
      %v770 = vunpack.c.l.b16 %v436
      %v771 = vunpack.c.l.b16 %v437
      %v772 = vunpack.c.l.b16 %v438
      %v773 = vunpack.c.l.b16 %v439
      %v774 = vunpack.c.l.b16 %v440
      %v775 = vunpack.c.l.b16 %v441
      %v776 = vunpack.c.l.b16 %v442
      %v777 = vunpack.c.l.b16 %v443
      %v778 = vunpack.c.l.b16 %v444
      %v779 = vunpack.c.l.b16 %v445
      %v780 = vunpack.c.l.b16 %v446
      %v781 = vunpack.c.l.b16 %v447
      %v782 = vunpack.c.l.b16 %v448
      %v783 = vunpack.c.l.b16 %v449
      %v784 = vunpack.c.l.b16 %v450
      %v785 = vunpack.c.l.b16 %v451
      %v786 = vunpack.c.l.b16 %v452
      %v787 = vunpack.c.l.b16 %v453
      %v788 = vunpack.c.l.b16 %v454
      %v789 = vunpack.c.l.b16 %v455
      %v790 = vunpack.c.l.b16 %v456
      %v791 = vunpack.c.l.b16 %v457
      %v792 = vunpack.c.l.b16 %v458
      %v793 = vpack.c.b16 %v650, %v649
      %v794 = vpack.c.b16 %v652, %v651
      %v795 = vpack.c.b16 %v654, %v653
      %v796 = vpack.c.b16 %v656, %v655
      %v797 = vpack.c.b16 %v658, %v657
      %v798 = vpack.c.b16 %v660, %v659
      %v799 = vpack.c.b16 %v662, %v661
      %v800 = vpack.c.b16 %v664, %v663
      %v801 = vpack.c.b16 %v666, %v665
      %v802 = vpack.c.b16 %v668, %v667
      %v803 = vpack.c.b16 %v670, %v669
      %v804 = vpack.c.b16 %v672, %v671
      %v805 = vpack.c.b16 %v674, %v673
      %v806 = vpack.c.b16 %v676, %v675
      %v807 = vpack.c.b16 %v678, %v677
      %v808 = vpack.c.b16 %v680, %v679
      %v809 = vpack.c.b16 %v682, %v681
      %v810 = vpack.c.b16 %v684, %v683
      %v811 = vpack.c.b16 %v686, %v685
      %v812 = vpack.c.b16 %v688, %v687
      %v813 = vpack.c.b16 %v690, %v689
      %v814 = vpack.c.b16 %v692, %v691
      %v815 = vpack.c.b16 %v694, %v693
      %v816 = vpack.c.b16 %v696, %v695
      %v817 = vpack.c.b16 %v698, %v697
      %v818 = vpack.c.b16 %v700, %v699
      %v819 = vpack.c.b16 %v702, %v701
      %v820 = vpack.c.b16 %v704, %v703
      %v821 = vpack.c.b16 %v706, %v705
      %v822 = vpack.c.b16 %v708, %v707
      %v823 = vpack.c.b16 %v710, %v709
      %v824 = vpack.c.b16 %v712, %v711
      %v825 = vpack.c.b16 %v714, %v713
      %v826 = vpack.c.b16 %v716, %v715
      %v827 = vpack.c.b16 %v718, %v717
      %v828 = vpack.c.b16 %v720, %v719
      %v829 = vpack.c.b16 %v722, %v721
      %v830 = vpack.c.b16 %v724, %v723
      %v831 = vpack.c.b16 %v726, %v725
      %v832 = vpack.c.b16 %v728, %v727
      %v833 = vpack.c.b16 %v730, %v729
      %v834 = vpack.c.b16 %v732, %v731
      %v835 = vpack.c.b16 %v734, %v733
      %v836 = vpack.c.b16 %v736, %v735
      %v837 = vpack.c.b16 %v738, %v737
      %v838 = vpack.c.b16 %v740, %v739
      %v839 = vpack.c.b16 %v742, %v741
      %v840 = vpack.c.b16 %v744, %v743
      %v841 = vpack.c.b16 %v746, %v745
      %v842 = vpack.c.b16 %v748, %v747
      %v843 = vpack.c.b16 %v750, %v749
      %v844 = vpack.c.b16 %v752, %v751
      %v845 = vpack.c.b16 %v754, %v753
      %v846 = vpack.c.b16 %v756, %v755
      %v847 = vpack.c.b16 %v758, %v757
      %v848 = vpack.c.b16 %v760, %v759
      %v849 = vpack.c.b16 %v762, %v761
      %v850 = vpack.c.b16 %v764, %v763
      %v851 = vpack.c.b16 %v766, %v765
      %v852 = vpack.c.b16 %v768, %v767
      %v853 = vpack.c.b16 %v770, %v769
      %v854 = vpack.c.b16 %v772, %v771
      %v855 = vpack.c.b16 %v774, %v773
      %v856 = vpack.c.b16 %v776, %v775
      %v857 = vpack.c.b16 %v778, %v777
      %v858 = vpack.c.b16 %v780, %v779
      %v859 = vpack.c.b16 %v782, %v781
      %v860 = vpack.c.b16 %v784, %v783
      %v861 = vpack.c.b16 %v786, %v785
      %v862 = vpack.c.b16 %v788, %v787
      %v863 = vpack.c.b16 %v790, %v789
      %v864 = vpack.c.b16 %v792, %v791
      %937 = vmatpush.bf16.msra.mxu0 %v800
      %938 = vmatpush.bf16.msra.mxu0 %v799
      %939 = vmatpush.bf16.msra.mxu0 %v798
      %940 = vmatpush.bf16.msra.mxu0 %v797
      %941 = vmatpush.bf16.msra.mxu0 %v796
      %942 = vmatpush.bf16.msra.mxu0 %v795
      %943 = vmatpush.bf16.msra.mxu0 %v794
      %944 = vmatpush.bf16.msra.mxu0 %v793
      %945 = vmatmul.bf16.gmra.mxu0 %v487
      %v946 = vpop.f32.mrf.mxu0
      %v947 = vadd.f32 0.0, %v946
      %v948 = vpop.f32.mrf.mxu0
      %v949 = vadd.f32 0.0, %v948
      %950 = vdwg.mxu0
      %951 = vmatpush.bf16.msra.mxu0 %v808
      %952 = vmatpush.bf16.msra.mxu0 %v807
      %953 = vmatpush.bf16.msra.mxu0 %v806
      %954 = vmatpush.bf16.msra.mxu0 %v805
      %955 = vmatpush.bf16.msra.mxu0 %v804
      %956 = vmatpush.bf16.msra.mxu0 %v803
      %957 = vmatpush.bf16.msra.mxu0 %v802
      %958 = vmatpush.bf16.msra.mxu0 %v801
      %959 = vmatmul.bf16.gmra.mxu0 %v488
      %v960 = vpop.f32.mrf.mxu0
      %v961 = vadd.f32 %v947, %v960
      %v962 = vpop.f32.mrf.mxu0
      %v963 = vadd.f32 %v949, %v962
      %964 = vdwg.mxu0
      %965 = vmatpush.bf16.msra.mxu0 %v816
      %966 = vmatpush.bf16.msra.mxu0 %v815
      %967 = vmatpush.bf16.msra.mxu0 %v814
      %968 = vmatpush.bf16.msra.mxu0 %v813
      %969 = vmatpush.bf16.msra.mxu0 %v812
      %970 = vmatpush.bf16.msra.mxu0 %v811
      %971 = vmatpush.bf16.msra.mxu0 %v810
      %972 = vmatpush.bf16.msra.mxu0 %v809
      %973 = vmatmul.bf16.gmra.mxu0 %v489
      %v974 = vpop.f32.mrf.mxu0
      %v975 = vadd.f32 %v961, %v974
      %v976 = vpop.f32.mrf.mxu0
      %v977 = vadd.f32 %v963, %v976
      %978 = vdwg.mxu0
      %979 = vmatpush.bf16.msra.mxu0 %v824
      %980 = vmatpush.bf16.msra.mxu0 %v823
      %981 = vmatpush.bf16.msra.mxu0 %v822
      %982 = vmatpush.bf16.msra.mxu0 %v821
      %983 = vmatpush.bf16.msra.mxu0 %v820
      %984 = vmatpush.bf16.msra.mxu0 %v819
      %985 = vmatpush.bf16.msra.mxu0 %v818
      %986 = vmatpush.bf16.msra.mxu0 %v817
      %987 = vmatmul.bf16.gmra.mxu0 %v490
      %v988 = vpop.f32.mrf.mxu0
      %v989 = vadd.f32 %v975, %v988
      %v990 = vpop.f32.mrf.mxu0
      %v991 = vadd.f32 %v977, %v990
      %992 = vdwg.mxu0
      %993 = vmatpush.bf16.msra.mxu0 %v832
      %994 = vmatpush.bf16.msra.mxu0 %v831
      %995 = vmatpush.bf16.msra.mxu0 %v830
      %996 = vmatpush.bf16.msra.mxu0 %v829
      %997 = vmatpush.bf16.msra.mxu0 %v828
      %998 = vmatpush.bf16.msra.mxu0 %v827
      %999 = vmatpush.bf16.msra.mxu0 %v826
      %1000 = vmatpush.bf16.msra.mxu0 %v825
      %1001 = vmatmul.bf16.gmra.mxu0 %v491
      %v1002 = vpop.f32.mrf.mxu0
      %v1003 = vadd.f32 %v989, %v1002
      %v1004 = vpop.f32.mrf.mxu0
      %v1005 = vadd.f32 %v991, %v1004
      %1006 = vdwg.mxu0
      %1007 = vmatpush.bf16.msra.mxu0 %v840
      %1008 = vmatpush.bf16.msra.mxu0 %v839
      %1009 = vmatpush.bf16.msra.mxu0 %v838
      %1010 = vmatpush.bf16.msra.mxu0 %v837
      %1011 = vmatpush.bf16.msra.mxu0 %v836
      %1012 = vmatpush.bf16.msra.mxu0 %v835
      %1013 = vmatpush.bf16.msra.mxu0 %v834
      %1014 = vmatpush.bf16.msra.mxu0 %v833
      %1015 = vmatmul.bf16.gmra.mxu0 %v492
      %v1016 = vpop.f32.mrf.mxu0
      %v1017 = vadd.f32 %v1003, %v1016
      %v1018 = vpop.f32.mrf.mxu0
      %v1019 = vadd.f32 %v1005, %v1018
      %1020 = vdwg.mxu0
      %1021 = vmatpush.bf16.msra.mxu0 %v848
      %1022 = vmatpush.bf16.msra.mxu0 %v847
      %1023 = vmatpush.bf16.msra.mxu0 %v846
      %1024 = vmatpush.bf16.msra.mxu0 %v845
      %1025 = vmatpush.bf16.msra.mxu0 %v844
      %1026 = vmatpush.bf16.msra.mxu0 %v843
      %1027 = vmatpush.bf16.msra.mxu0 %v842
      %1028 = vmatpush.bf16.msra.mxu0 %v841
      %1029 = vmatmul.bf16.gmra.mxu0 %v493
      %v1030 = vpop.f32.mrf.mxu0
      %v1031 = vadd.f32 %v1017, %v1030
      %v1032 = vpop.f32.mrf.mxu0
      %v1033 = vadd.f32 %v1019, %v1032
      %1034 = vdwg.mxu0
      %1035 = vmatpush.bf16.msra.mxu0 %v856
      %1036 = vmatpush.bf16.msra.mxu0 %v855
      %1037 = vmatpush.bf16.msra.mxu0 %v854
      %1038 = vmatpush.bf16.msra.mxu0 %v853
      %1039 = vmatpush.bf16.msra.mxu0 %v852
      %1040 = vmatpush.bf16.msra.mxu0 %v851
      %1041 = vmatpush.bf16.msra.mxu0 %v850
      %1042 = vmatpush.bf16.msra.mxu0 %v849
      %1043 = vmatmul.bf16.gmra.mxu0 %v494
      %v1044 = vpop.f32.mrf.mxu0
      %v1045 = vadd.f32 %v1031, %v1044
      %v1046 = vpop.f32.mrf.mxu0
      %v1047 = vadd.f32 %v1033, %v1046
      %1048 = vdwg.mxu0
      %1049 = vmatpush.bf16.msra.mxu0 %v864
      %1050 = vmatpush.bf16.msra.mxu0 %v863
      %1051 = vmatpush.bf16.msra.mxu0 %v862
      %1052 = vmatpush.bf16.msra.mxu0 %v861
      %1053 = vmatpush.bf16.msra.mxu0 %v860
      %1054 = vmatpush.bf16.msra.mxu0 %v859
      %1055 = vmatpush.bf16.msra.mxu0 %v858
      %1056 = vmatpush.bf16.msra.mxu0 %v857
      %1057 = vmatmul.bf16.gmra.mxu0 %v495
      %v1058 = vpop.f32.mrf.mxu0
      %v1059 = vadd.f32 %v1045, %v1058
      %v1060 = vpop.f32.mrf.mxu0
      %v1061 = vadd.f32 %v1047, %v1060
      %1062 = vdwg.mxu0
      %v1063 = vpack.c.bf16 %v1059, %v1059
      %v1064 = vpack.c.bf16 %v1061, %v1061
      %v1065 = vld [vmem:[%s284] sm:$0xf]
      %v1066 = vld [vmem:[%s284 + $0x4] sm:$0xf]
      %v1069 = vunpack.c.l.b16 %v1065
      %v1070 = vunpack.c.l.b16 %v1066
      %v1071 = vpack.c.b16 %v1070, %v1069
      %v1074 = vunpack.c.l.b16 %v1063
      %v1075 = vunpack.c.l.b16 %v1064
      %v1076 = vpack.c.b16 %v1075, %v1074
      %1077 = vrot.lane.b32.xlu0 %v1076, 48
      %v1078 = vpop.permute.xlu0 %1077
      %vm1079 = vcmask 392192
      %v1082 = vsel %vm1079, %v1071, %v1078
      %v1084 = vunpack.c.l.b16 %v1082
      %v1085 = vunpack.c.h.b16 %v1082
      %v1086 = vpack.c.b16 %v1084, %v1084
      %v1087 = vpack.c.b16 %v1085, %v1085
      %vm1090 = vcmask 650240
      %1091 = vst.msk [vmem:[%s299] sm:$0xf] %vm1090, %v1086
      %1092 = vst.msk [vmem:[%s299 + $0x4] sm:$0xf] %vm1090, %v1087
      %v1093 = vunpack.c.l.bf16 %v1063
      %v1094 = vunpack.c.l.bf16 %v1064
      %vm1095 = vcmask 261120
      %v1096 = vsel %vm1095, %v1093, 0.0
      %v1097 = vsel %vm1095, %v1094, 0.0
      %v1098 = vadd.f32 %v1096, %v1097
      %v1099 = vrot.slane %v1098, 4
      %v1100 = vadd.f32 %v1098, %v1099
      %v1101 = vrot.slane %v1100, 2
      %v1102 = vadd.f32 %v1100, %v1101
      %v1103 = vrot.slane %v1102, 1
      %v1104 = vadd.f32 %v1102, %v1103
      %v1105 = vmul.f32 %v1093, %v1093
      %v1106 = vmul.f32 %v1094, %v1094
      %v1107 = vsel %vm1095, %v1105, 0.0
      %v1108 = vsel %vm1095, %v1106, 0.0
      %v1109 = vadd.f32 %v1107, %v1108
      %v1110 = vrot.slane %v1109, 4
      %v1111 = vadd.f32 %v1109, %v1110
      %v1112 = vrot.slane %v1111, 2
      %v1113 = vadd.f32 %v1111, %v1112
      %v1114 = vrot.slane %v1113, 1
      %v1115 = vadd.f32 %v1113, %v1114
      %v1116 = vlaneseq
      %v1117 = vshrl.u32 %v1116, 7
      %vm1118 = vcmp.eq.s32.totalorder %v1117, 0
      %vm1119 = vcmp.eq.s32.totalorder %v1117, 1
      %v1120 = vsel %vm1119, %v1115, 0.0
      %v1121 = vsel %vm1118, %v1104, %v1120
      %1122 = vst.msk [vmem:[%s304] sm:$0xff] %vm1095, %v1121
      %s1123 = smul.u32 2, %s21
      %p1124 = scmp.lt.s32.totalorder %s1123, 3
      %s1125 = scalar_select %p1124, %s1123, 3
      %s1126 = smul.addr %s1125, 4
      %s1127 = scalar_lea.vmem %s3, %s1126
      %p1128 = scmp.lt.s32.totalorder %s21, 1
      %s1129 = scalar_select %p1128, %s21, 1
      %s1130 = smul.addr %s1129, 8
      %s1131 = scalar_lea.vmem %s4, %s1130
      // Predicated region
      $region33: #{densenet2_forward.28} parent=31 // pred_check
        %p1132 = pneg %p135
      $region34: #{densenet2_forward.28} parent=31 // pred_check_branch
        %1134 = sbr.rel (%p1132) target = $region36
      $region35: #{densenet2_forward.28} parent=31 // pred_region
        %s1135 = smul.u32 2, %s21
      $region36: #{densenet2_forward.28} parent=31 // pred_fallthru
        _
      // Predicated region
      $region37: #{densenet2_forward.28} parent=31 // pred_check
        %p1136 = pneg %p161
      $region38: #{densenet2_forward.28} parent=31 // pred_check_branch
        %1138 = sbr.rel (%p1136) target = $region40
      $region39: #{densenet2_forward.28} parent=31 // pred_region
        _
      $region40: #{densenet2_forward.28} parent=31 // pred_fallthru
        _
    $region32: #{densenet2_forward.28} parent=5 // pred_fallthru
      _
    %p1139 = scmp.le.s32.totalorder 2, %s11
    // Predicated region
    $region41: #{densenet2_forward.28} parent=5 // pred_check
      %p1140 = pneg %p1139
    $region42: #{densenet2_forward.28} parent=5 // pred_check_branch
      %1142 = sbr.rel (%p1140) target = $region44
    $region43: #{densenet2_forward.28} parent=5 // pred_region
      %s1143 = ssub.s32 %s11, 2
      // Predicated region
      $region45: #{densenet2_forward.28} parent=43 // pred_check
        %p1144 = pneg %p141
      $region46: #{densenet2_forward.28} parent=43 // pred_check_branch
        %1146 = sbr.rel (%p1144) target = $region48
      $region47: #{densenet2_forward.28} parent=43 // pred_region
        %s1147 = smul.u32 2, %s24
        %p1148 = scmp.lt.s32.totalorder %s1147, 3
        %s1149 = scalar_select %p1148, %s1147, 3
        %s1150 = smul.addr %s1149, 4
        %s1151 = scalar_lea.vmem %s3, %s1150
      $region48: #{densenet2_forward.28} parent=43 // pred_fallthru
        _
      // Predicated region
      $region49: #{densenet2_forward.28} parent=43 // pred_check
        %p1152 = pneg %p167
      $region50: #{densenet2_forward.28} parent=43 // pred_check_branch
        %1154 = sbr.rel (%p1152) target = $region52
      $region51: #{densenet2_forward.28} parent=43 // pred_region
        %p1155 = scmp.lt.s32.totalorder %s24, 1
        %s1156 = scalar_select %p1155, %s24, 1
        %s1157 = smul.addr %s1156, 8
        %s1158 = scalar_lea.vmem %s4, %s1157
      $region52: #{densenet2_forward.28} parent=43 // pred_fallthru
        _
    $region44: #{densenet2_forward.28} parent=5 // pred_fallthru
      _
  $region6: #{densenet2_forward.28} parent=0 // loop_footer
    %s15 = sadd.s32 1, %s11
  $region7: #{densenet2_forward.28} parent=0 // loop_footer_branch
    %10 = sbr.rel target = $region3
  $region8: #{densenet2_forward.28} parent=0 // loop_exit
    _

// kernel: densenet2_forward.30
$region0: #{densenet2_forward.30}
  #allocation0 [shape = 'u32[]', space=smem, size = 0x4, offset = 0x4, fixed_abs, tag = 'smem constant byte address 0x4 - core index']
  #allocation1 [shape = 'u32[72,128]{1,0:T(1,128)}', space=vmem, size = 0x9000, scoped, tag = 'internal scratch']
  %s0 = inlined_call_operand.vmem [shape: bf16[8,40], index: 0, kind: input, shape index: {}]
  %s1 = inlined_call_operand.vmem [shape: f32[1,40], index: 1, kind: input, shape index: {}]
  %s2 = inlined_call_operand.vmem [shape: f32[1,40], index: 2, kind: input, shape index: {}]
  %s3 = inlined_call_operand.vmem [shape: bf16[40,128], index: 3, kind: input, shape index: {}]
  %s4 = inlined_call_operand.vmem [shape: bf16[8,128], index: 4, kind: output, shape index: {0}]
  %s5 = inlined_call_operand.vmem [shape: f32[1,8,128], index: 5, kind: output, shape index: {1}]
  %6 = xla_tuple %s4, %s5
  %s7 = sld [smem:[#allocation0]]
  $region34: #{densenet2_forward.30} parent=0
    _
  %s9 = ssub.s32 1, %s7
  %s10 = scalar_select 0, %s9, %s7
  // Predicated region
  $region2: #{densenet2_forward.30} parent=0 // pred_check
    _
  $region3: #{densenet2_forward.30} parent=0 // pred_check_branch
    %12 = sbr.rel (0) target = $region5
  $region4: #{densenet2_forward.30} parent=0 // pred_region
    _
  $region5: #{densenet2_forward.30} parent=0 // pred_fallthru
    _
  // Predicated region
  $region6: #{densenet2_forward.30} parent=0 // pred_check
    _
  $region7: #{densenet2_forward.30} parent=0 // pred_check_branch
    %14 = sbr.rel (0) target = $region9
  $region8: #{densenet2_forward.30} parent=0 // pred_region
    _
  $region9: #{densenet2_forward.30} parent=0 // pred_fallthru
    _
  // Predicated region
  $region10: #{densenet2_forward.30} parent=0 // pred_check
    _
  $region11: #{densenet2_forward.30} parent=0 // pred_check_branch
    %16 = sbr.rel (0) target = $region13
  $region12: #{densenet2_forward.30} parent=0 // pred_region
    _
  $region13: #{densenet2_forward.30} parent=0 // pred_fallthru
    _
  // Predicated region
  $region14: #{densenet2_forward.30} parent=0 // pred_check
    _
  $region15: #{densenet2_forward.30} parent=0 // pred_check_branch
    %18 = sbr.rel (0) target = $region17
  $region16: #{densenet2_forward.30} parent=0 // pred_region
    _
  $region17: #{densenet2_forward.30} parent=0 // pred_fallthru
    _
  %v20 = vld [vmem:[%s0] sm:$0xf]
  %v21 = vunpack.c.l.bf16 %v20
  %v22 = vld [vmem:[%s1] sm:$0x1]
  %v24 = vperm.slane %v22, 0
  %v26 = vmul.f32 %v21, %v24
  %v27 = vld [vmem:[%s2] sm:$0x1]
  %v29 = vperm.slane %v27, 0
  %v31 = vadd.f32 %v26, %v29
  %v32 = vmax.f32 %v31, 0.0
  %v33 = vpack.c.bf16 %v32, %v32
  %v34 = vld [vmem:[%s3] sm:$0xf]
  %v35 = vld [vmem:[%s3 + $0x4] sm:$0xf]
  %v36 = vld [vmem:[%s3 + $0x8] sm:$0xf]
  %v37 = vld [vmem:[%s3 + $0xc] sm:$0xf]
  %v38 = vld [vmem:[%s3 + $0x10] sm:$0xf]
  %v44 = vunpack.c.l.b16 %v34
  %v45 = vunpack.c.l.b16 %v35
  %v46 = vunpack.c.l.b16 %v36
  %v47 = vunpack.c.l.b16 %v37
  %v48 = vunpack.c.l.b16 %v38
  %v49 = vpack.c.b16 %v45, %v44
  %v50 = vpack.c.b16 %v47, %v46
  %v51 = vpack.c.b16 %v48, %v48
  %vm54 = vcmask 326656
  %v56 = vsel %vm54, %v33, 0
  %vm58 = vcmask 1043456
  %v60 = vsel %vm58, %v51, 0
  %62 = vmatpush.bf16.msra.mxu0 0
  %63 = vmatpush.bf16.msra.mxu0 0
  %64 = vmatpush.bf16.msra.mxu0 0
  %65 = vmatpush.bf16.msra.mxu0 0
  %66 = vmatpush.bf16.msra.mxu0 0
  %67 = vmatpush.bf16.msra.mxu0 %v60
  %68 = vmatpush.bf16.msra.mxu0 %v50
  %69 = vmatpush.bf16.msra.mxu0 %v49
  %70 = vmatmul.bf16.gmra.mxu0 %v56
  %v71 = vpop.f32.mrf.mxu0
  %v72 = vadd.f32 0.0, %v71
  %v73 = vpop.f32.mrf.mxu0
  %74 = vdwg.mxu0
  %v75 = vpack.c.bf16 %v72, %v72
  %76 = vst [vmem:[%s4] sm:$0xf] %v75
  %v77 = vunpack.c.l.bf16 %v75
  %v78 = vrot.slane %v77, 4
  %v79 = vadd.f32 %v77, %v78
  %v80 = vrot.slane %v79, 2
  %v81 = vadd.f32 %v79, %v80
  %v82 = vrot.slane %v81, 1
  %v83 = vadd.f32 %v81, %v82
  %v84 = vmul.f32 %v77, %v77
  %v85 = vrot.slane %v84, 4
  %v86 = vadd.f32 %v84, %v85
  %v87 = vrot.slane %v86, 2
  %v88 = vadd.f32 %v86, %v87
  %v89 = vrot.slane %v88, 1
  %v90 = vadd.f32 %v88, %v89
  %v91 = vlaneseq
  %v92 = vshrl.u32 %v91, 7
  %vm93 = vcmp.eq.s32.totalorder %v92, 0
  %vm94 = vcmp.eq.s32.totalorder %v92, 1
  %v95 = vsel %vm94, %v90, 0.0
  %v96 = vsel %vm93, %v83, %v95
  %97 = vst [vmem:[%s5] sm:$0xff] %v96
  // Predicated region
  $region18: #{densenet2_forward.30} parent=0 // pred_check
    _
  $region19: #{densenet2_forward.30} parent=0 // pred_check_branch
    %99 = sbr.rel (0) target = $region21
  $region20: #{densenet2_forward.30} parent=0 // pred_region
    _
  $region21: #{densenet2_forward.30} parent=0 // pred_fallthru
    _
  // Predicated region
  $region22: #{densenet2_forward.30} parent=0 // pred_check
    _
  $region23: #{densenet2_forward.30} parent=0 // pred_check_branch
    %101 = sbr.rel (0) target = $region25
  $region24: #{densenet2_forward.30} parent=0 // pred_region
    _
  $region25: #{densenet2_forward.30} parent=0 // pred_fallthru
    _
  // Predicated region
  $region26: #{densenet2_forward.30} parent=0 // pred_check
    _
  $region27: #{densenet2_forward.30} parent=0 // pred_check_branch
    %103 = sbr.rel (0) target = $region29
  $region28: #{densenet2_forward.30} parent=0 // pred_region
    _
  $region29: #{densenet2_forward.30} parent=0 // pred_fallthru
    _
  // Predicated region
  $region30: #{densenet2_forward.30} parent=0 // pred_check
    _
  $region31: #{densenet2_forward.30} parent=0 // pred_check_branch
    %105 = sbr.rel (0) target = $region33
  $region32: #{densenet2_forward.30} parent=0 // pred_region
    _
  $region33: #{densenet2_forward.30} parent=0 // pred_fallthru
    _

// kernel: densenet2_forward.32
$region0: #{densenet2_forward.32}
  #allocation0 [shape = 'u32[]', space=smem, size = 0x4, offset = 0x4, fixed_abs, tag = 'smem constant byte address 0x4 - core index']
  #allocation1 [shape = 'u32[72,128]{1,0:T(1,128)}', space=vmem, size = 0x9000, scoped, tag = 'internal scratch']
  %s0 = inlined_call_operand.vmem [shape: bf16[8,72], index: 0, kind: input, shape index: {}]
  %s1 = inlined_call_operand.vmem [shape: f32[1,72], index: 1, kind: input, shape index: {}]
  %s2 = inlined_call_operand.vmem [shape: f32[1,72], index: 2, kind: input, shape index: {}]
  %s3 = inlined_call_operand.vmem [shape: bf16[72,36], index: 3, kind: input, shape index: {}]
  %s4 = inlined_call_operand.vmem [shape: bf16[8,36], index: 4, kind: output, shape index: {}]
  %s5 = sld [smem:[#allocation0]]
  $region26: #{densenet2_forward.32} parent=0
    _
  %s7 = ssub.s32 1, %s5
  %s8 = scalar_select 0, %s7, %s5
  // Predicated region
  $region2: #{densenet2_forward.32} parent=0 // pred_check
    _
  $region3: #{densenet2_forward.32} parent=0 // pred_check_branch
    %10 = sbr.rel (0) target = $region5
  $region4: #{densenet2_forward.32} parent=0 // pred_region
    _
  $region5: #{densenet2_forward.32} parent=0 // pred_fallthru
    _
  // Predicated region
  $region6: #{densenet2_forward.32} parent=0 // pred_check
    _
  $region7: #{densenet2_forward.32} parent=0 // pred_check_branch
    %12 = sbr.rel (0) target = $region9
  $region8: #{densenet2_forward.32} parent=0 // pred_region
    _
  $region9: #{densenet2_forward.32} parent=0 // pred_fallthru
    _
  // Predicated region
  $region10: #{densenet2_forward.32} parent=0 // pred_check
    _
  $region11: #{densenet2_forward.32} parent=0 // pred_check_branch
    %14 = sbr.rel (0) target = $region13
  $region12: #{densenet2_forward.32} parent=0 // pred_region
    _
  $region13: #{densenet2_forward.32} parent=0 // pred_fallthru
    _
  // Predicated region
  $region14: #{densenet2_forward.32} parent=0 // pred_check
    _
  $region15: #{densenet2_forward.32} parent=0 // pred_check_branch
    %16 = sbr.rel (0) target = $region17
  $region16: #{densenet2_forward.32} parent=0 // pred_region
    _
  $region17: #{densenet2_forward.32} parent=0 // pred_fallthru
    _
  %v18 = vld [vmem:[%s0] sm:$0xf]
  %v19 = vunpack.c.l.bf16 %v18
  %v20 = vld [vmem:[%s1] sm:$0x1]
  %v22 = vperm.slane %v20, 0
  %v24 = vmul.f32 %v19, %v22
  %v25 = vld [vmem:[%s2] sm:$0x1]
  %v27 = vperm.slane %v25, 0
  %v29 = vadd.f32 %v24, %v27
  %v30 = vmax.f32 %v29, 0.0
  %v31 = vpack.c.bf16 %v30, %v30
  %v32 = vld [vmem:[%s3] sm:$0xf]
  %v33 = vld [vmem:[%s3 + $0x4] sm:$0xf]
  %v34 = vld [vmem:[%s3 + $0x8] sm:$0xf]
  %v35 = vld [vmem:[%s3 + $0xc] sm:$0xf]
  %v36 = vld [vmem:[%s3 + $0x10] sm:$0xf]
  %v37 = vld [vmem:[%s3 + $0x14] sm:$0xf]
  %v38 = vld [vmem:[%s3 + $0x18] sm:$0xf]
  %v39 = vld [vmem:[%s3 + $0x1c] sm:$0xf]
  %v40 = vld [vmem:[%s3 + $0x20] sm:$0xf]
  %v50 = vunpack.c.l.b16 %v32
  %v51 = vunpack.c.l.b16 %v33
  %v52 = vunpack.c.l.b16 %v34
  %v53 = vunpack.c.l.b16 %v35
  %v54 = vunpack.c.l.b16 %v36
  %v55 = vunpack.c.l.b16 %v37
  %v56 = vunpack.c.l.b16 %v38
  %v57 = vunpack.c.l.b16 %v39
  %v58 = vunpack.c.l.b16 %v40
  %v59 = vpack.c.b16 %v51, %v50
  %v60 = vpack.c.b16 %v53, %v52
  %v61 = vpack.c.b16 %v55, %v54
  %v62 = vpack.c.b16 %v57, %v56
  %v63 = vpack.c.b16 %v58, %v58
  %vm68 = vcmask 588800
  %v70 = vsel %vm68, %v31, 0
  %vm72 = vcmask 1043456
  %v74 = vsel %vm72, %v63, 0
  %76 = vmatpush.bf16.msra.mxu0 0
  %77 = vmatpush.bf16.msra.mxu0 0
  %78 = vmatpush.bf16.msra.mxu0 0
  %79 = vmatpush.bf16.msra.mxu0 %v74
  %80 = vmatpush.bf16.msra.mxu0 %v62
  %81 = vmatpush.bf16.msra.mxu0 %v61
  %82 = vmatpush.bf16.msra.mxu0 %v60
  %83 = vmatpush.bf16.msra.mxu0 %v59
  %84 = vmatmul.bf16.gmra.mxu0 %v70
  %v85 = vpop.f32.mrf.mxu0
  %v86 = vadd.f32 0.0, %v85
  %v87 = vpop.f32.mrf.mxu0
  %88 = vdwg.mxu0
  %v89 = vpack.c.bf16 %v86, %v86
  %vm90 = vcmask 289792
  %91 = vst.msk [vmem:[%s4] sm:$0xf] %vm90, %v89
  // Predicated region
  $region18: #{densenet2_forward.32} parent=0 // pred_check
    _
  $region19: #{densenet2_forward.32} parent=0 // pred_check_branch
    %93 = sbr.rel (0) target = $region21
  $region20: #{densenet2_forward.32} parent=0 // pred_region
    _
  $region21: #{densenet2_forward.32} parent=0 // pred_fallthru
    _
  // Predicated region
  $region22: #{densenet2_forward.32} parent=0 // pred_check
    _
  $region23: #{densenet2_forward.32} parent=0 // pred_check_branch
    %95 = sbr.rel (0) target = $region25
  $region24: #{densenet2_forward.32} parent=0 // pred_region
    _
  $region25: #{densenet2_forward.32} parent=0 // pred_fallthru
    _

// kernel: densenet2_forward.31
$region0: #{densenet2_forward.31}
  #allocation0 [shape = 'u32[]', space=smem, size = 0x4, offset = 0x4, fixed_abs, tag = 'smem constant byte address 0x4 - core index']
  #allocation1 [shape = 'u32[72,128]{1,0:T(1,128)}', space=vmem, size = 0x9000, scoped, tag = 'internal scratch']
  %s0 = inlined_call_operand.vmem [shape: bf16[8,1152], index: 0, kind: input, shape index: {}]
  %s1 = inlined_call_operand.vmem [shape: bf16[8,40], index: 1, kind: input, shape index: {}]
  %s2 = inlined_call_operand.vmem [shape: bf16[1152,32], index: 2, kind: input, shape index: {}]
  %s3 = inlined_call_operand.vmem [shape: bf16[8,72], index: 3, kind: output, shape index: {0}]
  %s4 = inlined_call_operand.vmem [shape: f32[1,8,32], index: 4, kind: output, shape index: {1}]
  %5 = xla_tuple %s3, %s4
  %s6 = sld [smem:[#allocation0]]
  $region30: #{densenet2_forward.31} parent=0
    _
  %s8 = ssub.s32 1, %s6
  %s9 = scalar_select 0, %s8, %s6
  // Predicated region
  $region2: #{densenet2_forward.31} parent=0 // pred_check
    _
  $region3: #{densenet2_forward.31} parent=0 // pred_check_branch
    %11 = sbr.rel (0) target = $region5
  $region4: #{densenet2_forward.31} parent=0 // pred_region
    _
  $region5: #{densenet2_forward.31} parent=0 // pred_fallthru
    _
  // Predicated region
  $region6: #{densenet2_forward.31} parent=0 // pred_check
    _
  $region7: #{densenet2_forward.31} parent=0 // pred_check_branch
    %13 = sbr.rel (0) target = $region9
  $region8: #{densenet2_forward.31} parent=0 // pred_region
    _
  $region9: #{densenet2_forward.31} parent=0 // pred_fallthru
    _
  // Predicated region
  $region10: #{densenet2_forward.31} parent=0 // pred_check
    _
  $region11: #{densenet2_forward.31} parent=0 // pred_check_branch
    %15 = sbr.rel (0) target = $region13
  $region12: #{densenet2_forward.31} parent=0 // pred_region
    _
  $region13: #{densenet2_forward.31} parent=0 // pred_fallthru
    _
  %v16 = vld [vmem:[%s0] sm:$0xff]
  %v17 = vld [vmem:[%s0 + $0x8] sm:$0xff]
  %v18 = vld [vmem:[%s0 + $0x10] sm:$0xff]
  %v19 = vld [vmem:[%s0 + $0x18] sm:$0xff]
  %v20 = vld [vmem:[%s0 + $0x20] sm:$0xf]
  %v21 = vld [vmem:[%s2] sm:$0xf]
  %v22 = vld [vmem:[%s2 + $0x4] sm:$0xf]
  %v23 = vld [vmem:[%s2 + $0x8] sm:$0xf]
  %v24 = vld [vmem:[%s2 + $0xc] sm:$0xf]
  %v25 = vld [vmem:[%s2 + $0x10] sm:$0xf]
  %v26 = vld [vmem:[%s2 + $0x14] sm:$0xf]
  %v27 = vld [vmem:[%s2 + $0x18] sm:$0xf]
  %v28 = vld [vmem:[%s2 + $0x1c] sm:$0xf]
  %v29 = vld [vmem:[%s2 + $0x20] sm:$0xf]
  %v30 = vld [vmem:[%s2 + $0x24] sm:$0xf]
  %v31 = vld [vmem:[%s2 + $0x28] sm:$0xf]
  %v32 = vld [vmem:[%s2 + $0x2c] sm:$0xf]
  %v33 = vld [vmem:[%s2 + $0x30] sm:$0xf]
  %v34 = vld [vmem:[%s2 + $0x34] sm:$0xf]
  %v35 = vld [vmem:[%s2 + $0x38] sm:$0xf]
  %v36 = vld [vmem:[%s2 + $0x3c] sm:$0xf]
  %v37 = vld [vmem:[%s2 + $0x40] sm:$0xf]
  %v38 = vld [vmem:[%s2 + $0x44] sm:$0xf]
  %v39 = vld [vmem:[%s2 + $0x48] sm:$0xf]
  %v40 = vld [vmem:[%s2 + $0x4c] sm:$0xf]
  %v41 = vld [vmem:[%s2 + $0x50] sm:$0xf]
  %v42 = vld [vmem:[%s2 + $0x54] sm:$0xf]
  %v43 = vld [vmem:[%s2 + $0x58] sm:$0xf]
  %v44 = vld [vmem:[%s2 + $0x5c] sm:$0xf]
  %v45 = vld [vmem:[%s2 + $0x60] sm:$0xf]
  %v46 = vld [vmem:[%s2 + $0x64] sm:$0xf]
  %v47 = vld [vmem:[%s2 + $0x68] sm:$0xf]
  %v48 = vld [vmem:[%s2 + $0x6c] sm:$0xf]
  %v49 = vld [vmem:[%s2 + $0x70] sm:$0xf]
  %v50 = vld [vmem:[%s2 + $0x74] sm:$0xf]
  %v51 = vld [vmem:[%s2 + $0x78] sm:$0xf]
  %v52 = vld [vmem:[%s2 + $0x7c] sm:$0xf]
  %v53 = vld [vmem:[%s2 + $0x80] sm:$0xf]
  %v54 = vld [vmem:[%s2 + $0x84] sm:$0xf]
  %v55 = vld [vmem:[%s2 + $0x88] sm:$0xf]
  %v56 = vld [vmem:[%s2 + $0x8c] sm:$0xf]
  %v57 = vld [vmem:[%s2 + $0x90] sm:$0xf]
  %v58 = vld [vmem:[%s2 + $0x94] sm:$0xf]
  %v59 = vld [vmem:[%s2 + $0x98] sm:$0xf]
  %v60 = vld [vmem:[%s2 + $0x9c] sm:$0xf]
  %v61 = vld [vmem:[%s2 + $0xa0] sm:$0xf]
  %v62 = vld [vmem:[%s2 + $0xa4] sm:$0xf]
  %v63 = vld [vmem:[%s2 + $0xa8] sm:$0xf]
  %v64 = vld [vmem:[%s2 + $0xac] sm:$0xf]
  %v65 = vld [vmem:[%s2 + $0xb0] sm:$0xf]
  %v66 = vld [vmem:[%s2 + $0xb4] sm:$0xf]
  %v67 = vld [vmem:[%s2 + $0xb8] sm:$0xf]
  %v68 = vld [vmem:[%s2 + $0xbc] sm:$0xf]
  %v69 = vld [vmem:[%s2 + $0xc0] sm:$0xf]
  %v70 = vld [vmem:[%s2 + $0xc4] sm:$0xf]
  %v71 = vld [vmem:[%s2 + $0xc8] sm:$0xf]
  %v72 = vld [vmem:[%s2 + $0xcc] sm:$0xf]
  %v73 = vld [vmem:[%s2 + $0xd0] sm:$0xf]
  %v74 = vld [vmem:[%s2 + $0xd4] sm:$0xf]
  %v75 = vld [vmem:[%s2 + $0xd8] sm:$0xf]
  %v76 = vld [vmem:[%s2 + $0xdc] sm:$0xf]
  %v77 = vld [vmem:[%s2 + $0xe0] sm:$0xf]
  %v78 = vld [vmem:[%s2 + $0xe4] sm:$0xf]
  %v79 = vld [vmem:[%s2 + $0xe8] sm:$0xf]
  %v80 = vld [vmem:[%s2 + $0xec] sm:$0xf]
  %v81 = vld [vmem:[%s2 + $0xf0] sm:$0xf]
  %v82 = vld [vmem:[%s2 + $0xf4] sm:$0xf]
  %v83 = vld [vmem:[%s2 + $0xf8] sm:$0xf]
  %v84 = vld [vmem:[%s2 + $0xfc] sm:$0xf]
  %v85 = vld [vmem:[%s2 + $0x100] sm:$0xf]
  %v86 = vld [vmem:[%s2 + $0x104] sm:$0xf]
  %v87 = vld [vmem:[%s2 + $0x108] sm:$0xf]
  %v88 = vld [vmem:[%s2 + $0x10c] sm:$0xf]
  %v89 = vld [vmem:[%s2 + $0x110] sm:$0xf]
  %v90 = vld [vmem:[%s2 + $0x114] sm:$0xf]
  %v91 = vld [vmem:[%s2 + $0x118] sm:$0xf]
  %v92 = vld [vmem:[%s2 + $0x11c] sm:$0xf]
  %v93 = vld [vmem:[%s2 + $0x120] sm:$0xf]
  %v94 = vld [vmem:[%s2 + $0x124] sm:$0xf]
  %v95 = vld [vmem:[%s2 + $0x128] sm:$0xf]
  %v96 = vld [vmem:[%s2 + $0x12c] sm:$0xf]
  %v97 = vld [vmem:[%s2 + $0x130] sm:$0xf]
  %v98 = vld [vmem:[%s2 + $0x134] sm:$0xf]
  %v99 = vld [vmem:[%s2 + $0x138] sm:$0xf]
  %v100 = vld [vmem:[%s2 + $0x13c] sm:$0xf]
  %v101 = vld [vmem:[%s2 + $0x140] sm:$0xf]
  %v102 = vld [vmem:[%s2 + $0x144] sm:$0xf]
  %v103 = vld [vmem:[%s2 + $0x148] sm:$0xf]
  %v104 = vld [vmem:[%s2 + $0x14c] sm:$0xf]
  %v105 = vld [vmem:[%s2 + $0x150] sm:$0xf]
  %v106 = vld [vmem:[%s2 + $0x154] sm:$0xf]
  %v107 = vld [vmem:[%s2 + $0x158] sm:$0xf]
  %v108 = vld [vmem:[%s2 + $0x15c] sm:$0xf]
  %v109 = vld [vmem:[%s2 + $0x160] sm:$0xf]
  %v110 = vld [vmem:[%s2 + $0x164] sm:$0xf]
  %v111 = vld [vmem:[%s2 + $0x168] sm:$0xf]
  %v112 = vld [vmem:[%s2 + $0x16c] sm:$0xf]
  %v113 = vld [vmem:[%s2 + $0x170] sm:$0xf]
  %v114 = vld [vmem:[%s2 + $0x174] sm:$0xf]
  %v115 = vld [vmem:[%s2 + $0x178] sm:$0xf]
  %v116 = vld [vmem:[%s2 + $0x17c] sm:$0xf]
  %v117 = vld [vmem:[%s2 + $0x180] sm:$0xf]
  %v118 = vld [vmem:[%s2 + $0x184] sm:$0xf]
  %v119 = vld [vmem:[%s2 + $0x188] sm:$0xf]
  %v120 = vld [vmem:[%s2 + $0x18c] sm:$0xf]
  %v121 = vld [vmem:[%s2 + $0x190] sm:$0xf]
  %v122 = vld [vmem:[%s2 + $0x194] sm:$0xf]
  %v123 = vld [vmem:[%s2 + $0x198] sm:$0xf]
  %v124 = vld [vmem:[%s2 + $0x19c] sm:$0xf]
  %v125 = vld [vmem:[%s2 + $0x1a0] sm:$0xf]
  %v126 = vld [vmem:[%s2 + $0x1a4] sm:$0xf]
  %v127 = vld [vmem:[%s2 + $0x1a8] sm:$0xf]
  %v128 = vld [vmem:[%s2 + $0x1ac] sm:$0xf]
  %v129 = vld [vmem:[%s2 + $0x1b0] sm:$0xf]
  %v130 = vld [vmem:[%s2 + $0x1b4] sm:$0xf]
  %v131 = vld [vmem:[%s2 + $0x1b8] sm:$0xf]
  %v132 = vld [vmem:[%s2 + $0x1bc] sm:$0xf]
  %v133 = vld [vmem:[%s2 + $0x1c0] sm:$0xf]
  %v134 = vld [vmem:[%s2 + $0x1c4] sm:$0xf]
  %v135 = vld [vmem:[%s2 + $0x1c8] sm:$0xf]
  %v136 = vld [vmem:[%s2 + $0x1cc] sm:$0xf]
  %v137 = vld [vmem:[%s2 + $0x1d0] sm:$0xf]
  %v138 = vld [vmem:[%s2 + $0x1d4] sm:$0xf]
  %v139 = vld [vmem:[%s2 + $0x1d8] sm:$0xf]
  %v140 = vld [vmem:[%s2 + $0x1dc] sm:$0xf]
  %v141 = vld [vmem:[%s2 + $0x1e0] sm:$0xf]
  %v142 = vld [vmem:[%s2 + $0x1e4] sm:$0xf]
  %v143 = vld [vmem:[%s2 + $0x1e8] sm:$0xf]
  %v144 = vld [vmem:[%s2 + $0x1ec] sm:$0xf]
  %v145 = vld [vmem:[%s2 + $0x1f0] sm:$0xf]
  %v146 = vld [vmem:[%s2 + $0x1f4] sm:$0xf]
  %v147 = vld [vmem:[%s2 + $0x1f8] sm:$0xf]
  %v148 = vld [vmem:[%s2 + $0x1fc] sm:$0xf]
  %v149 = vld [vmem:[%s2 + $0x200] sm:$0xf]
  %v150 = vld [vmem:[%s2 + $0x204] sm:$0xf]
  %v151 = vld [vmem:[%s2 + $0x208] sm:$0xf]
  %v152 = vld [vmem:[%s2 + $0x20c] sm:$0xf]
  %v153 = vld [vmem:[%s2 + $0x210] sm:$0xf]
  %v154 = vld [vmem:[%s2 + $0x214] sm:$0xf]
  %v155 = vld [vmem:[%s2 + $0x218] sm:$0xf]
  %v156 = vld [vmem:[%s2 + $0x21c] sm:$0xf]
  %v157 = vld [vmem:[%s2 + $0x220] sm:$0xf]
  %v158 = vld [vmem:[%s2 + $0x224] sm:$0xf]
  %v159 = vld [vmem:[%s2 + $0x228] sm:$0xf]
  %v160 = vld [vmem:[%s2 + $0x22c] sm:$0xf]
  %v161 = vld [vmem:[%s2 + $0x230] sm:$0xf]
  %v162 = vld [vmem:[%s2 + $0x234] sm:$0xf]
  %v163 = vld [vmem:[%s2 + $0x238] sm:$0xf]
  %v164 = vld [vmem:[%s2 + $0x23c] sm:$0xf]
  %v170 = vunpack.c.l.b16 %v16
  %v171 = vunpack.c.h.b16 %v16
  %v172 = vunpack.c.l.b16 %v17
  %v173 = vunpack.c.h.b16 %v17
  %v174 = vunpack.c.l.b16 %v18
  %v175 = vunpack.c.h.b16 %v18
  %v176 = vunpack.c.l.b16 %v19
  %v177 = vunpack.c.h.b16 %v19
  %v178 = vunpack.c.l.b16 %v20
  %v179 = vpack.c.b16 %v170, %v170
  %v180 = vpack.c.b16 %v171, %v171
  %v181 = vpack.c.b16 %v172, %v172
  %v182 = vpack.c.b16 %v173, %v173
  %v183 = vpack.c.b16 %v174, %v174
  %v184 = vpack.c.b16 %v175, %v175
  %v185 = vpack.c.b16 %v176, %v176
  %v186 = vpack.c.b16 %v177, %v177
  %v187 = vpack.c.b16 %v178, %v178
  %v341 = vunpack.c.l.b16 %v21
  %v342 = vunpack.c.l.b16 %v22
  %v343 = vunpack.c.l.b16 %v23
  %v344 = vunpack.c.l.b16 %v24
  %v345 = vunpack.c.l.b16 %v25
  %v346 = vunpack.c.l.b16 %v26
  %v347 = vunpack.c.l.b16 %v27
  %v348 = vunpack.c.l.b16 %v28
  %v349 = vunpack.c.l.b16 %v29
  %v350 = vunpack.c.l.b16 %v30
  %v351 = vunpack.c.l.b16 %v31
  %v352 = vunpack.c.l.b16 %v32
  %v353 = vunpack.c.l.b16 %v33
  %v354 = vunpack.c.l.b16 %v34
  %v355 = vunpack.c.l.b16 %v35
  %v356 = vunpack.c.l.b16 %v36
  %v357 = vunpack.c.l.b16 %v37
  %v358 = vunpack.c.l.b16 %v38
  %v359 = vunpack.c.l.b16 %v39
  %v360 = vunpack.c.l.b16 %v40
  %v361 = vunpack.c.l.b16 %v41
  %v362 = vunpack.c.l.b16 %v42
  %v363 = vunpack.c.l.b16 %v43
  %v364 = vunpack.c.l.b16 %v44
  %v365 = vunpack.c.l.b16 %v45
  %v366 = vunpack.c.l.b16 %v46
  %v367 = vunpack.c.l.b16 %v47
  %v368 = vunpack.c.l.b16 %v48
  %v369 = vunpack.c.l.b16 %v49
  %v370 = vunpack.c.l.b16 %v50
  %v371 = vunpack.c.l.b16 %v51
  %v372 = vunpack.c.l.b16 %v52
  %v373 = vunpack.c.l.b16 %v53
  %v374 = vunpack.c.l.b16 %v54
  %v375 = vunpack.c.l.b16 %v55
  %v376 = vunpack.c.l.b16 %v56
  %v377 = vunpack.c.l.b16 %v57
  %v378 = vunpack.c.l.b16 %v58
  %v379 = vunpack.c.l.b16 %v59
  %v380 = vunpack.c.l.b16 %v60
  %v381 = vunpack.c.l.b16 %v61
  %v382 = vunpack.c.l.b16 %v62
  %v383 = vunpack.c.l.b16 %v63
  %v384 = vunpack.c.l.b16 %v64
  %v385 = vunpack.c.l.b16 %v65
  %v386 = vunpack.c.l.b16 %v66
  %v387 = vunpack.c.l.b16 %v67
  %v388 = vunpack.c.l.b16 %v68
  %v389 = vunpack.c.l.b16 %v69
  %v390 = vunpack.c.l.b16 %v70
  %v391 = vunpack.c.l.b16 %v71
  %v392 = vunpack.c.l.b16 %v72
  %v393 = vunpack.c.l.b16 %v73
  %v394 = vunpack.c.l.b16 %v74
  %v395 = vunpack.c.l.b16 %v75
  %v396 = vunpack.c.l.b16 %v76
  %v397 = vunpack.c.l.b16 %v77
  %v398 = vunpack.c.l.b16 %v78
  %v399 = vunpack.c.l.b16 %v79
  %v400 = vunpack.c.l.b16 %v80
  %v401 = vunpack.c.l.b16 %v81
  %v402 = vunpack.c.l.b16 %v82
  %v403 = vunpack.c.l.b16 %v83
  %v404 = vunpack.c.l.b16 %v84
  %v405 = vunpack.c.l.b16 %v85
  %v406 = vunpack.c.l.b16 %v86
  %v407 = vunpack.c.l.b16 %v87
  %v408 = vunpack.c.l.b16 %v88
  %v409 = vunpack.c.l.b16 %v89
  %v410 = vunpack.c.l.b16 %v90
  %v411 = vunpack.c.l.b16 %v91
  %v412 = vunpack.c.l.b16 %v92
  %v413 = vunpack.c.l.b16 %v93
  %v414 = vunpack.c.l.b16 %v94
  %v415 = vunpack.c.l.b16 %v95
  %v416 = vunpack.c.l.b16 %v96
  %v417 = vunpack.c.l.b16 %v97
  %v418 = vunpack.c.l.b16 %v98
  %v419 = vunpack.c.l.b16 %v99
  %v420 = vunpack.c.l.b16 %v100
  %v421 = vunpack.c.l.b16 %v101
  %v422 = vunpack.c.l.b16 %v102
  %v423 = vunpack.c.l.b16 %v103
  %v424 = vunpack.c.l.b16 %v104
  %v425 = vunpack.c.l.b16 %v105
  %v426 = vunpack.c.l.b16 %v106
  %v427 = vunpack.c.l.b16 %v107
  %v428 = vunpack.c.l.b16 %v108
  %v429 = vunpack.c.l.b16 %v109
  %v430 = vunpack.c.l.b16 %v110
  %v431 = vunpack.c.l.b16 %v111
  %v432 = vunpack.c.l.b16 %v112
  %v433 = vunpack.c.l.b16 %v113
  %v434 = vunpack.c.l.b16 %v114
  %v435 = vunpack.c.l.b16 %v115
  %v436 = vunpack.c.l.b16 %v116
  %v437 = vunpack.c.l.b16 %v117
  %v438 = vunpack.c.l.b16 %v118
  %v439 = vunpack.c.l.b16 %v119
  %v440 = vunpack.c.l.b16 %v120
  %v441 = vunpack.c.l.b16 %v121
  %v442 = vunpack.c.l.b16 %v122
  %v443 = vunpack.c.l.b16 %v123
  %v444 = vunpack.c.l.b16 %v124
  %v445 = vunpack.c.l.b16 %v125
  %v446 = vunpack.c.l.b16 %v126
  %v447 = vunpack.c.l.b16 %v127
  %v448 = vunpack.c.l.b16 %v128
  %v449 = vunpack.c.l.b16 %v129
  %v450 = vunpack.c.l.b16 %v130
  %v451 = vunpack.c.l.b16 %v131
  %v452 = vunpack.c.l.b16 %v132
  %v453 = vunpack.c.l.b16 %v133
  %v454 = vunpack.c.l.b16 %v134
  %v455 = vunpack.c.l.b16 %v135
  %v456 = vunpack.c.l.b16 %v136
  %v457 = vunpack.c.l.b16 %v137
  %v458 = vunpack.c.l.b16 %v138
  %v459 = vunpack.c.l.b16 %v139
  %v460 = vunpack.c.l.b16 %v140
  %v461 = vunpack.c.l.b16 %v141
  %v462 = vunpack.c.l.b16 %v142
  %v463 = vunpack.c.l.b16 %v143
  %v464 = vunpack.c.l.b16 %v144
  %v465 = vunpack.c.l.b16 %v145
  %v466 = vunpack.c.l.b16 %v146
  %v467 = vunpack.c.l.b16 %v147
  %v468 = vunpack.c.l.b16 %v148
  %v469 = vunpack.c.l.b16 %v149
  %v470 = vunpack.c.l.b16 %v150
  %v471 = vunpack.c.l.b16 %v151
  %v472 = vunpack.c.l.b16 %v152
  %v473 = vunpack.c.l.b16 %v153
  %v474 = vunpack.c.l.b16 %v154
  %v475 = vunpack.c.l.b16 %v155
  %v476 = vunpack.c.l.b16 %v156
  %v477 = vunpack.c.l.b16 %v157
  %v478 = vunpack.c.l.b16 %v158
  %v479 = vunpack.c.l.b16 %v159
  %v480 = vunpack.c.l.b16 %v160
  %v481 = vunpack.c.l.b16 %v161
  %v482 = vunpack.c.l.b16 %v162
  %v483 = vunpack.c.l.b16 %v163
  %v484 = vunpack.c.l.b16 %v164
  %v485 = vpack.c.b16 %v342, %v341
  %v486 = vpack.c.b16 %v344, %v343
  %v487 = vpack.c.b16 %v346, %v345
  %v488 = vpack.c.b16 %v348, %v347
  %v489 = vpack.c.b16 %v350, %v349
  %v490 = vpack.c.b16 %v352, %v351
  %v491 = vpack.c.b16 %v354, %v353
  %v492 = vpack.c.b16 %v356, %v355
  %v493 = vpack.c.b16 %v358, %v357
  %v494 = vpack.c.b16 %v360, %v359
  %v495 = vpack.c.b16 %v362, %v361
  %v496 = vpack.c.b16 %v364, %v363
  %v497 = vpack.c.b16 %v366, %v365
  %v498 = vpack.c.b16 %v368, %v367
  %v499 = vpack.c.b16 %v370, %v369
  %v500 = vpack.c.b16 %v372, %v371
  %v501 = vpack.c.b16 %v374, %v373
  %v502 = vpack.c.b16 %v376, %v375
  %v503 = vpack.c.b16 %v378, %v377
  %v504 = vpack.c.b16 %v380, %v379
  %v505 = vpack.c.b16 %v382, %v381
  %v506 = vpack.c.b16 %v384, %v383
  %v507 = vpack.c.b16 %v386, %v385
  %v508 = vpack.c.b16 %v388, %v387
  %v509 = vpack.c.b16 %v390, %v389
  %v510 = vpack.c.b16 %v392, %v391
  %v511 = vpack.c.b16 %v394, %v393
  %v512 = vpack.c.b16 %v396, %v395
  %v513 = vpack.c.b16 %v398, %v397
  %v514 = vpack.c.b16 %v400, %v399
  %v515 = vpack.c.b16 %v402, %v401
  %v516 = vpack.c.b16 %v404, %v403
  %v517 = vpack.c.b16 %v406, %v405
  %v518 = vpack.c.b16 %v408, %v407
  %v519 = vpack.c.b16 %v410, %v409
  %v520 = vpack.c.b16 %v412, %v411
  %v521 = vpack.c.b16 %v414, %v413
  %v522 = vpack.c.b16 %v416, %v415
  %v523 = vpack.c.b16 %v418, %v417
  %v524 = vpack.c.b16 %v420, %v419
  %v525 = vpack.c.b16 %v422, %v421
  %v526 = vpack.c.b16 %v424, %v423
  %v527 = vpack.c.b16 %v426, %v425
  %v528 = vpack.c.b16 %v428, %v427
  %v529 = vpack.c.b16 %v430, %v429
  %v530 = vpack.c.b16 %v432, %v431
  %v531 = vpack.c.b16 %v434, %v433
  %v532 = vpack.c.b16 %v436, %v435
  %v533 = vpack.c.b16 %v438, %v437
  %v534 = vpack.c.b16 %v440, %v439
  %v535 = vpack.c.b16 %v442, %v441
  %v536 = vpack.c.b16 %v444, %v443
  %v537 = vpack.c.b16 %v446, %v445
  %v538 = vpack.c.b16 %v448, %v447
  %v539 = vpack.c.b16 %v450, %v449
  %v540 = vpack.c.b16 %v452, %v451
  %v541 = vpack.c.b16 %v454, %v453
  %v542 = vpack.c.b16 %v456, %v455
  %v543 = vpack.c.b16 %v458, %v457
  %v544 = vpack.c.b16 %v460, %v459
  %v545 = vpack.c.b16 %v462, %v461
  %v546 = vpack.c.b16 %v464, %v463
  %v547 = vpack.c.b16 %v466, %v465
  %v548 = vpack.c.b16 %v468, %v467
  %v549 = vpack.c.b16 %v470, %v469
  %v550 = vpack.c.b16 %v472, %v471
  %v551 = vpack.c.b16 %v474, %v473
  %v552 = vpack.c.b16 %v476, %v475
  %v553 = vpack.c.b16 %v478, %v477
  %v554 = vpack.c.b16 %v480, %v479
  %v555 = vpack.c.b16 %v482, %v481
  %v556 = vpack.c.b16 %v484, %v483
  %629 = vmatpush.bf16.msra.mxu0 %v492
  %630 = vmatpush.bf16.msra.mxu0 %v491
  %631 = vmatpush.bf16.msra.mxu0 %v490
  %632 = vmatpush.bf16.msra.mxu0 %v489
  %633 = vmatpush.bf16.msra.mxu0 %v488
  %634 = vmatpush.bf16.msra.mxu0 %v487
  %635 = vmatpush.bf16.msra.mxu0 %v486
  %636 = vmatpush.bf16.msra.mxu0 %v485
  %637 = vmatmul.bf16.gmra.mxu0 %v179
  %v638 = vpop.f32.mrf.mxu0
  %v639 = vadd.f32 0.0, %v638
  %v640 = vpop.f32.mrf.mxu0
  %641 = vdwg.mxu0
  %642 = vmatpush.bf16.msra.mxu0 %v500
  %643 = vmatpush.bf16.msra.mxu0 %v499
  %644 = vmatpush.bf16.msra.mxu0 %v498
  %645 = vmatpush.bf16.msra.mxu0 %v497
  %646 = vmatpush.bf16.msra.mxu0 %v496
  %647 = vmatpush.bf16.msra.mxu0 %v495
  %648 = vmatpush.bf16.msra.mxu0 %v494
  %649 = vmatpush.bf16.msra.mxu0 %v493
  %650 = vmatmul.bf16.gmra.mxu0 %v180
  %v651 = vpop.f32.mrf.mxu0
  %v652 = vadd.f32 %v639, %v651
  %v653 = vpop.f32.mrf.mxu0
  %654 = vdwg.mxu0
  %655 = vmatpush.bf16.msra.mxu0 %v508
  %656 = vmatpush.bf16.msra.mxu0 %v507
  %657 = vmatpush.bf16.msra.mxu0 %v506
  %658 = vmatpush.bf16.msra.mxu0 %v505
  %659 = vmatpush.bf16.msra.mxu0 %v504
  %660 = vmatpush.bf16.msra.mxu0 %v503
  %661 = vmatpush.bf16.msra.mxu0 %v502
  %662 = vmatpush.bf16.msra.mxu0 %v501
  %663 = vmatmul.bf16.gmra.mxu0 %v181
  %v664 = vpop.f32.mrf.mxu0
  %v665 = vadd.f32 %v652, %v664
  %v666 = vpop.f32.mrf.mxu0
  %667 = vdwg.mxu0
  %668 = vmatpush.bf16.msra.mxu0 %v516
  %669 = vmatpush.bf16.msra.mxu0 %v515
  %670 = vmatpush.bf16.msra.mxu0 %v514
  %671 = vmatpush.bf16.msra.mxu0 %v513
  %672 = vmatpush.bf16.msra.mxu0 %v512
  %673 = vmatpush.bf16.msra.mxu0 %v511
  %674 = vmatpush.bf16.msra.mxu0 %v510
  %675 = vmatpush.bf16.msra.mxu0 %v509
  %676 = vmatmul.bf16.gmra.mxu0 %v182
  %v677 = vpop.f32.mrf.mxu0
  %v678 = vadd.f32 %v665, %v677
  %v679 = vpop.f32.mrf.mxu0
  %680 = vdwg.mxu0
  %681 = vmatpush.bf16.msra.mxu0 %v524
  %682 = vmatpush.bf16.msra.mxu0 %v523
  %683 = vmatpush.bf16.msra.mxu0 %v522
  %684 = vmatpush.bf16.msra.mxu0 %v521
  %685 = vmatpush.bf16.msra.mxu0 %v520
  %686 = vmatpush.bf16.msra.mxu0 %v519
  %687 = vmatpush.bf16.msra.mxu0 %v518
  %688 = vmatpush.bf16.msra.mxu0 %v517
  %689 = vmatmul.bf16.gmra.mxu0 %v183
  %v690 = vpop.f32.mrf.mxu0
  %v691 = vadd.f32 %v678, %v690
  %v692 = vpop.f32.mrf.mxu0
  %693 = vdwg.mxu0
  %694 = vmatpush.bf16.msra.mxu0 %v532
  %695 = vmatpush.bf16.msra.mxu0 %v531
  %696 = vmatpush.bf16.msra.mxu0 %v530
  %697 = vmatpush.bf16.msra.mxu0 %v529
  %698 = vmatpush.bf16.msra.mxu0 %v528
  %699 = vmatpush.bf16.msra.mxu0 %v527
  %700 = vmatpush.bf16.msra.mxu0 %v526
  %701 = vmatpush.bf16.msra.mxu0 %v525
  %702 = vmatmul.bf16.gmra.mxu0 %v184
  %v703 = vpop.f32.mrf.mxu0
  %v704 = vadd.f32 %v691, %v703
  %v705 = vpop.f32.mrf.mxu0
  %706 = vdwg.mxu0
  %707 = vmatpush.bf16.msra.mxu0 %v540
  %708 = vmatpush.bf16.msra.mxu0 %v539
  %709 = vmatpush.bf16.msra.mxu0 %v538
  %710 = vmatpush.bf16.msra.mxu0 %v537
  %711 = vmatpush.bf16.msra.mxu0 %v536
  %712 = vmatpush.bf16.msra.mxu0 %v535
  %713 = vmatpush.bf16.msra.mxu0 %v534
  %714 = vmatpush.bf16.msra.mxu0 %v533
  %715 = vmatmul.bf16.gmra.mxu0 %v185
  %v716 = vpop.f32.mrf.mxu0
  %v717 = vadd.f32 %v704, %v716
  %v718 = vpop.f32.mrf.mxu0
  %719 = vdwg.mxu0
  %720 = vmatpush.bf16.msra.mxu0 %v548
  %721 = vmatpush.bf16.msra.mxu0 %v547
  %722 = vmatpush.bf16.msra.mxu0 %v546
  %723 = vmatpush.bf16.msra.mxu0 %v545
  %724 = vmatpush.bf16.msra.mxu0 %v544
  %725 = vmatpush.bf16.msra.mxu0 %v543
  %726 = vmatpush.bf16.msra.mxu0 %v542
  %727 = vmatpush.bf16.msra.mxu0 %v541
  %728 = vmatmul.bf16.gmra.mxu0 %v186
  %v729 = vpop.f32.mrf.mxu0
  %v730 = vadd.f32 %v717, %v729
  %v731 = vpop.f32.mrf.mxu0
  %732 = vdwg.mxu0
  %733 = vmatpush.bf16.msra.mxu0 %v556
  %734 = vmatpush.bf16.msra.mxu0 %v555
  %735 = vmatpush.bf16.msra.mxu0 %v554
  %736 = vmatpush.bf16.msra.mxu0 %v553
  %737 = vmatpush.bf16.msra.mxu0 %v552
  %738 = vmatpush.bf16.msra.mxu0 %v551
  %739 = vmatpush.bf16.msra.mxu0 %v550
  %740 = vmatpush.bf16.msra.mxu0 %v549
  %741 = vmatmul.bf16.gmra.mxu0 %v187
  %v742 = vpop.f32.mrf.mxu0
  %v743 = vadd.f32 %v730, %v742
  %v744 = vpop.f32.mrf.mxu0
  %745 = vdwg.mxu0
  %v746 = vpack.c.bf16 %v743, %v743
  %v747 = vld [vmem:[%s1] sm:$0xf]
  %v749 = vunpack.c.l.b16 %v746
  %v750 = vpack.c.b16 %v749, %v749
  %751 = vrot.lane.b32.xlu0 %v750, 40
  %v752 = vpop.permute.xlu0 %751
  %vm753 = vcmask 326656
  %v756 = vsel %vm753, %v747, %v752
  %vm758 = vcmask 584704
  %759 = vst.msk [vmem:[%s3] sm:$0xf] %vm758, %v756
  %v760 = vunpack.c.l.bf16 %v746
  %vm761 = vcmask 261120
  %v762 = vsel %vm761, %v760, 0.0
  %v763 = vrot.slane %v762, 4
  %v764 = vadd.f32 %v762, %v763
  %v765 = vrot.slane %v764, 2
  %v766 = vadd.f32 %v764, %v765
  %v767 = vrot.slane %v766, 1
  %v768 = vadd.f32 %v766, %v767
  %v769 = vmul.f32 %v760, %v760
  %v770 = vsel %vm761, %v769, 0.0
  %v771 = vrot.slane %v770, 4
  %v772 = vadd.f32 %v770, %v771
  %v773 = vrot.slane %v772, 2
  %v774 = vadd.f32 %v772, %v773
  %v775 = vrot.slane %v774, 1
  %v776 = vadd.f32 %v774, %v775
  %v777 = vlaneseq
  %v778 = vshrl.u32 %v777, 7
  %vm779 = vcmp.eq.s32.totalorder %v778, 0
  %vm780 = vcmp.eq.s32.totalorder %v778, 1
  %v781 = vsel %vm780, %v776, 0.0
  %v782 = vsel %vm779, %v768, %v781
  %783 = vst.msk [vmem:[%s4] sm:$0xff] %vm761, %v782
  // Predicated region
  $region14: #{densenet2_forward.31} parent=0 // pred_check
    _
  $region15: #{densenet2_forward.31} parent=0 // pred_check_branch
    %785 = sbr.rel (0) target = $region17
  $region16: #{densenet2_forward.31} parent=0 // pred_region
    _
  $region17: #{densenet2_forward.31} parent=0 // pred_fallthru
    _
  // Predicated region
  $region18: #{densenet2_forward.31} parent=0 // pred_check
    _
  $region19: #{densenet2_forward.31} parent=0 // pred_check_branch
    %787 = sbr.rel (0) target = $region21
  $region20: #{densenet2_forward.31} parent=0 // pred_region
    _
  $region21: #{densenet2_forward.31} parent=0 // pred_fallthru
    _
  // Predicated region
  $region22: #{densenet2_forward.31} parent=0 // pred_check
    _
  $region23: #{densenet2_forward.31} parent=0 // pred_check_branch
    %789 = sbr.rel (0) target = $region25
  $region24: #{densenet2_forward.31} parent=0 // pred_region
    _
  $region25: #{densenet2_forward.31} parent=0 // pred_fallthru
    _
  // Predicated region
  $region26: #{densenet2_forward.31} parent=0 // pred_check
    _
  $region27: #{densenet2_forward.31} parent=0 // pred_check_branch
    %791 = sbr.rel (0) target = $region29
  $region28: #{densenet2_forward.31} parent=0 // pred_region
    _
  $region29: #{densenet2_forward.31} parent=0 // pred_fallthru
    _

// kernel: densenet2_forward.43
$region0: #{densenet2_forward.43}
  #allocation0 [shape = 'u32[]', space=smem, size = 0x4, offset = 0x4, fixed_abs, tag = 'smem constant byte address 0x4 - core index']
  #allocation1 [shape = 'u32[72,128]{1,0:T(1,128)}', space=vmem, size = 0x9000, scoped, tag = 'internal scratch']
  %s0 = inlined_call_operand.vmem [shape: bf16[8,36], index: 0, kind: input, shape index: {}]
  %s1 = inlined_call_operand.vmem [shape: f32[1,36], index: 1, kind: input, shape index: {}]
  %s2 = inlined_call_operand.vmem [shape: f32[1,36], index: 2, kind: input, shape index: {}]
  %s3 = inlined_call_operand.vmem [shape: bf16[36,128], index: 3, kind: input, shape index: {}]
  %s4 = inlined_call_operand.vmem [shape: bf16[8,128], index: 4, kind: output, shape index: {0}]
  %s5 = inlined_call_operand.vmem [shape: f32[1,8,128], index: 5, kind: output, shape index: {1}]
  %6 = xla_tuple %s4, %s5
  %s7 = sld [smem:[#allocation0]]
  $region34: #{densenet2_forward.43} parent=0
    _
  %s9 = ssub.s32 1, %s7
  %s10 = scalar_select 0, %s9, %s7
  // Predicated region
  $region2: #{densenet2_forward.43} parent=0 // pred_check
    _
  $region3: #{densenet2_forward.43} parent=0 // pred_check_branch
    %12 = sbr.rel (0) target = $region5
  $region4: #{densenet2_forward.43} parent=0 // pred_region
    _
  $region5: #{densenet2_forward.43} parent=0 // pred_fallthru
    _
  // Predicated region
  $region6: #{densenet2_forward.43} parent=0 // pred_check
    _
  $region7: #{densenet2_forward.43} parent=0 // pred_check_branch
    %14 = sbr.rel (0) target = $region9
  $region8: #{densenet2_forward.43} parent=0 // pred_region
    _
  $region9: #{densenet2_forward.43} parent=0 // pred_fallthru
    _
  // Predicated region
  $region10: #{densenet2_forward.43} parent=0 // pred_check
    _
  $region11: #{densenet2_forward.43} parent=0 // pred_check_branch
    %16 = sbr.rel (0) target = $region13
  $region12: #{densenet2_forward.43} parent=0 // pred_region
    _
  $region13: #{densenet2_forward.43} parent=0 // pred_fallthru
    _
  // Predicated region
  $region14: #{densenet2_forward.43} parent=0 // pred_check
    _
  $region15: #{densenet2_forward.43} parent=0 // pred_check_branch
    %18 = sbr.rel (0) target = $region17
  $region16: #{densenet2_forward.43} parent=0 // pred_region
    _
  $region17: #{densenet2_forward.43} parent=0 // pred_fallthru
    _
  %v20 = vld [vmem:[%s0] sm:$0xf]
  %v21 = vunpack.c.l.bf16 %v20
  %v22 = vld [vmem:[%s1] sm:$0x1]
  %v24 = vperm.slane %v22, 0
  %v26 = vmul.f32 %v21, %v24
  %v27 = vld [vmem:[%s2] sm:$0x1]
  %v29 = vperm.slane %v27, 0
  %v31 = vadd.f32 %v26, %v29
  %v32 = vmax.f32 %v31, 0.0
  %v33 = vpack.c.bf16 %v32, %v32
  %v34 = vld [vmem:[%s3] sm:$0xf]
  %v35 = vld [vmem:[%s3 + $0x4] sm:$0xf]
  %v36 = vld [vmem:[%s3 + $0x8] sm:$0xf]
  %v37 = vld [vmem:[%s3 + $0xc] sm:$0xf]
  %v38 = vld [vmem:[%s3 + $0x10] sm:$0x3]
  %v44 = vunpack.c.l.b16 %v34
  %v45 = vunpack.c.l.b16 %v35
  %v46 = vunpack.c.l.b16 %v36
  %v47 = vunpack.c.l.b16 %v37
  %v48 = vunpack.c.l.b16 %v38
  %v49 = vpack.c.b16 %v45, %v44
  %v50 = vpack.c.b16 %v47, %v46
  %v51 = vpack.c.b16 %v48, %v48
  %vm54 = vcmask 293888
  %v56 = vsel %vm54, %v33, 0
  %vm58 = vcmask 1041408
  %v60 = vsel %vm58, %v51, 0
  %62 = vmatpush.bf16.msra.mxu0 0
  %63 = vmatpush.bf16.msra.mxu0 0
  %64 = vmatpush.bf16.msra.mxu0 0
  %65 = vmatpush.bf16.msra.mxu0 0
  %66 = vmatpush.bf16.msra.mxu0 0
  %67 = vmatpush.bf16.msra.mxu0 %v60
  %68 = vmatpush.bf16.msra.mxu0 %v50
  %69 = vmatpush.bf16.msra.mxu0 %v49
  %70 = vmatmul.bf16.gmra.mxu0 %v56
  %v71 = vpop.f32.mrf.mxu0
  %v72 = vadd.f32 0.0, %v71
  %v73 = vpop.f32.mrf.mxu0
  %74 = vdwg.mxu0
  %v75 = vpack.c.bf16 %v72, %v72
  %76 = vst [vmem:[%s4] sm:$0xf] %v75
  %v77 = vunpack.c.l.bf16 %v75
  %v78 = vlaneseq
  %v79 = vshrl.u32 %v78, 7
  %s80 = smul.u32 0, 8
  %v81 = vstv %s80
  %v82 = vadd.s32 %v79, %v81
  %vm83 = vcmp.lt.s32.totalorder %v82, 2
  %v84 = vsel %vm83, %v77, 0.0
  %v85 = vrot.slane %v84, 4
  %v86 = vadd.f32 %v84, %v85
  %v87 = vrot.slane %v86, 2
  %v88 = vadd.f32 %v86, %v87
  %v89 = vrot.slane %v88, 1
  %v90 = vadd.f32 %v88, %v89
  %v91 = vmul.f32 %v84, %v84
  %v92 = vrot.slane %v91, 4
  %v93 = vadd.f32 %v91, %v92
  %v94 = vrot.slane %v93, 2
  %v95 = vadd.f32 %v93, %v94
  %v96 = vrot.slane %v95, 1
  %v97 = vadd.f32 %v95, %v96
  %vm98 = vcmp.eq.s32.totalorder %v79, 0
  %vm99 = vcmp.eq.s32.totalorder %v79, 1
  %v100 = vsel %vm99, %v97, 0.0
  %v101 = vsel %vm98, %v90, %v100
  %102 = vst [vmem:[%s5] sm:$0xff] %v101
  // Predicated region
  $region18: #{densenet2_forward.43} parent=0 // pred_check
    _
  $region19: #{densenet2_forward.43} parent=0 // pred_check_branch
    %104 = sbr.rel (0) target = $region21
  $region20: #{densenet2_forward.43} parent=0 // pred_region
    _
  $region21: #{densenet2_forward.43} parent=0 // pred_fallthru
    _
  // Predicated region
  $region22: #{densenet2_forward.43} parent=0 // pred_check
    _
  $region23: #{densenet2_forward.43} parent=0 // pred_check_branch
    %106 = sbr.rel (0) target = $region25
  $region24: #{densenet2_forward.43} parent=0 // pred_region
    _
  $region25: #{densenet2_forward.43} parent=0 // pred_fallthru
    _
  // Predicated region
  $region26: #{densenet2_forward.43} parent=0 // pred_check
    _
  $region27: #{densenet2_forward.43} parent=0 // pred_check_branch
    %108 = sbr.rel (0) target = $region29
  $region28: #{densenet2_forward.43} parent=0 // pred_region
    _
  $region29: #{densenet2_forward.43} parent=0 // pred_fallthru
    _
  // Predicated region
  $region30: #{densenet2_forward.43} parent=0 // pred_check
    _
  $region31: #{densenet2_forward.43} parent=0 // pred_check_branch
    %110 = sbr.rel (0) target = $region33
  $region32: #{densenet2_forward.43} parent=0 // pred_region
    _
  $region33: #{densenet2_forward.43} parent=0 // pred_fallthru
    _

// kernel: densenet2_forward.45
$region0: #{densenet2_forward.45}
  #allocation0 [shape = 'u32[]', space=smem, size = 0x4, offset = 0x4, fixed_abs, tag = 'smem constant byte address 0x4 - core index']
  #allocation1 [shape = 'u32[72,128]{1,0:T(1,128)}', space=vmem, size = 0x9000, scoped, tag = 'internal scratch']
  %s0 = inlined_call_operand.vmem [shape: bf16[8,128], index: 0, kind: input, shape index: {}]
  %s1 = inlined_call_operand.vmem [shape: f32[1,128], index: 1, kind: input, shape index: {}]
  %s2 = inlined_call_operand.vmem [shape: f32[1,128], index: 2, kind: input, shape index: {}]
  %s3 = inlined_call_operand.vmem [shape: bf16[128,128], index: 3, kind: input, shape index: {}]
  %s4 = inlined_call_operand.vmem [shape: f32[8,128], index: 4, kind: output, shape index: {}]
  %s5 = sld [smem:[#allocation0]]
  $region26: #{densenet2_forward.45} parent=0
    _
  %s7 = ssub.s32 1, %s5
  %s8 = scalar_select 0, %s7, %s5
  // Predicated region
  $region2: #{densenet2_forward.45} parent=0 // pred_check
    _
  $region3: #{densenet2_forward.45} parent=0 // pred_check_branch
    %10 = sbr.rel (0) target = $region5
  $region4: #{densenet2_forward.45} parent=0 // pred_region
    _
  $region5: #{densenet2_forward.45} parent=0 // pred_fallthru
    _
  // Predicated region
  $region6: #{densenet2_forward.45} parent=0 // pred_check
    _
  $region7: #{densenet2_forward.45} parent=0 // pred_check_branch
    %12 = sbr.rel (0) target = $region9
  $region8: #{densenet2_forward.45} parent=0 // pred_region
    _
  $region9: #{densenet2_forward.45} parent=0 // pred_fallthru
    _
  // Predicated region
  $region10: #{densenet2_forward.45} parent=0 // pred_check
    _
  $region11: #{densenet2_forward.45} parent=0 // pred_check_branch
    %14 = sbr.rel (0) target = $region13
  $region12: #{densenet2_forward.45} parent=0 // pred_region
    _
  $region13: #{densenet2_forward.45} parent=0 // pred_fallthru
    _
  // Predicated region
  $region14: #{densenet2_forward.45} parent=0 // pred_check
    _
  $region15: #{densenet2_forward.45} parent=0 // pred_check_branch
    %16 = sbr.rel (0) target = $region17
  $region16: #{densenet2_forward.45} parent=0 // pred_region
    _
  $region17: #{densenet2_forward.45} parent=0 // pred_fallthru
    _
  %v17 = vld [vmem:[%s0] sm:$0xf]
  %v18 = vunpack.c.l.bf16 %v17
  %v19 = vld [vmem:[%s1] sm:$0x1]
  %v21 = vperm.slane %v19, 0
  %v23 = vmul.f32 %v18, %v21
  %v24 = vld [vmem:[%s2] sm:$0x1]
  %v26 = vperm.slane %v24, 0
  %v28 = vadd.f32 %v23, %v26
  %v29 = vpack.c.bf16 %v28, %v28
  %v30 = vld [vmem:[%s3] sm:$0xf]
  %v31 = vld [vmem:[%s3 + $0x4] sm:$0xf]
  %v32 = vld [vmem:[%s3 + $0x8] sm:$0xf]
  %v33 = vld [vmem:[%s3 + $0xc] sm:$0xf]
  %v34 = vld [vmem:[%s3 + $0x10] sm:$0xf]
  %v35 = vld [vmem:[%s3 + $0x14] sm:$0xf]
  %v36 = vld [vmem:[%s3 + $0x18] sm:$0xf]
  %v37 = vld [vmem:[%s3 + $0x1c] sm:$0xf]
  %v38 = vld [vmem:[%s3 + $0x20] sm:$0xf]
  %v39 = vld [vmem:[%s3 + $0x24] sm:$0xf]
  %v40 = vld [vmem:[%s3 + $0x28] sm:$0xf]
  %v41 = vld [vmem:[%s3 + $0x2c] sm:$0xf]
  %v42 = vld [vmem:[%s3 + $0x30] sm:$0xf]
  %v43 = vld [vmem:[%s3 + $0x34] sm:$0xf]
  %v44 = vld [vmem:[%s3 + $0x38] sm:$0xf]
  %v45 = vld [vmem:[%s3 + $0x3c] sm:$0xf]
  %v62 = vunpack.c.l.b16 %v30
  %v63 = vunpack.c.l.b16 %v31
  %v64 = vunpack.c.l.b16 %v32
  %v65 = vunpack.c.l.b16 %v33
  %v66 = vunpack.c.l.b16 %v34
  %v67 = vunpack.c.l.b16 %v35
  %v68 = vunpack.c.l.b16 %v36
  %v69 = vunpack.c.l.b16 %v37
  %v70 = vunpack.c.l.b16 %v38
  %v71 = vunpack.c.l.b16 %v39
  %v72 = vunpack.c.l.b16 %v40
  %v73 = vunpack.c.l.b16 %v41
  %v74 = vunpack.c.l.b16 %v42
  %v75 = vunpack.c.l.b16 %v43
  %v76 = vunpack.c.l.b16 %v44
  %v77 = vunpack.c.l.b16 %v45
  %v78 = vpack.c.b16 %v63, %v62
  %v79 = vpack.c.b16 %v65, %v64
  %v80 = vpack.c.b16 %v67, %v66
  %v81 = vpack.c.b16 %v69, %v68
  %v82 = vpack.c.b16 %v71, %v70
  %v83 = vpack.c.b16 %v73, %v72
  %v84 = vpack.c.b16 %v75, %v74
  %v85 = vpack.c.b16 %v77, %v76
  %94 = vmatpush.bf16.msra.mxu0 %v85
  %95 = vmatpush.bf16.msra.mxu0 %v84
  %96 = vmatpush.bf16.msra.mxu0 %v83
  %97 = vmatpush.bf16.msra.mxu0 %v82
  %98 = vmatpush.bf16.msra.mxu0 %v81
  %99 = vmatpush.bf16.msra.mxu0 %v80
  %100 = vmatpush.bf16.msra.mxu0 %v79
  %101 = vmatpush.bf16.msra.mxu0 %v78
  %102 = vmatmul.bf16.gmra.mxu0 %v29
  %v103 = vpop.f32.mrf.mxu0
  %v104 = vadd.f32 0.0, %v103
  %v105 = vpop.f32.mrf.mxu0
  %106 = vdwg.mxu0
  %107 = vst [vmem:[%s4] sm:$0xff] %v104
  // Predicated region
  $region18: #{densenet2_forward.45} parent=0 // pred_check
    _
  $region19: #{densenet2_forward.45} parent=0 // pred_check_branch
    %109 = sbr.rel (0) target = $region21
  $region20: #{densenet2_forward.45} parent=0 // pred_region
    _
  $region21: #{densenet2_forward.45} parent=0 // pred_fallthru
    _
  // Predicated region
  $region22: #{densenet2_forward.45} parent=0 // pred_check
    _
  $region23: #{densenet2_forward.45} parent=0 // pred_check_branch
    %111 = sbr.rel (0) target = $region25
  $region24: #{densenet2_forward.45} parent=0 // pred_region
    _
  $region25: #{densenet2_forward.45} parent=0 // pred_fallthru
    _

// kernel: densenet2_forward.44
$region0: #{densenet2_forward.44}
  #allocation0 [shape = 'u32[]', space=smem, size = 0x4, offset = 0x4, fixed_abs, tag = 'smem constant byte address 0x4 - core index']
  #allocation1 [shape = 'u32[72,128]{1,0:T(1,128)}', space=vmem, size = 0x9000, scoped, tag = 'internal scratch']
  %s0 = inlined_call_operand.vmem [shape: bf16[8,1152], index: 0, kind: input, shape index: {}]
  %s1 = inlined_call_operand.vmem [shape: bf16[8,36], index: 1, kind: input, shape index: {}]
  %s2 = inlined_call_operand.vmem [shape: bf16[1152,32], index: 2, kind: input, shape index: {}]
  %s3 = inlined_call_operand.vmem [shape: bf16[8,68], index: 3, kind: output, shape index: {0}]
  %s4 = inlined_call_operand.vmem [shape: f32[1,8,32], index: 4, kind: output, shape index: {1}]
  %5 = xla_tuple %s3, %s4
  %s6 = sld [smem:[#allocation0]]
  $region30: #{densenet2_forward.44} parent=0
    _
  %s8 = ssub.s32 1, %s6
  %s9 = scalar_select 0, %s8, %s6
  // Predicated region
  $region2: #{densenet2_forward.44} parent=0 // pred_check
    _
  $region3: #{densenet2_forward.44} parent=0 // pred_check_branch
    %11 = sbr.rel (0) target = $region5
  $region4: #{densenet2_forward.44} parent=0 // pred_region
    _
  $region5: #{densenet2_forward.44} parent=0 // pred_fallthru
    _
  // Predicated region
  $region6: #{densenet2_forward.44} parent=0 // pred_check
    _
  $region7: #{densenet2_forward.44} parent=0 // pred_check_branch
    %13 = sbr.rel (0) target = $region9
  $region8: #{densenet2_forward.44} parent=0 // pred_region
    _
  $region9: #{densenet2_forward.44} parent=0 // pred_fallthru
    _
  // Predicated region
  $region10: #{densenet2_forward.44} parent=0 // pred_check
    _
  $region11: #{densenet2_forward.44} parent=0 // pred_check_branch
    %15 = sbr.rel (0) target = $region13
  $region12: #{densenet2_forward.44} parent=0 // pred_region
    _
  $region13: #{densenet2_forward.44} parent=0 // pred_fallthru
    _
  %v16 = vld [vmem:[%s0] sm:$0xff]
  %v17 = vld [vmem:[%s0 + $0x8] sm:$0xff]
  %v18 = vld [vmem:[%s0 + $0x10] sm:$0xff]
  %v19 = vld [vmem:[%s0 + $0x18] sm:$0xff]
  %v20 = vld [vmem:[%s0 + $0x20] sm:$0xf]
  %v21 = vld [vmem:[%s2] sm:$0xf]
  %v22 = vld [vmem:[%s2 + $0x4] sm:$0xf]
  %v23 = vld [vmem:[%s2 + $0x8] sm:$0xf]
  %v24 = vld [vmem:[%s2 + $0xc] sm:$0xf]
  %v25 = vld [vmem:[%s2 + $0x10] sm:$0xf]
  %v26 = vld [vmem:[%s2 + $0x14] sm:$0xf]
  %v27 = vld [vmem:[%s2 + $0x18] sm:$0xf]
  %v28 = vld [vmem:[%s2 + $0x1c] sm:$0xf]
  %v29 = vld [vmem:[%s2 + $0x20] sm:$0xf]
  %v30 = vld [vmem:[%s2 + $0x24] sm:$0xf]
  %v31 = vld [vmem:[%s2 + $0x28] sm:$0xf]
  %v32 = vld [vmem:[%s2 + $0x2c] sm:$0xf]
  %v33 = vld [vmem:[%s2 + $0x30] sm:$0xf]
  %v34 = vld [vmem:[%s2 + $0x34] sm:$0xf]
  %v35 = vld [vmem:[%s2 + $0x38] sm:$0xf]
  %v36 = vld [vmem:[%s2 + $0x3c] sm:$0xf]
  %v37 = vld [vmem:[%s2 + $0x40] sm:$0xf]
  %v38 = vld [vmem:[%s2 + $0x44] sm:$0xf]
  %v39 = vld [vmem:[%s2 + $0x48] sm:$0xf]
  %v40 = vld [vmem:[%s2 + $0x4c] sm:$0xf]
  %v41 = vld [vmem:[%s2 + $0x50] sm:$0xf]
  %v42 = vld [vmem:[%s2 + $0x54] sm:$0xf]
  %v43 = vld [vmem:[%s2 + $0x58] sm:$0xf]
  %v44 = vld [vmem:[%s2 + $0x5c] sm:$0xf]
  %v45 = vld [vmem:[%s2 + $0x60] sm:$0xf]
  %v46 = vld [vmem:[%s2 + $0x64] sm:$0xf]
  %v47 = vld [vmem:[%s2 + $0x68] sm:$0xf]
  %v48 = vld [vmem:[%s2 + $0x6c] sm:$0xf]
  %v49 = vld [vmem:[%s2 + $0x70] sm:$0xf]
  %v50 = vld [vmem:[%s2 + $0x74] sm:$0xf]
  %v51 = vld [vmem:[%s2 + $0x78] sm:$0xf]
  %v52 = vld [vmem:[%s2 + $0x7c] sm:$0xf]
  %v53 = vld [vmem:[%s2 + $0x80] sm:$0xf]
  %v54 = vld [vmem:[%s2 + $0x84] sm:$0xf]
  %v55 = vld [vmem:[%s2 + $0x88] sm:$0xf]
  %v56 = vld [vmem:[%s2 + $0x8c] sm:$0xf]
  %v57 = vld [vmem:[%s2 + $0x90] sm:$0xf]
  %v58 = vld [vmem:[%s2 + $0x94] sm:$0xf]
  %v59 = vld [vmem:[%s2 + $0x98] sm:$0xf]
  %v60 = vld [vmem:[%s2 + $0x9c] sm:$0xf]
  %v61 = vld [vmem:[%s2 + $0xa0] sm:$0xf]
  %v62 = vld [vmem:[%s2 + $0xa4] sm:$0xf]
  %v63 = vld [vmem:[%s2 + $0xa8] sm:$0xf]
  %v64 = vld [vmem:[%s2 + $0xac] sm:$0xf]
  %v65 = vld [vmem:[%s2 + $0xb0] sm:$0xf]
  %v66 = vld [vmem:[%s2 + $0xb4] sm:$0xf]
  %v67 = vld [vmem:[%s2 + $0xb8] sm:$0xf]
  %v68 = vld [vmem:[%s2 + $0xbc] sm:$0xf]
  %v69 = vld [vmem:[%s2 + $0xc0] sm:$0xf]
  %v70 = vld [vmem:[%s2 + $0xc4] sm:$0xf]
  %v71 = vld [vmem:[%s2 + $0xc8] sm:$0xf]
  %v72 = vld [vmem:[%s2 + $0xcc] sm:$0xf]
  %v73 = vld [vmem:[%s2 + $0xd0] sm:$0xf]
  %v74 = vld [vmem:[%s2 + $0xd4] sm:$0xf]
  %v75 = vld [vmem:[%s2 + $0xd8] sm:$0xf]
  %v76 = vld [vmem:[%s2 + $0xdc] sm:$0xf]
  %v77 = vld [vmem:[%s2 + $0xe0] sm:$0xf]
  %v78 = vld [vmem:[%s2 + $0xe4] sm:$0xf]
  %v79 = vld [vmem:[%s2 + $0xe8] sm:$0xf]
  %v80 = vld [vmem:[%s2 + $0xec] sm:$0xf]
  %v81 = vld [vmem:[%s2 + $0xf0] sm:$0xf]
  %v82 = vld [vmem:[%s2 + $0xf4] sm:$0xf]
  %v83 = vld [vmem:[%s2 + $0xf8] sm:$0xf]
  %v84 = vld [vmem:[%s2 + $0xfc] sm:$0xf]
  %v85 = vld [vmem:[%s2 + $0x100] sm:$0xf]
  %v86 = vld [vmem:[%s2 + $0x104] sm:$0xf]
  %v87 = vld [vmem:[%s2 + $0x108] sm:$0xf]
  %v88 = vld [vmem:[%s2 + $0x10c] sm:$0xf]
  %v89 = vld [vmem:[%s2 + $0x110] sm:$0xf]
  %v90 = vld [vmem:[%s2 + $0x114] sm:$0xf]
  %v91 = vld [vmem:[%s2 + $0x118] sm:$0xf]
  %v92 = vld [vmem:[%s2 + $0x11c] sm:$0xf]
  %v93 = vld [vmem:[%s2 + $0x120] sm:$0xf]
  %v94 = vld [vmem:[%s2 + $0x124] sm:$0xf]
  %v95 = vld [vmem:[%s2 + $0x128] sm:$0xf]
  %v96 = vld [vmem:[%s2 + $0x12c] sm:$0xf]
  %v97 = vld [vmem:[%s2 + $0x130] sm:$0xf]
  %v98 = vld [vmem:[%s2 + $0x134] sm:$0xf]
  %v99 = vld [vmem:[%s2 + $0x138] sm:$0xf]
  %v100 = vld [vmem:[%s2 + $0x13c] sm:$0xf]
  %v101 = vld [vmem:[%s2 + $0x140] sm:$0xf]
  %v102 = vld [vmem:[%s2 + $0x144] sm:$0xf]
  %v103 = vld [vmem:[%s2 + $0x148] sm:$0xf]
  %v104 = vld [vmem:[%s2 + $0x14c] sm:$0xf]
  %v105 = vld [vmem:[%s2 + $0x150] sm:$0xf]
  %v106 = vld [vmem:[%s2 + $0x154] sm:$0xf]
  %v107 = vld [vmem:[%s2 + $0x158] sm:$0xf]
  %v108 = vld [vmem:[%s2 + $0x15c] sm:$0xf]
  %v109 = vld [vmem:[%s2 + $0x160] sm:$0xf]
  %v110 = vld [vmem:[%s2 + $0x164] sm:$0xf]
  %v111 = vld [vmem:[%s2 + $0x168] sm:$0xf]
  %v112 = vld [vmem:[%s2 + $0x16c] sm:$0xf]
  %v113 = vld [vmem:[%s2 + $0x170] sm:$0xf]
  %v114 = vld [vmem:[%s2 + $0x174] sm:$0xf]
  %v115 = vld [vmem:[%s2 + $0x178] sm:$0xf]
  %v116 = vld [vmem:[%s2 + $0x17c] sm:$0xf]
  %v117 = vld [vmem:[%s2 + $0x180] sm:$0xf]
  %v118 = vld [vmem:[%s2 + $0x184] sm:$0xf]
  %v119 = vld [vmem:[%s2 + $0x188] sm:$0xf]
  %v120 = vld [vmem:[%s2 + $0x18c] sm:$0xf]
  %v121 = vld [vmem:[%s2 + $0x190] sm:$0xf]
  %v122 = vld [vmem:[%s2 + $0x194] sm:$0xf]
  %v123 = vld [vmem:[%s2 + $0x198] sm:$0xf]
  %v124 = vld [vmem:[%s2 + $0x19c] sm:$0xf]
  %v125 = vld [vmem:[%s2 + $0x1a0] sm:$0xf]
  %v126 = vld [vmem:[%s2 + $0x1a4] sm:$0xf]
  %v127 = vld [vmem:[%s2 + $0x1a8] sm:$0xf]
  %v128 = vld [vmem:[%s2 + $0x1ac] sm:$0xf]
  %v129 = vld [vmem:[%s2 + $0x1b0] sm:$0xf]
  %v130 = vld [vmem:[%s2 + $0x1b4] sm:$0xf]
  %v131 = vld [vmem:[%s2 + $0x1b8] sm:$0xf]
  %v132 = vld [vmem:[%s2 + $0x1bc] sm:$0xf]
  %v133 = vld [vmem:[%s2 + $0x1c0] sm:$0xf]
  %v134 = vld [vmem:[%s2 + $0x1c4] sm:$0xf]
  %v135 = vld [vmem:[%s2 + $0x1c8] sm:$0xf]
  %v136 = vld [vmem:[%s2 + $0x1cc] sm:$0xf]
  %v137 = vld [vmem:[%s2 + $0x1d0] sm:$0xf]
  %v138 = vld [vmem:[%s2 + $0x1d4] sm:$0xf]
  %v139 = vld [vmem:[%s2 + $0x1d8] sm:$0xf]
  %v140 = vld [vmem:[%s2 + $0x1dc] sm:$0xf]
  %v141 = vld [vmem:[%s2 + $0x1e0] sm:$0xf]
  %v142 = vld [vmem:[%s2 + $0x1e4] sm:$0xf]
  %v143 = vld [vmem:[%s2 + $0x1e8] sm:$0xf]
  %v144 = vld [vmem:[%s2 + $0x1ec] sm:$0xf]
  %v145 = vld [vmem:[%s2 + $0x1f0] sm:$0xf]
  %v146 = vld [vmem:[%s2 + $0x1f4] sm:$0xf]
  %v147 = vld [vmem:[%s2 + $0x1f8] sm:$0xf]
  %v148 = vld [vmem:[%s2 + $0x1fc] sm:$0xf]
  %v149 = vld [vmem:[%s2 + $0x200] sm:$0xf]
  %v150 = vld [vmem:[%s2 + $0x204] sm:$0xf]
  %v151 = vld [vmem:[%s2 + $0x208] sm:$0xf]
  %v152 = vld [vmem:[%s2 + $0x20c] sm:$0xf]
  %v153 = vld [vmem:[%s2 + $0x210] sm:$0xf]
  %v154 = vld [vmem:[%s2 + $0x214] sm:$0xf]
  %v155 = vld [vmem:[%s2 + $0x218] sm:$0xf]
  %v156 = vld [vmem:[%s2 + $0x21c] sm:$0xf]
  %v157 = vld [vmem:[%s2 + $0x220] sm:$0xf]
  %v158 = vld [vmem:[%s2 + $0x224] sm:$0xf]
  %v159 = vld [vmem:[%s2 + $0x228] sm:$0xf]
  %v160 = vld [vmem:[%s2 + $0x22c] sm:$0xf]
  %v161 = vld [vmem:[%s2 + $0x230] sm:$0xf]
  %v162 = vld [vmem:[%s2 + $0x234] sm:$0xf]
  %v163 = vld [vmem:[%s2 + $0x238] sm:$0xf]
  %v164 = vld [vmem:[%s2 + $0x23c] sm:$0xf]
  %v170 = vunpack.c.l.b16 %v16
  %v171 = vunpack.c.h.b16 %v16
  %v172 = vunpack.c.l.b16 %v17
  %v173 = vunpack.c.h.b16 %v17
  %v174 = vunpack.c.l.b16 %v18
  %v175 = vunpack.c.h.b16 %v18
  %v176 = vunpack.c.l.b16 %v19
  %v177 = vunpack.c.h.b16 %v19
  %v178 = vunpack.c.l.b16 %v20
  %v179 = vpack.c.b16 %v170, %v170
  %v180 = vpack.c.b16 %v171, %v171
  %v181 = vpack.c.b16 %v172, %v172
  %v182 = vpack.c.b16 %v173, %v173
  %v183 = vpack.c.b16 %v174, %v174
  %v184 = vpack.c.b16 %v175, %v175
  %v185 = vpack.c.b16 %v176, %v176
  %v186 = vpack.c.b16 %v177, %v177
  %v187 = vpack.c.b16 %v178, %v178
  %v341 = vunpack.c.l.b16 %v21
  %v342 = vunpack.c.l.b16 %v22
  %v343 = vunpack.c.l.b16 %v23
  %v344 = vunpack.c.l.b16 %v24
  %v345 = vunpack.c.l.b16 %v25
  %v346 = vunpack.c.l.b16 %v26
  %v347 = vunpack.c.l.b16 %v27
  %v348 = vunpack.c.l.b16 %v28
  %v349 = vunpack.c.l.b16 %v29
  %v350 = vunpack.c.l.b16 %v30
  %v351 = vunpack.c.l.b16 %v31
  %v352 = vunpack.c.l.b16 %v32
  %v353 = vunpack.c.l.b16 %v33
  %v354 = vunpack.c.l.b16 %v34
  %v355 = vunpack.c.l.b16 %v35
  %v356 = vunpack.c.l.b16 %v36
  %v357 = vunpack.c.l.b16 %v37
  %v358 = vunpack.c.l.b16 %v38
  %v359 = vunpack.c.l.b16 %v39
  %v360 = vunpack.c.l.b16 %v40
  %v361 = vunpack.c.l.b16 %v41
  %v362 = vunpack.c.l.b16 %v42
  %v363 = vunpack.c.l.b16 %v43
  %v364 = vunpack.c.l.b16 %v44
  %v365 = vunpack.c.l.b16 %v45
  %v366 = vunpack.c.l.b16 %v46
  %v367 = vunpack.c.l.b16 %v47
  %v368 = vunpack.c.l.b16 %v48
  %v369 = vunpack.c.l.b16 %v49
  %v370 = vunpack.c.l.b16 %v50
  %v371 = vunpack.c.l.b16 %v51
  %v372 = vunpack.c.l.b16 %v52
  %v373 = vunpack.c.l.b16 %v53
  %v374 = vunpack.c.l.b16 %v54
  %v375 = vunpack.c.l.b16 %v55
  %v376 = vunpack.c.l.b16 %v56
  %v377 = vunpack.c.l.b16 %v57
  %v378 = vunpack.c.l.b16 %v58
  %v379 = vunpack.c.l.b16 %v59
  %v380 = vunpack.c.l.b16 %v60
  %v381 = vunpack.c.l.b16 %v61
  %v382 = vunpack.c.l.b16 %v62
  %v383 = vunpack.c.l.b16 %v63
  %v384 = vunpack.c.l.b16 %v64
  %v385 = vunpack.c.l.b16 %v65
  %v386 = vunpack.c.l.b16 %v66
  %v387 = vunpack.c.l.b16 %v67
  %v388 = vunpack.c.l.b16 %v68
  %v389 = vunpack.c.l.b16 %v69
  %v390 = vunpack.c.l.b16 %v70
  %v391 = vunpack.c.l.b16 %v71
  %v392 = vunpack.c.l.b16 %v72
  %v393 = vunpack.c.l.b16 %v73
  %v394 = vunpack.c.l.b16 %v74
  %v395 = vunpack.c.l.b16 %v75
  %v396 = vunpack.c.l.b16 %v76
  %v397 = vunpack.c.l.b16 %v77
  %v398 = vunpack.c.l.b16 %v78
  %v399 = vunpack.c.l.b16 %v79
  %v400 = vunpack.c.l.b16 %v80
  %v401 = vunpack.c.l.b16 %v81
  %v402 = vunpack.c.l.b16 %v82
  %v403 = vunpack.c.l.b16 %v83
  %v404 = vunpack.c.l.b16 %v84
  %v405 = vunpack.c.l.b16 %v85
  %v406 = vunpack.c.l.b16 %v86
  %v407 = vunpack.c.l.b16 %v87
  %v408 = vunpack.c.l.b16 %v88
  %v409 = vunpack.c.l.b16 %v89
  %v410 = vunpack.c.l.b16 %v90
  %v411 = vunpack.c.l.b16 %v91
  %v412 = vunpack.c.l.b16 %v92
  %v413 = vunpack.c.l.b16 %v93
  %v414 = vunpack.c.l.b16 %v94
  %v415 = vunpack.c.l.b16 %v95
  %v416 = vunpack.c.l.b16 %v96
  %v417 = vunpack.c.l.b16 %v97
  %v418 = vunpack.c.l.b16 %v98
  %v419 = vunpack.c.l.b16 %v99
  %v420 = vunpack.c.l.b16 %v100
  %v421 = vunpack.c.l.b16 %v101
  %v422 = vunpack.c.l.b16 %v102
  %v423 = vunpack.c.l.b16 %v103
  %v424 = vunpack.c.l.b16 %v104
  %v425 = vunpack.c.l.b16 %v105
  %v426 = vunpack.c.l.b16 %v106
  %v427 = vunpack.c.l.b16 %v107
  %v428 = vunpack.c.l.b16 %v108
  %v429 = vunpack.c.l.b16 %v109
  %v430 = vunpack.c.l.b16 %v110
  %v431 = vunpack.c.l.b16 %v111
  %v432 = vunpack.c.l.b16 %v112
  %v433 = vunpack.c.l.b16 %v113
  %v434 = vunpack.c.l.b16 %v114
  %v435 = vunpack.c.l.b16 %v115
  %v436 = vunpack.c.l.b16 %v116
  %v437 = vunpack.c.l.b16 %v117
  %v438 = vunpack.c.l.b16 %v118
  %v439 = vunpack.c.l.b16 %v119
  %v440 = vunpack.c.l.b16 %v120
  %v441 = vunpack.c.l.b16 %v121
  %v442 = vunpack.c.l.b16 %v122
  %v443 = vunpack.c.l.b16 %v123
  %v444 = vunpack.c.l.b16 %v124
  %v445 = vunpack.c.l.b16 %v125
  %v446 = vunpack.c.l.b16 %v126
  %v447 = vunpack.c.l.b16 %v127
  %v448 = vunpack.c.l.b16 %v128
  %v449 = vunpack.c.l.b16 %v129
  %v450 = vunpack.c.l.b16 %v130
  %v451 = vunpack.c.l.b16 %v131
  %v452 = vunpack.c.l.b16 %v132
  %v453 = vunpack.c.l.b16 %v133
  %v454 = vunpack.c.l.b16 %v134
  %v455 = vunpack.c.l.b16 %v135
  %v456 = vunpack.c.l.b16 %v136
  %v457 = vunpack.c.l.b16 %v137
  %v458 = vunpack.c.l.b16 %v138
  %v459 = vunpack.c.l.b16 %v139
  %v460 = vunpack.c.l.b16 %v140
  %v461 = vunpack.c.l.b16 %v141
  %v462 = vunpack.c.l.b16 %v142
  %v463 = vunpack.c.l.b16 %v143
  %v464 = vunpack.c.l.b16 %v144
  %v465 = vunpack.c.l.b16 %v145
  %v466 = vunpack.c.l.b16 %v146
  %v467 = vunpack.c.l.b16 %v147
  %v468 = vunpack.c.l.b16 %v148
  %v469 = vunpack.c.l.b16 %v149
  %v470 = vunpack.c.l.b16 %v150
  %v471 = vunpack.c.l.b16 %v151
  %v472 = vunpack.c.l.b16 %v152
  %v473 = vunpack.c.l.b16 %v153
  %v474 = vunpack.c.l.b16 %v154
  %v475 = vunpack.c.l.b16 %v155
  %v476 = vunpack.c.l.b16 %v156
  %v477 = vunpack.c.l.b16 %v157
  %v478 = vunpack.c.l.b16 %v158
  %v479 = vunpack.c.l.b16 %v159
  %v480 = vunpack.c.l.b16 %v160
  %v481 = vunpack.c.l.b16 %v161
  %v482 = vunpack.c.l.b16 %v162
  %v483 = vunpack.c.l.b16 %v163
  %v484 = vunpack.c.l.b16 %v164
  %v485 = vpack.c.b16 %v342, %v341
  %v486 = vpack.c.b16 %v344, %v343
  %v487 = vpack.c.b16 %v346, %v345
  %v488 = vpack.c.b16 %v348, %v347
  %v489 = vpack.c.b16 %v350, %v349
  %v490 = vpack.c.b16 %v352, %v351
  %v491 = vpack.c.b16 %v354, %v353
  %v492 = vpack.c.b16 %v356, %v355
  %v493 = vpack.c.b16 %v358, %v357
  %v494 = vpack.c.b16 %v360, %v359
  %v495 = vpack.c.b16 %v362, %v361
  %v496 = vpack.c.b16 %v364, %v363
  %v497 = vpack.c.b16 %v366, %v365
  %v498 = vpack.c.b16 %v368, %v367
  %v499 = vpack.c.b16 %v370, %v369
  %v500 = vpack.c.b16 %v372, %v371
  %v501 = vpack.c.b16 %v374, %v373
  %v502 = vpack.c.b16 %v376, %v375
  %v503 = vpack.c.b16 %v378, %v377
  %v504 = vpack.c.b16 %v380, %v379
  %v505 = vpack.c.b16 %v382, %v381
  %v506 = vpack.c.b16 %v384, %v383
  %v507 = vpack.c.b16 %v386, %v385
  %v508 = vpack.c.b16 %v388, %v387
  %v509 = vpack.c.b16 %v390, %v389
  %v510 = vpack.c.b16 %v392, %v391
  %v511 = vpack.c.b16 %v394, %v393
  %v512 = vpack.c.b16 %v396, %v395
  %v513 = vpack.c.b16 %v398, %v397
  %v514 = vpack.c.b16 %v400, %v399
  %v515 = vpack.c.b16 %v402, %v401
  %v516 = vpack.c.b16 %v404, %v403
  %v517 = vpack.c.b16 %v406, %v405
  %v518 = vpack.c.b16 %v408, %v407
  %v519 = vpack.c.b16 %v410, %v409
  %v520 = vpack.c.b16 %v412, %v411
  %v521 = vpack.c.b16 %v414, %v413
  %v522 = vpack.c.b16 %v416, %v415
  %v523 = vpack.c.b16 %v418, %v417
  %v524 = vpack.c.b16 %v420, %v419
  %v525 = vpack.c.b16 %v422, %v421
  %v526 = vpack.c.b16 %v424, %v423
  %v527 = vpack.c.b16 %v426, %v425
  %v528 = vpack.c.b16 %v428, %v427
  %v529 = vpack.c.b16 %v430, %v429
  %v530 = vpack.c.b16 %v432, %v431
  %v531 = vpack.c.b16 %v434, %v433
  %v532 = vpack.c.b16 %v436, %v435
  %v533 = vpack.c.b16 %v438, %v437
  %v534 = vpack.c.b16 %v440, %v439
  %v535 = vpack.c.b16 %v442, %v441
  %v536 = vpack.c.b16 %v444, %v443
  %v537 = vpack.c.b16 %v446, %v445
  %v538 = vpack.c.b16 %v448, %v447
  %v539 = vpack.c.b16 %v450, %v449
  %v540 = vpack.c.b16 %v452, %v451
  %v541 = vpack.c.b16 %v454, %v453
  %v542 = vpack.c.b16 %v456, %v455
  %v543 = vpack.c.b16 %v458, %v457
  %v544 = vpack.c.b16 %v460, %v459
  %v545 = vpack.c.b16 %v462, %v461
  %v546 = vpack.c.b16 %v464, %v463
  %v547 = vpack.c.b16 %v466, %v465
  %v548 = vpack.c.b16 %v468, %v467
  %v549 = vpack.c.b16 %v470, %v469
  %v550 = vpack.c.b16 %v472, %v471
  %v551 = vpack.c.b16 %v474, %v473
  %v552 = vpack.c.b16 %v476, %v475
  %v553 = vpack.c.b16 %v478, %v477
  %v554 = vpack.c.b16 %v480, %v479
  %v555 = vpack.c.b16 %v482, %v481
  %v556 = vpack.c.b16 %v484, %v483
  %629 = vmatpush.bf16.msra.mxu0 %v492
  %630 = vmatpush.bf16.msra.mxu0 %v491
  %631 = vmatpush.bf16.msra.mxu0 %v490
  %632 = vmatpush.bf16.msra.mxu0 %v489
  %633 = vmatpush.bf16.msra.mxu0 %v488
  %634 = vmatpush.bf16.msra.mxu0 %v487
  %635 = vmatpush.bf16.msra.mxu0 %v486
  %636 = vmatpush.bf16.msra.mxu0 %v485
  %637 = vmatmul.bf16.gmra.mxu0 %v179
  %v638 = vpop.f32.mrf.mxu0
  %v639 = vadd.f32 0.0, %v638
  %v640 = vpop.f32.mrf.mxu0
  %641 = vdwg.mxu0
  %642 = vmatpush.bf16.msra.mxu0 %v500
  %643 = vmatpush.bf16.msra.mxu0 %v499
  %644 = vmatpush.bf16.msra.mxu0 %v498
  %645 = vmatpush.bf16.msra.mxu0 %v497
  %646 = vmatpush.bf16.msra.mxu0 %v496
  %647 = vmatpush.bf16.msra.mxu0 %v495
  %648 = vmatpush.bf16.msra.mxu0 %v494
  %649 = vmatpush.bf16.msra.mxu0 %v493
  %650 = vmatmul.bf16.gmra.mxu0 %v180
  %v651 = vpop.f32.mrf.mxu0
  %v652 = vadd.f32 %v639, %v651
  %v653 = vpop.f32.mrf.mxu0
  %654 = vdwg.mxu0
  %655 = vmatpush.bf16.msra.mxu0 %v508
  %656 = vmatpush.bf16.msra.mxu0 %v507
  %657 = vmatpush.bf16.msra.mxu0 %v506
  %658 = vmatpush.bf16.msra.mxu0 %v505
  %659 = vmatpush.bf16.msra.mxu0 %v504
  %660 = vmatpush.bf16.msra.mxu0 %v503
  %661 = vmatpush.bf16.msra.mxu0 %v502
  %662 = vmatpush.bf16.msra.mxu0 %v501
  %663 = vmatmul.bf16.gmra.mxu0 %v181
  %v664 = vpop.f32.mrf.mxu0
  %v665 = vadd.f32 %v652, %v664
  %v666 = vpop.f32.mrf.mxu0
  %667 = vdwg.mxu0
  %668 = vmatpush.bf16.msra.mxu0 %v516
  %669 = vmatpush.bf16.msra.mxu0 %v515
  %670 = vmatpush.bf16.msra.mxu0 %v514
  %671 = vmatpush.bf16.msra.mxu0 %v513
  %672 = vmatpush.bf16.msra.mxu0 %v512
  %673 = vmatpush.bf16.msra.mxu0 %v511
  %674 = vmatpush.bf16.msra.mxu0 %v510
  %675 = vmatpush.bf16.msra.mxu0 %v509
  %676 = vmatmul.bf16.gmra.mxu0 %v182
  %v677 = vpop.f32.mrf.mxu0
  %v678 = vadd.f32 %v665, %v677
  %v679 = vpop.f32.mrf.mxu0
  %680 = vdwg.mxu0
  %681 = vmatpush.bf16.msra.mxu0 %v524
  %682 = vmatpush.bf16.msra.mxu0 %v523
  %683 = vmatpush.bf16.msra.mxu0 %v522
  %684 = vmatpush.bf16.msra.mxu0 %v521
  %685 = vmatpush.bf16.msra.mxu0 %v520
  %686 = vmatpush.bf16.msra.mxu0 %v519
  %687 = vmatpush.bf16.msra.mxu0 %v518
  %688 = vmatpush.bf16.msra.mxu0 %v517
  %689 = vmatmul.bf16.gmra.mxu0 %v183
  %v690 = vpop.f32.mrf.mxu0
  %v691 = vadd.f32 %v678, %v690
  %v692 = vpop.f32.mrf.mxu0
  %693 = vdwg.mxu0
  %694 = vmatpush.bf16.msra.mxu0 %v532
  %695 = vmatpush.bf16.msra.mxu0 %v531
  %696 = vmatpush.bf16.msra.mxu0 %v530
  %697 = vmatpush.bf16.msra.mxu0 %v529
  %698 = vmatpush.bf16.msra.mxu0 %v528
  %699 = vmatpush.bf16.msra.mxu0 %v527
  %700 = vmatpush.bf16.msra.mxu0 %v526
  %701 = vmatpush.bf16.msra.mxu0 %v525
  %702 = vmatmul.bf16.gmra.mxu0 %v184
  %v703 = vpop.f32.mrf.mxu0
  %v704 = vadd.f32 %v691, %v703
  %v705 = vpop.f32.mrf.mxu0
  %706 = vdwg.mxu0
  %707 = vmatpush.bf16.msra.mxu0 %v540
  %708 = vmatpush.bf16.msra.mxu0 %v539
  %709 = vmatpush.bf16.msra.mxu0 %v538
  %710 = vmatpush.bf16.msra.mxu0 %v537
  %711 = vmatpush.bf16.msra.mxu0 %v536
  %712 = vmatpush.bf16.msra.mxu0 %v535
  %713 = vmatpush.bf16.msra.mxu0 %v534
  %714 = vmatpush.bf16.msra.mxu0 %v533
  %715 = vmatmul.bf16.gmra.mxu0 %v185
  %v716 = vpop.f32.mrf.mxu0
  %v717 = vadd.f32 %v704, %v716
  %v718 = vpop.f32.mrf.mxu0
  %719 = vdwg.mxu0
  %720 = vmatpush.bf16.msra.mxu0 %v548
  %721 = vmatpush.bf16.msra.mxu0 %v547
  %722 = vmatpush.bf16.msra.mxu0 %v546
  %723 = vmatpush.bf16.msra.mxu0 %v545
  %724 = vmatpush.bf16.msra.mxu0 %v544
  %725 = vmatpush.bf16.msra.mxu0 %v543
  %726 = vmatpush.bf16.msra.mxu0 %v542
  %727 = vmatpush.bf16.msra.mxu0 %v541
  %728 = vmatmul.bf16.gmra.mxu0 %v186
  %v729 = vpop.f32.mrf.mxu0
  %v730 = vadd.f32 %v717, %v729
  %v731 = vpop.f32.mrf.mxu0
  %732 = vdwg.mxu0
  %733 = vmatpush.bf16.msra.mxu0 %v556
  %734 = vmatpush.bf16.msra.mxu0 %v555
  %735 = vmatpush.bf16.msra.mxu0 %v554
  %736 = vmatpush.bf16.msra.mxu0 %v553
  %737 = vmatpush.bf16.msra.mxu0 %v552
  %738 = vmatpush.bf16.msra.mxu0 %v551
  %739 = vmatpush.bf16.msra.mxu0 %v550
  %740 = vmatpush.bf16.msra.mxu0 %v549
  %741 = vmatmul.bf16.gmra.mxu0 %v187
  %v742 = vpop.f32.mrf.mxu0
  %v743 = vadd.f32 %v730, %v742
  %v744 = vpop.f32.mrf.mxu0
  %745 = vdwg.mxu0
  %v746 = vpack.c.bf16 %v743, %v743
  %v747 = vld [vmem:[%s1] sm:$0xf]
  %v749 = vunpack.c.l.b16 %v746
  %v750 = vpack.c.b16 %v749, %v749
  %751 = vrot.lane.b32.xlu0 %v750, 36
  %v752 = vpop.permute.xlu0 %751
  %vm753 = vcmask 293888
  %v756 = vsel %vm753, %v747, %v752
  %vm758 = vcmask 551936
  %759 = vst.msk [vmem:[%s3] sm:$0xf] %vm758, %v756
  %v760 = vunpack.c.l.bf16 %v746
  %v761 = vlaneseq
  %v762 = vshrl.u32 %v761, 7
  %s763 = smul.u32 0, 8
  %v764 = vstv %s763
  %v765 = vadd.s32 %v762, %v764
  %vm766 = vcmp.lt.s32.totalorder %v765, 2
  %v767 = vsel %vm766, %v760, 0.0
  %vm768 = vcmask 261120
  %v769 = vsel %vm768, %v767, 0.0
  %v770 = vrot.slane %v769, 4
  %v771 = vadd.f32 %v769, %v770
  %v772 = vrot.slane %v771, 2
  %v773 = vadd.f32 %v771, %v772
  %v774 = vrot.slane %v773, 1
  %v775 = vadd.f32 %v773, %v774
  %v776 = vmul.f32 %v767, %v767
  %v777 = vsel %vm768, %v776, 0.0
  %v778 = vrot.slane %v777, 4
  %v779 = vadd.f32 %v777, %v778
  %v780 = vrot.slane %v779, 2
  %v781 = vadd.f32 %v779, %v780
  %v782 = vrot.slane %v781, 1
  %v783 = vadd.f32 %v781, %v782
  %vm784 = vcmp.eq.s32.totalorder %v762, 0
  %vm785 = vcmp.eq.s32.totalorder %v762, 1
  %v786 = vsel %vm785, %v783, 0.0
  %v787 = vsel %vm784, %v775, %v786
  %788 = vst.msk [vmem:[%s4] sm:$0xff] %vm768, %v787
  // Predicated region
  $region14: #{densenet2_forward.44} parent=0 // pred_check
    _
  $region15: #{densenet2_forward.44} parent=0 // pred_check_branch
    %790 = sbr.rel (0) target = $region17
  $region16: #{densenet2_forward.44} parent=0 // pred_region
    _
  $region17: #{densenet2_forward.44} parent=0 // pred_fallthru
    _
  // Predicated region
  $region18: #{densenet2_forward.44} parent=0 // pred_check
    _
  $region19: #{densenet2_forward.44} parent=0 // pred_check_branch
    %792 = sbr.rel (0) target = $region21
  $region20: #{densenet2_forward.44} parent=0 // pred_region
    _
  $region21: #{densenet2_forward.44} parent=0 // pred_fallthru
    _
  // Predicated region
  $region22: #{densenet2_forward.44} parent=0 // pred_check
    _
  $region23: #{densenet2_forward.44} parent=0 // pred_check_branch
    %794 = sbr.rel (0) target = $region25
  $region24: #{densenet2_forward.44} parent=0 // pred_region
    _
  $region25: #{densenet2_forward.44} parent=0 // pred_fallthru
    _
  // Predicated region
  $region26: #{densenet2_forward.44} parent=0 // pred_check
    _
  $region27: #{densenet2_forward.44} parent=0 // pred_check_branch
    %796 = sbr.rel (0) target = $region29
  $region28: #{densenet2_forward.44} parent=0 // pred_region
    _
  $region29: #{densenet2_forward.44} parent=0 // pred_fallthru
    _

</llo_original>
